<compile_context>
chip_gen: v7x
topology: tpu7x:2x2x1
jax: 0.10.0
libtpu: 0.0.40
codegen_flags: <defaults>
</compile_context>

<pallas_src>
import functools

import jax
import jax.numpy as jnp
from jax import lax
from jax.experimental import pallas as pl
from jax.experimental.pallas import tpu as pltpu


def _bottleneck_kernel(x_ref, x_hbm, w1_ref, w2_ref, w3_ref,
                       sb1_ref, sb2_ref, sb3_ref, o_ref,
                       xtop, xbot, h1pad, sems, *, tile_h, d, W, pad_l):
    """One (batch, row-tile) step of the fused bottleneck.

    x_ref:  (1, tile_h, W, Cin) bf16   auto-pipelined centre rows of x
    x_hbm:  (N, H, W, Cin) bf16        raw HBM ref (manual halo DMA only)
    w1_ref: (Cin, P) bf16              sb1_ref: (2, P)  f32  [scale, shift]
    w2_ref: (3, 3, P, P) bf16          sb2_ref: (2, P)  f32
    w3_ref: (P, 4P) bf16               sb3_ref: (2, 4P) f32
    o_ref:  (1, tile_h, W, 4P) bf16
    xtop/xbot: (d, W, Cin) bf16 scratch (row halos)
    h1pad:  (tile_h+2d, pad_l+W+d, P) bf16 scratch (zero-padded conv1 output)
    """
    n = pl.program_id(0)
    h = pl.program_id(1)
    n_h = pl.num_programs(1)
    P = h1pad.shape[-1]
    wpad = h1pad.shape[1]
    thp = tile_h + 2 * d
    r0 = h * tile_h

    # ---- kick off the +-d row-halo DMAs first so they overlap conv1 --------
    @pl.when(h > 0)
    def _():
        pltpu.make_async_copy(x_hbm.at[n, pl.ds(r0 - d, d)], xtop, sems.at[0]).start()

    @pl.when(h < n_h - 1)
    def _():
        pltpu.make_async_copy(x_hbm.at[n, pl.ds(r0 + tile_h, d)], xbot, sems.at[1]).start()

    def conv1_bn_relu(xrows):
        t = jnp.dot(xrows, w1_ref[...], preferred_element_type=jnp.float32)
        return jnp.maximum(t * sb1_ref[0] + sb1_ref[1], 0.0).astype(h1pad.dtype)

    # ---- conv1 (1x1) + BN1 + ReLU on the centre rows while halos are in flight
    # pad_l is a multiple of 16 (bf16 sublane quantum) -> aligned store.
    h1pad[d:d + tile_h, pad_l:pad_l + W, :] = conv1_bn_relu(x_ref[0])

    # W-direction zero padding strips read by the dilated conv2 windows.
    h1pad[:, pad_l - d:pad_l, :] = jnp.zeros((thp, d, P), h1pad.dtype)
    h1pad[:, pad_l + W:pad_l + W + d, :] = jnp.zeros((thp, d, P), h1pad.dtype)

    # ---- halo rows: conv1 on the fetched rows, or zeros at the image border -
    @pl.when(h > 0)
    def _():
        pltpu.make_async_copy(x_hbm.at[n, pl.ds(r0 - d, d)], xtop, sems.at[0]).wait()
        h1pad[0:d, pad_l:pad_l + W, :] = conv1_bn_relu(xtop[...])

    @pl.when(h == 0)
    def _():
        h1pad[0:d, :, :] = jnp.zeros((d, wpad, P), h1pad.dtype)

    @pl.when(h < n_h - 1)
    def _():
        pltpu.make_async_copy(x_hbm.at[n, pl.ds(r0 + tile_h, d)], xbot, sems.at[1]).wait()
        h1pad[tile_h + d:thp, pad_l:pad_l + W, :] = conv1_bn_relu(xbot[...])

    @pl.when(h == n_h - 1)
    def _():
        h1pad[tile_h + d:thp, :, :] = jnp.zeros((d, wpad, P), h1pad.dtype)

    # ---- conv2 (3x3, dilation d): 9 shifted matmuls, accumulated as a value
    # (single writeback, no f32 VMEM read-modify-write loop).  Column windows
    # are hoisted per kx and reused for the 3 row taps (row slices are on the
    # untiled leading axis -> free).
    acc = None
    for kx in range(3):
        off = pad_l - d + kx * d
        cwin = h1pad[:, off:off + W, :]                           # (thp, W, P)
        for ky in range(3):
            part = jnp.dot(cwin[ky * d:ky * d + tile_h], w2_ref[ky, kx],
                           preferred_element_type=jnp.float32)
            acc = part if acc is None else acc + part

    # ---- BN2 + ReLU, conv3 (1x1) + BN3, identity residual, final ReLU ------
    h2 = jnp.maximum(acc * sb2_ref[0] + sb2_ref[1], 0.0).astype(jnp.bfloat16)
    y = jnp.dot(h2, w3_ref[...], preferred_element_type=jnp.float32)
    y = y * sb3_ref[0] + sb3_ref[1] + x_ref[0].astype(jnp.float32)
    o_ref[0] = jnp.maximum(y, 0.0).astype(o_ref.dtype)


def _pick_tile_h(H, d, cap):
    """Largest divisor of H that is <= cap and >= d (or H itself if n_h == 1)."""
    divs = [t for t in range(1, H + 1) if H % t == 0]
    cands = [t for t in divs if t <= max(cap, 1) and (t >= d or t == H)]
    return max(cands) if cands else H


def _derived_vmem_limit(tile_h, d, W, wpad, Cin, planes, c_out):
    """Per-step working-set estimate (bytes), clamped to device VMEM capacity."""
    b2, b4 = 2, 4
    thp = tile_h + 2 * d
    weights = (Cin * planes + 9 * planes * planes + planes * c_out) * b2 \
        + (4 * planes + 2 * c_out) * b4
    x_blk = tile_h * W * Cin * b2
    o_blk = tile_h * W * c_out * b2
    scratch = 2 * d * W * Cin * b2 + thp * wpad * planes * b2
    temps = 2 * tile_h * W * planes * b4          # conv2 value accumulator
    temps += 3 * thp * W * planes * b2            # unaligned column-window relayouts
    temps += 2 * tile_h * W * c_out * b4          # conv3 f32 result + epilogue temp
    est = 2 * weights + 2 * (x_blk + o_blk) + scratch + temps
    limit = int(est * 1.4) + (8 << 20)
    try:
        cap = int(getattr(pltpu.get_tpu_info(), "vmem_capacity_bytes", 64 << 20))
    except Exception:
        cap = 64 << 20
    return min(max(limit, 32 << 20), max(cap - (2 << 20), 16 << 20))


def bottleneck_pallas(x_nhwc, params, *, dilation=1, max_tile_h=16):
    """Fused Bottleneck forward.  x_nhwc: (N, H, W, Cin) -> (N, H, W, 4*planes)."""
    N, H, W, Cin = x_nhwc.shape
    w1, w2, w3 = params["w1"], params["w2"], params["w3"]
    planes = w1.shape[1]
    c_out = w3.shape[1]
    assert w2.shape == (3, 3, planes, planes)
    assert c_out == 4 * planes
    # Identity residual path only (downsample=None, stride=1).
    assert c_out == Cin, "identity residual needs inplanes == planes * expansion"

    d = int(dilation)
    tile_h = _pick_tile_h(H, d, max_tile_h)
    n_h = H // tile_h
    thp = tile_h + 2 * d
    pad_l = ((d + 15) // 16) * 16          # bf16 sublane-aligned left zero pad
    wpad = pad_l + W + d

    eps = 1e-5  # PyTorch BatchNorm2d default

    def fold_bn(p):
        g, b, m, v = p
        s = g / jnp.sqrt(v + eps)
        return jnp.stack([s, b - m * s]).astype(jnp.float32)   # (2, C): scale, shift

    sb1 = fold_bn(params["bn1"])
    sb2 = fold_bn(params["bn2"])
    sb3 = fold_bn(params["bn3"])

    xb = x_nhwc.astype(jnp.bfloat16)
    w1b = w1.astype(jnp.bfloat16)
    w2b = w2.astype(jnp.bfloat16)
    w3b = w3.astype(jnp.bfloat16)

    kernel = functools.partial(_bottleneck_kernel, tile_h=tile_h, d=d, W=W, pad_l=pad_l)
    vmem_limit = _derived_vmem_limit(tile_h, d, W, wpad, Cin, planes, c_out)

    def build(single_buffer_consts):
        def const_spec(shape):
            zeros = (0,) * len(shape)
            if single_buffer_consts:
                # Constant index_map -> one buffer is enough; reclaims VMEM.
                return pl.BlockSpec(shape, lambda n, h: zeros,
                                    pipeline_mode=pl.Buffered(1))
            return pl.BlockSpec(shape, lambda n, h: zeros)

        in_specs = [
            pl.BlockSpec((1, tile_h, W, Cin), lambda n, h: (n, h, 0, 0)),  # centre x
            pl.BlockSpec(memory_space=pl.ANY),                             # x in HBM (halos)
            const_spec((Cin, planes)),
            const_spec((3, 3, planes, planes)),
            const_spec((planes, c_out)),
            const_spec((2, planes)),
            const_spec((2, planes)),
            const_spec((2, c_out)),
        ]
        return pl.pallas_call(
            kernel,
            out_shape=jax.ShapeDtypeStruct((N, H, W, c_out), jnp.bfloat16),
            grid=(N, n_h),
            in_specs=in_specs,
            out_specs=pl.BlockSpec((1, tile_h, W, c_out), lambda n, h: (n, h, 0, 0)),
            scratch_shapes=[
                pltpu.VMEM((d, W, Cin), jnp.bfloat16),              # top halo rows
                pltpu.VMEM((d, W, Cin), jnp.bfloat16),              # bottom halo rows
                pltpu.VMEM((thp, wpad, planes), jnp.bfloat16),      # padded conv1 output
                pltpu.SemaphoreType.DMA((2,)),
            ],
            compiler_params=pltpu.CompilerParams(
                dimension_semantics=("parallel", "parallel"),
                vmem_limit_bytes=vmem_limit,
            ),
        )

    args = (xb, xb, w1b, w2b, w3b, sb1, sb2, sb3)
    try:
        out = jax.block_until_ready(build(True)(*args))
    except Exception:
        # Fallback for JAX versions without BlockSpec pipeline_mode support.
        out = jax.block_until_ready(build(False)(*args))
    return out


def _reference_bottleneck(x_bf16, params, dilation):
    """Pure-JAX reference (lax.conv_general_dilated), same bf16/f32 precision."""
    eps = 1e-5
    f32 = jnp.float32

    def bn(y, p):
        g, b, m, v = p
        s = (g / jnp.sqrt(v + eps)).astype(f32)
        return y * s + (b - m * s).astype(f32)

    def conv(lhs, w_hwio, pad, dil):
        return lax.conv_general_dilated(
            lhs, w_hwio, window_strides=(1, 1),
            padding=((pad, pad), (pad, pad)),
            rhs_dilation=(dil, dil),
            dimension_numbers=("NHWC", "HWIO", "NHWC"),
            preferred_element_type=f32)

    d = int(dilation)
    w1 = params["w1"].astype(jnp.bfloat16)[None, None]     # (1,1,Cin,P)
    w2 = params["w2"].astype(jnp.bfloat16)                 # (3,3,P,P)
    w3 = params["w3"].astype(jnp.bfloat16)[None, None]     # (1,1,P,4P)

    h1 = jnp.maximum(bn(conv(x_bf16, w1, 0, 1), params["bn1"]), 0.0).astype(jnp.bfloat16)
    h2 = jnp.maximum(bn(conv(h1, w2, d, d), params["bn2"]), 0.0).astype(jnp.bfloat16)
    y = bn(conv(h2, w3, 0, 1), params["bn3"]) + x_bf16.astype(f32)
    return jnp.maximum(y, 0.0)


if __name__ == "__main__":
    key = jax.random.PRNGKey(0)
    # Small shapes consistent with the module: inplanes == planes*4 so the
    # default identity-residual path applies.
    N, H, W = 2, 16, 16
    inplanes, planes, dilation = 16, 4, 2

    ks = jax.random.split(key, 8)

    def conv_w(k, shape, fan_in):
        return (2.0 / fan_in) ** 0.5 * jax.random.normal(k, shape, jnp.float32)

    def bn_p(k, c):
        k1, k2, k3, k4 = jax.random.split(k, 4)
        gamma = 1.0 + 0.1 * jax.random.normal(k1, (c,), jnp.float32)
        beta = 0.1 * jax.random.normal(k2, (c,), jnp.float32)
        mean = 0.1 * jax.random.normal(k3, (c,), jnp.float32)
        var = jax.random.uniform(k4, (c,), jnp.float32, 0.5, 1.5)
        return (gamma, beta, mean, var)

    params = {
        "w1": conv_w(ks[0], (inplanes, planes), inplanes),            # 1x1: (Cin, P)
        "w2": conv_w(ks[1], (3, 3, planes, planes), 9 * planes),      # 3x3 HWIO
        "w3": conv_w(ks[2], (planes, 4 * planes), planes),            # 1x1: (P, 4P)
        "bn1": bn_p(ks[3], planes),
        "bn2": bn_p(ks[4], planes),
        "bn3": bn_p(ks[5], 4 * planes),
    }

    x = jax.random.normal(ks[6], (N, H, W, inplanes), jnp.float32).astype(jnp.bfloat16)

    out = bottleneck_pallas(x, params, dilation=dilation)
    out = jax.block_until_ready(out)

    ref = _reference_bottleneck(x, params, dilation)
    assert out.shape == (N, H, W, 4 * planes), out.shape
    err = jnp.max(jnp.abs(out.astype(jnp.float32) - ref))
    assert jnp.allclose(out.astype(jnp.float32), ref, atol=5e-2, rtol=5e-2), float(err)

    print("KERNEL_OK")
</pallas_src>

<mosaic_0001>
module attributes {stable_mosaic.version = 11 : i64} {
  func.func @_bottleneck_kernel(%arg0: i32, %arg1: i32, %arg2: memref<1x16x16x16xbf16, #tpu.memory_space<vmem>>, %arg3: memref<2x16x16x16xbf16, #tpu.memory_space<any>>, %arg4: memref<16x4xbf16, #tpu.memory_space<vmem>>, %arg5: memref<3x3x4x4xbf16, #tpu.memory_space<vmem>>, %arg6: memref<4x16xbf16, #tpu.memory_space<vmem>>, %arg7: memref<2x4xf32, #tpu.memory_space<vmem>>, %arg8: memref<2x4xf32, #tpu.memory_space<vmem>>, %arg9: memref<2x16xf32, #tpu.memory_space<vmem>>, %arg10: memref<1x16x16x16xbf16, #tpu.memory_space<vmem>>, %arg11: memref<2x16x16xbf16, #tpu.memory_space<vmem>>, %arg12: memref<2x16x16xbf16, #tpu.memory_space<vmem>>, %arg13: memref<20x34x4xbf16, #tpu.memory_space<vmem>>, %arg14: memref<2x!tpu.dma_semaphore, #tpu.memory_space<semaphore_mem>>) attributes {dimension_semantics = [#tpu.dimension_semantics<parallel>, #tpu.dimension_semantics<parallel>], iteration_bounds = array<i64: 2, 1>, scalar_prefetch = 0 : i64, scratch_operands = 4 : i64, tpu.core_type = #tpu.core_type<tc>, window_params = [{transform_indices = @transform_0, window_bounds = array<i64: 1, 16, 16, 16>}, {}, {pipeline_mode = #tpu.pipeline_mode<synchronous>, transform_indices = @transform_2, window_bounds = array<i64: 16, 4>}, {pipeline_mode = #tpu.pipeline_mode<synchronous>, transform_indices = @transform_3, window_bounds = array<i64: 3, 3, 4, 4>}, {pipeline_mode = #tpu.pipeline_mode<synchronous>, transform_indices = @transform_4, window_bounds = array<i64: 4, 16>}, {pipeline_mode = #tpu.pipeline_mode<synchronous>, transform_indices = @transform_5, window_bounds = array<i64: 2, 4>}, {pipeline_mode = #tpu.pipeline_mode<synchronous>, transform_indices = @transform_6, window_bounds = array<i64: 2, 4>}, {pipeline_mode = #tpu.pipeline_mode<synchronous>, transform_indices = @transform_7, window_bounds = array<i64: 2, 16>}, {transform_indices = @transform_8, window_bounds = array<i64: 1, 16, 16, 16>}]} {
    %c16_i32 = arith.constant 16 : i32
    %0 = arith.muli %arg1, %c16_i32 : i32
    %c0_i32 = arith.constant 0 : i32
    %1 = arith.cmpi sgt, %arg1, %c0_i32 : i32
    %2 = arith.extui %1 : i1 to i32
    %c0_i32_0 = arith.constant 0 : i32
    %3 = arith.cmpi ne, %2, %c0_i32_0 : i32
    scf.if %3 {
      %c2_i32 = arith.constant 2 : i32
      %123 = arith.subi %0, %c2_i32 : i32
      %c0_i32_101 = arith.constant 0 : i32
      %c0_i32_102 = arith.constant 0 : i32
      %c0_i32_103 = arith.constant 0 : i32
      %124 = tpu.memref_slice %arg3[%arg0, %123, %c0_i32_102, %c0_i32_103] : memref<2x16x16x16xbf16, #tpu.memory_space<any>> -> memref<1x2x16x16xbf16, #tpu.memory_space<any>>
      %125 = tpu.memref_squeeze %124 : memref<1x2x16x16xbf16, #tpu.memory_space<any>> -> memref<2x16x16xbf16, #tpu.memory_space<any>>
      %126 = tpu.memref_slice %arg14[%c0_i32_101] : memref<2x!tpu.dma_semaphore, #tpu.memory_space<semaphore_mem>> -> memref<1x!tpu.dma_semaphore, #tpu.memory_space<semaphore_mem>>
      %127 = tpu.memref_squeeze %126 : memref<1x!tpu.dma_semaphore, #tpu.memory_space<semaphore_mem>> -> memref<!tpu.dma_semaphore, #tpu.memory_space<semaphore_mem>>
      tpu.enqueue_dma source(%125 : memref<2x16x16xbf16, #tpu.memory_space<any>>) target(%arg11 : memref<2x16x16xbf16, #tpu.memory_space<vmem>>) target_semaphore(%127 : memref<!tpu.dma_semaphore, #tpu.memory_space<semaphore_mem>>)
    } else {
    }
    %c0_i32_1 = arith.constant 0 : i32
    %4 = arith.cmpi slt, %arg1, %c0_i32_1 : i32
    %5 = arith.extui %4 : i1 to i32
    %c0_i32_2 = arith.constant 0 : i32
    %6 = arith.cmpi ne, %5, %c0_i32_2 : i32
    scf.if %6 {
      %c16_i32_101 = arith.constant 16 : i32
      %123 = arith.addi %0, %c16_i32_101 : i32
      %c1_i32 = arith.constant 1 : i32
      %c0_i32_102 = arith.constant 0 : i32
      %c0_i32_103 = arith.constant 0 : i32
      %124 = tpu.memref_slice %arg3[%arg0, %123, %c0_i32_102, %c0_i32_103] : memref<2x16x16x16xbf16, #tpu.memory_space<any>> -> memref<1x2x16x16xbf16, #tpu.memory_space<any>>
      %125 = tpu.memref_squeeze %124 : memref<1x2x16x16xbf16, #tpu.memory_space<any>> -> memref<2x16x16xbf16, #tpu.memory_space<any>>
      %126 = tpu.memref_slice %arg14[%c1_i32] : memref<2x!tpu.dma_semaphore, #tpu.memory_space<semaphore_mem>> -> memref<1x!tpu.dma_semaphore, #tpu.memory_space<semaphore_mem>>
      %127 = tpu.memref_squeeze %126 : memref<1x!tpu.dma_semaphore, #tpu.memory_space<semaphore_mem>> -> memref<!tpu.dma_semaphore, #tpu.memory_space<semaphore_mem>>
      tpu.enqueue_dma source(%125 : memref<2x16x16xbf16, #tpu.memory_space<any>>) target(%arg12 : memref<2x16x16xbf16, #tpu.memory_space<vmem>>) target_semaphore(%127 : memref<!tpu.dma_semaphore, #tpu.memory_space<semaphore_mem>>)
    } else {
    }
    %c0 = arith.constant 0 : index
    %c0_3 = arith.constant 0 : index
    %c0_4 = arith.constant 0 : index
    %c0_5 = arith.constant 0 : index
    %7 = vector.load %arg2[%c0, %c0_3, %c0_4, %c0_5] : memref<1x16x16x16xbf16, #tpu.memory_space<vmem>>, vector<1x16x16x16xbf16>
    %8 = vector.shape_cast %7 : vector<1x16x16x16xbf16> to vector<16x16x16xbf16>
    %c0_6 = arith.constant 0 : index
    %c0_7 = arith.constant 0 : index
    %9 = vector.load %arg4[%c0_6, %c0_7] : memref<16x4xbf16, #tpu.memory_space<vmem>>, vector<16x4xbf16>
    %cst = arith.constant dense<0.000000e+00> : vector<16x16x4xf32>
    %10 = tpu.matmul %8, %9, %cst {dimension_numbers = #tpu.dot_dimension_numbers<[2], [0], [0, 1], [1], [0, 0, 0, 1, 1, 1], [], []>} : vector<16x16x16xbf16>, vector<16x4xbf16>, vector<16x16x4xf32> -> vector<16x16x4xf32>
    %c0_8 = arith.constant 0 : index
    %c0_9 = arith.constant 0 : index
    %11 = vector.load %arg7[%c0_8, %c0_9] : memref<2x4xf32, #tpu.memory_space<vmem>>, vector<1x4xf32>
    %12 = vector.shape_cast %11 : vector<1x4xf32> to vector<4xf32>
    %13 = vector.shape_cast %12 : vector<4xf32> to vector<1x1x4xf32>
    %14 = vector.broadcast %13 : vector<1x1x4xf32> to vector<16x16x4xf32>
    %15 = arith.mulf %10, %14 : vector<16x16x4xf32>
    %c1 = arith.constant 1 : index
    %c0_10 = arith.constant 0 : index
    %16 = vector.load %arg7[%c1, %c0_10] : memref<2x4xf32, #tpu.memory_space<vmem>>, vector<1x4xf32>
    %17 = vector.shape_cast %16 : vector<1x4xf32> to vector<4xf32>
    %18 = vector.shape_cast %17 : vector<4xf32> to vector<1x1x4xf32>
    %19 = vector.broadcast %18 : vector<1x1x4xf32> to vector<16x16x4xf32>
    %20 = arith.addf %15, %19 : vector<16x16x4xf32>
    %cst_11 = arith.constant 0.000000e+00 : f32
    %21 = vector.broadcast %cst_11 : f32 to vector<16x16x4xf32>
    %22 = arith.maximumf %20, %21 : vector<16x16x4xf32>
    %23 = arith.truncf %22 : vector<16x16x4xf32> to vector<16x16x4xbf16>
    %c2 = arith.constant 2 : index
    %c16 = arith.constant 16 : index
    %c0_12 = arith.constant 0 : index
    %24 = vector.load %arg13[%c2, %c16, %c0_12] : memref<20x34x4xbf16, #tpu.memory_space<vmem>>, vector<16x16x4xbf16>
    tpu.vector_store %arg13[%c2, %c16, %c0_12], %23 {strides = array<i32>} : memref<20x34x4xbf16, #tpu.memory_space<vmem>>, vector<16x16x4xbf16>,
    %cst_13 = arith.constant 0.000000e+00 : bf16
    %25 = vector.broadcast %cst_13 : bf16 to vector<20x2x4xbf16>
    %c0_14 = arith.constant 0 : index
    %c14 = arith.constant 14 : index
    %c0_15 = arith.constant 0 : index
    %26 = vector.load %arg13[%c0_14, %c14, %c0_15] : memref<20x34x4xbf16, #tpu.memory_space<vmem>>, vector<20x2x4xbf16>
    tpu.vector_store %arg13[%c0_14, %c14, %c0_15], %25 {strides = array<i32>} : memref<20x34x4xbf16, #tpu.memory_space<vmem>>, vector<20x2x4xbf16>,
    %cst_16 = arith.constant 0.000000e+00 : bf16
    %27 = vector.broadcast %cst_16 : bf16 to vector<20x2x4xbf16>
    %c0_17 = arith.constant 0 : index
    %c32 = arith.constant 32 : index
    %c0_18 = arith.constant 0 : index
    %28 = vector.load %arg13[%c0_17, %c32, %c0_18] : memref<20x34x4xbf16, #tpu.memory_space<vmem>>, vector<20x2x4xbf16>
    tpu.vector_store %arg13[%c0_17, %c32, %c0_18], %27 {strides = array<i32>} : memref<20x34x4xbf16, #tpu.memory_space<vmem>>, vector<20x2x4xbf16>,
    %c0_i32_19 = arith.constant 0 : i32
    %29 = arith.cmpi sgt, %arg1, %c0_i32_19 : i32
    %30 = arith.extui %29 : i1 to i32
    %c0_i32_20 = arith.constant 0 : i32
    %31 = arith.cmpi ne, %30, %c0_i32_20 : i32
    scf.if %31 {
      %c2_i32 = arith.constant 2 : i32
      %123 = arith.subi %0, %c2_i32 : i32
      %c0_i32_101 = arith.constant 0 : i32
      %c0_i32_102 = arith.constant 0 : i32
      %c0_i32_103 = arith.constant 0 : i32
      %124 = tpu.memref_slice %arg3[%arg0, %123, %c0_i32_102, %c0_i32_103] : memref<2x16x16x16xbf16, #tpu.memory_space<any>> -> memref<1x2x16x16xbf16, #tpu.memory_space<any>>
      %125 = tpu.memref_squeeze %124 : memref<1x2x16x16xbf16, #tpu.memory_space<any>> -> memref<2x16x16xbf16, #tpu.memory_space<any>>
      %126 = tpu.memref_slice %arg14[%c0_i32_101] : memref<2x!tpu.dma_semaphore, #tpu.memory_space<semaphore_mem>> -> memref<1x!tpu.dma_semaphore, #tpu.memory_space<semaphore_mem>>
      %127 = tpu.memref_squeeze %126 : memref<1x!tpu.dma_semaphore, #tpu.memory_space<semaphore_mem>> -> memref<!tpu.dma_semaphore, #tpu.memory_space<semaphore_mem>>
      tpu.wait_dma2 semaphore(%127 : memref<!tpu.dma_semaphore, #tpu.memory_space<semaphore_mem>>) src(%125 : memref<2x16x16xbf16, #tpu.memory_space<any>>) dst(%arg11 : memref<2x16x16xbf16, #tpu.memory_space<vmem>>)
      %c0_104 = arith.constant 0 : index
      %c0_105 = arith.constant 0 : index
      %c0_106 = arith.constant 0 : index
      %128 = vector.load %arg11[%c0_104, %c0_105, %c0_106] : memref<2x16x16xbf16, #tpu.memory_space<vmem>>, vector<2x16x16xbf16>
      %c0_107 = arith.constant 0 : index
      %c0_108 = arith.constant 0 : index
      %129 = vector.load %arg4[%c0_107, %c0_108] : memref<16x4xbf16, #tpu.memory_space<vmem>>, vector<16x4xbf16>
      %cst_109 = arith.constant dense<0.000000e+00> : vector<2x16x4xf32>
      %130 = tpu.matmul %128, %129, %cst_109 {dimension_numbers = #tpu.dot_dimension_numbers<[2], [0], [0, 1], [1], [0, 0, 0, 1, 1, 1], [], []>} : vector<2x16x16xbf16>, vector<16x4xbf16>, vector<2x16x4xf32> -> vector<2x16x4xf32>
      %c0_110 = arith.constant 0 : index
      %c0_111 = arith.constant 0 : index
      %131 = vector.load %arg7[%c0_110, %c0_111] : memref<2x4xf32, #tpu.memory_space<vmem>>, vector<1x4xf32>
      %132 = vector.shape_cast %131 : vector<1x4xf32> to vector<4xf32>
      %133 = vector.shape_cast %132 : vector<4xf32> to vector<1x1x4xf32>
      %134 = vector.broadcast %133 : vector<1x1x4xf32> to vector<2x16x4xf32>
      %135 = arith.mulf %130, %134 : vector<2x16x4xf32>
      %c1_112 = arith.constant 1 : index
      %c0_113 = arith.constant 0 : index
      %136 = vector.load %arg7[%c1_112, %c0_113] : memref<2x4xf32, #tpu.memory_space<vmem>>, vector<1x4xf32>
      %137 = vector.shape_cast %136 : vector<1x4xf32> to vector<4xf32>
      %138 = vector.shape_cast %137 : vector<4xf32> to vector<1x1x4xf32>
      %139 = vector.broadcast %138 : vector<1x1x4xf32> to vector<2x16x4xf32>
      %140 = arith.addf %135, %139 : vector<2x16x4xf32>
      %cst_114 = arith.constant 0.000000e+00 : f32
      %141 = vector.broadcast %cst_114 : f32 to vector<2x16x4xf32>
      %142 = arith.maximumf %140, %141 : vector<2x16x4xf32>
      %143 = arith.truncf %142 : vector<2x16x4xf32> to vector<2x16x4xbf16>
      %c0_115 = arith.constant 0 : index
      %c16_116 = arith.constant 16 : index
      %c0_117 = arith.constant 0 : index
      %144 = vector.load %arg13[%c0_115, %c16_116, %c0_117] : memref<20x34x4xbf16, #tpu.memory_space<vmem>>, vector<2x16x4xbf16>
      tpu.vector_store %arg13[%c0_115, %c16_116, %c0_117], %143 {strides = array<i32>} : memref<20x34x4xbf16, #tpu.memory_space<vmem>>, vector<2x16x4xbf16>,
    } else {
    }
    %c0_i32_21 = arith.constant 0 : i32
    %32 = arith.cmpi eq, %arg1, %c0_i32_21 : i32
    %33 = arith.extui %32 : i1 to i32
    %c0_i32_22 = arith.constant 0 : i32
    %34 = arith.cmpi ne, %33, %c0_i32_22 : i32
    scf.if %34 {
      %cst_101 = arith.constant 0.000000e+00 : bf16
      %123 = vector.broadcast %cst_101 : bf16 to vector<2x34x4xbf16>
      %c0_102 = arith.constant 0 : index
      %c0_103 = arith.constant 0 : index
      %c0_104 = arith.constant 0 : index
      %124 = vector.load %arg13[%c0_102, %c0_103, %c0_104] : memref<20x34x4xbf16, #tpu.memory_space<vmem>>, vector<2x34x4xbf16>
      tpu.vector_store %arg13[%c0_102, %c0_103, %c0_104], %123 {strides = array<i32>} : memref<20x34x4xbf16, #tpu.memory_space<vmem>>, vector<2x34x4xbf16>,
    } else {
    }
    %c0_i32_23 = arith.constant 0 : i32
    %35 = arith.cmpi slt, %arg1, %c0_i32_23 : i32
    %36 = arith.extui %35 : i1 to i32
    %c0_i32_24 = arith.constant 0 : i32
    %37 = arith.cmpi ne, %36, %c0_i32_24 : i32
    scf.if %37 {
      %c16_i32_101 = arith.constant 16 : i32
      %123 = arith.addi %0, %c16_i32_101 : i32
      %c1_i32 = arith.constant 1 : i32
      %c0_i32_102 = arith.constant 0 : i32
      %c0_i32_103 = arith.constant 0 : i32
      %124 = tpu.memref_slice %arg3[%arg0, %123, %c0_i32_102, %c0_i32_103] : memref<2x16x16x16xbf16, #tpu.memory_space<any>> -> memref<1x2x16x16xbf16, #tpu.memory_space<any>>
      %125 = tpu.memref_squeeze %124 : memref<1x2x16x16xbf16, #tpu.memory_space<any>> -> memref<2x16x16xbf16, #tpu.memory_space<any>>
      %126 = tpu.memref_slice %arg14[%c1_i32] : memref<2x!tpu.dma_semaphore, #tpu.memory_space<semaphore_mem>> -> memref<1x!tpu.dma_semaphore, #tpu.memory_space<semaphore_mem>>
      %127 = tpu.memref_squeeze %126 : memref<1x!tpu.dma_semaphore, #tpu.memory_space<semaphore_mem>> -> memref<!tpu.dma_semaphore, #tpu.memory_space<semaphore_mem>>
      tpu.wait_dma2 semaphore(%127 : memref<!tpu.dma_semaphore, #tpu.memory_space<semaphore_mem>>) src(%125 : memref<2x16x16xbf16, #tpu.memory_space<any>>) dst(%arg12 : memref<2x16x16xbf16, #tpu.memory_space<vmem>>)
      %c0_104 = arith.constant 0 : index
      %c0_105 = arith.constant 0 : index
      %c0_106 = arith.constant 0 : index
      %128 = vector.load %arg12[%c0_104, %c0_105, %c0_106] : memref<2x16x16xbf16, #tpu.memory_space<vmem>>, vector<2x16x16xbf16>
      %c0_107 = arith.constant 0 : index
      %c0_108 = arith.constant 0 : index
      %129 = vector.load %arg4[%c0_107, %c0_108] : memref<16x4xbf16, #tpu.memory_space<vmem>>, vector<16x4xbf16>
      %cst_109 = arith.constant dense<0.000000e+00> : vector<2x16x4xf32>
      %130 = tpu.matmul %128, %129, %cst_109 {dimension_numbers = #tpu.dot_dimension_numbers<[2], [0], [0, 1], [1], [0, 0, 0, 1, 1, 1], [], []>} : vector<2x16x16xbf16>, vector<16x4xbf16>, vector<2x16x4xf32> -> vector<2x16x4xf32>
      %c0_110 = arith.constant 0 : index
      %c0_111 = arith.constant 0 : index
      %131 = vector.load %arg7[%c0_110, %c0_111] : memref<2x4xf32, #tpu.memory_space<vmem>>, vector<1x4xf32>
      %132 = vector.shape_cast %131 : vector<1x4xf32> to vector<4xf32>
      %133 = vector.shape_cast %132 : vector<4xf32> to vector<1x1x4xf32>
      %134 = vector.broadcast %133 : vector<1x1x4xf32> to vector<2x16x4xf32>
      %135 = arith.mulf %130, %134 : vector<2x16x4xf32>
      %c1_112 = arith.constant 1 : index
      %c0_113 = arith.constant 0 : index
      %136 = vector.load %arg7[%c1_112, %c0_113] : memref<2x4xf32, #tpu.memory_space<vmem>>, vector<1x4xf32>
      %137 = vector.shape_cast %136 : vector<1x4xf32> to vector<4xf32>
      %138 = vector.shape_cast %137 : vector<4xf32> to vector<1x1x4xf32>
      %139 = vector.broadcast %138 : vector<1x1x4xf32> to vector<2x16x4xf32>
      %140 = arith.addf %135, %139 : vector<2x16x4xf32>
      %cst_114 = arith.constant 0.000000e+00 : f32
      %141 = vector.broadcast %cst_114 : f32 to vector<2x16x4xf32>
      %142 = arith.maximumf %140, %141 : vector<2x16x4xf32>
      %143 = arith.truncf %142 : vector<2x16x4xf32> to vector<2x16x4xbf16>
      %c18_115 = arith.constant 18 : index
      %c16_116 = arith.constant 16 : index
      %c0_117 = arith.constant 0 : index
      %144 = vector.load %arg13[%c18_115, %c16_116, %c0_117] : memref<20x34x4xbf16, #tpu.memory_space<vmem>>, vector<2x16x4xbf16>
      tpu.vector_store %arg13[%c18_115, %c16_116, %c0_117], %143 {strides = array<i32>} : memref<20x34x4xbf16, #tpu.memory_space<vmem>>, vector<2x16x4xbf16>,
    } else {
    }
    %c0_i32_25 = arith.constant 0 : i32
    %38 = arith.cmpi eq, %arg1, %c0_i32_25 : i32
    %39 = arith.extui %38 : i1 to i32
    %c0_i32_26 = arith.constant 0 : i32
    %40 = arith.cmpi ne, %39, %c0_i32_26 : i32
    scf.if %40 {
      %cst_101 = arith.constant 0.000000e+00 : bf16
      %123 = vector.broadcast %cst_101 : bf16 to vector<2x34x4xbf16>
      %c18_102 = arith.constant 18 : index
      %c0_103 = arith.constant 0 : index
      %c0_104 = arith.constant 0 : index
      %124 = vector.load %arg13[%c18_102, %c0_103, %c0_104] : memref<20x34x4xbf16, #tpu.memory_space<vmem>>, vector<2x34x4xbf16>
      tpu.vector_store %arg13[%c18_102, %c0_103, %c0_104], %123 {strides = array<i32>} : memref<20x34x4xbf16, #tpu.memory_space<vmem>>, vector<2x34x4xbf16>,
    } else {
    }
    %c0_27 = arith.constant 0 : index
    %c14_28 = arith.constant 14 : index
    %c0_29 = arith.constant 0 : index
    %41 = vector.load %arg13[%c0_27, %c14_28, %c0_29] : memref<20x34x4xbf16, #tpu.memory_space<vmem>>, vector<20x16x4xbf16>
    %42 = vector.extract_strided_slice %41 {offsets = [0, 0, 0], sizes = [16, 16, 4], strides = [1, 1, 1]} : vector<20x16x4xbf16> to vector<16x16x4xbf16>
    %c0_30 = arith.constant 0 : index
    %c0_31 = arith.constant 0 : index
    %c0_32 = arith.constant 0 : index
    %c0_33 = arith.constant 0 : index
    %43 = vector.load %arg5[%c0_30, %c0_31, %c0_32, %c0_33] : memref<3x3x4x4xbf16, #tpu.memory_space<vmem>>, vector<1x1x4x4xbf16>
    %44 = vector.shape_cast %43 : vector<1x1x4x4xbf16> to vector<4x4xbf16>
    %cst_34 = arith.constant dense<0.000000e+00> : vector<16x16x4xf32>
    %45 = tpu.matmul %42, %44, %cst_34 {dimension_numbers = #tpu.dot_dimension_numbers<[2], [0], [0, 1], [1], [0, 0, 0, 1, 1, 1], [], []>} : vector<16x16x4xbf16>, vector<4x4xbf16>, vector<16x16x4xf32> -> vector<16x16x4xf32>
    %46 = vector.extract_strided_slice %41 {offsets = [2, 0, 0], sizes = [16, 16, 4], strides = [1, 1, 1]} : vector<20x16x4xbf16> to vector<16x16x4xbf16>
    %c1_35 = arith.constant 1 : index
    %c0_36 = arith.constant 0 : index
    %c0_37 = arith.constant 0 : index
    %c0_38 = arith.constant 0 : index
    %47 = vector.load %arg5[%c1_35, %c0_36, %c0_37, %c0_38] : memref<3x3x4x4xbf16, #tpu.memory_space<vmem>>, vector<1x1x4x4xbf16>
    %48 = vector.shape_cast %47 : vector<1x1x4x4xbf16> to vector<4x4xbf16>
    %cst_39 = arith.constant dense<0.000000e+00> : vector<16x16x4xf32>
    %49 = tpu.matmul %46, %48, %cst_39 {dimension_numbers = #tpu.dot_dimension_numbers<[2], [0], [0, 1], [1], [0, 0, 0, 1, 1, 1], [], []>} : vector<16x16x4xbf16>, vector<4x4xbf16>, vector<16x16x4xf32> -> vector<16x16x4xf32>
    %50 = arith.addf %45, %49 : vector<16x16x4xf32>
    %51 = vector.extract_strided_slice %41 {offsets = [4, 0, 0], sizes = [16, 16, 4], strides = [1, 1, 1]} : vector<20x16x4xbf16> to vector<16x16x4xbf16>
    %c2_40 = arith.constant 2 : index
    %c0_41 = arith.constant 0 : index
    %c0_42 = arith.constant 0 : index
    %c0_43 = arith.constant 0 : index
    %52 = vector.load %arg5[%c2_40, %c0_41, %c0_42, %c0_43] : memref<3x3x4x4xbf16, #tpu.memory_space<vmem>>, vector<1x1x4x4xbf16>
    %53 = vector.shape_cast %52 : vector<1x1x4x4xbf16> to vector<4x4xbf16>
    %cst_44 = arith.constant dense<0.000000e+00> : vector<16x16x4xf32>
    %54 = tpu.matmul %51, %53, %cst_44 {dimension_numbers = #tpu.dot_dimension_numbers<[2], [0], [0, 1], [1], [0, 0, 0, 1, 1, 1], [], []>} : vector<16x16x4xbf16>, vector<4x4xbf16>, vector<16x16x4xf32> -> vector<16x16x4xf32>
    %55 = arith.addf %50, %54 : vector<16x16x4xf32>
    %c0_45 = arith.constant 0 : index
    %c16_46 = arith.constant 16 : index
    %c0_47 = arith.constant 0 : index
    %56 = vector.load %arg13[%c0_45, %c16_46, %c0_47] : memref<20x34x4xbf16, #tpu.memory_space<vmem>>, vector<20x16x4xbf16>
    %57 = vector.extract_strided_slice %56 {offsets = [0, 0, 0], sizes = [16, 16, 4], strides = [1, 1, 1]} : vector<20x16x4xbf16> to vector<16x16x4xbf16>
    %c0_48 = arith.constant 0 : index
    %c1_49 = arith.constant 1 : index
    %c0_50 = arith.constant 0 : index
    %c0_51 = arith.constant 0 : index
    %58 = vector.load %arg5[%c0_48, %c1_49, %c0_50, %c0_51] : memref<3x3x4x4xbf16, #tpu.memory_space<vmem>>, vector<1x1x4x4xbf16>
    %59 = vector.shape_cast %58 : vector<1x1x4x4xbf16> to vector<4x4xbf16>
    %cst_52 = arith.constant dense<0.000000e+00> : vector<16x16x4xf32>
    %60 = tpu.matmul %57, %59, %cst_52 {dimension_numbers = #tpu.dot_dimension_numbers<[2], [0], [0, 1], [1], [0, 0, 0, 1, 1, 1], [], []>} : vector<16x16x4xbf16>, vector<4x4xbf16>, vector<16x16x4xf32> -> vector<16x16x4xf32>
    %61 = arith.addf %55, %60 : vector<16x16x4xf32>
    %62 = vector.extract_strided_slice %56 {offsets = [2, 0, 0], sizes = [16, 16, 4], strides = [1, 1, 1]} : vector<20x16x4xbf16> to vector<16x16x4xbf16>
    %c1_53 = arith.constant 1 : index
    %c1_54 = arith.constant 1 : index
    %c0_55 = arith.constant 0 : index
    %c0_56 = arith.constant 0 : index
    %63 = vector.load %arg5[%c1_53, %c1_54, %c0_55, %c0_56] : memref<3x3x4x4xbf16, #tpu.memory_space<vmem>>, vector<1x1x4x4xbf16>
    %64 = vector.shape_cast %63 : vector<1x1x4x4xbf16> to vector<4x4xbf16>
    %cst_57 = arith.constant dense<0.000000e+00> : vector<16x16x4xf32>
    %65 = tpu.matmul %62, %64, %cst_57 {dimension_numbers = #tpu.dot_dimension_numbers<[2], [0], [0, 1], [1], [0, 0, 0, 1, 1, 1], [], []>} : vector<16x16x4xbf16>, vector<4x4xbf16>, vector<16x16x4xf32> -> vector<16x16x4xf32>
    %66 = arith.addf %61, %65 : vector<16x16x4xf32>
    %67 = vector.extract_strided_slice %56 {offsets = [4, 0, 0], sizes = [16, 16, 4], strides = [1, 1, 1]} : vector<20x16x4xbf16> to vector<16x16x4xbf16>
    %c2_58 = arith.constant 2 : index
    %c1_59 = arith.constant 1 : index
    %c0_60 = arith.constant 0 : index
    %c0_61 = arith.constant 0 : index
    %68 = vector.load %arg5[%c2_58, %c1_59, %c0_60, %c0_61] : memref<3x3x4x4xbf16, #tpu.memory_space<vmem>>, vector<1x1x4x4xbf16>
    %69 = vector.shape_cast %68 : vector<1x1x4x4xbf16> to vector<4x4xbf16>
    %cst_62 = arith.constant dense<0.000000e+00> : vector<16x16x4xf32>
    %70 = tpu.matmul %67, %69, %cst_62 {dimension_numbers = #tpu.dot_dimension_numbers<[2], [0], [0, 1], [1], [0, 0, 0, 1, 1, 1], [], []>} : vector<16x16x4xbf16>, vector<4x4xbf16>, vector<16x16x4xf32> -> vector<16x16x4xf32>
    %71 = arith.addf %66, %70 : vector<16x16x4xf32>
    %c0_63 = arith.constant 0 : index
    %c18 = arith.constant 18 : index
    %c0_64 = arith.constant 0 : index
    %72 = vector.load %arg13[%c0_63, %c18, %c0_64] : memref<20x34x4xbf16, #tpu.memory_space<vmem>>, vector<20x16x4xbf16>
    %73 = vector.extract_strided_slice %72 {offsets = [0, 0, 0], sizes = [16, 16, 4], strides = [1, 1, 1]} : vector<20x16x4xbf16> to vector<16x16x4xbf16>
    %c0_65 = arith.constant 0 : index
    %c2_66 = arith.constant 2 : index
    %c0_67 = arith.constant 0 : index
    %c0_68 = arith.constant 0 : index
    %74 = vector.load %arg5[%c0_65, %c2_66, %c0_67, %c0_68] : memref<3x3x4x4xbf16, #tpu.memory_space<vmem>>, vector<1x1x4x4xbf16>
    %75 = vector.shape_cast %74 : vector<1x1x4x4xbf16> to vector<4x4xbf16>
    %cst_69 = arith.constant dense<0.000000e+00> : vector<16x16x4xf32>
    %76 = tpu.matmul %73, %75, %cst_69 {dimension_numbers = #tpu.dot_dimension_numbers<[2], [0], [0, 1], [1], [0, 0, 0, 1, 1, 1], [], []>} : vector<16x16x4xbf16>, vector<4x4xbf16>, vector<16x16x4xf32> -> vector<16x16x4xf32>
    %77 = arith.addf %71, %76 : vector<16x16x4xf32>
    %78 = vector.extract_strided_slice %72 {offsets = [2, 0, 0], sizes = [16, 16, 4], strides = [1, 1, 1]} : vector<20x16x4xbf16> to vector<16x16x4xbf16>
    %c1_70 = arith.constant 1 : index
    %c2_71 = arith.constant 2 : index
    %c0_72 = arith.constant 0 : index
    %c0_73 = arith.constant 0 : index
    %79 = vector.load %arg5[%c1_70, %c2_71, %c0_72, %c0_73] : memref<3x3x4x4xbf16, #tpu.memory_space<vmem>>, vector<1x1x4x4xbf16>
    %80 = vector.shape_cast %79 : vector<1x1x4x4xbf16> to vector<4x4xbf16>
    %cst_74 = arith.constant dense<0.000000e+00> : vector<16x16x4xf32>
    %81 = tpu.matmul %78, %80, %cst_74 {dimension_numbers = #tpu.dot_dimension_numbers<[2], [0], [0, 1], [1], [0, 0, 0, 1, 1, 1], [], []>} : vector<16x16x4xbf16>, vector<4x4xbf16>, vector<16x16x4xf32> -> vector<16x16x4xf32>
    %82 = arith.addf %77, %81 : vector<16x16x4xf32>
    %83 = vector.extract_strided_slice %72 {offsets = [4, 0, 0], sizes = [16, 16, 4], strides = [1, 1, 1]} : vector<20x16x4xbf16> to vector<16x16x4xbf16>
    %c2_75 = arith.constant 2 : index
    %c2_76 = arith.constant 2 : index
    %c0_77 = arith.constant 0 : index
    %c0_78 = arith.constant 0 : index
    %84 = vector.load %arg5[%c2_75, %c2_76, %c0_77, %c0_78] : memref<3x3x4x4xbf16, #tpu.memory_space<vmem>>, vector<1x1x4x4xbf16>
    %85 = vector.shape_cast %84 : vector<1x1x4x4xbf16> to vector<4x4xbf16>
    %cst_79 = arith.constant dense<0.000000e+00> : vector<16x16x4xf32>
    %86 = tpu.matmul %83, %85, %cst_79 {dimension_numbers = #tpu.dot_dimension_numbers<[2], [0], [0, 1], [1], [0, 0, 0, 1, 1, 1], [], []>} : vector<16x16x4xbf16>, vector<4x4xbf16>, vector<16x16x4xf32> -> vector<16x16x4xf32>
    %87 = arith.addf %82, %86 : vector<16x16x4xf32>
    %c0_80 = arith.constant 0 : index
    %c0_81 = arith.constant 0 : index
    %88 = vector.load %arg8[%c0_80, %c0_81] : memref<2x4xf32, #tpu.memory_space<vmem>>, vector<1x4xf32>
    %89 = vector.shape_cast %88 : vector<1x4xf32> to vector<4xf32>
    %90 = vector.shape_cast %89 : vector<4xf32> to vector<1x1x4xf32>
    %91 = vector.broadcast %90 : vector<1x1x4xf32> to vector<16x16x4xf32>
    %92 = arith.mulf %87, %91 : vector<16x16x4xf32>
    %c1_82 = arith.constant 1 : index
    %c0_83 = arith.constant 0 : index
    %93 = vector.load %arg8[%c1_82, %c0_83] : memref<2x4xf32, #tpu.memory_space<vmem>>, vector<1x4xf32>
    %94 = vector.shape_cast %93 : vector<1x4xf32> to vector<4xf32>
    %95 = vector.shape_cast %94 : vector<4xf32> to vector<1x1x4xf32>
    %96 = vector.broadcast %95 : vector<1x1x4xf32> to vector<16x16x4xf32>
    %97 = arith.addf %92, %96 : vector<16x16x4xf32>
    %cst_84 = arith.constant 0.000000e+00 : f32
    %98 = vector.broadcast %cst_84 : f32 to vector<16x16x4xf32>
    %99 = arith.maximumf %97, %98 : vector<16x16x4xf32>
    %100 = arith.truncf %99 : vector<16x16x4xf32> to vector<16x16x4xbf16>
    %c0_85 = arith.constant 0 : index
    %c0_86 = arith.constant 0 : index
    %101 = vector.load %arg6[%c0_85, %c0_86] : memref<4x16xbf16, #tpu.memory_space<vmem>>, vector<4x16xbf16>
    %cst_87 = arith.constant dense<0.000000e+00> : vector<16x16x16xf32>
    %102 = tpu.matmul %100, %101, %cst_87 {dimension_numbers = #tpu.dot_dimension_numbers<[2], [0], [0, 1], [1], [0, 0, 0, 1, 1, 1], [], []>} : vector<16x16x4xbf16>, vector<4x16xbf16>, vector<16x16x16xf32> -> vector<16x16x16xf32>
    %c0_88 = arith.constant 0 : index
    %c0_89 = arith.constant 0 : index
    %103 = vector.load %arg9[%c0_88, %c0_89] : memref<2x16xf32, #tpu.memory_space<vmem>>, vector<1x16xf32>
    %104 = vector.shape_cast %103 : vector<1x16xf32> to vector<16xf32>
    %105 = vector.shape_cast %104 : vector<16xf32> to vector<1x1x16xf32>
    %106 = vector.broadcast %105 : vector<1x1x16xf32> to vector<16x16x16xf32>
    %107 = arith.mulf %102, %106 : vector<16x16x16xf32>
    %c1_90 = arith.constant 1 : index
    %c0_91 = arith.constant 0 : index
    %108 = vector.load %arg9[%c1_90, %c0_91] : memref<2x16xf32, #tpu.memory_space<vmem>>, vector<1x16xf32>
    %109 = vector.shape_cast %108 : vector<1x16xf32> to vector<16xf32>
    %110 = vector.shape_cast %109 : vector<16xf32> to vector<1x1x16xf32>
    %111 = vector.broadcast %110 : vector<1x1x16xf32> to vector<16x16x16xf32>
    %112 = arith.addf %107, %111 : vector<16x16x16xf32>
    %c0_92 = arith.constant 0 : index
    %c0_93 = arith.constant 0 : index
    %c0_94 = arith.constant 0 : index
    %c0_95 = arith.constant 0 : index
    %113 = vector.load %arg2[%c0_92, %c0_93, %c0_94, %c0_95] : memref<1x16x16x16xbf16, #tpu.memory_space<vmem>>, vector<1x16x16x16xbf16>
    %114 = vector.shape_cast %113 : vector<1x16x16x16xbf16> to vector<16x16x16xbf16>
    %115 = arith.extf %114 : vector<16x16x16xbf16> to vector<16x16x16xf32>
    %116 = arith.addf %112, %115 : vector<16x16x16xf32>
    %cst_96 = arith.constant 0.000000e+00 : f32
    %117 = vector.broadcast %cst_96 : f32 to vector<16x16x16xf32>
    %118 = arith.maximumf %116, %117 : vector<16x16x16xf32>
    %119 = arith.truncf %118 : vector<16x16x16xf32> to vector<16x16x16xbf16>
    %c0_97 = arith.constant 0 : index
    %c0_98 = arith.constant 0 : index
    %c0_99 = arith.constant 0 : index
    %c0_100 = arith.constant 0 : index
    %120 = vector.load %arg10[%c0_97, %c0_98, %c0_99, %c0_100] : memref<1x16x16x16xbf16, #tpu.memory_space<vmem>>, vector<1x16x16x16xbf16>
    %121 = vector.shape_cast %120 : vector<1x16x16x16xbf16> to vector<16x16x16xbf16>
    %122 = vector.shape_cast %119 : vector<16x16x16xbf16> to vector<1x16x16x16xbf16>
    tpu.vector_store %arg10[%c0_97, %c0_98, %c0_99, %c0_100], %122 {strides = array<i32>} : memref<1x16x16x16xbf16, #tpu.memory_space<vmem>>, vector<1x16x16x16xbf16>,
    return
  }
  func.func @transform_0(%arg0: i32, %arg1: i32) -> (i32, i32, i32, i32) {
    %c0_i32 = arith.constant 0 : i32
    %c0_i32_0 = arith.constant 0 : i32
    %c0_i32_1 = arith.constant 0 : i32
    return %arg0, %arg1, %c0_i32, %c0_i32_0 : i32, i32, i32, i32
  }
  func.func @transform_2(%arg0: i32, %arg1: i32) -> (i32, i32) {
    %c0_i32 = arith.constant 0 : i32
    %c0_i32_0 = arith.constant 0 : i32
    %c0_i32_1 = arith.constant 0 : i32
    return %c0_i32, %c0_i32_0 : i32, i32
  }
  func.func @transform_3(%arg0: i32, %arg1: i32) -> (i32, i32, i32, i32) {
    %c0_i32 = arith.constant 0 : i32
    %c0_i32_0 = arith.constant 0 : i32
    %c0_i32_1 = arith.constant 0 : i32
    %c0_i32_2 = arith.constant 0 : i32
    %c0_i32_3 = arith.constant 0 : i32
    return %c0_i32, %c0_i32_0, %c0_i32_1, %c0_i32_2 : i32, i32, i32, i32
  }
  func.func @transform_4(%arg0: i32, %arg1: i32) -> (i32, i32) {
    %c0_i32 = arith.constant 0 : i32
    %c0_i32_0 = arith.constant 0 : i32
    %c0_i32_1 = arith.constant 0 : i32
    return %c0_i32, %c0_i32_0 : i32, i32
  }
  func.func @transform_5(%arg0: i32, %arg1: i32) -> (i32, i32) {
    %c0_i32 = arith.constant 0 : i32
    %c0_i32_0 = arith.constant 0 : i32
    %c0_i32_1 = arith.constant 0 : i32
    return %c0_i32, %c0_i32_0 : i32, i32
  }
  func.func @transform_6(%arg0: i32, %arg1: i32) -> (i32, i32) {
    %c0_i32 = arith.constant 0 : i32
    %c0_i32_0 = arith.constant 0 : i32
    %c0_i32_1 = arith.constant 0 : i32
    return %c0_i32, %c0_i32_0 : i32, i32
  }
  func.func @transform_7(%arg0: i32, %arg1: i32) -> (i32, i32) {
    %c0_i32 = arith.constant 0 : i32
    %c0_i32_0 = arith.constant 0 : i32
    %c0_i32_1 = arith.constant 0 : i32
    return %c0_i32, %c0_i32_0 : i32, i32
  }
  func.func @transform_8(%arg0: i32, %arg1: i32) -> (i32, i32, i32, i32) {
    %c0_i32 = arith.constant 0 : i32
    %c0_i32_0 = arith.constant 0 : i32
    %c0_i32_1 = arith.constant 0 : i32
    return %arg0, %arg1, %c0_i32, %c0_i32_0 : i32, i32, i32, i32
  }
}

module attributes {stable_mosaic.version = 11 : i64} {
  func.func @_bottleneck_kernel(%arg0: i32, %arg1: i32, %arg2: memref<1x16x16x16xbf16, #tpu.memory_space<vmem>>, %arg3: memref<2x16x16x16xbf16, #tpu.memory_space<any>>, %arg4: memref<16x4xbf16, #tpu.memory_space<vmem>>, %arg5: memref<3x3x4x4xbf16, #tpu.memory_space<vmem>>, %arg6: memref<4x16xbf16, #tpu.memory_space<vmem>>, %arg7: memref<2x4xf32, #tpu.memory_space<vmem>>, %arg8: memref<2x4xf32, #tpu.memory_space<vmem>>, %arg9: memref<2x16xf32, #tpu.memory_space<vmem>>, %arg10: memref<1x16x16x16xbf16, #tpu.memory_space<vmem>>, %arg11: memref<2x16x16xbf16, #tpu.memory_space<vmem>>, %arg12: memref<2x16x16xbf16, #tpu.memory_space<vmem>>, %arg13: memref<20x34x4xbf16, #tpu.memory_space<vmem>>, %arg14: memref<2x!tpu.dma_semaphore, #tpu.memory_space<semaphore_mem>>) attributes {dimension_semantics = [#tpu.dimension_semantics<parallel>, #tpu.dimension_semantics<parallel>], iteration_bounds = array<i64: 2, 1>, scalar_prefetch = 0 : i64, scratch_operands = 4 : i64, tpu.core_type = #tpu.core_type<tc>, window_params = [{transform_indices = @transform_0, window_bounds = array<i64: 1, 16, 16, 16>}, {}, {pipeline_mode = #tpu.pipeline_mode<synchronous>, transform_indices = @transform_2, window_bounds = array<i64: 16, 4>}, {pipeline_mode = #tpu.pipeline_mode<synchronous>, transform_indices = @transform_3, window_bounds = array<i64: 3, 3, 4, 4>}, {pipeline_mode = #tpu.pipeline_mode<synchronous>, transform_indices = @transform_4, window_bounds = array<i64: 4, 16>}, {pipeline_mode = #tpu.pipeline_mode<synchronous>, transform_indices = @transform_5, window_bounds = array<i64: 2, 4>}, {pipeline_mode = #tpu.pipeline_mode<synchronous>, transform_indices = @transform_6, window_bounds = array<i64: 2, 4>}, {pipeline_mode = #tpu.pipeline_mode<synchronous>, transform_indices = @transform_7, window_bounds = array<i64: 2, 16>}, {transform_indices = @transform_8, window_bounds = array<i64: 1, 16, 16, 16>}]} {
    %c16_i32 = arith.constant 16 : i32
    %0 = arith.muli %arg1, %c16_i32 : i32
    %c0_i32 = arith.constant 0 : i32
    %1 = arith.cmpi sgt, %arg1, %c0_i32 : i32
    %2 = arith.extui %1 : i1 to i32
    %c0_i32_0 = arith.constant 0 : i32
    %3 = arith.cmpi ne, %2, %c0_i32_0 : i32
    scf.if %3 {
      %c2_i32 = arith.constant 2 : i32
      %123 = arith.subi %0, %c2_i32 : i32
      %c0_i32_101 = arith.constant 0 : i32
      %c0_i32_102 = arith.constant 0 : i32
      %c0_i32_103 = arith.constant 0 : i32
      %124 = tpu.memref_slice %arg3[%arg0, %123, %c0_i32_102, %c0_i32_103] : memref<2x16x16x16xbf16, #tpu.memory_space<any>> -> memref<1x2x16x16xbf16, #tpu.memory_space<any>>
      %125 = tpu.memref_squeeze %124 : memref<1x2x16x16xbf16, #tpu.memory_space<any>> -> memref<2x16x16xbf16, #tpu.memory_space<any>>
      %126 = tpu.memref_slice %arg14[%c0_i32_101] : memref<2x!tpu.dma_semaphore, #tpu.memory_space<semaphore_mem>> -> memref<1x!tpu.dma_semaphore, #tpu.memory_space<semaphore_mem>>
      %127 = tpu.memref_squeeze %126 : memref<1x!tpu.dma_semaphore, #tpu.memory_space<semaphore_mem>> -> memref<!tpu.dma_semaphore, #tpu.memory_space<semaphore_mem>>
      tpu.enqueue_dma source(%125 : memref<2x16x16xbf16, #tpu.memory_space<any>>) target(%arg11 : memref<2x16x16xbf16, #tpu.memory_space<vmem>>) target_semaphore(%127 : memref<!tpu.dma_semaphore, #tpu.memory_space<semaphore_mem>>)
    } else {
    }
    %c0_i32_1 = arith.constant 0 : i32
    %4 = arith.cmpi slt, %arg1, %c0_i32_1 : i32
    %5 = arith.extui %4 : i1 to i32
    %c0_i32_2 = arith.constant 0 : i32
    %6 = arith.cmpi ne, %5, %c0_i32_2 : i32
    scf.if %6 {
      %c16_i32_101 = arith.constant 16 : i32
      %123 = arith.addi %0, %c16_i32_101 : i32
      %c1_i32 = arith.constant 1 : i32
      %c0_i32_102 = arith.constant 0 : i32
      %c0_i32_103 = arith.constant 0 : i32
      %124 = tpu.memref_slice %arg3[%arg0, %123, %c0_i32_102, %c0_i32_103] : memref<2x16x16x16xbf16, #tpu.memory_space<any>> -> memref<1x2x16x16xbf16, #tpu.memory_space<any>>
      %125 = tpu.memref_squeeze %124 : memref<1x2x16x16xbf16, #tpu.memory_space<any>> -> memref<2x16x16xbf16, #tpu.memory_space<any>>
      %126 = tpu.memref_slice %arg14[%c1_i32] : memref<2x!tpu.dma_semaphore, #tpu.memory_space<semaphore_mem>> -> memref<1x!tpu.dma_semaphore, #tpu.memory_space<semaphore_mem>>
      %127 = tpu.memref_squeeze %126 : memref<1x!tpu.dma_semaphore, #tpu.memory_space<semaphore_mem>> -> memref<!tpu.dma_semaphore, #tpu.memory_space<semaphore_mem>>
      tpu.enqueue_dma source(%125 : memref<2x16x16xbf16, #tpu.memory_space<any>>) target(%arg12 : memref<2x16x16xbf16, #tpu.memory_space<vmem>>) target_semaphore(%127 : memref<!tpu.dma_semaphore, #tpu.memory_space<semaphore_mem>>)
    } else {
    }
    %c0 = arith.constant 0 : index
    %c0_3 = arith.constant 0 : index
    %c0_4 = arith.constant 0 : index
    %c0_5 = arith.constant 0 : index
    %7 = vector.load %arg2[%c0, %c0_3, %c0_4, %c0_5] : memref<1x16x16x16xbf16, #tpu.memory_space<vmem>>, vector<1x16x16x16xbf16>
    %8 = vector.shape_cast %7 : vector<1x16x16x16xbf16> to vector<16x16x16xbf16>
    %c0_6 = arith.constant 0 : index
    %c0_7 = arith.constant 0 : index
    %9 = vector.load %arg4[%c0_6, %c0_7] : memref<16x4xbf16, #tpu.memory_space<vmem>>, vector<16x4xbf16>
    %cst = arith.constant dense<0.000000e+00> : vector<16x16x4xf32>
    %10 = tpu.matmul %8, %9, %cst {dimension_numbers = #tpu.dot_dimension_numbers<[2], [0], [0, 1], [1], [0, 0, 0, 1, 1, 1], [], []>} : vector<16x16x16xbf16>, vector<16x4xbf16>, vector<16x16x4xf32> -> vector<16x16x4xf32>
    %c0_8 = arith.constant 0 : index
    %c0_9 = arith.constant 0 : index
    %11 = vector.load %arg7[%c0_8, %c0_9] : memref<2x4xf32, #tpu.memory_space<vmem>>, vector<1x4xf32>
    %12 = vector.shape_cast %11 : vector<1x4xf32> to vector<4xf32>
    %13 = vector.shape_cast %12 : vector<4xf32> to vector<1x1x4xf32>
    %14 = vector.broadcast %13 : vector<1x1x4xf32> to vector<16x16x4xf32>
    %15 = arith.mulf %10, %14 : vector<16x16x4xf32>
    %c1 = arith.constant 1 : index
    %c0_10 = arith.constant 0 : index
    %16 = vector.load %arg7[%c1, %c0_10] : memref<2x4xf32, #tpu.memory_space<vmem>>, vector<1x4xf32>
    %17 = vector.shape_cast %16 : vector<1x4xf32> to vector<4xf32>
    %18 = vector.shape_cast %17 : vector<4xf32> to vector<1x1x4xf32>
    %19 = vector.broadcast %18 : vector<1x1x4xf32> to vector<16x16x4xf32>
    %20 = arith.addf %15, %19 : vector<16x16x4xf32>
    %cst_11 = arith.constant 0.000000e+00 : f32
    %21 = vector.broadcast %cst_11 : f32 to vector<16x16x4xf32>
    %22 = arith.maximumf %20, %21 : vector<16x16x4xf32>
    %23 = arith.truncf %22 : vector<16x16x4xf32> to vector<16x16x4xbf16>
    %c2 = arith.constant 2 : index
    %c16 = arith.constant 16 : index
    %c0_12 = arith.constant 0 : index
    %24 = vector.load %arg13[%c2, %c16, %c0_12] : memref<20x34x4xbf16, #tpu.memory_space<vmem>>, vector<16x16x4xbf16>
    tpu.vector_store %arg13[%c2, %c16, %c0_12], %23 {strides = array<i32>} : memref<20x34x4xbf16, #tpu.memory_space<vmem>>, vector<16x16x4xbf16>,
    %cst_13 = arith.constant 0.000000e+00 : bf16
    %25 = vector.broadcast %cst_13 : bf16 to vector<20x2x4xbf16>
    %c0_14 = arith.constant 0 : index
    %c14 = arith.constant 14 : index
    %c0_15 = arith.constant 0 : index
    %26 = vector.load %arg13[%c0_14, %c14, %c0_15] : memref<20x34x4xbf16, #tpu.memory_space<vmem>>, vector<20x2x4xbf16>
    tpu.vector_store %arg13[%c0_14, %c14, %c0_15], %25 {strides = array<i32>} : memref<20x34x4xbf16, #tpu.memory_space<vmem>>, vector<20x2x4xbf16>,
    %cst_16 = arith.constant 0.000000e+00 : bf16
    %27 = vector.broadcast %cst_16 : bf16 to vector<20x2x4xbf16>
    %c0_17 = arith.constant 0 : index
    %c32 = arith.constant 32 : index
    %c0_18 = arith.constant 0 : index
    %28 = vector.load %arg13[%c0_17, %c32, %c0_18] : memref<20x34x4xbf16, #tpu.memory_space<vmem>>, vector<20x2x4xbf16>
    tpu.vector_store %arg13[%c0_17, %c32, %c0_18], %27 {strides = array<i32>} : memref<20x34x4xbf16, #tpu.memory_space<vmem>>, vector<20x2x4xbf16>,
    %c0_i32_19 = arith.constant 0 : i32
    %29 = arith.cmpi sgt, %arg1, %c0_i32_19 : i32
    %30 = arith.extui %29 : i1 to i32
    %c0_i32_20 = arith.constant 0 : i32
    %31 = arith.cmpi ne, %30, %c0_i32_20 : i32
    scf.if %31 {
      %c2_i32 = arith.constant 2 : i32
      %123 = arith.subi %0, %c2_i32 : i32
      %c0_i32_101 = arith.constant 0 : i32
      %c0_i32_102 = arith.constant 0 : i32
      %c0_i32_103 = arith.constant 0 : i32
      %124 = tpu.memref_slice %arg3[%arg0, %123, %c0_i32_102, %c0_i32_103] : memref<2x16x16x16xbf16, #tpu.memory_space<any>> -> memref<1x2x16x16xbf16, #tpu.memory_space<any>>
      %125 = tpu.memref_squeeze %124 : memref<1x2x16x16xbf16, #tpu.memory_space<any>> -> memref<2x16x16xbf16, #tpu.memory_space<any>>
      %126 = tpu.memref_slice %arg14[%c0_i32_101] : memref<2x!tpu.dma_semaphore, #tpu.memory_space<semaphore_mem>> -> memref<1x!tpu.dma_semaphore, #tpu.memory_space<semaphore_mem>>
      %127 = tpu.memref_squeeze %126 : memref<1x!tpu.dma_semaphore, #tpu.memory_space<semaphore_mem>> -> memref<!tpu.dma_semaphore, #tpu.memory_space<semaphore_mem>>
      tpu.wait_dma2 semaphore(%127 : memref<!tpu.dma_semaphore, #tpu.memory_space<semaphore_mem>>) src(%125 : memref<2x16x16xbf16, #tpu.memory_space<any>>) dst(%arg11 : memref<2x16x16xbf16, #tpu.memory_space<vmem>>)
      %c0_104 = arith.constant 0 : index
      %c0_105 = arith.constant 0 : index
      %c0_106 = arith.constant 0 : index
      %128 = vector.load %arg11[%c0_104, %c0_105, %c0_106] : memref<2x16x16xbf16, #tpu.memory_space<vmem>>, vector<2x16x16xbf16>
      %c0_107 = arith.constant 0 : index
      %c0_108 = arith.constant 0 : index
      %129 = vector.load %arg4[%c0_107, %c0_108] : memref<16x4xbf16, #tpu.memory_space<vmem>>, vector<16x4xbf16>
      %cst_109 = arith.constant dense<0.000000e+00> : vector<2x16x4xf32>
      %130 = tpu.matmul %128, %129, %cst_109 {dimension_numbers = #tpu.dot_dimension_numbers<[2], [0], [0, 1], [1], [0, 0, 0, 1, 1, 1], [], []>} : vector<2x16x16xbf16>, vector<16x4xbf16>, vector<2x16x4xf32> -> vector<2x16x4xf32>
      %c0_110 = arith.constant 0 : index
      %c0_111 = arith.constant 0 : index
      %131 = vector.load %arg7[%c0_110, %c0_111] : memref<2x4xf32, #tpu.memory_space<vmem>>, vector<1x4xf32>
      %132 = vector.shape_cast %131 : vector<1x4xf32> to vector<4xf32>
      %133 = vector.shape_cast %132 : vector<4xf32> to vector<1x1x4xf32>
      %134 = vector.broadcast %133 : vector<1x1x4xf32> to vector<2x16x4xf32>
      %135 = arith.mulf %130, %134 : vector<2x16x4xf32>
      %c1_112 = arith.constant 1 : index
      %c0_113 = arith.constant 0 : index
      %136 = vector.load %arg7[%c1_112, %c0_113] : memref<2x4xf32, #tpu.memory_space<vmem>>, vector<1x4xf32>
      %137 = vector.shape_cast %136 : vector<1x4xf32> to vector<4xf32>
      %138 = vector.shape_cast %137 : vector<4xf32> to vector<1x1x4xf32>
      %139 = vector.broadcast %138 : vector<1x1x4xf32> to vector<2x16x4xf32>
      %140 = arith.addf %135, %139 : vector<2x16x4xf32>
      %cst_114 = arith.constant 0.000000e+00 : f32
      %141 = vector.broadcast %cst_114 : f32 to vector<2x16x4xf32>
      %142 = arith.maximumf %140, %141 : vector<2x16x4xf32>
      %143 = arith.truncf %142 : vector<2x16x4xf32> to vector<2x16x4xbf16>
      %c0_115 = arith.constant 0 : index
      %c16_116 = arith.constant 16 : index
      %c0_117 = arith.constant 0 : index
      %144 = vector.load %arg13[%c0_115, %c16_116, %c0_117] : memref<20x34x4xbf16, #tpu.memory_space<vmem>>, vector<2x16x4xbf16>
      tpu.vector_store %arg13[%c0_115, %c16_116, %c0_117], %143 {strides = array<i32>} : memref<20x34x4xbf16, #tpu.memory_space<vmem>>, vector<2x16x4xbf16>,
    } else {
    }
    %c0_i32_21 = arith.constant 0 : i32
    %32 = arith.cmpi eq, %arg1, %c0_i32_21 : i32
    %33 = arith.extui %32 : i1 to i32
    %c0_i32_22 = arith.constant 0 : i32
    %34 = arith.cmpi ne, %33, %c0_i32_22 : i32
    scf.if %34 {
      %cst_101 = arith.constant 0.000000e+00 : bf16
      %123 = vector.broadcast %cst_101 : bf16 to vector<2x34x4xbf16>
      %c0_102 = arith.constant 0 : index
      %c0_103 = arith.constant 0 : index
      %c0_104 = arith.constant 0 : index
      %124 = vector.load %arg13[%c0_102, %c0_103, %c0_104] : memref<20x34x4xbf16, #tpu.memory_space<vmem>>, vector<2x34x4xbf16>
      tpu.vector_store %arg13[%c0_102, %c0_103, %c0_104], %123 {strides = array<i32>} : memref<20x34x4xbf16, #tpu.memory_space<vmem>>, vector<2x34x4xbf16>,
    } else {
    }
    %c0_i32_23 = arith.constant 0 : i32
    %35 = arith.cmpi slt, %arg1, %c0_i32_23 : i32
    %36 = arith.extui %35 : i1 to i32
    %c0_i32_24 = arith.constant 0 : i32
    %37 = arith.cmpi ne, %36, %c0_i32_24 : i32
    scf.if %37 {
      %c16_i32_101 = arith.constant 16 : i32
      %123 = arith.addi %0, %c16_i32_101 : i32
      %c1_i32 = arith.constant 1 : i32
      %c0_i32_102 = arith.constant 0 : i32
      %c0_i32_103 = arith.constant 0 : i32
      %124 = tpu.memref_slice %arg3[%arg0, %123, %c0_i32_102, %c0_i32_103] : memref<2x16x16x16xbf16, #tpu.memory_space<any>> -> memref<1x2x16x16xbf16, #tpu.memory_space<any>>
      %125 = tpu.memref_squeeze %124 : memref<1x2x16x16xbf16, #tpu.memory_space<any>> -> memref<2x16x16xbf16, #tpu.memory_space<any>>
      %126 = tpu.memref_slice %arg14[%c1_i32] : memref<2x!tpu.dma_semaphore, #tpu.memory_space<semaphore_mem>> -> memref<1x!tpu.dma_semaphore, #tpu.memory_space<semaphore_mem>>
      %127 = tpu.memref_squeeze %126 : memref<1x!tpu.dma_semaphore, #tpu.memory_space<semaphore_mem>> -> memref<!tpu.dma_semaphore, #tpu.memory_space<semaphore_mem>>
      tpu.wait_dma2 semaphore(%127 : memref<!tpu.dma_semaphore, #tpu.memory_space<semaphore_mem>>) src(%125 : memref<2x16x16xbf16, #tpu.memory_space<any>>) dst(%arg12 : memref<2x16x16xbf16, #tpu.memory_space<vmem>>)
      %c0_104 = arith.constant 0 : index
      %c0_105 = arith.constant 0 : index
      %c0_106 = arith.constant 0 : index
      %128 = vector.load %arg12[%c0_104, %c0_105, %c0_106] : memref<2x16x16xbf16, #tpu.memory_space<vmem>>, vector<2x16x16xbf16>
      %c0_107 = arith.constant 0 : index
      %c0_108 = arith.constant 0 : index
      %129 = vector.load %arg4[%c0_107, %c0_108] : memref<16x4xbf16, #tpu.memory_space<vmem>>, vector<16x4xbf16>
      %cst_109 = arith.constant dense<0.000000e+00> : vector<2x16x4xf32>
      %130 = tpu.matmul %128, %129, %cst_109 {dimension_numbers = #tpu.dot_dimension_numbers<[2], [0], [0, 1], [1], [0, 0, 0, 1, 1, 1], [], []>} : vector<2x16x16xbf16>, vector<16x4xbf16>, vector<2x16x4xf32> -> vector<2x16x4xf32>
      %c0_110 = arith.constant 0 : index
      %c0_111 = arith.constant 0 : index
      %131 = vector.load %arg7[%c0_110, %c0_111] : memref<2x4xf32, #tpu.memory_space<vmem>>, vector<1x4xf32>
      %132 = vector.shape_cast %131 : vector<1x4xf32> to vector<4xf32>
      %133 = vector.shape_cast %132 : vector<4xf32> to vector<1x1x4xf32>
      %134 = vector.broadcast %133 : vector<1x1x4xf32> to vector<2x16x4xf32>
      %135 = arith.mulf %130, %134 : vector<2x16x4xf32>
      %c1_112 = arith.constant 1 : index
      %c0_113 = arith.constant 0 : index
      %136 = vector.load %arg7[%c1_112, %c0_113] : memref<2x4xf32, #tpu.memory_space<vmem>>, vector<1x4xf32>
      %137 = vector.shape_cast %136 : vector<1x4xf32> to vector<4xf32>
      %138 = vector.shape_cast %137 : vector<4xf32> to vector<1x1x4xf32>
      %139 = vector.broadcast %138 : vector<1x1x4xf32> to vector<2x16x4xf32>
      %140 = arith.addf %135, %139 : vector<2x16x4xf32>
      %cst_114 = arith.constant 0.000000e+00 : f32
      %141 = vector.broadcast %cst_114 : f32 to vector<2x16x4xf32>
      %142 = arith.maximumf %140, %141 : vector<2x16x4xf32>
      %143 = arith.truncf %142 : vector<2x16x4xf32> to vector<2x16x4xbf16>
      %c18_115 = arith.constant 18 : index
      %c16_116 = arith.constant 16 : index
      %c0_117 = arith.constant 0 : index
      %144 = vector.load %arg13[%c18_115, %c16_116, %c0_117] : memref<20x34x4xbf16, #tpu.memory_space<vmem>>, vector<2x16x4xbf16>
      tpu.vector_store %arg13[%c18_115, %c16_116, %c0_117], %143 {strides = array<i32>} : memref<20x34x4xbf16, #tpu.memory_space<vmem>>, vector<2x16x4xbf16>,
    } else {
    }
    %c0_i32_25 = arith.constant 0 : i32
    %38 = arith.cmpi eq, %arg1, %c0_i32_25 : i32
    %39 = arith.extui %38 : i1 to i32
    %c0_i32_26 = arith.constant 0 : i32
    %40 = arith.cmpi ne, %39, %c0_i32_26 : i32
    scf.if %40 {
      %cst_101 = arith.constant 0.000000e+00 : bf16
      %123 = vector.broadcast %cst_101 : bf16 to vector<2x34x4xbf16>
      %c18_102 = arith.constant 18 : index
      %c0_103 = arith.constant 0 : index
      %c0_104 = arith.constant 0 : index
      %124 = vector.load %arg13[%c18_102, %c0_103, %c0_104] : memref<20x34x4xbf16, #tpu.memory_space<vmem>>, vector<2x34x4xbf16>
      tpu.vector_store %arg13[%c18_102, %c0_103, %c0_104], %123 {strides = array<i32>} : memref<20x34x4xbf16, #tpu.memory_space<vmem>>, vector<2x34x4xbf16>,
    } else {
    }
    %c0_27 = arith.constant 0 : index
    %c14_28 = arith.constant 14 : index
    %c0_29 = arith.constant 0 : index
    %41 = vector.load %arg13[%c0_27, %c14_28, %c0_29] : memref<20x34x4xbf16, #tpu.memory_space<vmem>>, vector<20x16x4xbf16>
    %42 = vector.extract_strided_slice %41 {offsets = [0, 0, 0], sizes = [16, 16, 4], strides = [1, 1, 1]} : vector<20x16x4xbf16> to vector<16x16x4xbf16>
    %c0_30 = arith.constant 0 : index
    %c0_31 = arith.constant 0 : index
    %c0_32 = arith.constant 0 : index
    %c0_33 = arith.constant 0 : index
    %43 = vector.load %arg5[%c0_30, %c0_31, %c0_32, %c0_33] : memref<3x3x4x4xbf16, #tpu.memory_space<vmem>>, vector<1x1x4x4xbf16>
    %44 = vector.shape_cast %43 : vector<1x1x4x4xbf16> to vector<4x4xbf16>
    %cst_34 = arith.constant dense<0.000000e+00> : vector<16x16x4xf32>
    %45 = tpu.matmul %42, %44, %cst_34 {dimension_numbers = #tpu.dot_dimension_numbers<[2], [0], [0, 1], [1], [0, 0, 0, 1, 1, 1], [], []>} : vector<16x16x4xbf16>, vector<4x4xbf16>, vector<16x16x4xf32> -> vector<16x16x4xf32>
    %46 = vector.extract_strided_slice %41 {offsets = [2, 0, 0], sizes = [16, 16, 4], strides = [1, 1, 1]} : vector<20x16x4xbf16> to vector<16x16x4xbf16>
    %c1_35 = arith.constant 1 : index
    %c0_36 = arith.constant 0 : index
    %c0_37 = arith.constant 0 : index
    %c0_38 = arith.constant 0 : index
    %47 = vector.load %arg5[%c1_35, %c0_36, %c0_37, %c0_38] : memref<3x3x4x4xbf16, #tpu.memory_space<vmem>>, vector<1x1x4x4xbf16>
    %48 = vector.shape_cast %47 : vector<1x1x4x4xbf16> to vector<4x4xbf16>
    %cst_39 = arith.constant dense<0.000000e+00> : vector<16x16x4xf32>
    %49 = tpu.matmul %46, %48, %cst_39 {dimension_numbers = #tpu.dot_dimension_numbers<[2], [0], [0, 1], [1], [0, 0, 0, 1, 1, 1], [], []>} : vector<16x16x4xbf16>, vector<4x4xbf16>, vector<16x16x4xf32> -> vector<16x16x4xf32>
    %50 = arith.addf %45, %49 : vector<16x16x4xf32>
    %51 = vector.extract_strided_slice %41 {offsets = [4, 0, 0], sizes = [16, 16, 4], strides = [1, 1, 1]} : vector<20x16x4xbf16> to vector<16x16x4xbf16>
    %c2_40 = arith.constant 2 : index
    %c0_41 = arith.constant 0 : index
    %c0_42 = arith.constant 0 : index
    %c0_43 = arith.constant 0 : index
    %52 = vector.load %arg5[%c2_40, %c0_41, %c0_42, %c0_43] : memref<3x3x4x4xbf16, #tpu.memory_space<vmem>>, vector<1x1x4x4xbf16>
    %53 = vector.shape_cast %52 : vector<1x1x4x4xbf16> to vector<4x4xbf16>
    %cst_44 = arith.constant dense<0.000000e+00> : vector<16x16x4xf32>
    %54 = tpu.matmul %51, %53, %cst_44 {dimension_numbers = #tpu.dot_dimension_numbers<[2], [0], [0, 1], [1], [0, 0, 0, 1, 1, 1], [], []>} : vector<16x16x4xbf16>, vector<4x4xbf16>, vector<16x16x4xf32> -> vector<16x16x4xf32>
    %55 = arith.addf %50, %54 : vector<16x16x4xf32>
    %c0_45 = arith.constant 0 : index
    %c16_46 = arith.constant 16 : index
    %c0_47 = arith.constant 0 : index
    %56 = vector.load %arg13[%c0_45, %c16_46, %c0_47] : memref<20x34x4xbf16, #tpu.memory_space<vmem>>, vector<20x16x4xbf16>
    %57 = vector.extract_strided_slice %56 {offsets = [0, 0, 0], sizes = [16, 16, 4], strides = [1, 1, 1]} : vector<20x16x4xbf16> to vector<16x16x4xbf16>
    %c0_48 = arith.constant 0 : index
    %c1_49 = arith.constant 1 : index
    %c0_50 = arith.constant 0 : index
    %c0_51 = arith.constant 0 : index
    %58 = vector.load %arg5[%c0_48, %c1_49, %c0_50, %c0_51] : memref<3x3x4x4xbf16, #tpu.memory_space<vmem>>, vector<1x1x4x4xbf16>
    %59 = vector.shape_cast %58 : vector<1x1x4x4xbf16> to vector<4x4xbf16>
    %cst_52 = arith.constant dense<0.000000e+00> : vector<16x16x4xf32>
    %60 = tpu.matmul %57, %59, %cst_52 {dimension_numbers = #tpu.dot_dimension_numbers<[2], [0], [0, 1], [1], [0, 0, 0, 1, 1, 1], [], []>} : vector<16x16x4xbf16>, vector<4x4xbf16>, vector<16x16x4xf32> -> vector<16x16x4xf32>
    %61 = arith.addf %55, %60 : vector<16x16x4xf32>
    %62 = vector.extract_strided_slice %56 {offsets = [2, 0, 0], sizes = [16, 16, 4], strides = [1, 1, 1]} : vector<20x16x4xbf16> to vector<16x16x4xbf16>
    %c1_53 = arith.constant 1 : index
    %c1_54 = arith.constant 1 : index
    %c0_55 = arith.constant 0 : index
    %c0_56 = arith.constant 0 : index
    %63 = vector.load %arg5[%c1_53, %c1_54, %c0_55, %c0_56] : memref<3x3x4x4xbf16, #tpu.memory_space<vmem>>, vector<1x1x4x4xbf16>
    %64 = vector.shape_cast %63 : vector<1x1x4x4xbf16> to vector<4x4xbf16>
    %cst_57 = arith.constant dense<0.000000e+00> : vector<16x16x4xf32>
    %65 = tpu.matmul %62, %64, %cst_57 {dimension_numbers = #tpu.dot_dimension_numbers<[2], [0], [0, 1], [1], [0, 0, 0, 1, 1, 1], [], []>} : vector<16x16x4xbf16>, vector<4x4xbf16>, vector<16x16x4xf32> -> vector<16x16x4xf32>
    %66 = arith.addf %61, %65 : vector<16x16x4xf32>
    %67 = vector.extract_strided_slice %56 {offsets = [4, 0, 0], sizes = [16, 16, 4], strides = [1, 1, 1]} : vector<20x16x4xbf16> to vector<16x16x4xbf16>
    %c2_58 = arith.constant 2 : index
    %c1_59 = arith.constant 1 : index
    %c0_60 = arith.constant 0 : index
    %c0_61 = arith.constant 0 : index
    %68 = vector.load %arg5[%c2_58, %c1_59, %c0_60, %c0_61] : memref<3x3x4x4xbf16, #tpu.memory_space<vmem>>, vector<1x1x4x4xbf16>
    %69 = vector.shape_cast %68 : vector<1x1x4x4xbf16> to vector<4x4xbf16>
    %cst_62 = arith.constant dense<0.000000e+00> : vector<16x16x4xf32>
    %70 = tpu.matmul %67, %69, %cst_62 {dimension_numbers = #tpu.dot_dimension_numbers<[2], [0], [0, 1], [1], [0, 0, 0, 1, 1, 1], [], []>} : vector<16x16x4xbf16>, vector<4x4xbf16>, vector<16x16x4xf32> -> vector<16x16x4xf32>
    %71 = arith.addf %66, %70 : vector<16x16x4xf32>
    %c0_63 = arith.constant 0 : index
    %c18 = arith.constant 18 : index
    %c0_64 = arith.constant 0 : index
    %72 = vector.load %arg13[%c0_63, %c18, %c0_64] : memref<20x34x4xbf16, #tpu.memory_space<vmem>>, vector<20x16x4xbf16>
    %73 = vector.extract_strided_slice %72 {offsets = [0, 0, 0], sizes = [16, 16, 4], strides = [1, 1, 1]} : vector<20x16x4xbf16> to vector<16x16x4xbf16>
    %c0_65 = arith.constant 0 : index
    %c2_66 = arith.constant 2 : index
    %c0_67 = arith.constant 0 : index
    %c0_68 = arith.constant 0 : index
    %74 = vector.load %arg5[%c0_65, %c2_66, %c0_67, %c0_68] : memref<3x3x4x4xbf16, #tpu.memory_space<vmem>>, vector<1x1x4x4xbf16>
    %75 = vector.shape_cast %74 : vector<1x1x4x4xbf16> to vector<4x4xbf16>
    %cst_69 = arith.constant dense<0.000000e+00> : vector<16x16x4xf32>
    %76 = tpu.matmul %73, %75, %cst_69 {dimension_numbers = #tpu.dot_dimension_numbers<[2], [0], [0, 1], [1], [0, 0, 0, 1, 1, 1], [], []>} : vector<16x16x4xbf16>, vector<4x4xbf16>, vector<16x16x4xf32> -> vector<16x16x4xf32>
    %77 = arith.addf %71, %76 : vector<16x16x4xf32>
    %78 = vector.extract_strided_slice %72 {offsets = [2, 0, 0], sizes = [16, 16, 4], strides = [1, 1, 1]} : vector<20x16x4xbf16> to vector<16x16x4xbf16>
    %c1_70 = arith.constant 1 : index
    %c2_71 = arith.constant 2 : index
    %c0_72 = arith.constant 0 : index
    %c0_73 = arith.constant 0 : index
    %79 = vector.load %arg5[%c1_70, %c2_71, %c0_72, %c0_73] : memref<3x3x4x4xbf16, #tpu.memory_space<vmem>>, vector<1x1x4x4xbf16>
    %80 = vector.shape_cast %79 : vector<1x1x4x4xbf16> to vector<4x4xbf16>
    %cst_74 = arith.constant dense<0.000000e+00> : vector<16x16x4xf32>
    %81 = tpu.matmul %78, %80, %cst_74 {dimension_numbers = #tpu.dot_dimension_numbers<[2], [0], [0, 1], [1], [0, 0, 0, 1, 1, 1], [], []>} : vector<16x16x4xbf16>, vector<4x4xbf16>, vector<16x16x4xf32> -> vector<16x16x4xf32>
    %82 = arith.addf %77, %81 : vector<16x16x4xf32>
    %83 = vector.extract_strided_slice %72 {offsets = [4, 0, 0], sizes = [16, 16, 4], strides = [1, 1, 1]} : vector<20x16x4xbf16> to vector<16x16x4xbf16>
    %c2_75 = arith.constant 2 : index
    %c2_76 = arith.constant 2 : index
    %c0_77 = arith.constant 0 : index
    %c0_78 = arith.constant 0 : index
    %84 = vector.load %arg5[%c2_75, %c2_76, %c0_77, %c0_78] : memref<3x3x4x4xbf16, #tpu.memory_space<vmem>>, vector<1x1x4x4xbf16>
    %85 = vector.shape_cast %84 : vector<1x1x4x4xbf16> to vector<4x4xbf16>
    %cst_79 = arith.constant dense<0.000000e+00> : vector<16x16x4xf32>
    %86 = tpu.matmul %83, %85, %cst_79 {dimension_numbers = #tpu.dot_dimension_numbers<[2], [0], [0, 1], [1], [0, 0, 0, 1, 1, 1], [], []>} : vector<16x16x4xbf16>, vector<4x4xbf16>, vector<16x16x4xf32> -> vector<16x16x4xf32>
    %87 = arith.addf %82, %86 : vector<16x16x4xf32>
    %c0_80 = arith.constant 0 : index
    %c0_81 = arith.constant 0 : index
    %88 = vector.load %arg8[%c0_80, %c0_81] : memref<2x4xf32, #tpu.memory_space<vmem>>, vector<1x4xf32>
    %89 = vector.shape_cast %88 : vector<1x4xf32> to vector<4xf32>
    %90 = vector.shape_cast %89 : vector<4xf32> to vector<1x1x4xf32>
    %91 = vector.broadcast %90 : vector<1x1x4xf32> to vector<16x16x4xf32>
    %92 = arith.mulf %87, %91 : vector<16x16x4xf32>
    %c1_82 = arith.constant 1 : index
    %c0_83 = arith.constant 0 : index
    %93 = vector.load %arg8[%c1_82, %c0_83] : memref<2x4xf32, #tpu.memory_space<vmem>>, vector<1x4xf32>
    %94 = vector.shape_cast %93 : vector<1x4xf32> to vector<4xf32>
    %95 = vector.shape_cast %94 : vector<4xf32> to vector<1x1x4xf32>
    %96 = vector.broadcast %95 : vector<1x1x4xf32> to vector<16x16x4xf32>
    %97 = arith.addf %92, %96 : vector<16x16x4xf32>
    %cst_84 = arith.constant 0.000000e+00 : f32
    %98 = vector.broadcast %cst_84 : f32 to vector<16x16x4xf32>
    %99 = arith.maximumf %97, %98 : vector<16x16x4xf32>
    %100 = arith.truncf %99 : vector<16x16x4xf32> to vector<16x16x4xbf16>
    %c0_85 = arith.constant 0 : index
    %c0_86 = arith.constant 0 : index
    %101 = vector.load %arg6[%c0_85, %c0_86] : memref<4x16xbf16, #tpu.memory_space<vmem>>, vector<4x16xbf16>
    %cst_87 = arith.constant dense<0.000000e+00> : vector<16x16x16xf32>
    %102 = tpu.matmul %100, %101, %cst_87 {dimension_numbers = #tpu.dot_dimension_numbers<[2], [0], [0, 1], [1], [0, 0, 0, 1, 1, 1], [], []>} : vector<16x16x4xbf16>, vector<4x16xbf16>, vector<16x16x16xf32> -> vector<16x16x16xf32>
    %c0_88 = arith.constant 0 : index
    %c0_89 = arith.constant 0 : index
    %103 = vector.load %arg9[%c0_88, %c0_89] : memref<2x16xf32, #tpu.memory_space<vmem>>, vector<1x16xf32>
    %104 = vector.shape_cast %103 : vector<1x16xf32> to vector<16xf32>
    %105 = vector.shape_cast %104 : vector<16xf32> to vector<1x1x16xf32>
    %106 = vector.broadcast %105 : vector<1x1x16xf32> to vector<16x16x16xf32>
    %107 = arith.mulf %102, %106 : vector<16x16x16xf32>
    %c1_90 = arith.constant 1 : index
    %c0_91 = arith.constant 0 : index
    %108 = vector.load %arg9[%c1_90, %c0_91] : memref<2x16xf32, #tpu.memory_space<vmem>>, vector<1x16xf32>
    %109 = vector.shape_cast %108 : vector<1x16xf32> to vector<16xf32>
    %110 = vector.shape_cast %109 : vector<16xf32> to vector<1x1x16xf32>
    %111 = vector.broadcast %110 : vector<1x1x16xf32> to vector<16x16x16xf32>
    %112 = arith.addf %107, %111 : vector<16x16x16xf32>
    %c0_92 = arith.constant 0 : index
    %c0_93 = arith.constant 0 : index
    %c0_94 = arith.constant 0 : index
    %c0_95 = arith.constant 0 : index
    %113 = vector.load %arg2[%c0_92, %c0_93, %c0_94, %c0_95] : memref<1x16x16x16xbf16, #tpu.memory_space<vmem>>, vector<1x16x16x16xbf16>
    %114 = vector.shape_cast %113 : vector<1x16x16x16xbf16> to vector<16x16x16xbf16>
    %115 = arith.extf %114 : vector<16x16x16xbf16> to vector<16x16x16xf32>
    %116 = arith.addf %112, %115 : vector<16x16x16xf32>
    %cst_96 = arith.constant 0.000000e+00 : f32
    %117 = vector.broadcast %cst_96 : f32 to vector<16x16x16xf32>
    %118 = arith.maximumf %116, %117 : vector<16x16x16xf32>
    %119 = arith.truncf %118 : vector<16x16x16xf32> to vector<16x16x16xbf16>
    %c0_97 = arith.constant 0 : index
    %c0_98 = arith.constant 0 : index
    %c0_99 = arith.constant 0 : index
    %c0_100 = arith.constant 0 : index
    %120 = vector.load %arg10[%c0_97, %c0_98, %c0_99, %c0_100] : memref<1x16x16x16xbf16, #tpu.memory_space<vmem>>, vector<1x16x16x16xbf16>
    %121 = vector.shape_cast %120 : vector<1x16x16x16xbf16> to vector<16x16x16xbf16>
    %122 = vector.shape_cast %119 : vector<16x16x16xbf16> to vector<1x16x16x16xbf16>
    tpu.vector_store %arg10[%c0_97, %c0_98, %c0_99, %c0_100], %122 {strides = array<i32>} : memref<1x16x16x16xbf16, #tpu.memory_space<vmem>>, vector<1x16x16x16xbf16>,
    return
  }
  func.func @transform_0(%arg0: i32, %arg1: i32) -> (i32, i32, i32, i32) {
    %c0_i32 = arith.constant 0 : i32
    %c0_i32_0 = arith.constant 0 : i32
    %c0_i32_1 = arith.constant 0 : i32
    return %arg0, %arg1, %c0_i32, %c0_i32_0 : i32, i32, i32, i32
  }
  func.func @transform_2(%arg0: i32, %arg1: i32) -> (i32, i32) {
    %c0_i32 = arith.constant 0 : i32
    %c0_i32_0 = arith.constant 0 : i32
    %c0_i32_1 = arith.constant 0 : i32
    return %c0_i32, %c0_i32_0 : i32, i32
  }
  func.func @transform_3(%arg0: i32, %arg1: i32) -> (i32, i32, i32, i32) {
    %c0_i32 = arith.constant 0 : i32
    %c0_i32_0 = arith.constant 0 : i32
    %c0_i32_1 = arith.constant 0 : i32
    %c0_i32_2 = arith.constant 0 : i32
    %c0_i32_3 = arith.constant 0 : i32
    return %c0_i32, %c0_i32_0, %c0_i32_1, %c0_i32_2 : i32, i32, i32, i32
  }
  func.func @transform_4(%arg0: i32, %arg1: i32) -> (i32, i32) {
    %c0_i32 = arith.constant 0 : i32
    %c0_i32_0 = arith.constant 0 : i32
    %c0_i32_1 = arith.constant 0 : i32
    return %c0_i32, %c0_i32_0 : i32, i32
  }
  func.func @transform_5(%arg0: i32, %arg1: i32) -> (i32, i32) {
    %c0_i32 = arith.constant 0 : i32
    %c0_i32_0 = arith.constant 0 : i32
    %c0_i32_1 = arith.constant 0 : i32
    return %c0_i32, %c0_i32_0 : i32, i32
  }
  func.func @transform_6(%arg0: i32, %arg1: i32) -> (i32, i32) {
    %c0_i32 = arith.constant 0 : i32
    %c0_i32_0 = arith.constant 0 : i32
    %c0_i32_1 = arith.constant 0 : i32
    return %c0_i32, %c0_i32_0 : i32, i32
  }
  func.func @transform_7(%arg0: i32, %arg1: i32) -> (i32, i32) {
    %c0_i32 = arith.constant 0 : i32
    %c0_i32_0 = arith.constant 0 : i32
    %c0_i32_1 = arith.constant 0 : i32
    return %c0_i32, %c0_i32_0 : i32, i32
  }
  func.func @transform_8(%arg0: i32, %arg1: i32) -> (i32, i32, i32, i32) {
    %c0_i32 = arith.constant 0 : i32
    %c0_i32_0 = arith.constant 0 : i32
    %c0_i32_1 = arith.constant 0 : i32
    return %arg0, %arg1, %c0_i32, %c0_i32_0 : i32, i32, i32, i32
  }
}

</mosaic_0001>

<llo_original>
// kernel: tpu_custom_call.1
$region0: #{tpu_custom_call.1}
  #allocation0 [shape = 'u32[]', space=smem, size = 0x4, offset = 0x4, fixed_abs, tag = 'smem constant byte address 0x4 - core index']
  #allocation1 [shape = 'u32[144,128]{1,0:T(1,128)}', space=vmem, size = 0x12000, scoped, tag = 'internal scratch']
  #allocation2 [shape = 'bf16[2,16,16]{2,1,0:T(16,128)(2,1)}', space=vmem, size = 0x2000, scoped, tag = 'scratch operand']
  #allocation3 [shape = 'bf16[2,16,16]{2,1,0:T(16,128)(2,1)}', space=vmem, size = 0x2000, scoped, tag = 'scratch operand']
  #allocation4 [shape = 'bf16[20,34,4]{2,1,0:T(8,128)(2,1)}', space=vmem, size = 0x32000, scoped, tag = 'scratch operand']
  #allocation5 [shape = 's32[2]{0}', space=sflag, size = 0x8, scoped, tag = 'scratch operand']
  #allocation10 [shape = 's32[]', space=sflag, size = 0x4, offset = 0, fixed_abs, tag = 'sflag constant byte address 0x0 - dummy sync flag']
  #allocation11 [shape = 's32[]', space=sflag, size = 0x4, offset = 0, fixed_abs, tag = 'sflag constant byte address 0x0 - dummy sync flag']
  #allocation12 [shape = 'u32[]', space=smem, size = 0x4, offset = 0x44, fixed_abs, tag = 'smem constant byte address 0x44 - assertion arg 0']
  #allocation13 [shape = 'u32[]', space=smem, size = 0x4, offset = 0x48, fixed_abs, tag = 'smem constant byte address 0x48 - assertion arg 1']
  #allocation14 [shape = 's32[]', space=sflag, size = 0x4, offset = 0, fixed_abs, tag = 'sflag constant byte address 0x0 - dummy sync flag']
  #allocation15 [shape = 's32[]', space=sflag, size = 0x4, offset = 0, fixed_abs, tag = 'sflag constant byte address 0x0 - dummy sync flag']
  %s0 = inlined_call_operand.hbm [shape: bf16[2,16,16,16], index: 0, kind: input, shape index: {}]
  %s1 = inlined_call_operand.hbm [shape: bf16[2,16,16,16], index: 1, kind: input, shape index: {}]
  %s2 = inlined_call_operand.vmem [shape: bf16[16,4], index: 2, kind: input, shape index: {}]
  %s3 = inlined_call_operand.vmem [shape: bf16[3,3,4,4], index: 3, kind: input, shape index: {}]
  %s4 = inlined_call_operand.vmem [shape: bf16[4,16], index: 4, kind: input, shape index: {}]
  %s5 = inlined_call_operand.vmem [shape: f32[2,4], index: 5, kind: input, shape index: {}]
  %s6 = inlined_call_operand.vmem [shape: f32[2,4], index: 6, kind: input, shape index: {}]
  %s7 = inlined_call_operand.vmem [shape: f32[2,16], index: 7, kind: input, shape index: {}]
  %s8 = inlined_call_operand.hbm [shape: bf16[2,16,16,16], index: 8, kind: output, shape index: {}]
  %s9 = sld [smem:[#allocation0]]
  $region97: #{tpu_custom_call.1} parent=0
    _
  %s11 = ssub.s32 1, %s9
  %s12 = scalar_select 0, %s11, %s9
  $region1: #{tpu_custom_call.1} parent=0
    #allocation6 [shape = 'u8[131072]{0}', space=vmem, size = 0x20000, scoped, tag = 'input window, operand 0']
    #allocation7 [shape = 's32[2]{0}', space=sflag, size = 0x8, scoped, tag = 'scoped memory for tpu_custom_call.1']
    #allocation8 [shape = 's32[2]{0}', space=sflag, size = 0x8, scoped, tag = 'scoped memory for tpu_custom_call.1']
    #allocation9 [shape = 'u8[131072]{0}', space=vmem, size = 0x20000, scoped, tag = 'output window, operand 0']
    %13 = vsyncpa [#allocation7], 0
    %s14 = scalar_lea.sflag [#allocation7], 1
    %15 = vsyncpa %s14, 0
    %16 = vsyncpa [#allocation8], 0
    %s17 = scalar_lea.sflag [#allocation8], 1
    %18 = vsyncpa %s17, 0
    loop: start=0, step=1, limit=4
    $region2: #{tpu_custom_call.1} parent=1 // loop_pre_header
      _
    $region3: #{tpu_custom_call.1} parent=1 // loop_header
      %s20 = sphi 0, %s24
      %p21 = scmp.ge.s32.totalorder %s20, 4
      %s27 = sphi 0, %s39
      %s28 = sphi 0, %s35
      %s29 = sphi 0, %s27
      %s30 = sphi 0, %s28
      %s31 = sphi 0, %s29
      %s32 = sphi 0, %s30
      %s44 = sphi 0, %s46
      %s47 = sphi 0, %s44
      %s48 = sphi 0, %s47
      %s64 = sphi 0, %s48
      %s68 = sphi 0, %s68
      %s70 = sphi 0, %s68
      %s71 = sphi 0, %s70
      %s85 = sphi 0, %s71
      %s89 = sphi 0, %s89
      %s91 = sphi 0, %s89
      %s92 = sphi 0, %s91
      %s106 = sphi 0, %s92
      %s110 = sphi 0, %s110
      %s112 = sphi 0, %s110
      %s113 = sphi 0, %s112
      %s127 = sphi 0, %s113
      %s131 = sphi 0, %s131
      %s133 = sphi 0, %s131
      %s134 = sphi 0, %s133
      %s148 = sphi 0, %s134
      %s152 = sphi 0, %s152
      %s154 = sphi 0, %s152
      %s155 = sphi 0, %s154
      %s169 = sphi 0, %s155
      %s173 = sphi 0, %s173
      %s175 = sphi 0, %s173
      %s176 = sphi 0, %s175
      %s190 = sphi 0, %s176
      %s198 = sphi 0, %s200
      %s201 = sphi 0, %s198
      %s202 = sphi 0, %s201
      %s218 = sphi 0, %s202
    $region4: #{tpu_custom_call.1} parent=1 // loop_header_branch
      %23 = sbr.rel (%p21) target = $region8
    $region5: #{tpu_custom_call.1} parent=1 // loop_body
      %s25 = ssub.s32 %s20, 1
      %s26 = ssub.s32 %s20, 2
      %s33 = sadd.s32 1, %s28
      %p34 = scmp.ge.s32.totalorder %s33, 1
      %s35 = scalar_select %p34, 0, %s33
      %s36 = sadd.s32 1, %s27
      %s37 = scalar_select %p34, %s36, %s27
      %p38 = scmp.ge.s32.totalorder %s37, 2
      %s39 = scalar_select %p38, 0, %s37
      %s40 = ssub.s32 %s27, %s39
      %s41 = ssub.s32 %s28, %s35
      %s42 = sor.u32 %s40, %s41
      %p43 = scmp.eq.s32.totalorder %s42, 0
      %s45 = sadd.s32 %s44, 1
      %s46 = scalar_select %p43, %s44, %s45
      %p49 = pneg %p43
      %p50 = scmp.eq.s32.totalorder %s20, 1
      %p51 = por %p49, %p50
      %p52 = scmp.ne.s32.totalorder %s44, %s47
      %p53 = scmp.eq.s32.totalorder %s20, 0
      %p54 = por %p52, %p53
      %p55 = scmp.ne.s32.totalorder %s44, %s47
      %p56 = scmp.eq.s32.totalorder %s25, 1
      %p57 = por %p55, %p56
      %p58 = scmp.ne.s32.totalorder %s47, %s48
      %p59 = scmp.eq.s32.totalorder %s25, 0
      %p60 = por %p58, %p59
      %p61 = scmp.ne.s32.totalorder %s47, %s48
      %p62 = scmp.eq.s32.totalorder %s26, 1
      %p63 = por %p61, %p62
      %p65 = scmp.ne.s32.totalorder %s48, %s64
      %p66 = scmp.eq.s32.totalorder %s26, 0
      %p67 = por %p65, %p66
      %s69 = sadd.s32 %s68, 1
      %p72 = scmp.eq.s32.totalorder %s20, 1
      %p73 = scmp.ne.s32.totalorder %s68, %s70
      %p74 = scmp.eq.s32.totalorder %s20, 0
      %p75 = por %p73, %p74
      %p76 = scmp.ne.s32.totalorder %s68, %s70
      %p77 = scmp.eq.s32.totalorder %s25, 1
      %p78 = por %p76, %p77
      %p79 = scmp.ne.s32.totalorder %s70, %s71
      %p80 = scmp.eq.s32.totalorder %s25, 0
      %p81 = por %p79, %p80
      %p82 = scmp.ne.s32.totalorder %s70, %s71
      %p83 = scmp.eq.s32.totalorder %s26, 1
      %p84 = por %p82, %p83
      %p86 = scmp.ne.s32.totalorder %s71, %s85
      %p87 = scmp.eq.s32.totalorder %s26, 0
      %p88 = por %p86, %p87
      %s90 = sadd.s32 %s89, 1
      %p93 = scmp.eq.s32.totalorder %s20, 1
      %p94 = scmp.ne.s32.totalorder %s89, %s91
      %p95 = scmp.eq.s32.totalorder %s20, 0
      %p96 = por %p94, %p95
      %p97 = scmp.ne.s32.totalorder %s89, %s91
      %p98 = scmp.eq.s32.totalorder %s25, 1
      %p99 = por %p97, %p98
      %p100 = scmp.ne.s32.totalorder %s91, %s92
      %p101 = scmp.eq.s32.totalorder %s25, 0
      %p102 = por %p100, %p101
      %p103 = scmp.ne.s32.totalorder %s91, %s92
      %p104 = scmp.eq.s32.totalorder %s26, 1
      %p105 = por %p103, %p104
      %p107 = scmp.ne.s32.totalorder %s92, %s106
      %p108 = scmp.eq.s32.totalorder %s26, 0
      %p109 = por %p107, %p108
      %s111 = sadd.s32 %s110, 1
      %p114 = scmp.eq.s32.totalorder %s20, 1
      %p115 = scmp.ne.s32.totalorder %s110, %s112
      %p116 = scmp.eq.s32.totalorder %s20, 0
      %p117 = por %p115, %p116
      %p118 = scmp.ne.s32.totalorder %s110, %s112
      %p119 = scmp.eq.s32.totalorder %s25, 1
      %p120 = por %p118, %p119
      %p121 = scmp.ne.s32.totalorder %s112, %s113
      %p122 = scmp.eq.s32.totalorder %s25, 0
      %p123 = por %p121, %p122
      %p124 = scmp.ne.s32.totalorder %s112, %s113
      %p125 = scmp.eq.s32.totalorder %s26, 1
      %p126 = por %p124, %p125
      %p128 = scmp.ne.s32.totalorder %s113, %s127
      %p129 = scmp.eq.s32.totalorder %s26, 0
      %p130 = por %p128, %p129
      %s132 = sadd.s32 %s131, 1
      %p135 = scmp.eq.s32.totalorder %s20, 1
      %p136 = scmp.ne.s32.totalorder %s131, %s133
      %p137 = scmp.eq.s32.totalorder %s20, 0
      %p138 = por %p136, %p137
      %p139 = scmp.ne.s32.totalorder %s131, %s133
      %p140 = scmp.eq.s32.totalorder %s25, 1
      %p141 = por %p139, %p140
      %p142 = scmp.ne.s32.totalorder %s133, %s134
      %p143 = scmp.eq.s32.totalorder %s25, 0
      %p144 = por %p142, %p143
      %p145 = scmp.ne.s32.totalorder %s133, %s134
      %p146 = scmp.eq.s32.totalorder %s26, 1
      %p147 = por %p145, %p146
      %p149 = scmp.ne.s32.totalorder %s134, %s148
      %p150 = scmp.eq.s32.totalorder %s26, 0
      %p151 = por %p149, %p150
      %s153 = sadd.s32 %s152, 1
      %p156 = scmp.eq.s32.totalorder %s20, 1
      %p157 = scmp.ne.s32.totalorder %s152, %s154
      %p158 = scmp.eq.s32.totalorder %s20, 0
      %p159 = por %p157, %p158
      %p160 = scmp.ne.s32.totalorder %s152, %s154
      %p161 = scmp.eq.s32.totalorder %s25, 1
      %p162 = por %p160, %p161
      %p163 = scmp.ne.s32.totalorder %s154, %s155
      %p164 = scmp.eq.s32.totalorder %s25, 0
      %p165 = por %p163, %p164
      %p166 = scmp.ne.s32.totalorder %s154, %s155
      %p167 = scmp.eq.s32.totalorder %s26, 1
      %p168 = por %p166, %p167
      %p170 = scmp.ne.s32.totalorder %s155, %s169
      %p171 = scmp.eq.s32.totalorder %s26, 0
      %p172 = por %p170, %p171
      %s174 = sadd.s32 %s173, 1
      %p177 = scmp.eq.s32.totalorder %s20, 1
      %p178 = scmp.ne.s32.totalorder %s173, %s175
      %p179 = scmp.eq.s32.totalorder %s20, 0
      %p180 = por %p178, %p179
      %p181 = scmp.ne.s32.totalorder %s173, %s175
      %p182 = scmp.eq.s32.totalorder %s25, 1
      %p183 = por %p181, %p182
      %p184 = scmp.ne.s32.totalorder %s175, %s176
      %p185 = scmp.eq.s32.totalorder %s25, 0
      %p186 = por %p184, %p185
      %p187 = scmp.ne.s32.totalorder %s175, %s176
      %p188 = scmp.eq.s32.totalorder %s26, 1
      %p189 = por %p187, %p188
      %p191 = scmp.ne.s32.totalorder %s176, %s190
      %p192 = scmp.eq.s32.totalorder %s26, 0
      %p193 = por %p191, %p192
      %s194 = ssub.s32 %s27, %s39
      %s195 = ssub.s32 %s28, %s35
      %s196 = sor.u32 %s194, %s195
      %p197 = scmp.eq.s32.totalorder %s196, 0
      %s199 = sadd.s32 %s198, 1
      %s200 = scalar_select %p197, %s198, %s199
      %p203 = pneg %p197
      %p204 = scmp.eq.s32.totalorder %s20, 1
      %p205 = por %p203, %p204
      %p206 = scmp.ne.s32.totalorder %s198, %s201
      %p207 = scmp.eq.s32.totalorder %s20, 0
      %p208 = por %p206, %p207
      %p209 = scmp.ne.s32.totalorder %s198, %s201
      %p210 = scmp.eq.s32.totalorder %s25, 1
      %p211 = por %p209, %p210
      %p212 = scmp.ne.s32.totalorder %s201, %s202
      %p213 = scmp.eq.s32.totalorder %s25, 0
      %p214 = por %p212, %p213
      %p215 = scmp.ne.s32.totalorder %s201, %s202
      %p216 = scmp.eq.s32.totalorder %s26, 1
      %p217 = por %p215, %p216
      %p219 = scmp.ne.s32.totalorder %s202, %s218
      %p220 = scmp.eq.s32.totalorder %s26, 0
      %p221 = por %p219, %p220
      %p222 = scmp.le.s32.totalorder 1, %s20
      %p223 = scmp.lt.s32.totalorder %s20, 3
      %p224 = pnand %p222, %p223
      %p225 = pneg %p224
      // Predicated region
      $region9: #{tpu_custom_call.1} parent=5 // pred_check
        _
      $region10: #{tpu_custom_call.1} parent=5 // pred_check_branch
        %227 = sbr.rel (%p224) target = $region12
      $region11: #{tpu_custom_call.1} parent=5 // pred_region
        %s228 = ssub.s32 %s20, 1
        // Predicated region
        $region13: #{tpu_custom_call.1} parent=11 // pred_check
          %p229 = pneg %p81
        $region14: #{tpu_custom_call.1} parent=11 // pred_check_branch
          %231 = sbr.rel (%p229) target = $region16
        $region15: #{tpu_custom_call.1} parent=11 // pred_region
          _
        $region16: #{tpu_custom_call.1} parent=11 // pred_fallthru
          _
        // Predicated region
        $region17: #{tpu_custom_call.1} parent=11 // pred_check
          %p232 = pneg %p102
        $region18: #{tpu_custom_call.1} parent=11 // pred_check_branch
          %234 = sbr.rel (%p232) target = $region20
        $region19: #{tpu_custom_call.1} parent=11 // pred_region
          _
        $region20: #{tpu_custom_call.1} parent=11 // pred_fallthru
          _
        // Predicated region
        $region21: #{tpu_custom_call.1} parent=11 // pred_check
          %p235 = pneg %p123
        $region22: #{tpu_custom_call.1} parent=11 // pred_check_branch
          %237 = sbr.rel (%p235) target = $region24
        $region23: #{tpu_custom_call.1} parent=11 // pred_region
          _
        $region24: #{tpu_custom_call.1} parent=11 // pred_fallthru
          _
        // Predicated region
        $region25: #{tpu_custom_call.1} parent=11 // pred_check
          %p238 = pneg %p144
        $region26: #{tpu_custom_call.1} parent=11 // pred_check_branch
          %240 = sbr.rel (%p238) target = $region28
        $region27: #{tpu_custom_call.1} parent=11 // pred_region
          _
        $region28: #{tpu_custom_call.1} parent=11 // pred_fallthru
          _
        // Predicated region
        $region29: #{tpu_custom_call.1} parent=11 // pred_check
          %p241 = pneg %p165
        $region30: #{tpu_custom_call.1} parent=11 // pred_check_branch
          %243 = sbr.rel (%p241) target = $region32
        $region31: #{tpu_custom_call.1} parent=11 // pred_region
          _
        $region32: #{tpu_custom_call.1} parent=11 // pred_fallthru
          _
        // Predicated region
        $region33: #{tpu_custom_call.1} parent=11 // pred_check
          %p244 = pneg %p186
        $region34: #{tpu_custom_call.1} parent=11 // pred_check_branch
          %246 = sbr.rel (%p244) target = $region36
        $region35: #{tpu_custom_call.1} parent=11 // pred_region
          _
        $region36: #{tpu_custom_call.1} parent=11 // pred_fallthru
          _
      $region12: #{tpu_custom_call.1} parent=5 // pred_fallthru
        _
      %p247 = scmp.lt.s32.totalorder %s20, 2
      // Predicated region
      $region37: #{tpu_custom_call.1} parent=5 // pred_check
        %p248 = pneg %p247
      $region38: #{tpu_custom_call.1} parent=5 // pred_check_branch
        %250 = sbr.rel (%p248) target = $region40
      $region39: #{tpu_custom_call.1} parent=5 // pred_region
        // Predicated region
        $region41: #{tpu_custom_call.1} parent=39 // pred_check
          %p251 = pneg %p54
        $region42: #{tpu_custom_call.1} parent=39 // pred_check_branch
          %253 = sbr.rel (%p251) target = $region44
        $region43: #{tpu_custom_call.1} parent=39 // pred_region
          %s254 = sand.u32 %s44, 1
          %s255 = scalar_lea.sflag [#allocation7], %s254
          %s256 = sand.u32 %s44, 1
          %s257 = smul.addr %s256, 128
          %s258 = scalar_lea.vmem [#allocation6], %s257
          %s259 = smul.u32 16, %s28
          %s261 = ssub.s32 2048, 2048
          %262 = vsyncadd %s255, %s261
          %s263 = smul.addr %s259, 2
          %s264 = smul.addr %s27, 32
          %s265 = sadd.s32 %s263, %s264
          %s266 = smul.addr %s265, 64
          %s267 = scalar_lea.hbm %s0, %s266
          %s268 = sshll.u32 %s258, 4
          %s269 = int_to_ptr.vmem [resolvable:$true] %s268
          %274 = dma.hbm_to_vmem [thread:$0]  %s267, 2048, %s269, %s255, 64, 64, 4
        $region44: #{tpu_custom_call.1} parent=39 // pred_fallthru
          _
      $region40: #{tpu_custom_call.1} parent=5 // pred_fallthru
        _
      %p275 = scmp.le.s32.totalorder 1, %s20
      %p276 = scmp.lt.s32.totalorder %s20, 3
      %p277 = pnand %p275, %p276
      %p278 = pneg %p277
      // Predicated region
      $region45: #{tpu_custom_call.1} parent=5 // pred_check
        _
      $region46: #{tpu_custom_call.1} parent=5 // pred_check_branch
        %280 = sbr.rel (%p277) target = $region48
      $region47: #{tpu_custom_call.1} parent=5 // pred_region
        %s281 = ssub.s32 %s20, 1
        %s282 = sand.u32 %s47, 1
        %s283 = scalar_lea.sflag [#allocation7], %s282
        %s284 = sand.u32 %s47, 1
        %s285 = smul.addr %s284, 128
        %s286 = scalar_lea.vmem [#allocation6], %s285
        // Predicated region
        $region49: #{tpu_custom_call.1} parent=47 // pred_check
          %p287 = pneg %p60
        $region50: #{tpu_custom_call.1} parent=47 // pred_check_branch
          %289 = sbr.rel (%p287) target = $region52
        $region51: #{tpu_custom_call.1} parent=47 // pred_region
          %290 = dma.done %s283, 2048
        $region52: #{tpu_custom_call.1} parent=47 // pred_fallthru
          _
        %s291 = sand.u32 %s47, 1
        %s292 = scalar_lea.sflag [#allocation7], %s291
        %s293 = sand.u32 %s47, 1
        %s294 = smul.addr %s293, 128
        %s295 = scalar_lea.vmem [#allocation6], %s294
        %p296 = pneg %p60
        %p297 = pneg %p57
        %p298 = pneg %p81
        %p299 = pneg %p78
        %p300 = pneg %p102
        %p301 = pneg %p99
        %p302 = pneg %p123
        %p303 = pneg %p120
        %p304 = pneg %p144
        %p305 = pneg %p141
        %p306 = pneg %p165
        %p307 = pneg %p162
        %p308 = pneg %p186
        %p309 = pneg %p183
        %p310 = pneg %p214
        %p311 = pneg %p211
        %s312 = sand.u32 %s201, 1
        %s313 = scalar_lea.sflag [#allocation8], %s312
        %s314 = sand.u32 %s201, 1
        %s315 = smul.addr %s314, 128
        %s316 = scalar_lea.vmem [#allocation9], %s315
        %s317 = smul.u32 16, %s30
        %s318 = smul.u32 16, %s30
        %s320 = smul.u32 %s30, 16
        %p321 = scmp.gt.s32.totalorder %s30, 0
        // Predicated region
        $region53: #{tpu_custom_call.1} parent=47 // pred_check
          %p322 = pneg %p321
        $region54: #{tpu_custom_call.1} parent=47 // pred_check_branch
          %324 = sbr.rel (%p322) target = $region56
        $region55: #{tpu_custom_call.1} parent=47 // pred_region
          %s325 = ssub.s32 %s320, 2
          %s326 = smul.u32 %s325, 2
          %s327 = smul.u32 %s29, 32
          %s328 = sadd.s32 %s326, %s327
          %s329 = smul.addr %s328, 64
          %s330 = scalar_lea.hbm %s1, %s329
          // Predicated region
          $region57: #{tpu_custom_call.1} parent=55 // pred_check
            _
          $region58: #{tpu_custom_call.1} parent=55 // pred_check_branch
            %332 = sbr.rel target = $region60
          $region59: #{tpu_custom_call.1} parent=55 // pred_region
            %333 = sst [smem:[#allocation12]] [#allocation11]
            %334 = sst [smem:[#allocation13]] [#allocation10]
          $region60: #{tpu_custom_call.1} parent=55 // pred_fallthru
            _
          %336 = shalt.err (0)
          %s338 = sshll.u32 [#allocation2], 4
          %s339 = int_to_ptr.vmem [resolvable:$true] %s338
          %341 = dma.hbm_to_vmem [thread:$0]  %s330, 256, %s339, [#allocation5]
        $region56: #{tpu_custom_call.1} parent=47 // pred_fallthru
          _
        %p342 = scmp.lt.s32.totalorder %s30, 0
        // Predicated region
        $region61: #{tpu_custom_call.1} parent=47 // pred_check
          %p343 = pneg %p342
        $region62: #{tpu_custom_call.1} parent=47 // pred_check_branch
          %345 = sbr.rel (%p343) target = $region64
        $region63: #{tpu_custom_call.1} parent=47 // pred_region
          %s346 = sadd.s32 %s320, 16
          %s347 = smul.u32 %s346, 2
          %s348 = smul.u32 %s29, 32
          %s349 = sadd.s32 %s347, %s348
          %s350 = smul.addr %s349, 64
          %s351 = scalar_lea.hbm %s1, %s350
          %s352 = scalar_lea.sflag [#allocation5], 1
          // Predicated region
          $region65: #{tpu_custom_call.1} parent=63 // pred_check
            _
          $region66: #{tpu_custom_call.1} parent=63 // pred_check_branch
            %354 = sbr.rel target = $region68
          $region67: #{tpu_custom_call.1} parent=63 // pred_region
            %355 = sst [smem:[#allocation12]] [#allocation15]
            %356 = sst [smem:[#allocation13]] [#allocation14]
          $region68: #{tpu_custom_call.1} parent=63 // pred_fallthru
            _
          %358 = shalt.err (0)
          %s360 = sshll.u32 [#allocation3], 4
          %s361 = int_to_ptr.vmem [resolvable:$true] %s360
          %363 = dma.hbm_to_vmem [thread:$0]  %s351, 256, %s361, %s352
        $region64: #{tpu_custom_call.1} parent=47 // pred_fallthru
          _
        %v364 = vld [vmem:[%s286] sm:$0xf]
        %v365 = vld [vmem:[%s286 + $0x4] sm:$0xf]
        %v366 = vld [vmem:[%s286 + $0x8] sm:$0xf]
        %v367 = vld [vmem:[%s286 + $0xc] sm:$0xf]
        %v368 = vld [vmem:[%s286 + $0x10] sm:$0xf]
        %v369 = vld [vmem:[%s286 + $0x14] sm:$0xf]
        %v370 = vld [vmem:[%s286 + $0x18] sm:$0xf]
        %v371 = vld [vmem:[%s286 + $0x1c] sm:$0xf]
        %v372 = vld [vmem:[%s286 + $0x20] sm:$0xf]
        %v373 = vld [vmem:[%s286 + $0x24] sm:$0xf]
        %v374 = vld [vmem:[%s286 + $0x28] sm:$0xf]
        %v375 = vld [vmem:[%s286 + $0x2c] sm:$0xf]
        %v376 = vld [vmem:[%s286 + $0x30] sm:$0xf]
        %v377 = vld [vmem:[%s286 + $0x34] sm:$0xf]
        %v378 = vld [vmem:[%s286 + $0x38] sm:$0xf]
        %v379 = vld [vmem:[%s286 + $0x3c] sm:$0xf]
        %v380 = vld [vmem:[%s286 + $0x40] sm:$0xf]
        %v381 = vld [vmem:[%s286 + $0x44] sm:$0xf]
        %v382 = vld [vmem:[%s286 + $0x48] sm:$0xf]
        %v383 = vld [vmem:[%s286 + $0x4c] sm:$0xf]
        %v384 = vld [vmem:[%s286 + $0x50] sm:$0xf]
        %v385 = vld [vmem:[%s286 + $0x54] sm:$0xf]
        %v386 = vld [vmem:[%s286 + $0x58] sm:$0xf]
        %v387 = vld [vmem:[%s286 + $0x5c] sm:$0xf]
        %v388 = vld [vmem:[%s286 + $0x60] sm:$0xf]
        %v389 = vld [vmem:[%s286 + $0x64] sm:$0xf]
        %v390 = vld [vmem:[%s286 + $0x68] sm:$0xf]
        %v391 = vld [vmem:[%s286 + $0x6c] sm:$0xf]
        %v392 = vld [vmem:[%s286 + $0x70] sm:$0xf]
        %v393 = vld [vmem:[%s286 + $0x74] sm:$0xf]
        %v394 = vld [vmem:[%s286 + $0x78] sm:$0xf]
        %v395 = vld [vmem:[%s286 + $0x7c] sm:$0xf]
        %v396 = vld [vmem:[%s2] sm:$0xf]
        %v397 = vld [vmem:[%s2 + $0x4] sm:$0xf]
        %v430 = vunpack.c.l.b16 %v364
        %v431 = vunpack.c.l.b16 %v365
        %v432 = vunpack.c.l.b16 %v366
        %v433 = vunpack.c.l.b16 %v367
        %v434 = vunpack.c.l.b16 %v368
        %v435 = vunpack.c.l.b16 %v369
        %v436 = vunpack.c.l.b16 %v370
        %v437 = vunpack.c.l.b16 %v371
        %v438 = vunpack.c.l.b16 %v372
        %v439 = vunpack.c.l.b16 %v373
        %v440 = vunpack.c.l.b16 %v374
        %v441 = vunpack.c.l.b16 %v375
        %v442 = vunpack.c.l.b16 %v376
        %v443 = vunpack.c.l.b16 %v377
        %v444 = vunpack.c.l.b16 %v378
        %v445 = vunpack.c.l.b16 %v379
        %v446 = vunpack.c.l.b16 %v380
        %v447 = vunpack.c.l.b16 %v381
        %v448 = vunpack.c.l.b16 %v382
        %v449 = vunpack.c.l.b16 %v383
        %v450 = vunpack.c.l.b16 %v384
        %v451 = vunpack.c.l.b16 %v385
        %v452 = vunpack.c.l.b16 %v386
        %v453 = vunpack.c.l.b16 %v387
        %v454 = vunpack.c.l.b16 %v388
        %v455 = vunpack.c.l.b16 %v389
        %v456 = vunpack.c.l.b16 %v390
        %v457 = vunpack.c.l.b16 %v391
        %v458 = vunpack.c.l.b16 %v392
        %v459 = vunpack.c.l.b16 %v393
        %v460 = vunpack.c.l.b16 %v394
        %v461 = vunpack.c.l.b16 %v395
        %v462 = vpack.c.b16 %v431, %v430
        %v463 = vpack.c.b16 %v433, %v432
        %v464 = vpack.c.b16 %v435, %v434
        %v465 = vpack.c.b16 %v437, %v436
        %v466 = vpack.c.b16 %v439, %v438
        %v467 = vpack.c.b16 %v441, %v440
        %v468 = vpack.c.b16 %v443, %v442
        %v469 = vpack.c.b16 %v445, %v444
        %v470 = vpack.c.b16 %v447, %v446
        %v471 = vpack.c.b16 %v449, %v448
        %v472 = vpack.c.b16 %v451, %v450
        %v473 = vpack.c.b16 %v453, %v452
        %v474 = vpack.c.b16 %v455, %v454
        %v475 = vpack.c.b16 %v457, %v456
        %v476 = vpack.c.b16 %v459, %v458
        %v477 = vpack.c.b16 %v461, %v460
        %v480 = vunpack.c.l.b16 %v396
        %v481 = vunpack.c.l.b16 %v397
        %v482 = vpack.c.b16 %v481, %v480
        %vm484 = vcmask 130048
        %v486 = vsel %vm484, %v462, 0
        %v489 = vsel %vm484, %v463, 0
        %v492 = vsel %vm484, %v464, 0
        %v495 = vsel %vm484, %v465, 0
        %v498 = vsel %vm484, %v466, 0
        %v501 = vsel %vm484, %v467, 0
        %v504 = vsel %vm484, %v468, 0
        %v507 = vsel %vm484, %v469, 0
        %v510 = vsel %vm484, %v470, 0
        %v513 = vsel %vm484, %v471, 0
        %v516 = vsel %vm484, %v472, 0
        %v519 = vsel %vm484, %v473, 0
        %v522 = vsel %vm484, %v474, 0
        %v525 = vsel %vm484, %v475, 0
        %v528 = vsel %vm484, %v476, 0
        %v531 = vsel %vm484, %v477, 0
        %533 = vmatprep.subr.bf16.mxu0 0
        %534 = vmatpush1.bf16.msra.mxu0 %v482
        %535 = vmatprep.subr.bf16.mxu0 0
        %536 = vmatpush1.bf16.msra.mxu0 0
        %537 = vmatprep.subr.bf16.mxu0 0
        %538 = vmatpush1.bf16.msra.mxu0 0
        %539 = vmatprep.subr.bf16.mxu0 0
        %540 = vmatpush1.bf16.msra.mxu0 0
        %541 = vmatprep.subr.bf16.mxu0 0
        %542 = vmatpush1.bf16.msra.mxu0 0
        %543 = vmatprep.subr.bf16.mxu0 0
        %544 = vmatpush1.bf16.msra.mxu0 0
        %545 = vmatprep.subr.bf16.mxu0 0
        %546 = vmatpush1.bf16.msra.mxu0 0
        %547 = vmatprep.subr.bf16.mxu0 0
        %548 = vmatpush1.bf16.msra.mxu0 0
        %549 = vmatprep.subr.bf16.mxu0 0
        %550 = vmatpush1.bf16.msra.mxu0 0
        %551 = vmatprep.subr.bf16.mxu0 0
        %552 = vmatpush1.bf16.msra.mxu0 0
        %553 = vmatprep.subr.bf16.mxu0 0
        %554 = vmatpush1.bf16.msra.mxu0 0
        %555 = vmatprep.subr.bf16.mxu0 0
        %556 = vmatpush1.bf16.msra.mxu0 0
        %557 = vmatprep.subr.bf16.mxu0 0
        %558 = vmatpush1.bf16.msra.mxu0 0
        %559 = vmatprep.subr.bf16.mxu0 0
        %560 = vmatpush1.bf16.msra.mxu0 0
        %561 = vmatprep.subr.bf16.mxu0 0
        %562 = vmatpush1.bf16.msra.mxu0 0
        %563 = vmatprep.subr.bf16.mxu0 0
        %564 = vmatpush1.bf16.msra.mxu0 0
        %565 = vmatprep.mubr.bf16.mxu0 0
        %566 = vmatmul.mubr.bf16.gmra.mrb[0].mxu0 %v486
        %v567 = vpop.f32.mrb[0].mxu0
        %v568 = vadd.f32 0.0, %v567
        %v569 = vpop.f32.mrb[0].mxu0
        %v570 = vpop.f32.mrb[0].mxu0
        %v571 = vadd.f32 0.0, %v570
        %v572 = vpop.f32.mrb[0].mxu0
        %573 = vmatprep.mubr.bf16.mxu0 0
        %574 = vmatmul.mubr.bf16.gmra.mrb[0].mxu0 %v489
        %v575 = vpop.f32.mrb[0].mxu0
        %v576 = vadd.f32 0.0, %v575
        %v577 = vpop.f32.mrb[0].mxu0
        %v578 = vpop.f32.mrb[0].mxu0
        %v579 = vadd.f32 0.0, %v578
        %v580 = vpop.f32.mrb[0].mxu0
        %581 = vmatprep.mubr.bf16.mxu0 0
        %582 = vmatmul.mubr.bf16.gmra.mrb[0].mxu0 %v492
        %v583 = vpop.f32.mrb[0].mxu0
        %v584 = vadd.f32 0.0, %v583
        %v585 = vpop.f32.mrb[0].mxu0
        %v586 = vpop.f32.mrb[0].mxu0
        %v587 = vadd.f32 0.0, %v586
        %v588 = vpop.f32.mrb[0].mxu0
        %589 = vmatprep.mubr.bf16.mxu0 0
        %590 = vmatmul.mubr.bf16.gmra.mrb[0].mxu0 %v495
        %v591 = vpop.f32.mrb[0].mxu0
        %v592 = vadd.f32 0.0, %v591
        %v593 = vpop.f32.mrb[0].mxu0
        %v594 = vpop.f32.mrb[0].mxu0
        %v595 = vadd.f32 0.0, %v594
        %v596 = vpop.f32.mrb[0].mxu0
        %597 = vmatprep.mubr.bf16.mxu0 0
        %598 = vmatmul.mubr.bf16.gmra.mrb[0].mxu0 %v498
        %v599 = vpop.f32.mrb[0].mxu0
        %v600 = vadd.f32 0.0, %v599
        %v601 = vpop.f32.mrb[0].mxu0
        %v602 = vpop.f32.mrb[0].mxu0
        %v603 = vadd.f32 0.0, %v602
        %v604 = vpop.f32.mrb[0].mxu0
        %605 = vmatprep.mubr.bf16.mxu0 0
        %606 = vmatmul.mubr.bf16.gmra.mrb[0].mxu0 %v501
        %v607 = vpop.f32.mrb[0].mxu0
        %v608 = vadd.f32 0.0, %v607
        %v609 = vpop.f32.mrb[0].mxu0
        %v610 = vpop.f32.mrb[0].mxu0
        %v611 = vadd.f32 0.0, %v610
        %v612 = vpop.f32.mrb[0].mxu0
        %613 = vmatprep.mubr.bf16.mxu0 0
        %614 = vmatmul.mubr.bf16.gmra.mrb[0].mxu0 %v504
        %v615 = vpop.f32.mrb[0].mxu0
        %v616 = vadd.f32 0.0, %v615
        %v617 = vpop.f32.mrb[0].mxu0
        %v618 = vpop.f32.mrb[0].mxu0
        %v619 = vadd.f32 0.0, %v618
        %v620 = vpop.f32.mrb[0].mxu0
        %621 = vmatprep.mubr.bf16.mxu0 0
        %622 = vmatmul.mubr.bf16.gmra.mrb[0].mxu0 %v507
        %v623 = vpop.f32.mrb[0].mxu0
        %v624 = vadd.f32 0.0, %v623
        %v625 = vpop.f32.mrb[0].mxu0
        %v626 = vpop.f32.mrb[0].mxu0
        %v627 = vadd.f32 0.0, %v626
        %v628 = vpop.f32.mrb[0].mxu0
        %629 = vmatprep.mubr.bf16.mxu0 0
        %630 = vmatmul.mubr.bf16.gmra.mrb[0].mxu0 %v510
        %v631 = vpop.f32.mrb[0].mxu0
        %v632 = vadd.f32 0.0, %v631
        %v633 = vpop.f32.mrb[0].mxu0
        %v634 = vpop.f32.mrb[0].mxu0
        %v635 = vadd.f32 0.0, %v634
        %v636 = vpop.f32.mrb[0].mxu0
        %637 = vmatprep.mubr.bf16.mxu0 0
        %638 = vmatmul.mubr.bf16.gmra.mrb[0].mxu0 %v513
        %v639 = vpop.f32.mrb[0].mxu0
        %v640 = vadd.f32 0.0, %v639
        %v641 = vpop.f32.mrb[0].mxu0
        %v642 = vpop.f32.mrb[0].mxu0
        %v643 = vadd.f32 0.0, %v642
        %v644 = vpop.f32.mrb[0].mxu0
        %645 = vmatprep.mubr.bf16.mxu0 0
        %646 = vmatmul.mubr.bf16.gmra.mrb[0].mxu0 %v516
        %v647 = vpop.f32.mrb[0].mxu0
        %v648 = vadd.f32 0.0, %v647
        %v649 = vpop.f32.mrb[0].mxu0
        %v650 = vpop.f32.mrb[0].mxu0
        %v651 = vadd.f32 0.0, %v650
        %v652 = vpop.f32.mrb[0].mxu0
        %653 = vmatprep.mubr.bf16.mxu0 0
        %654 = vmatmul.mubr.bf16.gmra.mrb[0].mxu0 %v519
        %v655 = vpop.f32.mrb[0].mxu0
        %v656 = vadd.f32 0.0, %v655
        %v657 = vpop.f32.mrb[0].mxu0
        %v658 = vpop.f32.mrb[0].mxu0
        %v659 = vadd.f32 0.0, %v658
        %v660 = vpop.f32.mrb[0].mxu0
        %661 = vmatprep.mubr.bf16.mxu0 0
        %662 = vmatmul.mubr.bf16.gmra.mrb[0].mxu0 %v522
        %v663 = vpop.f32.mrb[0].mxu0
        %v664 = vadd.f32 0.0, %v663
        %v665 = vpop.f32.mrb[0].mxu0
        %v666 = vpop.f32.mrb[0].mxu0
        %v667 = vadd.f32 0.0, %v666
        %v668 = vpop.f32.mrb[0].mxu0
        %669 = vmatprep.mubr.bf16.mxu0 0
        %670 = vmatmul.mubr.bf16.gmra.mrb[0].mxu0 %v525
        %v671 = vpop.f32.mrb[0].mxu0
        %v672 = vadd.f32 0.0, %v671
        %v673 = vpop.f32.mrb[0].mxu0
        %v674 = vpop.f32.mrb[0].mxu0
        %v675 = vadd.f32 0.0, %v674
        %v676 = vpop.f32.mrb[0].mxu0
        %677 = vmatprep.mubr.bf16.mxu0 0
        %678 = vmatmul.mubr.bf16.gmra.mrb[0].mxu0 %v528
        %v679 = vpop.f32.mrb[0].mxu0
        %v680 = vadd.f32 0.0, %v679
        %v681 = vpop.f32.mrb[0].mxu0
        %v682 = vpop.f32.mrb[0].mxu0
        %v683 = vadd.f32 0.0, %v682
        %v684 = vpop.f32.mrb[0].mxu0
        %685 = vmatprep.mubr.bf16.mxu0 0
        %686 = vmatmul.mubr.bf16.gmra.mrb[0].mxu0 %v531
        %v687 = vpop.f32.mrb[0].mxu0
        %v688 = vadd.f32 0.0, %v687
        %v689 = vpop.f32.mrb[0].mxu0
        %v690 = vpop.f32.mrb[0].mxu0
        %v691 = vadd.f32 0.0, %v690
        %v692 = vpop.f32.mrb[0].mxu0
        %693 = vdwg.mxu0
        %v694 = vld [vmem:[%s5] sm:$0x1]
        %v695 = vlaneseq
        %v696 = vshrl.u32 %v695, 7
        %v697 = vsub.s32 0, %v696
        %v698 = vrot.slane %v694, %v697
        %v699 = vmul.f32 %v568, %v698
        %v700 = vmul.f32 %v571, %v698
        %v701 = vmul.f32 %v576, %v698
        %v702 = vmul.f32 %v579, %v698
        %v703 = vmul.f32 %v584, %v698
        %v704 = vmul.f32 %v587, %v698
        %v705 = vmul.f32 %v592, %v698
        %v706 = vmul.f32 %v595, %v698
        %v707 = vmul.f32 %v600, %v698
        %v708 = vmul.f32 %v603, %v698
        %v709 = vmul.f32 %v608, %v698
        %v710 = vmul.f32 %v611, %v698
        %v711 = vmul.f32 %v616, %v698
        %v712 = vmul.f32 %v619, %v698
        %v713 = vmul.f32 %v624, %v698
        %v714 = vmul.f32 %v627, %v698
        %v715 = vmul.f32 %v632, %v698
        %v716 = vmul.f32 %v635, %v698
        %v717 = vmul.f32 %v640, %v698
        %v718 = vmul.f32 %v643, %v698
        %v719 = vmul.f32 %v648, %v698
        %v720 = vmul.f32 %v651, %v698
        %v721 = vmul.f32 %v656, %v698
        %v722 = vmul.f32 %v659, %v698
        %v723 = vmul.f32 %v664, %v698
        %v724 = vmul.f32 %v667, %v698
        %v725 = vmul.f32 %v672, %v698
        %v726 = vmul.f32 %v675, %v698
        %v727 = vmul.f32 %v680, %v698
        %v728 = vmul.f32 %v683, %v698
        %v729 = vmul.f32 %v688, %v698
        %v730 = vmul.f32 %v691, %v698
        %v731 = vld [vmem:[%s5 + $0x1] sm:$0x1]
        %v732 = vlaneseq
        %v733 = vshrl.u32 %v732, 7
        %v734 = vsub.s32 0, %v733
        %v735 = vrot.slane %v731, %v734
        %v736 = vadd.f32 %v699, %v735
        %v737 = vadd.f32 %v700, %v735
        %v738 = vadd.f32 %v701, %v735
        %v739 = vadd.f32 %v702, %v735
        %v740 = vadd.f32 %v703, %v735
        %v741 = vadd.f32 %v704, %v735
        %v742 = vadd.f32 %v705, %v735
        %v743 = vadd.f32 %v706, %v735
        %v744 = vadd.f32 %v707, %v735
        %v745 = vadd.f32 %v708, %v735
        %v746 = vadd.f32 %v709, %v735
        %v747 = vadd.f32 %v710, %v735
        %v748 = vadd.f32 %v711, %v735
        %v749 = vadd.f32 %v712, %v735
        %v750 = vadd.f32 %v713, %v735
        %v751 = vadd.f32 %v714, %v735
        %v752 = vadd.f32 %v715, %v735
        %v753 = vadd.f32 %v716, %v735
        %v754 = vadd.f32 %v717, %v735
        %v755 = vadd.f32 %v718, %v735
        %v756 = vadd.f32 %v719, %v735
        %v757 = vadd.f32 %v720, %v735
        %v758 = vadd.f32 %v721, %v735
        %v759 = vadd.f32 %v722, %v735
        %v760 = vadd.f32 %v723, %v735
        %v761 = vadd.f32 %v724, %v735
        %v762 = vadd.f32 %v725, %v735
        %v763 = vadd.f32 %v726, %v735
        %v764 = vadd.f32 %v727, %v735
        %v765 = vadd.f32 %v728, %v735
        %v766 = vadd.f32 %v729, %v735
        %v767 = vadd.f32 %v730, %v735
        %v768 = vmax.f32 %v736, 0.0
        %v769 = vmax.f32 %v737, 0.0
        %v770 = vmax.f32 %v738, 0.0
        %v771 = vmax.f32 %v739, 0.0
        %v772 = vmax.f32 %v740, 0.0
        %v773 = vmax.f32 %v741, 0.0
        %v774 = vmax.f32 %v742, 0.0
        %v775 = vmax.f32 %v743, 0.0
        %v776 = vmax.f32 %v744, 0.0
        %v777 = vmax.f32 %v745, 0.0
        %v778 = vmax.f32 %v746, 0.0
        %v779 = vmax.f32 %v747, 0.0
        %v780 = vmax.f32 %v748, 0.0
        %v781 = vmax.f32 %v749, 0.0
        %v782 = vmax.f32 %v750, 0.0
        %v783 = vmax.f32 %v751, 0.0
        %v784 = vmax.f32 %v752, 0.0
        %v785 = vmax.f32 %v753, 0.0
        %v786 = vmax.f32 %v754, 0.0
        %v787 = vmax.f32 %v755, 0.0
        %v788 = vmax.f32 %v756, 0.0
        %v789 = vmax.f32 %v757, 0.0
        %v790 = vmax.f32 %v758, 0.0
        %v791 = vmax.f32 %v759, 0.0
        %v792 = vmax.f32 %v760, 0.0
        %v793 = vmax.f32 %v761, 0.0
        %v794 = vmax.f32 %v762, 0.0
        %v795 = vmax.f32 %v763, 0.0
        %v796 = vmax.f32 %v764, 0.0
        %v797 = vmax.f32 %v765, 0.0
        %v798 = vmax.f32 %v766, 0.0
        %v799 = vmax.f32 %v767, 0.0
        %v800 = vpack.c.bf16 %v769, %v768
        %v801 = vpack.c.bf16 %v771, %v770
        %v802 = vpack.c.bf16 %v773, %v772
        %v803 = vpack.c.bf16 %v775, %v774
        %v804 = vpack.c.bf16 %v777, %v776
        %v805 = vpack.c.bf16 %v779, %v778
        %v806 = vpack.c.bf16 %v781, %v780
        %v807 = vpack.c.bf16 %v783, %v782
        %v808 = vpack.c.bf16 %v785, %v784
        %v809 = vpack.c.bf16 %v787, %v786
        %v810 = vpack.c.bf16 %v789, %v788
        %v811 = vpack.c.bf16 %v791, %v790
        %v812 = vpack.c.bf16 %v793, %v792
        %v813 = vpack.c.bf16 %v795, %v794
        %v814 = vpack.c.bf16 %v797, %v796
        %v815 = vpack.c.bf16 %v799, %v798
        %v832 = vunpack.c.l.b16 %v800
        %v833 = vunpack.c.h.b16 %v800
        %v834 = vunpack.c.l.b16 %v801
        %v835 = vunpack.c.h.b16 %v801
        %v836 = vunpack.c.l.b16 %v802
        %v837 = vunpack.c.h.b16 %v802
        %v838 = vunpack.c.l.b16 %v803
        %v839 = vunpack.c.h.b16 %v803
        %v840 = vunpack.c.l.b16 %v804
        %v841 = vunpack.c.h.b16 %v804
        %v842 = vunpack.c.l.b16 %v805
        %v843 = vunpack.c.h.b16 %v805
        %v844 = vunpack.c.l.b16 %v806
        %v845 = vunpack.c.h.b16 %v806
        %v846 = vunpack.c.l.b16 %v807
        %v847 = vunpack.c.h.b16 %v807
        %v848 = vunpack.c.l.b16 %v808
        %v849 = vunpack.c.h.b16 %v808
        %v850 = vunpack.c.l.b16 %v809
        %v851 = vunpack.c.h.b16 %v809
        %v852 = vunpack.c.l.b16 %v810
        %v853 = vunpack.c.h.b16 %v810
        %v854 = vunpack.c.l.b16 %v811
        %v855 = vunpack.c.h.b16 %v811
        %v856 = vunpack.c.l.b16 %v812
        %v857 = vunpack.c.h.b16 %v812
        %v858 = vunpack.c.l.b16 %v813
        %v859 = vunpack.c.h.b16 %v813
        %v860 = vunpack.c.l.b16 %v814
        %v861 = vunpack.c.h.b16 %v814
        %v862 = vunpack.c.l.b16 %v815
        %v863 = vunpack.c.h.b16 %v815
        %v864 = vpack.c.b16 %v832, %v832
        %v865 = vpack.c.b16 %v833, %v833
        %v866 = vpack.c.b16 %v834, %v834
        %v867 = vpack.c.b16 %v835, %v835
        %v868 = vpack.c.b16 %v836, %v836
        %v869 = vpack.c.b16 %v837, %v837
        %v870 = vpack.c.b16 %v838, %v838
        %v871 = vpack.c.b16 %v839, %v839
        %v872 = vpack.c.b16 %v840, %v840
        %v873 = vpack.c.b16 %v841, %v841
        %v874 = vpack.c.b16 %v842, %v842
        %v875 = vpack.c.b16 %v843, %v843
        %v876 = vpack.c.b16 %v844, %v844
        %v877 = vpack.c.b16 %v845, %v845
        %v878 = vpack.c.b16 %v846, %v846
        %v879 = vpack.c.b16 %v847, %v847
        %v880 = vpack.c.b16 %v848, %v848
        %v881 = vpack.c.b16 %v849, %v849
        %v882 = vpack.c.b16 %v850, %v850
        %v883 = vpack.c.b16 %v851, %v851
        %v884 = vpack.c.b16 %v852, %v852
        %v885 = vpack.c.b16 %v853, %v853
        %v886 = vpack.c.b16 %v854, %v854
        %v887 = vpack.c.b16 %v855, %v855
        %v888 = vpack.c.b16 %v856, %v856
        %v889 = vpack.c.b16 %v857, %v857
        %v890 = vpack.c.b16 %v858, %v858
        %v891 = vpack.c.b16 %v859, %v859
        %v892 = vpack.c.b16 %v860, %v860
        %v893 = vpack.c.b16 %v861, %v861
        %v894 = vpack.c.b16 %v862, %v862
        %v895 = vpack.c.b16 %v863, %v863
        %s928 = scalar_lea.vmem [#allocation4], 40
        %vm929 = vcmask 27648
        %930 = vst.msk [vmem:[%s928 + $0x8] sm:$0xf] %vm929, %v864
        %931 = vst.msk [vmem:[%s928 + $0xc] sm:$0xf] %vm929, %v865
        %932 = vst.msk [vmem:[%s928 + $0x1c] sm:$0xf] %vm929, %v866
        %933 = vst.msk [vmem:[%s928 + $0x20] sm:$0xf] %vm929, %v867
        %934 = vst.msk [vmem:[%s928 + $0x30] sm:$0xf] %vm929, %v868
        %935 = vst.msk [vmem:[%s928 + $0x34] sm:$0xf] %vm929, %v869
        %936 = vst.msk [vmem:[%s928 + $0x44] sm:$0xf] %vm929, %v870
        %937 = vst.msk [vmem:[%s928 + $0x48] sm:$0xf] %vm929, %v871
        %938 = vst.msk [vmem:[%s928 + $0x58] sm:$0xf] %vm929, %v872
        %939 = vst.msk [vmem:[%s928 + $0x5c] sm:$0xf] %vm929, %v873
        %940 = vst.msk [vmem:[%s928 + $0x6c] sm:$0xf] %vm929, %v874
        %941 = vst.msk [vmem:[%s928 + $0x70] sm:$0xf] %vm929, %v875
        %942 = vst.msk [vmem:[%s928 + $0x80] sm:$0xf] %vm929, %v876
        %943 = vst.msk [vmem:[%s928 + $0x84] sm:$0xf] %vm929, %v877
        %944 = vst.msk [vmem:[%s928 + $0x94] sm:$0xf] %vm929, %v878
        %945 = vst.msk [vmem:[%s928 + $0x98] sm:$0xf] %vm929, %v879
        %946 = vst.msk [vmem:[%s928 + $0xa8] sm:$0xf] %vm929, %v880
        %947 = vst.msk [vmem:[%s928 + $0xac] sm:$0xf] %vm929, %v881
        %948 = vst.msk [vmem:[%s928 + $0xbc] sm:$0xf] %vm929, %v882
        %949 = vst.msk [vmem:[%s928 + $0xc0] sm:$0xf] %vm929, %v883
        %950 = vst.msk [vmem:[%s928 + $0xd0] sm:$0xf] %vm929, %v884
        %951 = vst.msk [vmem:[%s928 + $0xd4] sm:$0xf] %vm929, %v885
        %952 = vst.msk [vmem:[%s928 + $0xe4] sm:$0xf] %vm929, %v886
        %953 = vst.msk [vmem:[%s928 + $0xe8] sm:$0xf] %vm929, %v887
        %954 = vst.msk [vmem:[%s928 + $0xf8] sm:$0xf] %vm929, %v888
        %955 = vst.msk [vmem:[%s928 + $0xfc] sm:$0xf] %vm929, %v889
        %956 = vst.msk [vmem:[%s928 + $0x10c] sm:$0xf] %vm929, %v890
        %957 = vst.msk [vmem:[%s928 + $0x110] sm:$0xf] %vm929, %v891
        %958 = vst.msk [vmem:[%s928 + $0x120] sm:$0xf] %vm929, %v892
        %959 = vst.msk [vmem:[%s928 + $0x124] sm:$0xf] %vm929, %v893
        %960 = vst.msk [vmem:[%s928 + $0x134] sm:$0xf] %vm929, %v894
        %961 = vst.msk [vmem:[%s928 + $0x138] sm:$0xf] %vm929, %v895
        %vm962 = vcmask 27651
        %963 = vst.msk [vmem:[#allocation4 + $0x4] sm:$0x8] %vm962, 0
        %964 = vst.msk [vmem:[#allocation4 + $0x18] sm:$0x8] %vm962, 0
        %965 = vst.msk [vmem:[#allocation4 + $0x2c] sm:$0x8] %vm962, 0
        %966 = vst.msk [vmem:[#allocation4 + $0x40] sm:$0x8] %vm962, 0
        %967 = vst.msk [vmem:[#allocation4 + $0x54] sm:$0x8] %vm962, 0
        %968 = vst.msk [vmem:[#allocation4 + $0x68] sm:$0x8] %vm962, 0
        %969 = vst.msk [vmem:[#allocation4 + $0x7c] sm:$0x8] %vm962, 0
        %970 = vst.msk [vmem:[#allocation4 + $0x90] sm:$0x8] %vm962, 0
        %971 = vst.msk [vmem:[#allocation4 + $0xa4] sm:$0x8] %vm962, 0
        %972 = vst.msk [vmem:[#allocation4 + $0xb8] sm:$0x8] %vm962, 0
        %973 = vst.msk [vmem:[#allocation4 + $0xcc] sm:$0x8] %vm962, 0
        %974 = vst.msk [vmem:[#allocation4 + $0xe0] sm:$0x8] %vm962, 0
        %975 = vst.msk [vmem:[#allocation4 + $0xf4] sm:$0x8] %vm962, 0
        %976 = vst.msk [vmem:[#allocation4 + $0x108] sm:$0x8] %vm962, 0
        %977 = vst.msk [vmem:[#allocation4 + $0x11c] sm:$0x8] %vm962, 0
        %978 = vst.msk [vmem:[#allocation4 + $0x130] sm:$0x8] %vm962, 0
        %979 = vst.msk [vmem:[#allocation4 + $0x144] sm:$0x8] %vm962, 0
        %980 = vst.msk [vmem:[#allocation4 + $0x158] sm:$0x8] %vm962, 0
        %981 = vst.msk [vmem:[#allocation4 + $0x16c] sm:$0x8] %vm962, 0
        %982 = vst.msk [vmem:[#allocation4 + $0x180] sm:$0x8] %vm962, 0
        %vm983 = vcmask 24576
        %984 = vst.msk [vmem:[#allocation4 + $0x10] sm:$0x1] %vm983, 0
        %985 = vst.msk [vmem:[#allocation4 + $0x24] sm:$0x1] %vm983, 0
        %986 = vst.msk [vmem:[#allocation4 + $0x38] sm:$0x1] %vm983, 0
        %987 = vst.msk [vmem:[#allocation4 + $0x4c] sm:$0x1] %vm983, 0
        %988 = vst.msk [vmem:[#allocation4 + $0x60] sm:$0x1] %vm983, 0
        %989 = vst.msk [vmem:[#allocation4 + $0x74] sm:$0x1] %vm983, 0
        %990 = vst.msk [vmem:[#allocation4 + $0x88] sm:$0x1] %vm983, 0
        %991 = vst.msk [vmem:[#allocation4 + $0x9c] sm:$0x1] %vm983, 0
        %992 = vst.msk [vmem:[#allocation4 + $0xb0] sm:$0x1] %vm983, 0
        %993 = vst.msk [vmem:[#allocation4 + $0xc4] sm:$0x1] %vm983, 0
        %994 = vst.msk [vmem:[#allocation4 + $0xd8] sm:$0x1] %vm983, 0
        %995 = vst.msk [vmem:[#allocation4 + $0xec] sm:$0x1] %vm983, 0
        %996 = vst.msk [vmem:[#allocation4 + $0x100] sm:$0x1] %vm983, 0
        %997 = vst.msk [vmem:[#allocation4 + $0x114] sm:$0x1] %vm983, 0
        %998 = vst.msk [vmem:[#allocation4 + $0x128] sm:$0x1] %vm983, 0
        %999 = vst.msk [vmem:[#allocation4 + $0x13c] sm:$0x1] %vm983, 0
        %1000 = vst.msk [vmem:[#allocation4 + $0x150] sm:$0x1] %vm983, 0
        %1001 = vst.msk [vmem:[#allocation4 + $0x164] sm:$0x1] %vm983, 0
        %1002 = vst.msk [vmem:[#allocation4 + $0x178] sm:$0x1] %vm983, 0
        %1003 = vst.msk [vmem:[#allocation4 + $0x18c] sm:$0x1] %vm983, 0
        // Predicated region
        $region69: #{tpu_custom_call.1} parent=47 // pred_check
          %p1004 = pneg %p321
        $region70: #{tpu_custom_call.1} parent=47 // pred_check_branch
          %1006 = sbr.rel (%p1004) target = $region72
        $region71: #{tpu_custom_call.1} parent=47 // pred_region
          %s1007 = smul.u32 4, 2
          %s1008 = smul.u32 %s1007, 2
          %s1009 = smul.u32 %s1008, 1
          %s1010 = sshll.u32 %s1009, 4
          %1011 = dma.done [#allocation5], %s1010
          %v1012 = vld [vmem:[#allocation2] sm:$0xff]
          %v1013 = vld [vmem:[#allocation2 + $0x8] sm:$0xff]
          %v1014 = vld [vmem:[%s2] sm:$0xf]
          %v1015 = vld [vmem:[%s2 + $0x4] sm:$0xf]
          %v1018 = vunpack.c.l.b16 %v1014
          %v1019 = vunpack.c.l.b16 %v1015
          %v1020 = vpack.c.b16 %v1019, %v1018
          %v1023 = vsel %vm484, %v1012, 0
          %v1026 = vsel %vm484, %v1013, 0
          %1028 = vmatprep.subr.bf16.mxu0 0
          %1029 = vmatpush1.bf16.msra.mxu0 %v1020
          %1030 = vmatprep.subr.bf16.mxu0 0
          %1031 = vmatpush1.bf16.msra.mxu0 0
          %1032 = vmatprep.subr.bf16.mxu0 0
          %1033 = vmatpush1.bf16.msra.mxu0 0
          %1034 = vmatprep.subr.bf16.mxu0 0
          %1035 = vmatpush1.bf16.msra.mxu0 0
          %1036 = vmatprep.subr.bf16.mxu0 0
          %1037 = vmatpush1.bf16.msra.mxu0 0
          %1038 = vmatprep.subr.bf16.mxu0 0
          %1039 = vmatpush1.bf16.msra.mxu0 0
          %1040 = vmatprep.subr.bf16.mxu0 0
          %1041 = vmatpush1.bf16.msra.mxu0 0
          %1042 = vmatprep.subr.bf16.mxu0 0
          %1043 = vmatpush1.bf16.msra.mxu0 0
          %1044 = vmatprep.subr.bf16.mxu0 0
          %1045 = vmatpush1.bf16.msra.mxu0 0
          %1046 = vmatprep.subr.bf16.mxu0 0
          %1047 = vmatpush1.bf16.msra.mxu0 0
          %1048 = vmatprep.subr.bf16.mxu0 0
          %1049 = vmatpush1.bf16.msra.mxu0 0
          %1050 = vmatprep.subr.bf16.mxu0 0
          %1051 = vmatpush1.bf16.msra.mxu0 0
          %1052 = vmatprep.subr.bf16.mxu0 0
          %1053 = vmatpush1.bf16.msra.mxu0 0
          %1054 = vmatprep.subr.bf16.mxu0 0
          %1055 = vmatpush1.bf16.msra.mxu0 0
          %1056 = vmatprep.subr.bf16.mxu0 0
          %1057 = vmatpush1.bf16.msra.mxu0 0
          %1058 = vmatprep.subr.bf16.mxu0 0
          %1059 = vmatpush1.bf16.msra.mxu0 0
          %1060 = vmatprep.mubr.bf16.mxu0 0
          %1061 = vmatmul.mubr.bf16.gmra.mrb[0].mxu0 %v1023
          %v1062 = vpop.f32.mrb[0].mxu0
          %v1063 = vadd.f32 0.0, %v1062
          %v1064 = vpop.f32.mrb[0].mxu0
          %v1065 = vpop.f32.mrb[0].mxu0
          %v1066 = vadd.f32 0.0, %v1065
          %v1067 = vpop.f32.mrb[0].mxu0
          %1068 = vmatprep.mubr.bf16.mxu0 0
          %1069 = vmatmul.mubr.bf16.gmra.mrb[0].mxu0 %v1026
          %v1070 = vpop.f32.mrb[0].mxu0
          %v1071 = vadd.f32 0.0, %v1070
          %v1072 = vpop.f32.mrb[0].mxu0
          %v1073 = vpop.f32.mrb[0].mxu0
          %v1074 = vadd.f32 0.0, %v1073
          %v1075 = vpop.f32.mrb[0].mxu0
          %1076 = vdwg.mxu0
          %v1077 = vld [vmem:[%s5] sm:$0x1]
          %v1078 = vlaneseq
          %v1079 = vshrl.u32 %v1078, 7
          %v1080 = vsub.s32 0, %v1079
          %v1081 = vrot.slane %v1077, %v1080
          %v1082 = vmul.f32 %v1063, %v1081
          %v1083 = vmul.f32 %v1066, %v1081
          %v1084 = vmul.f32 %v1071, %v1081
          %v1085 = vmul.f32 %v1074, %v1081
          %v1086 = vld [vmem:[%s5 + $0x1] sm:$0x1]
          %v1087 = vlaneseq
          %v1088 = vshrl.u32 %v1087, 7
          %v1089 = vsub.s32 0, %v1088
          %v1090 = vrot.slane %v1086, %v1089
          %v1091 = vadd.f32 %v1082, %v1090
          %v1092 = vadd.f32 %v1083, %v1090
          %v1093 = vadd.f32 %v1084, %v1090
          %v1094 = vadd.f32 %v1085, %v1090
          %v1095 = vmax.f32 %v1091, 0.0
          %v1096 = vmax.f32 %v1092, 0.0
          %v1097 = vmax.f32 %v1093, 0.0
          %v1098 = vmax.f32 %v1094, 0.0
          %v1099 = vpack.c.bf16 %v1096, %v1095
          %v1100 = vpack.c.bf16 %v1098, %v1097
          %v1103 = vunpack.c.l.b16 %v1099
          %v1104 = vunpack.c.h.b16 %v1099
          %v1105 = vunpack.c.l.b16 %v1100
          %v1106 = vunpack.c.h.b16 %v1100
          %v1107 = vpack.c.b16 %v1103, %v1103
          %v1108 = vpack.c.b16 %v1104, %v1104
          %v1109 = vpack.c.b16 %v1105, %v1105
          %v1110 = vpack.c.b16 %v1106, %v1106
          %1115 = vst.msk [vmem:[#allocation4 + $0x8] sm:$0xf] %vm929, %v1107
          %1116 = vst.msk [vmem:[#allocation4 + $0xc] sm:$0xf] %vm929, %v1108
          %1117 = vst.msk [vmem:[#allocation4 + $0x1c] sm:$0xf] %vm929, %v1109
          %1118 = vst.msk [vmem:[#allocation4 + $0x20] sm:$0xf] %vm929, %v1110
        $region72: #{tpu_custom_call.1} parent=47 // pred_fallthru
          _
        %p1119 = scmp.eq.s32.totalorder %s30, 0
        // Predicated region
        $region73: #{tpu_custom_call.1} parent=47 // pred_check
          %p1120 = pneg %p1119
        $region74: #{tpu_custom_call.1} parent=47 // pred_check_branch
          %1122 = sbr.rel (%p1120) target = $region76
        $region75: #{tpu_custom_call.1} parent=47 // pred_region
          %1123 = vst.msk [vmem:[#allocation4] sm:$0xf] %vm929, 0
          %1124 = vst.msk [vmem:[#allocation4 + $0x4] sm:$0xf] %vm929, 0
          %1125 = vst.msk [vmem:[#allocation4 + $0x8] sm:$0xf] %vm929, 0
          %1126 = vst.msk [vmem:[#allocation4 + $0xc] sm:$0xf] %vm929, 0
          %1127 = vst.msk [vmem:[#allocation4 + $0x10] sm:$0x1] %vm983, 0
          %1128 = vst.msk [vmem:[#allocation4 + $0x14] sm:$0xf] %vm929, 0
          %1129 = vst.msk [vmem:[#allocation4 + $0x18] sm:$0xf] %vm929, 0
          %1130 = vst.msk [vmem:[#allocation4 + $0x1c] sm:$0xf] %vm929, 0
          %1131 = vst.msk [vmem:[#allocation4 + $0x20] sm:$0xf] %vm929, 0
          %1132 = vst.msk [vmem:[#allocation4 + $0x24] sm:$0x1] %vm983, 0
        $region76: #{tpu_custom_call.1} parent=47 // pred_fallthru
          _
        // Predicated region
        $region77: #{tpu_custom_call.1} parent=47 // pred_check
          %p1133 = pneg %p342
        $region78: #{tpu_custom_call.1} parent=47 // pred_check_branch
          %1135 = sbr.rel (%p1133) target = $region80
        $region79: #{tpu_custom_call.1} parent=47 // pred_region
          %s1136 = scalar_lea.sflag [#allocation5], 1
          %s1137 = smul.u32 4, 2
          %s1138 = smul.u32 %s1137, 2
          %s1139 = smul.u32 %s1138, 1
          %s1140 = sshll.u32 %s1139, 4
          %1141 = dma.done %s1136, %s1140
          %v1142 = vld [vmem:[#allocation3] sm:$0xff]
          %v1143 = vld [vmem:[#allocation3 + $0x8] sm:$0xff]
          %v1144 = vld [vmem:[%s2] sm:$0xf]
          %v1145 = vld [vmem:[%s2 + $0x4] sm:$0xf]
          %v1148 = vunpack.c.l.b16 %v1144
          %v1149 = vunpack.c.l.b16 %v1145
          %v1150 = vpack.c.b16 %v1149, %v1148
          %v1153 = vsel %vm484, %v1142, 0
          %v1156 = vsel %vm484, %v1143, 0
          %1158 = vmatprep.subr.bf16.mxu0 0
          %1159 = vmatpush1.bf16.msra.mxu0 %v1150
          %1160 = vmatprep.subr.bf16.mxu0 0
          %1161 = vmatpush1.bf16.msra.mxu0 0
          %1162 = vmatprep.subr.bf16.mxu0 0
          %1163 = vmatpush1.bf16.msra.mxu0 0
          %1164 = vmatprep.subr.bf16.mxu0 0
          %1165 = vmatpush1.bf16.msra.mxu0 0
          %1166 = vmatprep.subr.bf16.mxu0 0
          %1167 = vmatpush1.bf16.msra.mxu0 0
          %1168 = vmatprep.subr.bf16.mxu0 0
          %1169 = vmatpush1.bf16.msra.mxu0 0
          %1170 = vmatprep.subr.bf16.mxu0 0
          %1171 = vmatpush1.bf16.msra.mxu0 0
          %1172 = vmatprep.subr.bf16.mxu0 0
          %1173 = vmatpush1.bf16.msra.mxu0 0
          %1174 = vmatprep.subr.bf16.mxu0 0
          %1175 = vmatpush1.bf16.msra.mxu0 0
          %1176 = vmatprep.subr.bf16.mxu0 0
          %1177 = vmatpush1.bf16.msra.mxu0 0
          %1178 = vmatprep.subr.bf16.mxu0 0
          %1179 = vmatpush1.bf16.msra.mxu0 0
          %1180 = vmatprep.subr.bf16.mxu0 0
          %1181 = vmatpush1.bf16.msra.mxu0 0
          %1182 = vmatprep.subr.bf16.mxu0 0
          %1183 = vmatpush1.bf16.msra.mxu0 0
          %1184 = vmatprep.subr.bf16.mxu0 0
          %1185 = vmatpush1.bf16.msra.mxu0 0
          %1186 = vmatprep.subr.bf16.mxu0 0
          %1187 = vmatpush1.bf16.msra.mxu0 0
          %1188 = vmatprep.subr.bf16.mxu0 0
          %1189 = vmatpush1.bf16.msra.mxu0 0
          %1190 = vmatprep.mubr.bf16.mxu0 0
          %1191 = vmatmul.mubr.bf16.gmra.mrb[0].mxu0 %v1153
          %v1192 = vpop.f32.mrb[0].mxu0
          %v1193 = vadd.f32 0.0, %v1192
          %v1194 = vpop.f32.mrb[0].mxu0
          %v1195 = vpop.f32.mrb[0].mxu0
          %v1196 = vadd.f32 0.0, %v1195
          %v1197 = vpop.f32.mrb[0].mxu0
          %1198 = vmatprep.mubr.bf16.mxu0 0
          %1199 = vmatmul.mubr.bf16.gmra.mrb[0].mxu0 %v1156
          %v1200 = vpop.f32.mrb[0].mxu0
          %v1201 = vadd.f32 0.0, %v1200
          %v1202 = vpop.f32.mrb[0].mxu0
          %v1203 = vpop.f32.mrb[0].mxu0
          %v1204 = vadd.f32 0.0, %v1203
          %v1205 = vpop.f32.mrb[0].mxu0
          %1206 = vdwg.mxu0
          %v1207 = vld [vmem:[%s5] sm:$0x1]
          %v1208 = vlaneseq
          %v1209 = vshrl.u32 %v1208, 7
          %v1210 = vsub.s32 0, %v1209
          %v1211 = vrot.slane %v1207, %v1210
          %v1212 = vmul.f32 %v1193, %v1211
          %v1213 = vmul.f32 %v1196, %v1211
          %v1214 = vmul.f32 %v1201, %v1211
          %v1215 = vmul.f32 %v1204, %v1211
          %v1216 = vld [vmem:[%s5 + $0x1] sm:$0x1]
          %v1217 = vlaneseq
          %v1218 = vshrl.u32 %v1217, 7
          %v1219 = vsub.s32 0, %v1218
          %v1220 = vrot.slane %v1216, %v1219
          %v1221 = vadd.f32 %v1212, %v1220
          %v1222 = vadd.f32 %v1213, %v1220
          %v1223 = vadd.f32 %v1214, %v1220
          %v1224 = vadd.f32 %v1215, %v1220
          %v1225 = vmax.f32 %v1221, 0.0
          %v1226 = vmax.f32 %v1222, 0.0
          %v1227 = vmax.f32 %v1223, 0.0
          %v1228 = vmax.f32 %v1224, 0.0
          %v1229 = vpack.c.bf16 %v1226, %v1225
          %v1230 = vpack.c.bf16 %v1228, %v1227
          %v1233 = vunpack.c.l.b16 %v1229
          %v1234 = vunpack.c.h.b16 %v1229
          %v1235 = vunpack.c.l.b16 %v1230
          %v1236 = vunpack.c.h.b16 %v1230
          %v1237 = vpack.c.b16 %v1233, %v1233
          %v1238 = vpack.c.b16 %v1234, %v1234
          %v1239 = vpack.c.b16 %v1235, %v1235
          %v1240 = vpack.c.b16 %v1236, %v1236
          %s1245 = scalar_lea.vmem [#allocation4], 360
          %1246 = vst.msk [vmem:[%s1245 + $0x8] sm:$0xf] %vm929, %v1237
          %1247 = vst.msk [vmem:[%s1245 + $0xc] sm:$0xf] %vm929, %v1238
          %1248 = vst.msk [vmem:[%s1245 + $0x1c] sm:$0xf] %vm929, %v1239
          %1249 = vst.msk [vmem:[%s1245 + $0x20] sm:$0xf] %vm929, %v1240
        $region80: #{tpu_custom_call.1} parent=47 // pred_fallthru
          _
        // Predicated region
        $region81: #{tpu_custom_call.1} parent=47 // pred_check
          %p1250 = pneg %p1119
        $region82: #{tpu_custom_call.1} parent=47 // pred_check_branch
          %1252 = sbr.rel (%p1250) target = $region84
        $region83: #{tpu_custom_call.1} parent=47 // pred_region
          %s1253 = scalar_lea.vmem [#allocation4], 360
          %1254 = vst.msk [vmem:[%s1253] sm:$0xf] %vm929, 0
          %1255 = vst.msk [vmem:[%s1253 + $0x4] sm:$0xf] %vm929, 0
          %1256 = vst.msk [vmem:[%s1253 + $0x8] sm:$0xf] %vm929, 0
          %1257 = vst.msk [vmem:[%s1253 + $0xc] sm:$0xf] %vm929, 0
          %1258 = vst.msk [vmem:[%s1253 + $0x10] sm:$0x1] %vm983, 0
          %1259 = vst.msk [vmem:[%s1253 + $0x14] sm:$0xf] %vm929, 0
          %1260 = vst.msk [vmem:[%s1253 + $0x18] sm:$0xf] %vm929, 0
          %1261 = vst.msk [vmem:[%s1253 + $0x1c] sm:$0xf] %vm929, 0
          %1262 = vst.msk [vmem:[%s1253 + $0x20] sm:$0xf] %vm929, 0
          %1263 = vst.msk [vmem:[%s1253 + $0x24] sm:$0x1] %vm983, 0
        $region84: #{tpu_custom_call.1} parent=47 // pred_fallthru
          _
        %v1264 = vld [vmem:[#allocation4 + $0x4] sm:$0x8]
        %v1265 = vld [vmem:[#allocation4 + $0x8] sm:$0xf]
        %v1266 = vld [vmem:[#allocation4 + $0xc] sm:$0x7]
        %v1267 = vld [vmem:[#allocation4 + $0x18] sm:$0x8]
        %v1268 = vld [vmem:[#allocation4 + $0x1c] sm:$0xf]
        %v1269 = vld [vmem:[#allocation4 + $0x20] sm:$0x7]
        %v1270 = vld [vmem:[#allocation4 + $0x2c] sm:$0x8]
        %v1271 = vld [vmem:[#allocation4 + $0x30] sm:$0xf]
        %v1272 = vld [vmem:[#allocation4 + $0x34] sm:$0x7]
        %v1273 = vld [vmem:[#allocation4 + $0x40] sm:$0x8]
        %v1274 = vld [vmem:[#allocation4 + $0x44] sm:$0xf]
        %v1275 = vld [vmem:[#allocation4 + $0x48] sm:$0x7]
        %v1276 = vld [vmem:[#allocation4 + $0x54] sm:$0x8]
        %v1277 = vld [vmem:[#allocation4 + $0x58] sm:$0xf]
        %v1278 = vld [vmem:[#allocation4 + $0x5c] sm:$0x7]
        %v1279 = vld [vmem:[#allocation4 + $0x68] sm:$0x8]
        %v1280 = vld [vmem:[#allocation4 + $0x6c] sm:$0xf]
        %v1281 = vld [vmem:[#allocation4 + $0x70] sm:$0x7]
        %v1282 = vld [vmem:[#allocation4 + $0x7c] sm:$0x8]
        %v1283 = vld [vmem:[#allocation4 + $0x80] sm:$0xf]
        %v1284 = vld [vmem:[#allocation4 + $0x84] sm:$0x7]
        %v1285 = vld [vmem:[#allocation4 + $0x90] sm:$0x8]
        %v1286 = vld [vmem:[#allocation4 + $0x94] sm:$0xf]
        %v1287 = vld [vmem:[#allocation4 + $0x98] sm:$0x7]
        %v1288 = vld [vmem:[#allocation4 + $0xa4] sm:$0x8]
        %v1289 = vld [vmem:[#allocation4 + $0xa8] sm:$0xf]
        %v1290 = vld [vmem:[#allocation4 + $0xac] sm:$0x7]
        %v1291 = vld [vmem:[#allocation4 + $0xb8] sm:$0x8]
        %v1292 = vld [vmem:[#allocation4 + $0xbc] sm:$0xf]
        %v1293 = vld [vmem:[#allocation4 + $0xc0] sm:$0x7]
        %v1294 = vld [vmem:[#allocation4 + $0xcc] sm:$0x8]
        %v1295 = vld [vmem:[#allocation4 + $0xd0] sm:$0xf]
        %v1296 = vld [vmem:[#allocation4 + $0xd4] sm:$0x7]
        %v1297 = vld [vmem:[#allocation4 + $0xe0] sm:$0x8]
        %v1298 = vld [vmem:[#allocation4 + $0xe4] sm:$0xf]
        %v1299 = vld [vmem:[#allocation4 + $0xe8] sm:$0x7]
        %v1300 = vld [vmem:[#allocation4 + $0xf4] sm:$0x8]
        %v1301 = vld [vmem:[#allocation4 + $0xf8] sm:$0xf]
        %v1302 = vld [vmem:[#allocation4 + $0xfc] sm:$0x7]
        %v1303 = vld [vmem:[#allocation4 + $0x108] sm:$0x8]
        %v1304 = vld [vmem:[#allocation4 + $0x10c] sm:$0xf]
        %v1305 = vld [vmem:[#allocation4 + $0x110] sm:$0x7]
        %v1306 = vld [vmem:[#allocation4 + $0x11c] sm:$0x8]
        %v1307 = vld [vmem:[#allocation4 + $0x120] sm:$0xf]
        %v1308 = vld [vmem:[#allocation4 + $0x124] sm:$0x7]
        %v1309 = vld [vmem:[#allocation4 + $0x130] sm:$0x8]
        %v1310 = vld [vmem:[#allocation4 + $0x134] sm:$0xf]
        %v1311 = vld [vmem:[#allocation4 + $0x138] sm:$0x7]
        %v1312 = vld [vmem:[#allocation4 + $0x144] sm:$0x8]
        %v1313 = vld [vmem:[#allocation4 + $0x148] sm:$0xf]
        %v1314 = vld [vmem:[#allocation4 + $0x14c] sm:$0x7]
        %v1315 = vld [vmem:[#allocation4 + $0x158] sm:$0x8]
        %v1316 = vld [vmem:[#allocation4 + $0x15c] sm:$0xf]
        %v1317 = vld [vmem:[#allocation4 + $0x160] sm:$0x7]
        %v1318 = vld [vmem:[#allocation4 + $0x16c] sm:$0x8]
        %v1319 = vld [vmem:[#allocation4 + $0x170] sm:$0xf]
        %v1320 = vld [vmem:[#allocation4 + $0x174] sm:$0x7]
        %v1321 = vld [vmem:[#allocation4 + $0x180] sm:$0x8]
        %v1322 = vld [vmem:[#allocation4 + $0x184] sm:$0xf]
        %v1323 = vld [vmem:[#allocation4 + $0x188] sm:$0x7]
        %v1324 = vld [vmem:[%s3] sm:$0x3]
        %s1325 = scalar_lea.vmem %s3, 6
        %v1326 = vld [vmem:[%s1325] sm:$0x3]
        %vm1375 = vcmask 1040384
        %vm1376 = vcmask 1044484
        %vm1377 = vmor %vm1375, %vm1376
        %v1378 = vrot.slane %v1270, 7
        %v1379 = vrot.slane %v1378, 4
        %v1380 = vrot.slane %v1271, 7
        %v1381 = vsel %vm1377, %v1379, %v1380
        %v1382 = vrot.slane %v1380, 4
        %v1383 = vrot.slane %v1272, 7
        %v1384 = vsel %vm1377, %v1382, %v1383
        %v1385 = vrot.slane %v1273, 7
        %v1386 = vrot.slane %v1385, 4
        %v1387 = vrot.slane %v1274, 7
        %v1388 = vsel %vm1377, %v1386, %v1387
        %v1389 = vrot.slane %v1387, 4
        %v1390 = vrot.slane %v1275, 7
        %v1391 = vsel %vm1377, %v1389, %v1390
        %v1392 = vrot.slane %v1276, 7
        %v1393 = vrot.slane %v1392, 4
        %v1394 = vrot.slane %v1277, 7
        %v1395 = vsel %vm1377, %v1393, %v1394
        %v1396 = vrot.slane %v1394, 4
        %v1397 = vrot.slane %v1278, 7
        %v1398 = vsel %vm1377, %v1396, %v1397
        %v1399 = vrot.slane %v1279, 7
        %v1400 = vrot.slane %v1399, 4
        %v1401 = vrot.slane %v1280, 7
        %v1402 = vsel %vm1377, %v1400, %v1401
        %v1403 = vrot.slane %v1401, 4
        %v1404 = vrot.slane %v1281, 7
        %v1405 = vsel %vm1377, %v1403, %v1404
        %v1406 = vrot.slane %v1282, 7
        %v1407 = vrot.slane %v1406, 4
        %v1408 = vrot.slane %v1283, 7
        %v1409 = vsel %vm1377, %v1407, %v1408
        %v1410 = vrot.slane %v1408, 4
        %v1411 = vrot.slane %v1284, 7
        %v1412 = vsel %vm1377, %v1410, %v1411
        %v1413 = vrot.slane %v1285, 7
        %v1414 = vrot.slane %v1413, 4
        %v1415 = vrot.slane %v1286, 7
        %v1416 = vsel %vm1377, %v1414, %v1415
        %v1417 = vrot.slane %v1415, 4
        %v1418 = vrot.slane %v1287, 7
        %v1419 = vsel %vm1377, %v1417, %v1418
        %v1420 = vrot.slane %v1288, 7
        %v1421 = vrot.slane %v1420, 4
        %v1422 = vrot.slane %v1289, 7
        %v1423 = vsel %vm1377, %v1421, %v1422
        %v1424 = vrot.slane %v1422, 4
        %v1425 = vrot.slane %v1290, 7
        %v1426 = vsel %vm1377, %v1424, %v1425
        %v1427 = vrot.slane %v1291, 7
        %v1428 = vrot.slane %v1427, 4
        %v1429 = vrot.slane %v1292, 7
        %v1430 = vsel %vm1377, %v1428, %v1429
        %v1431 = vrot.slane %v1429, 4
        %v1432 = vrot.slane %v1293, 7
        %v1433 = vsel %vm1377, %v1431, %v1432
        %v1434 = vrot.slane %v1294, 7
        %v1435 = vrot.slane %v1434, 4
        %v1436 = vrot.slane %v1295, 7
        %v1437 = vsel %vm1377, %v1435, %v1436
        %v1438 = vrot.slane %v1436, 4
        %v1439 = vrot.slane %v1296, 7
        %v1440 = vsel %vm1377, %v1438, %v1439
        %v1441 = vrot.slane %v1297, 7
        %v1442 = vrot.slane %v1441, 4
        %v1443 = vrot.slane %v1298, 7
        %v1444 = vsel %vm1377, %v1442, %v1443
        %v1445 = vrot.slane %v1443, 4
        %v1446 = vrot.slane %v1299, 7
        %v1447 = vsel %vm1377, %v1445, %v1446
        %v1448 = vrot.slane %v1300, 7
        %v1449 = vrot.slane %v1448, 4
        %v1450 = vrot.slane %v1301, 7
        %v1451 = vsel %vm1377, %v1449, %v1450
        %v1452 = vrot.slane %v1450, 4
        %v1453 = vrot.slane %v1302, 7
        %v1454 = vsel %vm1377, %v1452, %v1453
        %v1455 = vrot.slane %v1303, 7
        %v1456 = vrot.slane %v1455, 4
        %v1457 = vrot.slane %v1304, 7
        %v1458 = vsel %vm1377, %v1456, %v1457
        %v1459 = vrot.slane %v1457, 4
        %v1460 = vrot.slane %v1305, 7
        %v1461 = vsel %vm1377, %v1459, %v1460
        %v1462 = vrot.slane %v1306, 7
        %v1463 = vrot.slane %v1462, 4
        %v1464 = vrot.slane %v1307, 7
        %v1465 = vsel %vm1377, %v1463, %v1464
        %v1466 = vrot.slane %v1464, 4
        %v1467 = vrot.slane %v1308, 7
        %v1468 = vsel %vm1377, %v1466, %v1467
        %v1469 = vrot.slane %v1309, 7
        %v1470 = vrot.slane %v1469, 4
        %v1471 = vrot.slane %v1310, 7
        %v1472 = vsel %vm1377, %v1470, %v1471
        %v1473 = vrot.slane %v1471, 4
        %v1474 = vrot.slane %v1311, 7
        %v1475 = vsel %vm1377, %v1473, %v1474
        %v1476 = vrot.slane %v1312, 7
        %v1477 = vrot.slane %v1476, 4
        %v1478 = vrot.slane %v1313, 7
        %v1479 = vsel %vm1377, %v1477, %v1478
        %v1480 = vrot.slane %v1478, 4
        %v1481 = vrot.slane %v1314, 7
        %v1482 = vsel %vm1377, %v1480, %v1481
        %v1483 = vrot.slane %v1315, 7
        %v1484 = vrot.slane %v1483, 4
        %v1485 = vrot.slane %v1316, 7
        %v1486 = vsel %vm1377, %v1484, %v1485
        %v1487 = vrot.slane %v1485, 4
        %v1488 = vrot.slane %v1317, 7
        %v1489 = vsel %vm1377, %v1487, %v1488
        %v1490 = vunpack.c.l.b16 %v1381
        %v1491 = vunpack.c.l.b16 %v1384
        %v1492 = vunpack.c.l.b16 %v1388
        %v1493 = vunpack.c.l.b16 %v1391
        %v1494 = vunpack.c.l.b16 %v1395
        %v1495 = vunpack.c.l.b16 %v1398
        %v1496 = vunpack.c.l.b16 %v1402
        %v1497 = vunpack.c.l.b16 %v1405
        %v1498 = vunpack.c.l.b16 %v1409
        %v1499 = vunpack.c.l.b16 %v1412
        %v1500 = vunpack.c.l.b16 %v1416
        %v1501 = vunpack.c.l.b16 %v1419
        %v1502 = vunpack.c.l.b16 %v1423
        %v1503 = vunpack.c.l.b16 %v1426
        %v1504 = vunpack.c.l.b16 %v1430
        %v1505 = vunpack.c.l.b16 %v1433
        %v1506 = vunpack.c.l.b16 %v1437
        %v1507 = vunpack.c.l.b16 %v1440
        %v1508 = vunpack.c.l.b16 %v1444
        %v1509 = vunpack.c.l.b16 %v1447
        %v1510 = vunpack.c.l.b16 %v1451
        %v1511 = vunpack.c.l.b16 %v1454
        %v1512 = vunpack.c.l.b16 %v1458
        %v1513 = vunpack.c.l.b16 %v1461
        %v1514 = vunpack.c.l.b16 %v1465
        %v1515 = vunpack.c.l.b16 %v1468
        %v1516 = vunpack.c.l.b16 %v1472
        %v1517 = vunpack.c.l.b16 %v1475
        %v1518 = vunpack.c.l.b16 %v1479
        %v1519 = vunpack.c.l.b16 %v1482
        %v1520 = vunpack.c.l.b16 %v1486
        %v1521 = vunpack.c.l.b16 %v1489
        %v1522 = vpack.c.b16 %v1491, %v1490
        %v1523 = vpack.c.b16 %v1493, %v1492
        %v1524 = vpack.c.b16 %v1495, %v1494
        %v1525 = vpack.c.b16 %v1497, %v1496
        %v1526 = vpack.c.b16 %v1499, %v1498
        %v1527 = vpack.c.b16 %v1501, %v1500
        %v1528 = vpack.c.b16 %v1503, %v1502
        %v1529 = vpack.c.b16 %v1505, %v1504
        %v1530 = vpack.c.b16 %v1507, %v1506
        %v1531 = vpack.c.b16 %v1509, %v1508
        %v1532 = vpack.c.b16 %v1511, %v1510
        %v1533 = vpack.c.b16 %v1513, %v1512
        %v1534 = vpack.c.b16 %v1515, %v1514
        %v1535 = vpack.c.b16 %v1517, %v1516
        %v1536 = vpack.c.b16 %v1519, %v1518
        %v1537 = vpack.c.b16 %v1521, %v1520
        %vm1538 = vcmask 31744
        %v1540 = vsel %vm1538, %v1522, 0
        %v1543 = vsel %vm1538, %v1523, 0
        %v1546 = vsel %vm1538, %v1524, 0
        %v1549 = vsel %vm1538, %v1525, 0
        %v1552 = vsel %vm1538, %v1526, 0
        %v1555 = vsel %vm1538, %v1527, 0
        %v1558 = vsel %vm1538, %v1528, 0
        %v1561 = vsel %vm1538, %v1529, 0
        %v1564 = vsel %vm1538, %v1530, 0
        %v1567 = vsel %vm1538, %v1531, 0
        %v1570 = vsel %vm1538, %v1532, 0
        %v1573 = vsel %vm1538, %v1533, 0
        %v1576 = vsel %vm1538, %v1534, 0
        %v1579 = vsel %vm1538, %v1535, 0
        %v1582 = vsel %vm1538, %v1536, 0
        %v1585 = vsel %vm1538, %v1537, 0
        %vm1587 = vcmask 1041408
        %v1589 = vsel %vm1587, %v1326, 0
        %1591 = vmatprep.subr.bf16.mxu0 0
        %1592 = vmatpush1.bf16.msra.mxu0 %v1589
        %1593 = vmatprep.subr.bf16.mxu0 0
        %1594 = vmatpush1.bf16.msra.mxu0 0
        %1595 = vmatprep.subr.bf16.mxu0 0
        %1596 = vmatpush1.bf16.msra.mxu0 0
        %1597 = vmatprep.subr.bf16.mxu0 0
        %1598 = vmatpush1.bf16.msra.mxu0 0
        %1599 = vmatprep.subr.bf16.mxu0 0
        %1600 = vmatpush1.bf16.msra.mxu0 0
        %1601 = vmatprep.subr.bf16.mxu0 0
        %1602 = vmatpush1.bf16.msra.mxu0 0
        %1603 = vmatprep.subr.bf16.mxu0 0
        %1604 = vmatpush1.bf16.msra.mxu0 0
        %1605 = vmatprep.subr.bf16.mxu0 0
        %1606 = vmatpush1.bf16.msra.mxu0 0
        %1607 = vmatprep.subr.bf16.mxu0 0
        %1608 = vmatpush1.bf16.msra.mxu0 0
        %1609 = vmatprep.subr.bf16.mxu0 0
        %1610 = vmatpush1.bf16.msra.mxu0 0
        %1611 = vmatprep.subr.bf16.mxu0 0
        %1612 = vmatpush1.bf16.msra.mxu0 0
        %1613 = vmatprep.subr.bf16.mxu0 0
        %1614 = vmatpush1.bf16.msra.mxu0 0
        %1615 = vmatprep.subr.bf16.mxu0 0
        %1616 = vmatpush1.bf16.msra.mxu0 0
        %1617 = vmatprep.subr.bf16.mxu0 0
        %1618 = vmatpush1.bf16.msra.mxu0 0
        %1619 = vmatprep.subr.bf16.mxu0 0
        %1620 = vmatpush1.bf16.msra.mxu0 0
        %1621 = vmatprep.subr.bf16.mxu0 0
        %1622 = vmatpush1.bf16.msra.mxu0 0
        %1623 = vmatprep.mubr.bf16.mxu0 0
        %1624 = vmatmul.mubr.bf16.gmra.mrb[0].mxu0 %v1540
        %v1625 = vpop.f32.mrb[0].mxu0
        %v1626 = vadd.f32 0.0, %v1625
        %v1627 = vpop.f32.mrb[0].mxu0
        %v1628 = vpop.f32.mrb[0].mxu0
        %v1629 = vadd.f32 0.0, %v1628
        %v1630 = vpop.f32.mrb[0].mxu0
        %1631 = vmatprep.mubr.bf16.mxu0 0
        %1632 = vmatmul.mubr.bf16.gmra.mrb[0].mxu0 %v1543
        %v1633 = vpop.f32.mrb[0].mxu0
        %v1634 = vadd.f32 0.0, %v1633
        %v1635 = vpop.f32.mrb[0].mxu0
        %v1636 = vpop.f32.mrb[0].mxu0
        %v1637 = vadd.f32 0.0, %v1636
        %v1638 = vpop.f32.mrb[0].mxu0
        %1639 = vmatprep.mubr.bf16.mxu0 0
        %1640 = vmatmul.mubr.bf16.gmra.mrb[0].mxu0 %v1546
        %v1641 = vpop.f32.mrb[0].mxu0
        %v1642 = vadd.f32 0.0, %v1641
        %v1643 = vpop.f32.mrb[0].mxu0
        %v1644 = vpop.f32.mrb[0].mxu0
        %v1645 = vadd.f32 0.0, %v1644
        %v1646 = vpop.f32.mrb[0].mxu0
        %1647 = vmatprep.mubr.bf16.mxu0 0
        %1648 = vmatmul.mubr.bf16.gmra.mrb[0].mxu0 %v1549
        %v1649 = vpop.f32.mrb[0].mxu0
        %v1650 = vadd.f32 0.0, %v1649
        %v1651 = vpop.f32.mrb[0].mxu0
        %v1652 = vpop.f32.mrb[0].mxu0
        %v1653 = vadd.f32 0.0, %v1652
        %v1654 = vpop.f32.mrb[0].mxu0
        %1655 = vmatprep.mubr.bf16.mxu0 0
        %1656 = vmatmul.mubr.bf16.gmra.mrb[0].mxu0 %v1552
        %v1657 = vpop.f32.mrb[0].mxu0
        %v1658 = vadd.f32 0.0, %v1657
        %v1659 = vpop.f32.mrb[0].mxu0
        %v1660 = vpop.f32.mrb[0].mxu0
        %v1661 = vadd.f32 0.0, %v1660
        %v1662 = vpop.f32.mrb[0].mxu0
        %1663 = vmatprep.mubr.bf16.mxu0 0
        %1664 = vmatmul.mubr.bf16.gmra.mrb[0].mxu0 %v1555
        %v1665 = vpop.f32.mrb[0].mxu0
        %v1666 = vadd.f32 0.0, %v1665
        %v1667 = vpop.f32.mrb[0].mxu0
        %v1668 = vpop.f32.mrb[0].mxu0
        %v1669 = vadd.f32 0.0, %v1668
        %v1670 = vpop.f32.mrb[0].mxu0
        %1671 = vmatprep.mubr.bf16.mxu0 0
        %1672 = vmatmul.mubr.bf16.gmra.mrb[0].mxu0 %v1558
        %v1673 = vpop.f32.mrb[0].mxu0
        %v1674 = vadd.f32 0.0, %v1673
        %v1675 = vpop.f32.mrb[0].mxu0
        %v1676 = vpop.f32.mrb[0].mxu0
        %v1677 = vadd.f32 0.0, %v1676
        %v1678 = vpop.f32.mrb[0].mxu0
        %1679 = vmatprep.mubr.bf16.mxu0 0
        %1680 = vmatmul.mubr.bf16.gmra.mrb[0].mxu0 %v1561
        %v1681 = vpop.f32.mrb[0].mxu0
        %v1682 = vadd.f32 0.0, %v1681
        %v1683 = vpop.f32.mrb[0].mxu0
        %v1684 = vpop.f32.mrb[0].mxu0
        %v1685 = vadd.f32 0.0, %v1684
        %v1686 = vpop.f32.mrb[0].mxu0
        %1687 = vmatprep.mubr.bf16.mxu0 0
        %1688 = vmatmul.mubr.bf16.gmra.mrb[0].mxu0 %v1564
        %v1689 = vpop.f32.mrb[0].mxu0
        %v1690 = vadd.f32 0.0, %v1689
        %v1691 = vpop.f32.mrb[0].mxu0
        %v1692 = vpop.f32.mrb[0].mxu0
        %v1693 = vadd.f32 0.0, %v1692
        %v1694 = vpop.f32.mrb[0].mxu0
        %1695 = vmatprep.mubr.bf16.mxu0 0
        %1696 = vmatmul.mubr.bf16.gmra.mrb[0].mxu0 %v1567
        %v1697 = vpop.f32.mrb[0].mxu0
        %v1698 = vadd.f32 0.0, %v1697
        %v1699 = vpop.f32.mrb[0].mxu0
        %v1700 = vpop.f32.mrb[0].mxu0
        %v1701 = vadd.f32 0.0, %v1700
        %v1702 = vpop.f32.mrb[0].mxu0
        %1703 = vmatprep.mubr.bf16.mxu0 0
        %1704 = vmatmul.mubr.bf16.gmra.mrb[0].mxu0 %v1570
        %v1705 = vpop.f32.mrb[0].mxu0
        %v1706 = vadd.f32 0.0, %v1705
        %v1707 = vpop.f32.mrb[0].mxu0
        %v1708 = vpop.f32.mrb[0].mxu0
        %v1709 = vadd.f32 0.0, %v1708
        %v1710 = vpop.f32.mrb[0].mxu0
        %1711 = vmatprep.mubr.bf16.mxu0 0
        %1712 = vmatmul.mubr.bf16.gmra.mrb[0].mxu0 %v1573
        %v1713 = vpop.f32.mrb[0].mxu0
        %v1714 = vadd.f32 0.0, %v1713
        %v1715 = vpop.f32.mrb[0].mxu0
        %v1716 = vpop.f32.mrb[0].mxu0
        %v1717 = vadd.f32 0.0, %v1716
        %v1718 = vpop.f32.mrb[0].mxu0
        %1719 = vmatprep.mubr.bf16.mxu0 0
        %1720 = vmatmul.mubr.bf16.gmra.mrb[0].mxu0 %v1576
        %v1721 = vpop.f32.mrb[0].mxu0
        %v1722 = vadd.f32 0.0, %v1721
        %v1723 = vpop.f32.mrb[0].mxu0
        %v1724 = vpop.f32.mrb[0].mxu0
        %v1725 = vadd.f32 0.0, %v1724
        %v1726 = vpop.f32.mrb[0].mxu0
        %1727 = vmatprep.mubr.bf16.mxu0 0
        %1728 = vmatmul.mubr.bf16.gmra.mrb[0].mxu0 %v1579
        %v1729 = vpop.f32.mrb[0].mxu0
        %v1730 = vadd.f32 0.0, %v1729
        %v1731 = vpop.f32.mrb[0].mxu0
        %v1732 = vpop.f32.mrb[0].mxu0
        %v1733 = vadd.f32 0.0, %v1732
        %v1734 = vpop.f32.mrb[0].mxu0
        %1735 = vmatprep.mubr.bf16.mxu0 0
        %1736 = vmatmul.mubr.bf16.gmra.mrb[0].mxu0 %v1582
        %v1737 = vpop.f32.mrb[0].mxu0
        %v1738 = vadd.f32 0.0, %v1737
        %v1739 = vpop.f32.mrb[0].mxu0
        %v1740 = vpop.f32.mrb[0].mxu0
        %v1741 = vadd.f32 0.0, %v1740
        %v1742 = vpop.f32.mrb[0].mxu0
        %1743 = vmatprep.mubr.bf16.mxu0 0
        %1744 = vmatmul.mubr.bf16.gmra.mrb[0].mxu0 %v1585
        %v1745 = vpop.f32.mrb[0].mxu0
        %v1746 = vadd.f32 0.0, %v1745
        %v1747 = vpop.f32.mrb[0].mxu0
        %v1748 = vpop.f32.mrb[0].mxu0
        %v1749 = vadd.f32 0.0, %v1748
        %v1750 = vpop.f32.mrb[0].mxu0
        %1751 = vdwg.mxu0
        %v1758 = vrot.slane %v1264, 7
        %v1759 = vrot.slane %v1758, 4
        %v1760 = vrot.slane %v1265, 7
        %v1761 = vsel %vm1377, %v1759, %v1760
        %v1762 = vrot.slane %v1760, 4
        %v1763 = vrot.slane %v1266, 7
        %v1764 = vsel %vm1377, %v1762, %v1763
        %v1765 = vrot.slane %v1267, 7
        %v1766 = vrot.slane %v1765, 4
        %v1767 = vrot.slane %v1268, 7
        %v1768 = vsel %vm1377, %v1766, %v1767
        %v1769 = vrot.slane %v1767, 4
        %v1770 = vrot.slane %v1269, 7
        %v1771 = vsel %vm1377, %v1769, %v1770
        %v1772 = vunpack.c.l.b16 %v1761
        %v1773 = vunpack.c.l.b16 %v1764
        %v1774 = vunpack.c.l.b16 %v1768
        %v1775 = vunpack.c.l.b16 %v1771
        %v1776 = vpack.c.b16 %v1773, %v1772
        %v1777 = vpack.c.b16 %v1775, %v1774
        %v1779 = vsel %vm1538, %v1776, 0
        %v1782 = vsel %vm1538, %v1777, 0
        %v1785 = vsel %vm1587, %v1324, 0
        %1787 = vmatprep.subr.bf16.mxu0 0
        %1788 = vmatpush1.bf16.msra.mxu0 %v1785
        %1789 = vmatprep.subr.bf16.mxu0 0
        %1790 = vmatpush1.bf16.msra.mxu0 0
        %1791 = vmatprep.subr.bf16.mxu0 0
        %1792 = vmatpush1.bf16.msra.mxu0 0
        %1793 = vmatprep.subr.bf16.mxu0 0
        %1794 = vmatpush1.bf16.msra.mxu0 0
        %1795 = vmatprep.subr.bf16.mxu0 0
        %1796 = vmatpush1.bf16.msra.mxu0 0
        %1797 = vmatprep.subr.bf16.mxu0 0
        %1798 = vmatpush1.bf16.msra.mxu0 0
        %1799 = vmatprep.subr.bf16.mxu0 0
        %1800 = vmatpush1.bf16.msra.mxu0 0
        %1801 = vmatprep.subr.bf16.mxu0 0
        %1802 = vmatpush1.bf16.msra.mxu0 0
        %1803 = vmatprep.subr.bf16.mxu0 0
        %1804 = vmatpush1.bf16.msra.mxu0 0
        %1805 = vmatprep.subr.bf16.mxu0 0
        %1806 = vmatpush1.bf16.msra.mxu0 0
        %1807 = vmatprep.subr.bf16.mxu0 0
        %1808 = vmatpush1.bf16.msra.mxu0 0
        %1809 = vmatprep.subr.bf16.mxu0 0
        %1810 = vmatpush1.bf16.msra.mxu0 0
        %1811 = vmatprep.subr.bf16.mxu0 0
        %1812 = vmatpush1.bf16.msra.mxu0 0
        %1813 = vmatprep.subr.bf16.mxu0 0
        %1814 = vmatpush1.bf16.msra.mxu0 0
        %1815 = vmatprep.subr.bf16.mxu0 0
        %1816 = vmatpush1.bf16.msra.mxu0 0
        %1817 = vmatprep.subr.bf16.mxu0 0
        %1818 = vmatpush1.bf16.msra.mxu0 0
        %1819 = vmatprep.mubr.bf16.mxu0 0
        %1820 = vmatmul.mubr.bf16.gmra.mrb[0].mxu0 %v1779
        %v1821 = vpop.f32.mrb[0].mxu0
        %v1822 = vadd.f32 %v1626, %v1821
        %v1823 = vpop.f32.mrb[0].mxu0
        %v1824 = vpop.f32.mrb[0].mxu0
        %v1825 = vadd.f32 %v1629, %v1824
        %v1826 = vpop.f32.mrb[0].mxu0
        %1827 = vmatprep.mubr.bf16.mxu0 0
        %1828 = vmatmul.mubr.bf16.gmra.mrb[0].mxu0 %v1782
        %v1829 = vpop.f32.mrb[0].mxu0
        %v1830 = vadd.f32 %v1634, %v1829
        %v1831 = vpop.f32.mrb[0].mxu0
        %v1832 = vpop.f32.mrb[0].mxu0
        %v1833 = vadd.f32 %v1637, %v1832
        %v1834 = vpop.f32.mrb[0].mxu0
        %1835 = vmatprep.mubr.bf16.mxu0 0
        %1836 = vmatmul.mubr.bf16.gmra.mrb[0].mxu0 %v1540
        %v1837 = vpop.f32.mrb[0].mxu0
        %v1838 = vadd.f32 %v1642, %v1837
        %v1839 = vpop.f32.mrb[0].mxu0
        %v1840 = vpop.f32.mrb[0].mxu0
        %v1841 = vadd.f32 %v1645, %v1840
        %v1842 = vpop.f32.mrb[0].mxu0
        %1843 = vmatprep.mubr.bf16.mxu0 0
        %1844 = vmatmul.mubr.bf16.gmra.mrb[0].mxu0 %v1543
        %v1845 = vpop.f32.mrb[0].mxu0
        %v1846 = vadd.f32 %v1650, %v1845
        %v1847 = vpop.f32.mrb[0].mxu0
        %v1848 = vpop.f32.mrb[0].mxu0
        %v1849 = vadd.f32 %v1653, %v1848
        %v1850 = vpop.f32.mrb[0].mxu0
        %1851 = vmatprep.mubr.bf16.mxu0 0
        %1852 = vmatmul.mubr.bf16.gmra.mrb[0].mxu0 %v1546
        %v1853 = vpop.f32.mrb[0].mxu0
        %v1854 = vadd.f32 %v1658, %v1853
        %v1855 = vpop.f32.mrb[0].mxu0
        %v1856 = vpop.f32.mrb[0].mxu0
        %v1857 = vadd.f32 %v1661, %v1856
        %v1858 = vpop.f32.mrb[0].mxu0
        %1859 = vmatprep.mubr.bf16.mxu0 0
        %1860 = vmatmul.mubr.bf16.gmra.mrb[0].mxu0 %v1549
        %v1861 = vpop.f32.mrb[0].mxu0
        %v1862 = vadd.f32 %v1666, %v1861
        %v1863 = vpop.f32.mrb[0].mxu0
        %v1864 = vpop.f32.mrb[0].mxu0
        %v1865 = vadd.f32 %v1669, %v1864
        %v1866 = vpop.f32.mrb[0].mxu0
        %1867 = vmatprep.mubr.bf16.mxu0 0
        %1868 = vmatmul.mubr.bf16.gmra.mrb[0].mxu0 %v1552
        %v1869 = vpop.f32.mrb[0].mxu0
        %v1870 = vadd.f32 %v1674, %v1869
        %v1871 = vpop.f32.mrb[0].mxu0
        %v1872 = vpop.f32.mrb[0].mxu0
        %v1873 = vadd.f32 %v1677, %v1872
        %v1874 = vpop.f32.mrb[0].mxu0
        %1875 = vmatprep.mubr.bf16.mxu0 0
        %1876 = vmatmul.mubr.bf16.gmra.mrb[0].mxu0 %v1555
        %v1877 = vpop.f32.mrb[0].mxu0
        %v1878 = vadd.f32 %v1682, %v1877
        %v1879 = vpop.f32.mrb[0].mxu0
        %v1880 = vpop.f32.mrb[0].mxu0
        %v1881 = vadd.f32 %v1685, %v1880
        %v1882 = vpop.f32.mrb[0].mxu0
        %1883 = vmatprep.mubr.bf16.mxu0 0
        %1884 = vmatmul.mubr.bf16.gmra.mrb[0].mxu0 %v1558
        %v1885 = vpop.f32.mrb[0].mxu0
        %v1886 = vadd.f32 %v1690, %v1885
        %v1887 = vpop.f32.mrb[0].mxu0
        %v1888 = vpop.f32.mrb[0].mxu0
        %v1889 = vadd.f32 %v1693, %v1888
        %v1890 = vpop.f32.mrb[0].mxu0
        %1891 = vmatprep.mubr.bf16.mxu0 0
        %1892 = vmatmul.mubr.bf16.gmra.mrb[0].mxu0 %v1561
        %v1893 = vpop.f32.mrb[0].mxu0
        %v1894 = vadd.f32 %v1698, %v1893
        %v1895 = vpop.f32.mrb[0].mxu0
        %v1896 = vpop.f32.mrb[0].mxu0
        %v1897 = vadd.f32 %v1701, %v1896
        %v1898 = vpop.f32.mrb[0].mxu0
        %1899 = vmatprep.mubr.bf16.mxu0 0
        %1900 = vmatmul.mubr.bf16.gmra.mrb[0].mxu0 %v1564
        %v1901 = vpop.f32.mrb[0].mxu0
        %v1902 = vadd.f32 %v1706, %v1901
        %v1903 = vpop.f32.mrb[0].mxu0
        %v1904 = vpop.f32.mrb[0].mxu0
        %v1905 = vadd.f32 %v1709, %v1904
        %v1906 = vpop.f32.mrb[0].mxu0
        %1907 = vmatprep.mubr.bf16.mxu0 0
        %1908 = vmatmul.mubr.bf16.gmra.mrb[0].mxu0 %v1567
        %v1909 = vpop.f32.mrb[0].mxu0
        %v1910 = vadd.f32 %v1714, %v1909
        %v1911 = vpop.f32.mrb[0].mxu0
        %v1912 = vpop.f32.mrb[0].mxu0
        %v1913 = vadd.f32 %v1717, %v1912
        %v1914 = vpop.f32.mrb[0].mxu0
        %1915 = vmatprep.mubr.bf16.mxu0 0
        %1916 = vmatmul.mubr.bf16.gmra.mrb[0].mxu0 %v1570
        %v1917 = vpop.f32.mrb[0].mxu0
        %v1918 = vadd.f32 %v1722, %v1917
        %v1919 = vpop.f32.mrb[0].mxu0
        %v1920 = vpop.f32.mrb[0].mxu0
        %v1921 = vadd.f32 %v1725, %v1920
        %v1922 = vpop.f32.mrb[0].mxu0
        %1923 = vmatprep.mubr.bf16.mxu0 0
        %1924 = vmatmul.mubr.bf16.gmra.mrb[0].mxu0 %v1573
        %v1925 = vpop.f32.mrb[0].mxu0
        %v1926 = vadd.f32 %v1730, %v1925
        %v1927 = vpop.f32.mrb[0].mxu0
        %v1928 = vpop.f32.mrb[0].mxu0
        %v1929 = vadd.f32 %v1733, %v1928
        %v1930 = vpop.f32.mrb[0].mxu0
        %1931 = vmatprep.mubr.bf16.mxu0 0
        %1932 = vmatmul.mubr.bf16.gmra.mrb[0].mxu0 %v1576
        %v1933 = vpop.f32.mrb[0].mxu0
        %v1934 = vadd.f32 %v1738, %v1933
        %v1935 = vpop.f32.mrb[0].mxu0
        %v1936 = vpop.f32.mrb[0].mxu0
        %v1937 = vadd.f32 %v1741, %v1936
        %v1938 = vpop.f32.mrb[0].mxu0
        %1939 = vmatprep.mubr.bf16.mxu0 0
        %1940 = vmatmul.mubr.bf16.gmra.mrb[0].mxu0 %v1579
        %v1941 = vpop.f32.mrb[0].mxu0
        %v1942 = vadd.f32 %v1746, %v1941
        %v1943 = vpop.f32.mrb[0].mxu0
        %v1944 = vpop.f32.mrb[0].mxu0
        %v1945 = vadd.f32 %v1749, %v1944
        %v1946 = vpop.f32.mrb[0].mxu0
        %1947 = vdwg.mxu0
        %s1948 = scalar_lea.vmem %s3, 12
        %v1949 = vld [vmem:[%s1948] sm:$0x3]
        %v1956 = vrot.slane %v1318, 7
        %v1957 = vrot.slane %v1956, 4
        %v1958 = vrot.slane %v1319, 7
        %v1959 = vsel %vm1377, %v1957, %v1958
        %v1960 = vrot.slane %v1958, 4
        %v1961 = vrot.slane %v1320, 7
        %v1962 = vsel %vm1377, %v1960, %v1961
        %v1963 = vrot.slane %v1321, 7
        %v1964 = vrot.slane %v1963, 4
        %v1965 = vrot.slane %v1322, 7
        %v1966 = vsel %vm1377, %v1964, %v1965
        %v1967 = vrot.slane %v1965, 4
        %v1968 = vrot.slane %v1323, 7
        %v1969 = vsel %vm1377, %v1967, %v1968
        %v1970 = vunpack.c.l.b16 %v1959
        %v1971 = vunpack.c.l.b16 %v1962
        %v1972 = vunpack.c.l.b16 %v1966
        %v1973 = vunpack.c.l.b16 %v1969
        %v1974 = vpack.c.b16 %v1971, %v1970
        %v1975 = vpack.c.b16 %v1973, %v1972
        %v1977 = vsel %vm1538, %v1974, 0
        %v1980 = vsel %vm1538, %v1975, 0
        %v1983 = vsel %vm1587, %v1949, 0
        %1985 = vmatprep.subr.bf16.mxu0 0
        %1986 = vmatpush1.bf16.msra.mxu0 %v1983
        %1987 = vmatprep.subr.bf16.mxu0 0
        %1988 = vmatpush1.bf16.msra.mxu0 0
        %1989 = vmatprep.subr.bf16.mxu0 0
        %1990 = vmatpush1.bf16.msra.mxu0 0
        %1991 = vmatprep.subr.bf16.mxu0 0
        %1992 = vmatpush1.bf16.msra.mxu0 0
        %1993 = vmatprep.subr.bf16.mxu0 0
        %1994 = vmatpush1.bf16.msra.mxu0 0
        %1995 = vmatprep.subr.bf16.mxu0 0
        %1996 = vmatpush1.bf16.msra.mxu0 0
        %1997 = vmatprep.subr.bf16.mxu0 0
        %1998 = vmatpush1.bf16.msra.mxu0 0
        %1999 = vmatprep.subr.bf16.mxu0 0
        %2000 = vmatpush1.bf16.msra.mxu0 0
        %2001 = vmatprep.subr.bf16.mxu0 0
        %2002 = vmatpush1.bf16.msra.mxu0 0
        %2003 = vmatprep.subr.bf16.mxu0 0
        %2004 = vmatpush1.bf16.msra.mxu0 0
        %2005 = vmatprep.subr.bf16.mxu0 0
        %2006 = vmatpush1.bf16.msra.mxu0 0
        %2007 = vmatprep.subr.bf16.mxu0 0
        %2008 = vmatpush1.bf16.msra.mxu0 0
        %2009 = vmatprep.subr.bf16.mxu0 0
        %2010 = vmatpush1.bf16.msra.mxu0 0
        %2011 = vmatprep.subr.bf16.mxu0 0
        %2012 = vmatpush1.bf16.msra.mxu0 0
        %2013 = vmatprep.subr.bf16.mxu0 0
        %2014 = vmatpush1.bf16.msra.mxu0 0
        %2015 = vmatprep.subr.bf16.mxu0 0
        %2016 = vmatpush1.bf16.msra.mxu0 0
        %2017 = vmatprep.mubr.bf16.mxu0 0
        %2018 = vmatmul.mubr.bf16.gmra.mrb[0].mxu0 %v1546
        %v2019 = vpop.f32.mrb[0].mxu0
        %v2020 = vadd.f32 0.0, %v2019
        %v2021 = vpop.f32.mrb[0].mxu0
        %v2022 = vpop.f32.mrb[0].mxu0
        %v2023 = vadd.f32 0.0, %v2022
        %v2024 = vpop.f32.mrb[0].mxu0
        %2025 = vmatprep.mubr.bf16.mxu0 0
        %2026 = vmatmul.mubr.bf16.gmra.mrb[0].mxu0 %v1549
        %v2027 = vpop.f32.mrb[0].mxu0
        %v2028 = vadd.f32 0.0, %v2027
        %v2029 = vpop.f32.mrb[0].mxu0
        %v2030 = vpop.f32.mrb[0].mxu0
        %v2031 = vadd.f32 0.0, %v2030
        %v2032 = vpop.f32.mrb[0].mxu0
        %2033 = vmatprep.mubr.bf16.mxu0 0
        %2034 = vmatmul.mubr.bf16.gmra.mrb[0].mxu0 %v1552
        %v2035 = vpop.f32.mrb[0].mxu0
        %v2036 = vadd.f32 0.0, %v2035
        %v2037 = vpop.f32.mrb[0].mxu0
        %v2038 = vpop.f32.mrb[0].mxu0
        %v2039 = vadd.f32 0.0, %v2038
        %v2040 = vpop.f32.mrb[0].mxu0
        %2041 = vmatprep.mubr.bf16.mxu0 0
        %2042 = vmatmul.mubr.bf16.gmra.mrb[0].mxu0 %v1555
        %v2043 = vpop.f32.mrb[0].mxu0
        %v2044 = vadd.f32 0.0, %v2043
        %v2045 = vpop.f32.mrb[0].mxu0
        %v2046 = vpop.f32.mrb[0].mxu0
        %v2047 = vadd.f32 0.0, %v2046
        %v2048 = vpop.f32.mrb[0].mxu0
        %2049 = vmatprep.mubr.bf16.mxu0 0
        %2050 = vmatmul.mubr.bf16.gmra.mrb[0].mxu0 %v1558
        %v2051 = vpop.f32.mrb[0].mxu0
        %v2052 = vadd.f32 0.0, %v2051
        %v2053 = vpop.f32.mrb[0].mxu0
        %v2054 = vpop.f32.mrb[0].mxu0
        %v2055 = vadd.f32 0.0, %v2054
        %v2056 = vpop.f32.mrb[0].mxu0
        %2057 = vmatprep.mubr.bf16.mxu0 0
        %2058 = vmatmul.mubr.bf16.gmra.mrb[0].mxu0 %v1561
        %v2059 = vpop.f32.mrb[0].mxu0
        %v2060 = vadd.f32 0.0, %v2059
        %v2061 = vpop.f32.mrb[0].mxu0
        %v2062 = vpop.f32.mrb[0].mxu0
        %v2063 = vadd.f32 0.0, %v2062
        %v2064 = vpop.f32.mrb[0].mxu0
        %2065 = vmatprep.mubr.bf16.mxu0 0
        %2066 = vmatmul.mubr.bf16.gmra.mrb[0].mxu0 %v1564
        %v2067 = vpop.f32.mrb[0].mxu0
        %v2068 = vadd.f32 0.0, %v2067
        %v2069 = vpop.f32.mrb[0].mxu0
        %v2070 = vpop.f32.mrb[0].mxu0
        %v2071 = vadd.f32 0.0, %v2070
        %v2072 = vpop.f32.mrb[0].mxu0
        %2073 = vmatprep.mubr.bf16.mxu0 0
        %2074 = vmatmul.mubr.bf16.gmra.mrb[0].mxu0 %v1567
        %v2075 = vpop.f32.mrb[0].mxu0
        %v2076 = vadd.f32 0.0, %v2075
        %v2077 = vpop.f32.mrb[0].mxu0
        %v2078 = vpop.f32.mrb[0].mxu0
        %v2079 = vadd.f32 0.0, %v2078
        %v2080 = vpop.f32.mrb[0].mxu0
        %2081 = vmatprep.mubr.bf16.mxu0 0
        %2082 = vmatmul.mubr.bf16.gmra.mrb[0].mxu0 %v1570
        %v2083 = vpop.f32.mrb[0].mxu0
        %v2084 = vadd.f32 0.0, %v2083
        %v2085 = vpop.f32.mrb[0].mxu0
        %v2086 = vpop.f32.mrb[0].mxu0
        %v2087 = vadd.f32 0.0, %v2086
        %v2088 = vpop.f32.mrb[0].mxu0
        %2089 = vmatprep.mubr.bf16.mxu0 0
        %2090 = vmatmul.mubr.bf16.gmra.mrb[0].mxu0 %v1573
        %v2091 = vpop.f32.mrb[0].mxu0
        %v2092 = vadd.f32 0.0, %v2091
        %v2093 = vpop.f32.mrb[0].mxu0
        %v2094 = vpop.f32.mrb[0].mxu0
        %v2095 = vadd.f32 0.0, %v2094
        %v2096 = vpop.f32.mrb[0].mxu0
        %2097 = vmatprep.mubr.bf16.mxu0 0
        %2098 = vmatmul.mubr.bf16.gmra.mrb[0].mxu0 %v1576
        %v2099 = vpop.f32.mrb[0].mxu0
        %v2100 = vadd.f32 0.0, %v2099
        %v2101 = vpop.f32.mrb[0].mxu0
        %v2102 = vpop.f32.mrb[0].mxu0
        %v2103 = vadd.f32 0.0, %v2102
        %v2104 = vpop.f32.mrb[0].mxu0
        %2105 = vmatprep.mubr.bf16.mxu0 0
        %2106 = vmatmul.mubr.bf16.gmra.mrb[0].mxu0 %v1579
        %v2107 = vpop.f32.mrb[0].mxu0
        %v2108 = vadd.f32 0.0, %v2107
        %v2109 = vpop.f32.mrb[0].mxu0
        %v2110 = vpop.f32.mrb[0].mxu0
        %v2111 = vadd.f32 0.0, %v2110
        %v2112 = vpop.f32.mrb[0].mxu0
        %2113 = vmatprep.mubr.bf16.mxu0 0
        %2114 = vmatmul.mubr.bf16.gmra.mrb[0].mxu0 %v1582
        %v2115 = vpop.f32.mrb[0].mxu0
        %v2116 = vadd.f32 0.0, %v2115
        %v2117 = vpop.f32.mrb[0].mxu0
        %v2118 = vpop.f32.mrb[0].mxu0
        %v2119 = vadd.f32 0.0, %v2118
        %v2120 = vpop.f32.mrb[0].mxu0
        %2121 = vmatprep.mubr.bf16.mxu0 0
        %2122 = vmatmul.mubr.bf16.gmra.mrb[0].mxu0 %v1585
        %v2123 = vpop.f32.mrb[0].mxu0
        %v2124 = vadd.f32 0.0, %v2123
        %v2125 = vpop.f32.mrb[0].mxu0
        %v2126 = vpop.f32.mrb[0].mxu0
        %v2127 = vadd.f32 0.0, %v2126
        %v2128 = vpop.f32.mrb[0].mxu0
        %2129 = vmatprep.mubr.bf16.mxu0 0
        %2130 = vmatmul.mubr.bf16.gmra.mrb[0].mxu0 %v1977
        %v2131 = vpop.f32.mrb[0].mxu0
        %v2132 = vadd.f32 0.0, %v2131
        %v2133 = vpop.f32.mrb[0].mxu0
        %v2134 = vpop.f32.mrb[0].mxu0
        %v2135 = vadd.f32 0.0, %v2134
        %v2136 = vpop.f32.mrb[0].mxu0
        %2137 = vmatprep.mubr.bf16.mxu0 0
        %2138 = vmatmul.mubr.bf16.gmra.mrb[0].mxu0 %v1980
        %v2139 = vpop.f32.mrb[0].mxu0
        %v2140 = vadd.f32 0.0, %v2139
        %v2141 = vpop.f32.mrb[0].mxu0
        %v2142 = vpop.f32.mrb[0].mxu0
        %v2143 = vadd.f32 0.0, %v2142
        %v2144 = vpop.f32.mrb[0].mxu0
        %2145 = vdwg.mxu0
        %v2146 = vadd.f32 %v1822, %v2020
        %v2147 = vadd.f32 %v1825, %v2023
        %v2148 = vadd.f32 %v1830, %v2028
        %v2149 = vadd.f32 %v1833, %v2031
        %v2150 = vadd.f32 %v1838, %v2036
        %v2151 = vadd.f32 %v1841, %v2039
        %v2152 = vadd.f32 %v1846, %v2044
        %v2153 = vadd.f32 %v1849, %v2047
        %v2154 = vadd.f32 %v1854, %v2052
        %v2155 = vadd.f32 %v1857, %v2055
        %v2156 = vadd.f32 %v1862, %v2060
        %v2157 = vadd.f32 %v1865, %v2063
        %v2158 = vadd.f32 %v1870, %v2068
        %v2159 = vadd.f32 %v1873, %v2071
        %v2160 = vadd.f32 %v1878, %v2076
        %v2161 = vadd.f32 %v1881, %v2079
        %v2162 = vadd.f32 %v1886, %v2084
        %v2163 = vadd.f32 %v1889, %v2087
        %v2164 = vadd.f32 %v1894, %v2092
        %v2165 = vadd.f32 %v1897, %v2095
        %v2166 = vadd.f32 %v1902, %v2100
        %v2167 = vadd.f32 %v1905, %v2103
        %v2168 = vadd.f32 %v1910, %v2108
        %v2169 = vadd.f32 %v1913, %v2111
        %v2170 = vadd.f32 %v1918, %v2116
        %v2171 = vadd.f32 %v1921, %v2119
        %v2172 = vadd.f32 %v1926, %v2124
        %v2173 = vadd.f32 %v1929, %v2127
        %v2174 = vadd.f32 %v1934, %v2132
        %v2175 = vadd.f32 %v1937, %v2135
        %v2176 = vadd.f32 %v1942, %v2140
        %v2177 = vadd.f32 %v1945, %v2143
        %v2178 = vld [vmem:[#allocation4 + $0xc] sm:$0xf]
        %v2179 = vld [vmem:[#allocation4 + $0x20] sm:$0xf]
        %v2180 = vld [vmem:[#allocation4 + $0x34] sm:$0xf]
        %v2181 = vld [vmem:[#allocation4 + $0x48] sm:$0xf]
        %v2182 = vld [vmem:[#allocation4 + $0x5c] sm:$0xf]
        %v2183 = vld [vmem:[#allocation4 + $0x70] sm:$0xf]
        %v2184 = vld [vmem:[#allocation4 + $0x84] sm:$0xf]
        %v2185 = vld [vmem:[#allocation4 + $0x98] sm:$0xf]
        %v2186 = vld [vmem:[#allocation4 + $0xac] sm:$0xf]
        %v2187 = vld [vmem:[#allocation4 + $0xc0] sm:$0xf]
        %v2188 = vld [vmem:[#allocation4 + $0xd4] sm:$0xf]
        %v2189 = vld [vmem:[#allocation4 + $0xe8] sm:$0xf]
        %v2190 = vld [vmem:[#allocation4 + $0xfc] sm:$0xf]
        %v2191 = vld [vmem:[#allocation4 + $0x110] sm:$0xf]
        %v2192 = vld [vmem:[#allocation4 + $0x124] sm:$0xf]
        %v2193 = vld [vmem:[#allocation4 + $0x138] sm:$0xf]
        %v2194 = vld [vmem:[#allocation4 + $0x14c] sm:$0xf]
        %v2195 = vld [vmem:[#allocation4 + $0x160] sm:$0xf]
        %v2196 = vld [vmem:[#allocation4 + $0x174] sm:$0xf]
        %v2197 = vld [vmem:[#allocation4 + $0x188] sm:$0xf]
        %s2198 = scalar_lea.vmem %s3, 2
        %v2199 = vld [vmem:[%s2198] sm:$0x3]
        %v2216 = vunpack.c.l.b16 %v1265
        %v2217 = vunpack.c.l.b16 %v2178
        %v2218 = vunpack.c.l.b16 %v1268
        %v2219 = vunpack.c.l.b16 %v2179
        %v2220 = vunpack.c.l.b16 %v1271
        %v2221 = vunpack.c.l.b16 %v2180
        %v2222 = vunpack.c.l.b16 %v1274
        %v2223 = vunpack.c.l.b16 %v2181
        %v2224 = vunpack.c.l.b16 %v1277
        %v2225 = vunpack.c.l.b16 %v2182
        %v2226 = vunpack.c.l.b16 %v1280
        %v2227 = vunpack.c.l.b16 %v2183
        %v2228 = vunpack.c.l.b16 %v1283
        %v2229 = vunpack.c.l.b16 %v2184
        %v2230 = vunpack.c.l.b16 %v1286
        %v2231 = vunpack.c.l.b16 %v2185
        %v2232 = vunpack.c.l.b16 %v1289
        %v2233 = vunpack.c.l.b16 %v2186
        %v2234 = vunpack.c.l.b16 %v1292
        %v2235 = vunpack.c.l.b16 %v2187
        %v2236 = vunpack.c.l.b16 %v1295
        %v2237 = vunpack.c.l.b16 %v2188
        %v2238 = vunpack.c.l.b16 %v1298
        %v2239 = vunpack.c.l.b16 %v2189
        %v2240 = vunpack.c.l.b16 %v1301
        %v2241 = vunpack.c.l.b16 %v2190
        %v2242 = vunpack.c.l.b16 %v1304
        %v2243 = vunpack.c.l.b16 %v2191
        %v2244 = vunpack.c.l.b16 %v1307
        %v2245 = vunpack.c.l.b16 %v2192
        %v2246 = vunpack.c.l.b16 %v1310
        %v2247 = vunpack.c.l.b16 %v2193
        %v2248 = vpack.c.b16 %v2217, %v2216
        %v2249 = vpack.c.b16 %v2219, %v2218
        %v2250 = vpack.c.b16 %v2221, %v2220
        %v2251 = vpack.c.b16 %v2223, %v2222
        %v2252 = vpack.c.b16 %v2225, %v2224
        %v2253 = vpack.c.b16 %v2227, %v2226
        %v2254 = vpack.c.b16 %v2229, %v2228
        %v2255 = vpack.c.b16 %v2231, %v2230
        %v2256 = vpack.c.b16 %v2233, %v2232
        %v2257 = vpack.c.b16 %v2235, %v2234
        %v2258 = vpack.c.b16 %v2237, %v2236
        %v2259 = vpack.c.b16 %v2239, %v2238
        %v2260 = vpack.c.b16 %v2241, %v2240
        %v2261 = vpack.c.b16 %v2243, %v2242
        %v2262 = vpack.c.b16 %v2245, %v2244
        %v2263 = vpack.c.b16 %v2247, %v2246
        %v2265 = vsel %vm1538, %v2248, 0
        %v2268 = vsel %vm1538, %v2249, 0
        %v2271 = vsel %vm1538, %v2250, 0
        %v2274 = vsel %vm1538, %v2251, 0
        %v2277 = vsel %vm1538, %v2252, 0
        %v2280 = vsel %vm1538, %v2253, 0
        %v2283 = vsel %vm1538, %v2254, 0
        %v2286 = vsel %vm1538, %v2255, 0
        %v2289 = vsel %vm1538, %v2256, 0
        %v2292 = vsel %vm1538, %v2257, 0
        %v2295 = vsel %vm1538, %v2258, 0
        %v2298 = vsel %vm1538, %v2259, 0
        %v2301 = vsel %vm1538, %v2260, 0
        %v2304 = vsel %vm1538, %v2261, 0
        %v2307 = vsel %vm1538, %v2262, 0
        %v2310 = vsel %vm1538, %v2263, 0
        %v2313 = vsel %vm1587, %v2199, 0
        %2315 = vmatprep.subr.bf16.mxu0 0
        %2316 = vmatpush1.bf16.msra.mxu0 %v2313
        %2317 = vmatprep.subr.bf16.mxu0 0
        %2318 = vmatpush1.bf16.msra.mxu0 0
        %2319 = vmatprep.subr.bf16.mxu0 0
        %2320 = vmatpush1.bf16.msra.mxu0 0
        %2321 = vmatprep.subr.bf16.mxu0 0
        %2322 = vmatpush1.bf16.msra.mxu0 0
        %2323 = vmatprep.subr.bf16.mxu0 0
        %2324 = vmatpush1.bf16.msra.mxu0 0
        %2325 = vmatprep.subr.bf16.mxu0 0
        %2326 = vmatpush1.bf16.msra.mxu0 0
        %2327 = vmatprep.subr.bf16.mxu0 0
        %2328 = vmatpush1.bf16.msra.mxu0 0
        %2329 = vmatprep.subr.bf16.mxu0 0
        %2330 = vmatpush1.bf16.msra.mxu0 0
        %2331 = vmatprep.subr.bf16.mxu0 0
        %2332 = vmatpush1.bf16.msra.mxu0 0
        %2333 = vmatprep.subr.bf16.mxu0 0
        %2334 = vmatpush1.bf16.msra.mxu0 0
        %2335 = vmatprep.subr.bf16.mxu0 0
        %2336 = vmatpush1.bf16.msra.mxu0 0
        %2337 = vmatprep.subr.bf16.mxu0 0
        %2338 = vmatpush1.bf16.msra.mxu0 0
        %2339 = vmatprep.subr.bf16.mxu0 0
        %2340 = vmatpush1.bf16.msra.mxu0 0
        %2341 = vmatprep.subr.bf16.mxu0 0
        %2342 = vmatpush1.bf16.msra.mxu0 0
        %2343 = vmatprep.subr.bf16.mxu0 0
        %2344 = vmatpush1.bf16.msra.mxu0 0
        %2345 = vmatprep.subr.bf16.mxu0 0
        %2346 = vmatpush1.bf16.msra.mxu0 0
        %2347 = vmatprep.mubr.bf16.mxu0 0
        %2348 = vmatmul.mubr.bf16.gmra.mrb[0].mxu0 %v2265
        %v2349 = vpop.f32.mrb[0].mxu0
        %v2350 = vadd.f32 0.0, %v2349
        %v2351 = vpop.f32.mrb[0].mxu0
        %v2352 = vpop.f32.mrb[0].mxu0
        %v2353 = vadd.f32 0.0, %v2352
        %v2354 = vpop.f32.mrb[0].mxu0
        %2355 = vmatprep.mubr.bf16.mxu0 0
        %2356 = vmatmul.mubr.bf16.gmra.mrb[0].mxu0 %v2268
        %v2357 = vpop.f32.mrb[0].mxu0
        %v2358 = vadd.f32 0.0, %v2357
        %v2359 = vpop.f32.mrb[0].mxu0
        %v2360 = vpop.f32.mrb[0].mxu0
        %v2361 = vadd.f32 0.0, %v2360
        %v2362 = vpop.f32.mrb[0].mxu0
        %2363 = vmatprep.mubr.bf16.mxu0 0
        %2364 = vmatmul.mubr.bf16.gmra.mrb[0].mxu0 %v2271
        %v2365 = vpop.f32.mrb[0].mxu0
        %v2366 = vadd.f32 0.0, %v2365
        %v2367 = vpop.f32.mrb[0].mxu0
        %v2368 = vpop.f32.mrb[0].mxu0
        %v2369 = vadd.f32 0.0, %v2368
        %v2370 = vpop.f32.mrb[0].mxu0
        %2371 = vmatprep.mubr.bf16.mxu0 0
        %2372 = vmatmul.mubr.bf16.gmra.mrb[0].mxu0 %v2274
        %v2373 = vpop.f32.mrb[0].mxu0
        %v2374 = vadd.f32 0.0, %v2373
        %v2375 = vpop.f32.mrb[0].mxu0
        %v2376 = vpop.f32.mrb[0].mxu0
        %v2377 = vadd.f32 0.0, %v2376
        %v2378 = vpop.f32.mrb[0].mxu0
        %2379 = vmatprep.mubr.bf16.mxu0 0
        %2380 = vmatmul.mubr.bf16.gmra.mrb[0].mxu0 %v2277
        %v2381 = vpop.f32.mrb[0].mxu0
        %v2382 = vadd.f32 0.0, %v2381
        %v2383 = vpop.f32.mrb[0].mxu0
        %v2384 = vpop.f32.mrb[0].mxu0
        %v2385 = vadd.f32 0.0, %v2384
        %v2386 = vpop.f32.mrb[0].mxu0
        %2387 = vmatprep.mubr.bf16.mxu0 0
        %2388 = vmatmul.mubr.bf16.gmra.mrb[0].mxu0 %v2280
        %v2389 = vpop.f32.mrb[0].mxu0
        %v2390 = vadd.f32 0.0, %v2389
        %v2391 = vpop.f32.mrb[0].mxu0
        %v2392 = vpop.f32.mrb[0].mxu0
        %v2393 = vadd.f32 0.0, %v2392
        %v2394 = vpop.f32.mrb[0].mxu0
        %2395 = vmatprep.mubr.bf16.mxu0 0
        %2396 = vmatmul.mubr.bf16.gmra.mrb[0].mxu0 %v2283
        %v2397 = vpop.f32.mrb[0].mxu0
        %v2398 = vadd.f32 0.0, %v2397
        %v2399 = vpop.f32.mrb[0].mxu0
        %v2400 = vpop.f32.mrb[0].mxu0
        %v2401 = vadd.f32 0.0, %v2400
        %v2402 = vpop.f32.mrb[0].mxu0
        %2403 = vmatprep.mubr.bf16.mxu0 0
        %2404 = vmatmul.mubr.bf16.gmra.mrb[0].mxu0 %v2286
        %v2405 = vpop.f32.mrb[0].mxu0
        %v2406 = vadd.f32 0.0, %v2405
        %v2407 = vpop.f32.mrb[0].mxu0
        %v2408 = vpop.f32.mrb[0].mxu0
        %v2409 = vadd.f32 0.0, %v2408
        %v2410 = vpop.f32.mrb[0].mxu0
        %2411 = vmatprep.mubr.bf16.mxu0 0
        %2412 = vmatmul.mubr.bf16.gmra.mrb[0].mxu0 %v2289
        %v2413 = vpop.f32.mrb[0].mxu0
        %v2414 = vadd.f32 0.0, %v2413
        %v2415 = vpop.f32.mrb[0].mxu0
        %v2416 = vpop.f32.mrb[0].mxu0
        %v2417 = vadd.f32 0.0, %v2416
        %v2418 = vpop.f32.mrb[0].mxu0
        %2419 = vmatprep.mubr.bf16.mxu0 0
        %2420 = vmatmul.mubr.bf16.gmra.mrb[0].mxu0 %v2292
        %v2421 = vpop.f32.mrb[0].mxu0
        %v2422 = vadd.f32 0.0, %v2421
        %v2423 = vpop.f32.mrb[0].mxu0
        %v2424 = vpop.f32.mrb[0].mxu0
        %v2425 = vadd.f32 0.0, %v2424
        %v2426 = vpop.f32.mrb[0].mxu0
        %2427 = vmatprep.mubr.bf16.mxu0 0
        %2428 = vmatmul.mubr.bf16.gmra.mrb[0].mxu0 %v2295
        %v2429 = vpop.f32.mrb[0].mxu0
        %v2430 = vadd.f32 0.0, %v2429
        %v2431 = vpop.f32.mrb[0].mxu0
        %v2432 = vpop.f32.mrb[0].mxu0
        %v2433 = vadd.f32 0.0, %v2432
        %v2434 = vpop.f32.mrb[0].mxu0
        %2435 = vmatprep.mubr.bf16.mxu0 0
        %2436 = vmatmul.mubr.bf16.gmra.mrb[0].mxu0 %v2298
        %v2437 = vpop.f32.mrb[0].mxu0
        %v2438 = vadd.f32 0.0, %v2437
        %v2439 = vpop.f32.mrb[0].mxu0
        %v2440 = vpop.f32.mrb[0].mxu0
        %v2441 = vadd.f32 0.0, %v2440
        %v2442 = vpop.f32.mrb[0].mxu0
        %2443 = vmatprep.mubr.bf16.mxu0 0
        %2444 = vmatmul.mubr.bf16.gmra.mrb[0].mxu0 %v2301
        %v2445 = vpop.f32.mrb[0].mxu0
        %v2446 = vadd.f32 0.0, %v2445
        %v2447 = vpop.f32.mrb[0].mxu0
        %v2448 = vpop.f32.mrb[0].mxu0
        %v2449 = vadd.f32 0.0, %v2448
        %v2450 = vpop.f32.mrb[0].mxu0
        %2451 = vmatprep.mubr.bf16.mxu0 0
        %2452 = vmatmul.mubr.bf16.gmra.mrb[0].mxu0 %v2304
        %v2453 = vpop.f32.mrb[0].mxu0
        %v2454 = vadd.f32 0.0, %v2453
        %v2455 = vpop.f32.mrb[0].mxu0
        %v2456 = vpop.f32.mrb[0].mxu0
        %v2457 = vadd.f32 0.0, %v2456
        %v2458 = vpop.f32.mrb[0].mxu0
        %2459 = vmatprep.mubr.bf16.mxu0 0
        %2460 = vmatmul.mubr.bf16.gmra.mrb[0].mxu0 %v2307
        %v2461 = vpop.f32.mrb[0].mxu0
        %v2462 = vadd.f32 0.0, %v2461
        %v2463 = vpop.f32.mrb[0].mxu0
        %v2464 = vpop.f32.mrb[0].mxu0
        %v2465 = vadd.f32 0.0, %v2464
        %v2466 = vpop.f32.mrb[0].mxu0
        %2467 = vmatprep.mubr.bf16.mxu0 0
        %2468 = vmatmul.mubr.bf16.gmra.mrb[0].mxu0 %v2310
        %v2469 = vpop.f32.mrb[0].mxu0
        %v2470 = vadd.f32 0.0, %v2469
        %v2471 = vpop.f32.mrb[0].mxu0
        %v2472 = vpop.f32.mrb[0].mxu0
        %v2473 = vadd.f32 0.0, %v2472
        %v2474 = vpop.f32.mrb[0].mxu0
        %2475 = vdwg.mxu0
        %v2476 = vadd.f32 %v2146, %v2350
        %v2477 = vadd.f32 %v2147, %v2353
        %v2478 = vadd.f32 %v2148, %v2358
        %v2479 = vadd.f32 %v2149, %v2361
        %v2480 = vadd.f32 %v2150, %v2366
        %v2481 = vadd.f32 %v2151, %v2369
        %v2482 = vadd.f32 %v2152, %v2374
        %v2483 = vadd.f32 %v2153, %v2377
        %v2484 = vadd.f32 %v2154, %v2382
        %v2485 = vadd.f32 %v2155, %v2385
        %v2486 = vadd.f32 %v2156, %v2390
        %v2487 = vadd.f32 %v2157, %v2393
        %v2488 = vadd.f32 %v2158, %v2398
        %v2489 = vadd.f32 %v2159, %v2401
        %v2490 = vadd.f32 %v2160, %v2406
        %v2491 = vadd.f32 %v2161, %v2409
        %v2492 = vadd.f32 %v2162, %v2414
        %v2493 = vadd.f32 %v2163, %v2417
        %v2494 = vadd.f32 %v2164, %v2422
        %v2495 = vadd.f32 %v2165, %v2425
        %v2496 = vadd.f32 %v2166, %v2430
        %v2497 = vadd.f32 %v2167, %v2433
        %v2498 = vadd.f32 %v2168, %v2438
        %v2499 = vadd.f32 %v2169, %v2441
        %v2500 = vadd.f32 %v2170, %v2446
        %v2501 = vadd.f32 %v2171, %v2449
        %v2502 = vadd.f32 %v2172, %v2454
        %v2503 = vadd.f32 %v2173, %v2457
        %v2504 = vadd.f32 %v2174, %v2462
        %v2505 = vadd.f32 %v2175, %v2465
        %v2506 = vadd.f32 %v2176, %v2470
        %v2507 = vadd.f32 %v2177, %v2473
        %s2508 = scalar_lea.vmem %s3, 8
        %v2509 = vld [vmem:[%s2508] sm:$0x3]
        %v2512 = vunpack.c.l.b16 %v1313
        %v2513 = vunpack.c.l.b16 %v2194
        %v2514 = vunpack.c.l.b16 %v1316
        %v2515 = vunpack.c.l.b16 %v2195
        %v2516 = vpack.c.b16 %v2513, %v2512
        %v2517 = vpack.c.b16 %v2515, %v2514
        %v2519 = vsel %vm1538, %v2516, 0
        %v2522 = vsel %vm1538, %v2517, 0
        %v2525 = vsel %vm1587, %v2509, 0
        %2527 = vmatprep.subr.bf16.mxu0 0
        %2528 = vmatpush1.bf16.msra.mxu0 %v2525
        %2529 = vmatprep.subr.bf16.mxu0 0
        %2530 = vmatpush1.bf16.msra.mxu0 0
        %2531 = vmatprep.subr.bf16.mxu0 0
        %2532 = vmatpush1.bf16.msra.mxu0 0
        %2533 = vmatprep.subr.bf16.mxu0 0
        %2534 = vmatpush1.bf16.msra.mxu0 0
        %2535 = vmatprep.subr.bf16.mxu0 0
        %2536 = vmatpush1.bf16.msra.mxu0 0
        %2537 = vmatprep.subr.bf16.mxu0 0
        %2538 = vmatpush1.bf16.msra.mxu0 0
        %2539 = vmatprep.subr.bf16.mxu0 0
        %2540 = vmatpush1.bf16.msra.mxu0 0
        %2541 = vmatprep.subr.bf16.mxu0 0
        %2542 = vmatpush1.bf16.msra.mxu0 0
        %2543 = vmatprep.subr.bf16.mxu0 0
        %2544 = vmatpush1.bf16.msra.mxu0 0
        %2545 = vmatprep.subr.bf16.mxu0 0
        %2546 = vmatpush1.bf16.msra.mxu0 0
        %2547 = vmatprep.subr.bf16.mxu0 0
        %2548 = vmatpush1.bf16.msra.mxu0 0
        %2549 = vmatprep.subr.bf16.mxu0 0
        %2550 = vmatpush1.bf16.msra.mxu0 0
        %2551 = vmatprep.subr.bf16.mxu0 0
        %2552 = vmatpush1.bf16.msra.mxu0 0
        %2553 = vmatprep.subr.bf16.mxu0 0
        %2554 = vmatpush1.bf16.msra.mxu0 0
        %2555 = vmatprep.subr.bf16.mxu0 0
        %2556 = vmatpush1.bf16.msra.mxu0 0
        %2557 = vmatprep.subr.bf16.mxu0 0
        %2558 = vmatpush1.bf16.msra.mxu0 0
        %2559 = vmatprep.mubr.bf16.mxu0 0
        %2560 = vmatmul.mubr.bf16.gmra.mrb[0].mxu0 %v2271
        %v2561 = vpop.f32.mrb[0].mxu0
        %v2562 = vadd.f32 0.0, %v2561
        %v2563 = vpop.f32.mrb[0].mxu0
        %v2564 = vpop.f32.mrb[0].mxu0
        %v2565 = vadd.f32 0.0, %v2564
        %v2566 = vpop.f32.mrb[0].mxu0
        %2567 = vmatprep.mubr.bf16.mxu0 0
        %2568 = vmatmul.mubr.bf16.gmra.mrb[0].mxu0 %v2274
        %v2569 = vpop.f32.mrb[0].mxu0
        %v2570 = vadd.f32 0.0, %v2569
        %v2571 = vpop.f32.mrb[0].mxu0
        %v2572 = vpop.f32.mrb[0].mxu0
        %v2573 = vadd.f32 0.0, %v2572
        %v2574 = vpop.f32.mrb[0].mxu0
        %2575 = vmatprep.mubr.bf16.mxu0 0
        %2576 = vmatmul.mubr.bf16.gmra.mrb[0].mxu0 %v2277
        %v2577 = vpop.f32.mrb[0].mxu0
        %v2578 = vadd.f32 0.0, %v2577
        %v2579 = vpop.f32.mrb[0].mxu0
        %v2580 = vpop.f32.mrb[0].mxu0
        %v2581 = vadd.f32 0.0, %v2580
        %v2582 = vpop.f32.mrb[0].mxu0
        %2583 = vmatprep.mubr.bf16.mxu0 0
        %2584 = vmatmul.mubr.bf16.gmra.mrb[0].mxu0 %v2280
        %v2585 = vpop.f32.mrb[0].mxu0
        %v2586 = vadd.f32 0.0, %v2585
        %v2587 = vpop.f32.mrb[0].mxu0
        %v2588 = vpop.f32.mrb[0].mxu0
        %v2589 = vadd.f32 0.0, %v2588
        %v2590 = vpop.f32.mrb[0].mxu0
        %2591 = vmatprep.mubr.bf16.mxu0 0
        %2592 = vmatmul.mubr.bf16.gmra.mrb[0].mxu0 %v2283
        %v2593 = vpop.f32.mrb[0].mxu0
        %v2594 = vadd.f32 0.0, %v2593
        %v2595 = vpop.f32.mrb[0].mxu0
        %v2596 = vpop.f32.mrb[0].mxu0
        %v2597 = vadd.f32 0.0, %v2596
        %v2598 = vpop.f32.mrb[0].mxu0
        %2599 = vmatprep.mubr.bf16.mxu0 0
        %2600 = vmatmul.mubr.bf16.gmra.mrb[0].mxu0 %v2286
        %v2601 = vpop.f32.mrb[0].mxu0
        %v2602 = vadd.f32 0.0, %v2601
        %v2603 = vpop.f32.mrb[0].mxu0
        %v2604 = vpop.f32.mrb[0].mxu0
        %v2605 = vadd.f32 0.0, %v2604
        %v2606 = vpop.f32.mrb[0].mxu0
        %2607 = vmatprep.mubr.bf16.mxu0 0
        %2608 = vmatmul.mubr.bf16.gmra.mrb[0].mxu0 %v2289
        %v2609 = vpop.f32.mrb[0].mxu0
        %v2610 = vadd.f32 0.0, %v2609
        %v2611 = vpop.f32.mrb[0].mxu0
        %v2612 = vpop.f32.mrb[0].mxu0
        %v2613 = vadd.f32 0.0, %v2612
        %v2614 = vpop.f32.mrb[0].mxu0
        %2615 = vmatprep.mubr.bf16.mxu0 0
        %2616 = vmatmul.mubr.bf16.gmra.mrb[0].mxu0 %v2292
        %v2617 = vpop.f32.mrb[0].mxu0
        %v2618 = vadd.f32 0.0, %v2617
        %v2619 = vpop.f32.mrb[0].mxu0
        %v2620 = vpop.f32.mrb[0].mxu0
        %v2621 = vadd.f32 0.0, %v2620
        %v2622 = vpop.f32.mrb[0].mxu0
        %2623 = vmatprep.mubr.bf16.mxu0 0
        %2624 = vmatmul.mubr.bf16.gmra.mrb[0].mxu0 %v2295
        %v2625 = vpop.f32.mrb[0].mxu0
        %v2626 = vadd.f32 0.0, %v2625
        %v2627 = vpop.f32.mrb[0].mxu0
        %v2628 = vpop.f32.mrb[0].mxu0
        %v2629 = vadd.f32 0.0, %v2628
        %v2630 = vpop.f32.mrb[0].mxu0
        %2631 = vmatprep.mubr.bf16.mxu0 0
        %2632 = vmatmul.mubr.bf16.gmra.mrb[0].mxu0 %v2298
        %v2633 = vpop.f32.mrb[0].mxu0
        %v2634 = vadd.f32 0.0, %v2633
        %v2635 = vpop.f32.mrb[0].mxu0
        %v2636 = vpop.f32.mrb[0].mxu0
        %v2637 = vadd.f32 0.0, %v2636
        %v2638 = vpop.f32.mrb[0].mxu0
        %2639 = vmatprep.mubr.bf16.mxu0 0
        %2640 = vmatmul.mubr.bf16.gmra.mrb[0].mxu0 %v2301
        %v2641 = vpop.f32.mrb[0].mxu0
        %v2642 = vadd.f32 0.0, %v2641
        %v2643 = vpop.f32.mrb[0].mxu0
        %v2644 = vpop.f32.mrb[0].mxu0
        %v2645 = vadd.f32 0.0, %v2644
        %v2646 = vpop.f32.mrb[0].mxu0
        %2647 = vmatprep.mubr.bf16.mxu0 0
        %2648 = vmatmul.mubr.bf16.gmra.mrb[0].mxu0 %v2304
        %v2649 = vpop.f32.mrb[0].mxu0
        %v2650 = vadd.f32 0.0, %v2649
        %v2651 = vpop.f32.mrb[0].mxu0
        %v2652 = vpop.f32.mrb[0].mxu0
        %v2653 = vadd.f32 0.0, %v2652
        %v2654 = vpop.f32.mrb[0].mxu0
        %2655 = vmatprep.mubr.bf16.mxu0 0
        %2656 = vmatmul.mubr.bf16.gmra.mrb[0].mxu0 %v2307
        %v2657 = vpop.f32.mrb[0].mxu0
        %v2658 = vadd.f32 0.0, %v2657
        %v2659 = vpop.f32.mrb[0].mxu0
        %v2660 = vpop.f32.mrb[0].mxu0
        %v2661 = vadd.f32 0.0, %v2660
        %v2662 = vpop.f32.mrb[0].mxu0
        %2663 = vmatprep.mubr.bf16.mxu0 0
        %2664 = vmatmul.mubr.bf16.gmra.mrb[0].mxu0 %v2310
        %v2665 = vpop.f32.mrb[0].mxu0
        %v2666 = vadd.f32 0.0, %v2665
        %v2667 = vpop.f32.mrb[0].mxu0
        %v2668 = vpop.f32.mrb[0].mxu0
        %v2669 = vadd.f32 0.0, %v2668
        %v2670 = vpop.f32.mrb[0].mxu0
        %2671 = vmatprep.mubr.bf16.mxu0 0
        %2672 = vmatmul.mubr.bf16.gmra.mrb[0].mxu0 %v2519
        %v2673 = vpop.f32.mrb[0].mxu0
        %v2674 = vadd.f32 0.0, %v2673
        %v2675 = vpop.f32.mrb[0].mxu0
        %v2676 = vpop.f32.mrb[0].mxu0
        %v2677 = vadd.f32 0.0, %v2676
        %v2678 = vpop.f32.mrb[0].mxu0
        %2679 = vmatprep.mubr.bf16.mxu0 0
        %2680 = vmatmul.mubr.bf16.gmra.mrb[0].mxu0 %v2522
        %v2681 = vpop.f32.mrb[0].mxu0
        %v2682 = vadd.f32 0.0, %v2681
        %v2683 = vpop.f32.mrb[0].mxu0
        %v2684 = vpop.f32.mrb[0].mxu0
        %v2685 = vadd.f32 0.0, %v2684
        %v2686 = vpop.f32.mrb[0].mxu0
        %2687 = vdwg.mxu0
        %v2688 = vadd.f32 %v2476, %v2562
        %v2689 = vadd.f32 %v2477, %v2565
        %v2690 = vadd.f32 %v2478, %v2570
        %v2691 = vadd.f32 %v2479, %v2573
        %v2692 = vadd.f32 %v2480, %v2578
        %v2693 = vadd.f32 %v2481, %v2581
        %v2694 = vadd.f32 %v2482, %v2586
        %v2695 = vadd.f32 %v2483, %v2589
        %v2696 = vadd.f32 %v2484, %v2594
        %v2697 = vadd.f32 %v2485, %v2597
        %v2698 = vadd.f32 %v2486, %v2602
        %v2699 = vadd.f32 %v2487, %v2605
        %v2700 = vadd.f32 %v2488, %v2610
        %v2701 = vadd.f32 %v2489, %v2613
        %v2702 = vadd.f32 %v2490, %v2618
        %v2703 = vadd.f32 %v2491, %v2621
        %v2704 = vadd.f32 %v2492, %v2626
        %v2705 = vadd.f32 %v2493, %v2629
        %v2706 = vadd.f32 %v2494, %v2634
        %v2707 = vadd.f32 %v2495, %v2637
        %v2708 = vadd.f32 %v2496, %v2642
        %v2709 = vadd.f32 %v2497, %v2645
        %v2710 = vadd.f32 %v2498, %v2650
        %v2711 = vadd.f32 %v2499, %v2653
        %v2712 = vadd.f32 %v2500, %v2658
        %v2713 = vadd.f32 %v2501, %v2661
        %v2714 = vadd.f32 %v2502, %v2666
        %v2715 = vadd.f32 %v2503, %v2669
        %v2716 = vadd.f32 %v2504, %v2674
        %v2717 = vadd.f32 %v2505, %v2677
        %v2718 = vadd.f32 %v2506, %v2682
        %v2719 = vadd.f32 %v2507, %v2685
        %s2720 = scalar_lea.vmem %s3, 14
        %v2721 = vld [vmem:[%s2720] sm:$0x3]
        %v2724 = vunpack.c.l.b16 %v1319
        %v2725 = vunpack.c.l.b16 %v2196
        %v2726 = vunpack.c.l.b16 %v1322
        %v2727 = vunpack.c.l.b16 %v2197
        %v2728 = vpack.c.b16 %v2725, %v2724
        %v2729 = vpack.c.b16 %v2727, %v2726
        %v2731 = vsel %vm1538, %v2728, 0
        %v2734 = vsel %vm1538, %v2729, 0
        %v2737 = vsel %vm1587, %v2721, 0
        %2739 = vmatprep.subr.bf16.mxu0 0
        %2740 = vmatpush1.bf16.msra.mxu0 %v2737
        %2741 = vmatprep.subr.bf16.mxu0 0
        %2742 = vmatpush1.bf16.msra.mxu0 0
        %2743 = vmatprep.subr.bf16.mxu0 0
        %2744 = vmatpush1.bf16.msra.mxu0 0
        %2745 = vmatprep.subr.bf16.mxu0 0
        %2746 = vmatpush1.bf16.msra.mxu0 0
        %2747 = vmatprep.subr.bf16.mxu0 0
        %2748 = vmatpush1.bf16.msra.mxu0 0
        %2749 = vmatprep.subr.bf16.mxu0 0
        %2750 = vmatpush1.bf16.msra.mxu0 0
        %2751 = vmatprep.subr.bf16.mxu0 0
        %2752 = vmatpush1.bf16.msra.mxu0 0
        %2753 = vmatprep.subr.bf16.mxu0 0
        %2754 = vmatpush1.bf16.msra.mxu0 0
        %2755 = vmatprep.subr.bf16.mxu0 0
        %2756 = vmatpush1.bf16.msra.mxu0 0
        %2757 = vmatprep.subr.bf16.mxu0 0
        %2758 = vmatpush1.bf16.msra.mxu0 0
        %2759 = vmatprep.subr.bf16.mxu0 0
        %2760 = vmatpush1.bf16.msra.mxu0 0
        %2761 = vmatprep.subr.bf16.mxu0 0
        %2762 = vmatpush1.bf16.msra.mxu0 0
        %2763 = vmatprep.subr.bf16.mxu0 0
        %2764 = vmatpush1.bf16.msra.mxu0 0
        %2765 = vmatprep.subr.bf16.mxu0 0
        %2766 = vmatpush1.bf16.msra.mxu0 0
        %2767 = vmatprep.subr.bf16.mxu0 0
        %2768 = vmatpush1.bf16.msra.mxu0 0
        %2769 = vmatprep.subr.bf16.mxu0 0
        %2770 = vmatpush1.bf16.msra.mxu0 0
        %2771 = vmatprep.mubr.bf16.mxu0 0
        %2772 = vmatmul.mubr.bf16.gmra.mrb[0].mxu0 %v2277
        %v2773 = vpop.f32.mrb[0].mxu0
        %v2774 = vadd.f32 0.0, %v2773
        %v2775 = vpop.f32.mrb[0].mxu0
        %v2776 = vpop.f32.mrb[0].mxu0
        %v2777 = vadd.f32 0.0, %v2776
        %v2778 = vpop.f32.mrb[0].mxu0
        %2779 = vmatprep.mubr.bf16.mxu0 0
        %2780 = vmatmul.mubr.bf16.gmra.mrb[0].mxu0 %v2280
        %v2781 = vpop.f32.mrb[0].mxu0
        %v2782 = vadd.f32 0.0, %v2781
        %v2783 = vpop.f32.mrb[0].mxu0
        %v2784 = vpop.f32.mrb[0].mxu0
        %v2785 = vadd.f32 0.0, %v2784
        %v2786 = vpop.f32.mrb[0].mxu0
        %2787 = vmatprep.mubr.bf16.mxu0 0
        %2788 = vmatmul.mubr.bf16.gmra.mrb[0].mxu0 %v2283
        %v2789 = vpop.f32.mrb[0].mxu0
        %v2790 = vadd.f32 0.0, %v2789
        %v2791 = vpop.f32.mrb[0].mxu0
        %v2792 = vpop.f32.mrb[0].mxu0
        %v2793 = vadd.f32 0.0, %v2792
        %v2794 = vpop.f32.mrb[0].mxu0
        %2795 = vmatprep.mubr.bf16.mxu0 0
        %2796 = vmatmul.mubr.bf16.gmra.mrb[0].mxu0 %v2286
        %v2797 = vpop.f32.mrb[0].mxu0
        %v2798 = vadd.f32 0.0, %v2797
        %v2799 = vpop.f32.mrb[0].mxu0
        %v2800 = vpop.f32.mrb[0].mxu0
        %v2801 = vadd.f32 0.0, %v2800
        %v2802 = vpop.f32.mrb[0].mxu0
        %2803 = vmatprep.mubr.bf16.mxu0 0
        %2804 = vmatmul.mubr.bf16.gmra.mrb[0].mxu0 %v2289
        %v2805 = vpop.f32.mrb[0].mxu0
        %v2806 = vadd.f32 0.0, %v2805
        %v2807 = vpop.f32.mrb[0].mxu0
        %v2808 = vpop.f32.mrb[0].mxu0
        %v2809 = vadd.f32 0.0, %v2808
        %v2810 = vpop.f32.mrb[0].mxu0
        %2811 = vmatprep.mubr.bf16.mxu0 0
        %2812 = vmatmul.mubr.bf16.gmra.mrb[0].mxu0 %v2292
        %v2813 = vpop.f32.mrb[0].mxu0
        %v2814 = vadd.f32 0.0, %v2813
        %v2815 = vpop.f32.mrb[0].mxu0
        %v2816 = vpop.f32.mrb[0].mxu0
        %v2817 = vadd.f32 0.0, %v2816
        %v2818 = vpop.f32.mrb[0].mxu0
        %2819 = vmatprep.mubr.bf16.mxu0 0
        %2820 = vmatmul.mubr.bf16.gmra.mrb[0].mxu0 %v2295
        %v2821 = vpop.f32.mrb[0].mxu0
        %v2822 = vadd.f32 0.0, %v2821
        %v2823 = vpop.f32.mrb[0].mxu0
        %v2824 = vpop.f32.mrb[0].mxu0
        %v2825 = vadd.f32 0.0, %v2824
        %v2826 = vpop.f32.mrb[0].mxu0
        %2827 = vmatprep.mubr.bf16.mxu0 0
        %2828 = vmatmul.mubr.bf16.gmra.mrb[0].mxu0 %v2298
        %v2829 = vpop.f32.mrb[0].mxu0
        %v2830 = vadd.f32 0.0, %v2829
        %v2831 = vpop.f32.mrb[0].mxu0
        %v2832 = vpop.f32.mrb[0].mxu0
        %v2833 = vadd.f32 0.0, %v2832
        %v2834 = vpop.f32.mrb[0].mxu0
        %2835 = vmatprep.mubr.bf16.mxu0 0
        %2836 = vmatmul.mubr.bf16.gmra.mrb[0].mxu0 %v2301
        %v2837 = vpop.f32.mrb[0].mxu0
        %v2838 = vadd.f32 0.0, %v2837
        %v2839 = vpop.f32.mrb[0].mxu0
        %v2840 = vpop.f32.mrb[0].mxu0
        %v2841 = vadd.f32 0.0, %v2840
        %v2842 = vpop.f32.mrb[0].mxu0
        %2843 = vmatprep.mubr.bf16.mxu0 0
        %2844 = vmatmul.mubr.bf16.gmra.mrb[0].mxu0 %v2304
        %v2845 = vpop.f32.mrb[0].mxu0
        %v2846 = vadd.f32 0.0, %v2845
        %v2847 = vpop.f32.mrb[0].mxu0
        %v2848 = vpop.f32.mrb[0].mxu0
        %v2849 = vadd.f32 0.0, %v2848
        %v2850 = vpop.f32.mrb[0].mxu0
        %2851 = vmatprep.mubr.bf16.mxu0 0
        %2852 = vmatmul.mubr.bf16.gmra.mrb[0].mxu0 %v2307
        %v2853 = vpop.f32.mrb[0].mxu0
        %v2854 = vadd.f32 0.0, %v2853
        %v2855 = vpop.f32.mrb[0].mxu0
        %v2856 = vpop.f32.mrb[0].mxu0
        %v2857 = vadd.f32 0.0, %v2856
        %v2858 = vpop.f32.mrb[0].mxu0
        %2859 = vmatprep.mubr.bf16.mxu0 0
        %2860 = vmatmul.mubr.bf16.gmra.mrb[0].mxu0 %v2310
        %v2861 = vpop.f32.mrb[0].mxu0
        %v2862 = vadd.f32 0.0, %v2861
        %v2863 = vpop.f32.mrb[0].mxu0
        %v2864 = vpop.f32.mrb[0].mxu0
        %v2865 = vadd.f32 0.0, %v2864
        %v2866 = vpop.f32.mrb[0].mxu0
        %2867 = vmatprep.mubr.bf16.mxu0 0
        %2868 = vmatmul.mubr.bf16.gmra.mrb[0].mxu0 %v2519
        %v2869 = vpop.f32.mrb[0].mxu0
        %v2870 = vadd.f32 0.0, %v2869
        %v2871 = vpop.f32.mrb[0].mxu0
        %v2872 = vpop.f32.mrb[0].mxu0
        %v2873 = vadd.f32 0.0, %v2872
        %v2874 = vpop.f32.mrb[0].mxu0
        %2875 = vmatprep.mubr.bf16.mxu0 0
        %2876 = vmatmul.mubr.bf16.gmra.mrb[0].mxu0 %v2522
        %v2877 = vpop.f32.mrb[0].mxu0
        %v2878 = vadd.f32 0.0, %v2877
        %v2879 = vpop.f32.mrb[0].mxu0
        %v2880 = vpop.f32.mrb[0].mxu0
        %v2881 = vadd.f32 0.0, %v2880
        %v2882 = vpop.f32.mrb[0].mxu0
        %2883 = vmatprep.mubr.bf16.mxu0 0
        %2884 = vmatmul.mubr.bf16.gmra.mrb[0].mxu0 %v2731
        %v2885 = vpop.f32.mrb[0].mxu0
        %v2886 = vadd.f32 0.0, %v2885
        %v2887 = vpop.f32.mrb[0].mxu0
        %v2888 = vpop.f32.mrb[0].mxu0
        %v2889 = vadd.f32 0.0, %v2888
        %v2890 = vpop.f32.mrb[0].mxu0
        %2891 = vmatprep.mubr.bf16.mxu0 0
        %2892 = vmatmul.mubr.bf16.gmra.mrb[0].mxu0 %v2734
        %v2893 = vpop.f32.mrb[0].mxu0
        %v2894 = vadd.f32 0.0, %v2893
        %v2895 = vpop.f32.mrb[0].mxu0
        %v2896 = vpop.f32.mrb[0].mxu0
        %v2897 = vadd.f32 0.0, %v2896
        %v2898 = vpop.f32.mrb[0].mxu0
        %2899 = vdwg.mxu0
        %v2900 = vadd.f32 %v2688, %v2774
        %v2901 = vadd.f32 %v2689, %v2777
        %v2902 = vadd.f32 %v2690, %v2782
        %v2903 = vadd.f32 %v2691, %v2785
        %v2904 = vadd.f32 %v2692, %v2790
        %v2905 = vadd.f32 %v2693, %v2793
        %v2906 = vadd.f32 %v2694, %v2798
        %v2907 = vadd.f32 %v2695, %v2801
        %v2908 = vadd.f32 %v2696, %v2806
        %v2909 = vadd.f32 %v2697, %v2809
        %v2910 = vadd.f32 %v2698, %v2814
        %v2911 = vadd.f32 %v2699, %v2817
        %v2912 = vadd.f32 %v2700, %v2822
        %v2913 = vadd.f32 %v2701, %v2825
        %v2914 = vadd.f32 %v2702, %v2830
        %v2915 = vadd.f32 %v2703, %v2833
        %v2916 = vadd.f32 %v2704, %v2838
        %v2917 = vadd.f32 %v2705, %v2841
        %v2918 = vadd.f32 %v2706, %v2846
        %v2919 = vadd.f32 %v2707, %v2849
        %v2920 = vadd.f32 %v2708, %v2854
        %v2921 = vadd.f32 %v2709, %v2857
        %v2922 = vadd.f32 %v2710, %v2862
        %v2923 = vadd.f32 %v2711, %v2865
        %v2924 = vadd.f32 %v2712, %v2870
        %v2925 = vadd.f32 %v2713, %v2873
        %v2926 = vadd.f32 %v2714, %v2878
        %v2927 = vadd.f32 %v2715, %v2881
        %v2928 = vadd.f32 %v2716, %v2886
        %v2929 = vadd.f32 %v2717, %v2889
        %v2930 = vadd.f32 %v2718, %v2894
        %v2931 = vadd.f32 %v2719, %v2897
        %v2932 = vld [vmem:[#allocation4 + $0x8] sm:$0xe]
        %v2933 = vld [vmem:[#allocation4 + $0xc] sm:$0xf]
        %v2934 = vld [vmem:[#allocation4 + $0x10] sm:$0x1]
        %v2935 = vld [vmem:[#allocation4 + $0x1c] sm:$0xe]
        %v2936 = vld [vmem:[#allocation4 + $0x20] sm:$0xf]
        %v2937 = vld [vmem:[#allocation4 + $0x24] sm:$0x1]
        %v2938 = vld [vmem:[#allocation4 + $0x30] sm:$0xe]
        %v2939 = vld [vmem:[#allocation4 + $0x34] sm:$0xf]
        %v2940 = vld [vmem:[#allocation4 + $0x38] sm:$0x1]
        %v2941 = vld [vmem:[#allocation4 + $0x44] sm:$0xe]
        %v2942 = vld [vmem:[#allocation4 + $0x48] sm:$0xf]
        %v2943 = vld [vmem:[#allocation4 + $0x4c] sm:$0x1]
        %v2944 = vld [vmem:[#allocation4 + $0x58] sm:$0xe]
        %v2945 = vld [vmem:[#allocation4 + $0x5c] sm:$0xf]
        %v2946 = vld [vmem:[#allocation4 + $0x60] sm:$0x1]
        %v2947 = vld [vmem:[#allocation4 + $0x6c] sm:$0xe]
        %v2948 = vld [vmem:[#allocation4 + $0x70] sm:$0xf]
        %v2949 = vld [vmem:[#allocation4 + $0x74] sm:$0x1]
        %v2950 = vld [vmem:[#allocation4 + $0x80] sm:$0xe]
        %v2951 = vld [vmem:[#allocation4 + $0x84] sm:$0xf]
        %v2952 = vld [vmem:[#allocation4 + $0x88] sm:$0x1]
        %v2953 = vld [vmem:[#allocation4 + $0x94] sm:$0xe]
        %v2954 = vld [vmem:[#allocation4 + $0x98] sm:$0xf]
        %v2955 = vld [vmem:[#allocation4 + $0x9c] sm:$0x1]
        %v2956 = vld [vmem:[#allocation4 + $0xa8] sm:$0xe]
        %v2957 = vld [vmem:[#allocation4 + $0xac] sm:$0xf]
        %v2958 = vld [vmem:[#allocation4 + $0xb0] sm:$0x1]
        %v2959 = vld [vmem:[#allocation4 + $0xbc] sm:$0xe]
        %v2960 = vld [vmem:[#allocation4 + $0xc0] sm:$0xf]
        %v2961 = vld [vmem:[#allocation4 + $0xc4] sm:$0x1]
        %v2962 = vld [vmem:[#allocation4 + $0xd0] sm:$0xe]
        %v2963 = vld [vmem:[#allocation4 + $0xd4] sm:$0xf]
        %v2964 = vld [vmem:[#allocation4 + $0xd8] sm:$0x1]
        %v2965 = vld [vmem:[#allocation4 + $0xe4] sm:$0xe]
        %v2966 = vld [vmem:[#allocation4 + $0xe8] sm:$0xf]
        %v2967 = vld [vmem:[#allocation4 + $0xec] sm:$0x1]
        %v2968 = vld [vmem:[#allocation4 + $0xf8] sm:$0xe]
        %v2969 = vld [vmem:[#allocation4 + $0xfc] sm:$0xf]
        %v2970 = vld [vmem:[#allocation4 + $0x100] sm:$0x1]
        %v2971 = vld [vmem:[#allocation4 + $0x10c] sm:$0xe]
        %v2972 = vld [vmem:[#allocation4 + $0x110] sm:$0xf]
        %v2973 = vld [vmem:[#allocation4 + $0x114] sm:$0x1]
        %v2974 = vld [vmem:[#allocation4 + $0x120] sm:$0xe]
        %v2975 = vld [vmem:[#allocation4 + $0x124] sm:$0xf]
        %v2976 = vld [vmem:[#allocation4 + $0x128] sm:$0x1]
        %v2977 = vld [vmem:[#allocation4 + $0x134] sm:$0xe]
        %v2978 = vld [vmem:[#allocation4 + $0x138] sm:$0xf]
        %v2979 = vld [vmem:[#allocation4 + $0x13c] sm:$0x1]
        %v2980 = vld [vmem:[#allocation4 + $0x148] sm:$0xe]
        %v2981 = vld [vmem:[#allocation4 + $0x14c] sm:$0xf]
        %v2982 = vld [vmem:[#allocation4 + $0x150] sm:$0x1]
        %v2983 = vld [vmem:[#allocation4 + $0x15c] sm:$0xe]
        %v2984 = vld [vmem:[#allocation4 + $0x160] sm:$0xf]
        %v2985 = vld [vmem:[#allocation4 + $0x164] sm:$0x1]
        %v2986 = vld [vmem:[#allocation4 + $0x170] sm:$0xe]
        %v2987 = vld [vmem:[#allocation4 + $0x174] sm:$0xf]
        %v2988 = vld [vmem:[#allocation4 + $0x178] sm:$0x1]
        %v2989 = vld [vmem:[#allocation4 + $0x184] sm:$0xe]
        %v2990 = vld [vmem:[#allocation4 + $0x188] sm:$0xf]
        %v2991 = vld [vmem:[#allocation4 + $0x18c] sm:$0x1]
        %s2992 = scalar_lea.vmem %s3, 4
        %v2993 = vld [vmem:[%s2992] sm:$0x3]
        %vm3042 = vcmask 1042432
        %vm3043 = vcmask 1046532
        %vm3044 = vmor %vm3042, %vm3043
        %v3045 = vrot.slane %v2932, 5
        %v3046 = vrot.slane %v3045, 4
        %v3047 = vrot.slane %v2933, 5
        %v3048 = vsel %vm3044, %v3046, %v3047
        %v3049 = vrot.slane %v3047, 4
        %v3050 = vrot.slane %v2934, 5
        %v3051 = vsel %vm3044, %v3049, %v3050
        %v3052 = vrot.slane %v2935, 5
        %v3053 = vrot.slane %v3052, 4
        %v3054 = vrot.slane %v2936, 5
        %v3055 = vsel %vm3044, %v3053, %v3054
        %v3056 = vrot.slane %v3054, 4
        %v3057 = vrot.slane %v2937, 5
        %v3058 = vsel %vm3044, %v3056, %v3057
        %v3059 = vrot.slane %v2938, 5
        %v3060 = vrot.slane %v3059, 4
        %v3061 = vrot.slane %v2939, 5
        %v3062 = vsel %vm3044, %v3060, %v3061
        %v3063 = vrot.slane %v3061, 4
        %v3064 = vrot.slane %v2940, 5
        %v3065 = vsel %vm3044, %v3063, %v3064
        %v3066 = vrot.slane %v2941, 5
        %v3067 = vrot.slane %v3066, 4
        %v3068 = vrot.slane %v2942, 5
        %v3069 = vsel %vm3044, %v3067, %v3068
        %v3070 = vrot.slane %v3068, 4
        %v3071 = vrot.slane %v2943, 5
        %v3072 = vsel %vm3044, %v3070, %v3071
        %v3073 = vrot.slane %v2944, 5
        %v3074 = vrot.slane %v3073, 4
        %v3075 = vrot.slane %v2945, 5
        %v3076 = vsel %vm3044, %v3074, %v3075
        %v3077 = vrot.slane %v3075, 4
        %v3078 = vrot.slane %v2946, 5
        %v3079 = vsel %vm3044, %v3077, %v3078
        %v3080 = vrot.slane %v2947, 5
        %v3081 = vrot.slane %v3080, 4
        %v3082 = vrot.slane %v2948, 5
        %v3083 = vsel %vm3044, %v3081, %v3082
        %v3084 = vrot.slane %v3082, 4
        %v3085 = vrot.slane %v2949, 5
        %v3086 = vsel %vm3044, %v3084, %v3085
        %v3087 = vrot.slane %v2950, 5
        %v3088 = vrot.slane %v3087, 4
        %v3089 = vrot.slane %v2951, 5
        %v3090 = vsel %vm3044, %v3088, %v3089
        %v3091 = vrot.slane %v3089, 4
        %v3092 = vrot.slane %v2952, 5
        %v3093 = vsel %vm3044, %v3091, %v3092
        %v3094 = vrot.slane %v2953, 5
        %v3095 = vrot.slane %v3094, 4
        %v3096 = vrot.slane %v2954, 5
        %v3097 = vsel %vm3044, %v3095, %v3096
        %v3098 = vrot.slane %v3096, 4
        %v3099 = vrot.slane %v2955, 5
        %v3100 = vsel %vm3044, %v3098, %v3099
        %v3101 = vrot.slane %v2956, 5
        %v3102 = vrot.slane %v3101, 4
        %v3103 = vrot.slane %v2957, 5
        %v3104 = vsel %vm3044, %v3102, %v3103
        %v3105 = vrot.slane %v3103, 4
        %v3106 = vrot.slane %v2958, 5
        %v3107 = vsel %vm3044, %v3105, %v3106
        %v3108 = vrot.slane %v2959, 5
        %v3109 = vrot.slane %v3108, 4
        %v3110 = vrot.slane %v2960, 5
        %v3111 = vsel %vm3044, %v3109, %v3110
        %v3112 = vrot.slane %v3110, 4
        %v3113 = vrot.slane %v2961, 5
        %v3114 = vsel %vm3044, %v3112, %v3113
        %v3115 = vrot.slane %v2962, 5
        %v3116 = vrot.slane %v3115, 4
        %v3117 = vrot.slane %v2963, 5
        %v3118 = vsel %vm3044, %v3116, %v3117
        %v3119 = vrot.slane %v3117, 4
        %v3120 = vrot.slane %v2964, 5
        %v3121 = vsel %vm3044, %v3119, %v3120
        %v3122 = vrot.slane %v2965, 5
        %v3123 = vrot.slane %v3122, 4
        %v3124 = vrot.slane %v2966, 5
        %v3125 = vsel %vm3044, %v3123, %v3124
        %v3126 = vrot.slane %v3124, 4
        %v3127 = vrot.slane %v2967, 5
        %v3128 = vsel %vm3044, %v3126, %v3127
        %v3129 = vrot.slane %v2968, 5
        %v3130 = vrot.slane %v3129, 4
        %v3131 = vrot.slane %v2969, 5
        %v3132 = vsel %vm3044, %v3130, %v3131
        %v3133 = vrot.slane %v3131, 4
        %v3134 = vrot.slane %v2970, 5
        %v3135 = vsel %vm3044, %v3133, %v3134
        %v3136 = vrot.slane %v2971, 5
        %v3137 = vrot.slane %v3136, 4
        %v3138 = vrot.slane %v2972, 5
        %v3139 = vsel %vm3044, %v3137, %v3138
        %v3140 = vrot.slane %v3138, 4
        %v3141 = vrot.slane %v2973, 5
        %v3142 = vsel %vm3044, %v3140, %v3141
        %v3143 = vrot.slane %v2974, 5
        %v3144 = vrot.slane %v3143, 4
        %v3145 = vrot.slane %v2975, 5
        %v3146 = vsel %vm3044, %v3144, %v3145
        %v3147 = vrot.slane %v3145, 4
        %v3148 = vrot.slane %v2976, 5
        %v3149 = vsel %vm3044, %v3147, %v3148
        %v3150 = vrot.slane %v2977, 5
        %v3151 = vrot.slane %v3150, 4
        %v3152 = vrot.slane %v2978, 5
        %v3153 = vsel %vm3044, %v3151, %v3152
        %v3154 = vrot.slane %v3152, 4
        %v3155 = vrot.slane %v2979, 5
        %v3156 = vsel %vm3044, %v3154, %v3155
        %v3157 = vunpack.c.l.b16 %v3048
        %v3158 = vunpack.c.l.b16 %v3051
        %v3159 = vunpack.c.l.b16 %v3055
        %v3160 = vunpack.c.l.b16 %v3058
        %v3161 = vunpack.c.l.b16 %v3062
        %v3162 = vunpack.c.l.b16 %v3065
        %v3163 = vunpack.c.l.b16 %v3069
        %v3164 = vunpack.c.l.b16 %v3072
        %v3165 = vunpack.c.l.b16 %v3076
        %v3166 = vunpack.c.l.b16 %v3079
        %v3167 = vunpack.c.l.b16 %v3083
        %v3168 = vunpack.c.l.b16 %v3086
        %v3169 = vunpack.c.l.b16 %v3090
        %v3170 = vunpack.c.l.b16 %v3093
        %v3171 = vunpack.c.l.b16 %v3097
        %v3172 = vunpack.c.l.b16 %v3100
        %v3173 = vunpack.c.l.b16 %v3104
        %v3174 = vunpack.c.l.b16 %v3107
        %v3175 = vunpack.c.l.b16 %v3111
        %v3176 = vunpack.c.l.b16 %v3114
        %v3177 = vunpack.c.l.b16 %v3118
        %v3178 = vunpack.c.l.b16 %v3121
        %v3179 = vunpack.c.l.b16 %v3125
        %v3180 = vunpack.c.l.b16 %v3128
        %v3181 = vunpack.c.l.b16 %v3132
        %v3182 = vunpack.c.l.b16 %v3135
        %v3183 = vunpack.c.l.b16 %v3139
        %v3184 = vunpack.c.l.b16 %v3142
        %v3185 = vunpack.c.l.b16 %v3146
        %v3186 = vunpack.c.l.b16 %v3149
        %v3187 = vunpack.c.l.b16 %v3153
        %v3188 = vunpack.c.l.b16 %v3156
        %v3189 = vpack.c.b16 %v3158, %v3157
        %v3190 = vpack.c.b16 %v3160, %v3159
        %v3191 = vpack.c.b16 %v3162, %v3161
        %v3192 = vpack.c.b16 %v3164, %v3163
        %v3193 = vpack.c.b16 %v3166, %v3165
        %v3194 = vpack.c.b16 %v3168, %v3167
        %v3195 = vpack.c.b16 %v3170, %v3169
        %v3196 = vpack.c.b16 %v3172, %v3171
        %v3197 = vpack.c.b16 %v3174, %v3173
        %v3198 = vpack.c.b16 %v3176, %v3175
        %v3199 = vpack.c.b16 %v3178, %v3177
        %v3200 = vpack.c.b16 %v3180, %v3179
        %v3201 = vpack.c.b16 %v3182, %v3181
        %v3202 = vpack.c.b16 %v3184, %v3183
        %v3203 = vpack.c.b16 %v3186, %v3185
        %v3204 = vpack.c.b16 %v3188, %v3187
        %v3206 = vsel %vm1538, %v3189, 0
        %v3209 = vsel %vm1538, %v3190, 0
        %v3212 = vsel %vm1538, %v3191, 0
        %v3215 = vsel %vm1538, %v3192, 0
        %v3218 = vsel %vm1538, %v3193, 0
        %v3221 = vsel %vm1538, %v3194, 0
        %v3224 = vsel %vm1538, %v3195, 0
        %v3227 = vsel %vm1538, %v3196, 0
        %v3230 = vsel %vm1538, %v3197, 0
        %v3233 = vsel %vm1538, %v3198, 0
        %v3236 = vsel %vm1538, %v3199, 0
        %v3239 = vsel %vm1538, %v3200, 0
        %v3242 = vsel %vm1538, %v3201, 0
        %v3245 = vsel %vm1538, %v3202, 0
        %v3248 = vsel %vm1538, %v3203, 0
        %v3251 = vsel %vm1538, %v3204, 0
        %v3254 = vsel %vm1587, %v2993, 0
        %3256 = vmatprep.subr.bf16.mxu0 0
        %3257 = vmatpush1.bf16.msra.mxu0 %v3254
        %3258 = vmatprep.subr.bf16.mxu0 0
        %3259 = vmatpush1.bf16.msra.mxu0 0
        %3260 = vmatprep.subr.bf16.mxu0 0
        %3261 = vmatpush1.bf16.msra.mxu0 0
        %3262 = vmatprep.subr.bf16.mxu0 0
        %3263 = vmatpush1.bf16.msra.mxu0 0
        %3264 = vmatprep.subr.bf16.mxu0 0
        %3265 = vmatpush1.bf16.msra.mxu0 0
        %3266 = vmatprep.subr.bf16.mxu0 0
        %3267 = vmatpush1.bf16.msra.mxu0 0
        %3268 = vmatprep.subr.bf16.mxu0 0
        %3269 = vmatpush1.bf16.msra.mxu0 0
        %3270 = vmatprep.subr.bf16.mxu0 0
        %3271 = vmatpush1.bf16.msra.mxu0 0
        %3272 = vmatprep.subr.bf16.mxu0 0
        %3273 = vmatpush1.bf16.msra.mxu0 0
        %3274 = vmatprep.subr.bf16.mxu0 0
        %3275 = vmatpush1.bf16.msra.mxu0 0
        %3276 = vmatprep.subr.bf16.mxu0 0
        %3277 = vmatpush1.bf16.msra.mxu0 0
        %3278 = vmatprep.subr.bf16.mxu0 0
        %3279 = vmatpush1.bf16.msra.mxu0 0
        %3280 = vmatprep.subr.bf16.mxu0 0
        %3281 = vmatpush1.bf16.msra.mxu0 0
        %3282 = vmatprep.subr.bf16.mxu0 0
        %3283 = vmatpush1.bf16.msra.mxu0 0
        %3284 = vmatprep.subr.bf16.mxu0 0
        %3285 = vmatpush1.bf16.msra.mxu0 0
        %3286 = vmatprep.subr.bf16.mxu0 0
        %3287 = vmatpush1.bf16.msra.mxu0 0
        %3288 = vmatprep.mubr.bf16.mxu0 0
        %3289 = vmatmul.mubr.bf16.gmra.mrb[0].mxu0 %v3206
        %v3290 = vpop.f32.mrb[0].mxu0
        %v3291 = vadd.f32 0.0, %v3290
        %v3292 = vpop.f32.mrb[0].mxu0
        %v3293 = vpop.f32.mrb[0].mxu0
        %v3294 = vadd.f32 0.0, %v3293
        %v3295 = vpop.f32.mrb[0].mxu0
        %3296 = vmatprep.mubr.bf16.mxu0 0
        %3297 = vmatmul.mubr.bf16.gmra.mrb[0].mxu0 %v3209
        %v3298 = vpop.f32.mrb[0].mxu0
        %v3299 = vadd.f32 0.0, %v3298
        %v3300 = vpop.f32.mrb[0].mxu0
        %v3301 = vpop.f32.mrb[0].mxu0
        %v3302 = vadd.f32 0.0, %v3301
        %v3303 = vpop.f32.mrb[0].mxu0
        %3304 = vmatprep.mubr.bf16.mxu0 0
        %3305 = vmatmul.mubr.bf16.gmra.mrb[0].mxu0 %v3212
        %v3306 = vpop.f32.mrb[0].mxu0
        %v3307 = vadd.f32 0.0, %v3306
        %v3308 = vpop.f32.mrb[0].mxu0
        %v3309 = vpop.f32.mrb[0].mxu0
        %v3310 = vadd.f32 0.0, %v3309
        %v3311 = vpop.f32.mrb[0].mxu0
        %3312 = vmatprep.mubr.bf16.mxu0 0
        %3313 = vmatmul.mubr.bf16.gmra.mrb[0].mxu0 %v3215
        %v3314 = vpop.f32.mrb[0].mxu0
        %v3315 = vadd.f32 0.0, %v3314
        %v3316 = vpop.f32.mrb[0].mxu0
        %v3317 = vpop.f32.mrb[0].mxu0
        %v3318 = vadd.f32 0.0, %v3317
        %v3319 = vpop.f32.mrb[0].mxu0
        %3320 = vmatprep.mubr.bf16.mxu0 0
        %3321 = vmatmul.mubr.bf16.gmra.mrb[0].mxu0 %v3218
        %v3322 = vpop.f32.mrb[0].mxu0
        %v3323 = vadd.f32 0.0, %v3322
        %v3324 = vpop.f32.mrb[0].mxu0
        %v3325 = vpop.f32.mrb[0].mxu0
        %v3326 = vadd.f32 0.0, %v3325
        %v3327 = vpop.f32.mrb[0].mxu0
        %3328 = vmatprep.mubr.bf16.mxu0 0
        %3329 = vmatmul.mubr.bf16.gmra.mrb[0].mxu0 %v3221
        %v3330 = vpop.f32.mrb[0].mxu0
        %v3331 = vadd.f32 0.0, %v3330
        %v3332 = vpop.f32.mrb[0].mxu0
        %v3333 = vpop.f32.mrb[0].mxu0
        %v3334 = vadd.f32 0.0, %v3333
        %v3335 = vpop.f32.mrb[0].mxu0
        %3336 = vmatprep.mubr.bf16.mxu0 0
        %3337 = vmatmul.mubr.bf16.gmra.mrb[0].mxu0 %v3224
        %v3338 = vpop.f32.mrb[0].mxu0
        %v3339 = vadd.f32 0.0, %v3338
        %v3340 = vpop.f32.mrb[0].mxu0
        %v3341 = vpop.f32.mrb[0].mxu0
        %v3342 = vadd.f32 0.0, %v3341
        %v3343 = vpop.f32.mrb[0].mxu0
        %3344 = vmatprep.mubr.bf16.mxu0 0
        %3345 = vmatmul.mubr.bf16.gmra.mrb[0].mxu0 %v3227
        %v3346 = vpop.f32.mrb[0].mxu0
        %v3347 = vadd.f32 0.0, %v3346
        %v3348 = vpop.f32.mrb[0].mxu0
        %v3349 = vpop.f32.mrb[0].mxu0
        %v3350 = vadd.f32 0.0, %v3349
        %v3351 = vpop.f32.mrb[0].mxu0
        %3352 = vmatprep.mubr.bf16.mxu0 0
        %3353 = vmatmul.mubr.bf16.gmra.mrb[0].mxu0 %v3230
        %v3354 = vpop.f32.mrb[0].mxu0
        %v3355 = vadd.f32 0.0, %v3354
        %v3356 = vpop.f32.mrb[0].mxu0
        %v3357 = vpop.f32.mrb[0].mxu0
        %v3358 = vadd.f32 0.0, %v3357
        %v3359 = vpop.f32.mrb[0].mxu0
        %3360 = vmatprep.mubr.bf16.mxu0 0
        %3361 = vmatmul.mubr.bf16.gmra.mrb[0].mxu0 %v3233
        %v3362 = vpop.f32.mrb[0].mxu0
        %v3363 = vadd.f32 0.0, %v3362
        %v3364 = vpop.f32.mrb[0].mxu0
        %v3365 = vpop.f32.mrb[0].mxu0
        %v3366 = vadd.f32 0.0, %v3365
        %v3367 = vpop.f32.mrb[0].mxu0
        %3368 = vmatprep.mubr.bf16.mxu0 0
        %3369 = vmatmul.mubr.bf16.gmra.mrb[0].mxu0 %v3236
        %v3370 = vpop.f32.mrb[0].mxu0
        %v3371 = vadd.f32 0.0, %v3370
        %v3372 = vpop.f32.mrb[0].mxu0
        %v3373 = vpop.f32.mrb[0].mxu0
        %v3374 = vadd.f32 0.0, %v3373
        %v3375 = vpop.f32.mrb[0].mxu0
        %3376 = vmatprep.mubr.bf16.mxu0 0
        %3377 = vmatmul.mubr.bf16.gmra.mrb[0].mxu0 %v3239
        %v3378 = vpop.f32.mrb[0].mxu0
        %v3379 = vadd.f32 0.0, %v3378
        %v3380 = vpop.f32.mrb[0].mxu0
        %v3381 = vpop.f32.mrb[0].mxu0
        %v3382 = vadd.f32 0.0, %v3381
        %v3383 = vpop.f32.mrb[0].mxu0
        %3384 = vmatprep.mubr.bf16.mxu0 0
        %3385 = vmatmul.mubr.bf16.gmra.mrb[0].mxu0 %v3242
        %v3386 = vpop.f32.mrb[0].mxu0
        %v3387 = vadd.f32 0.0, %v3386
        %v3388 = vpop.f32.mrb[0].mxu0
        %v3389 = vpop.f32.mrb[0].mxu0
        %v3390 = vadd.f32 0.0, %v3389
        %v3391 = vpop.f32.mrb[0].mxu0
        %3392 = vmatprep.mubr.bf16.mxu0 0
        %3393 = vmatmul.mubr.bf16.gmra.mrb[0].mxu0 %v3245
        %v3394 = vpop.f32.mrb[0].mxu0
        %v3395 = vadd.f32 0.0, %v3394
        %v3396 = vpop.f32.mrb[0].mxu0
        %v3397 = vpop.f32.mrb[0].mxu0
        %v3398 = vadd.f32 0.0, %v3397
        %v3399 = vpop.f32.mrb[0].mxu0
        %3400 = vmatprep.mubr.bf16.mxu0 0
        %3401 = vmatmul.mubr.bf16.gmra.mrb[0].mxu0 %v3248
        %v3402 = vpop.f32.mrb[0].mxu0
        %v3403 = vadd.f32 0.0, %v3402
        %v3404 = vpop.f32.mrb[0].mxu0
        %v3405 = vpop.f32.mrb[0].mxu0
        %v3406 = vadd.f32 0.0, %v3405
        %v3407 = vpop.f32.mrb[0].mxu0
        %3408 = vmatprep.mubr.bf16.mxu0 0
        %3409 = vmatmul.mubr.bf16.gmra.mrb[0].mxu0 %v3251
        %v3410 = vpop.f32.mrb[0].mxu0
        %v3411 = vadd.f32 0.0, %v3410
        %v3412 = vpop.f32.mrb[0].mxu0
        %v3413 = vpop.f32.mrb[0].mxu0
        %v3414 = vadd.f32 0.0, %v3413
        %v3415 = vpop.f32.mrb[0].mxu0
        %3416 = vdwg.mxu0
        %v3417 = vadd.f32 %v2900, %v3291
        %v3418 = vadd.f32 %v2901, %v3294
        %v3419 = vadd.f32 %v2902, %v3299
        %v3420 = vadd.f32 %v2903, %v3302
        %v3421 = vadd.f32 %v2904, %v3307
        %v3422 = vadd.f32 %v2905, %v3310
        %v3423 = vadd.f32 %v2906, %v3315
        %v3424 = vadd.f32 %v2907, %v3318
        %v3425 = vadd.f32 %v2908, %v3323
        %v3426 = vadd.f32 %v2909, %v3326
        %v3427 = vadd.f32 %v2910, %v3331
        %v3428 = vadd.f32 %v2911, %v3334
        %v3429 = vadd.f32 %v2912, %v3339
        %v3430 = vadd.f32 %v2913, %v3342
        %v3431 = vadd.f32 %v2914, %v3347
        %v3432 = vadd.f32 %v2915, %v3350
        %v3433 = vadd.f32 %v2916, %v3355
        %v3434 = vadd.f32 %v2917, %v3358
        %v3435 = vadd.f32 %v2918, %v3363
        %v3436 = vadd.f32 %v2919, %v3366
        %v3437 = vadd.f32 %v2920, %v3371
        %v3438 = vadd.f32 %v2921, %v3374
        %v3439 = vadd.f32 %v2922, %v3379
        %v3440 = vadd.f32 %v2923, %v3382
        %v3441 = vadd.f32 %v2924, %v3387
        %v3442 = vadd.f32 %v2925, %v3390
        %v3443 = vadd.f32 %v2926, %v3395
        %v3444 = vadd.f32 %v2927, %v3398
        %v3445 = vadd.f32 %v2928, %v3403
        %v3446 = vadd.f32 %v2929, %v3406
        %v3447 = vadd.f32 %v2930, %v3411
        %v3448 = vadd.f32 %v2931, %v3414
        %s3449 = scalar_lea.vmem %s3, 10
        %v3450 = vld [vmem:[%s3449] sm:$0x3]
        %v3457 = vrot.slane %v2980, 5
        %v3458 = vrot.slane %v3457, 4
        %v3459 = vrot.slane %v2981, 5
        %v3460 = vsel %vm3044, %v3458, %v3459
        %v3461 = vrot.slane %v3459, 4
        %v3462 = vrot.slane %v2982, 5
        %v3463 = vsel %vm3044, %v3461, %v3462
        %v3464 = vrot.slane %v2983, 5
        %v3465 = vrot.slane %v3464, 4
        %v3466 = vrot.slane %v2984, 5
        %v3467 = vsel %vm3044, %v3465, %v3466
        %v3468 = vrot.slane %v3466, 4
        %v3469 = vrot.slane %v2985, 5
        %v3470 = vsel %vm3044, %v3468, %v3469
        %v3471 = vunpack.c.l.b16 %v3460
        %v3472 = vunpack.c.l.b16 %v3463
        %v3473 = vunpack.c.l.b16 %v3467
        %v3474 = vunpack.c.l.b16 %v3470
        %v3475 = vpack.c.b16 %v3472, %v3471
        %v3476 = vpack.c.b16 %v3474, %v3473
        %v3478 = vsel %vm1538, %v3475, 0
        %v3481 = vsel %vm1538, %v3476, 0
        %v3484 = vsel %vm1587, %v3450, 0
        %3486 = vmatprep.subr.bf16.mxu0 0
        %3487 = vmatpush1.bf16.msra.mxu0 %v3484
        %3488 = vmatprep.subr.bf16.mxu0 0
        %3489 = vmatpush1.bf16.msra.mxu0 0
        %3490 = vmatprep.subr.bf16.mxu0 0
        %3491 = vmatpush1.bf16.msra.mxu0 0
        %3492 = vmatprep.subr.bf16.mxu0 0
        %3493 = vmatpush1.bf16.msra.mxu0 0
        %3494 = vmatprep.subr.bf16.mxu0 0
        %3495 = vmatpush1.bf16.msra.mxu0 0
        %3496 = vmatprep.subr.bf16.mxu0 0
        %3497 = vmatpush1.bf16.msra.mxu0 0
        %3498 = vmatprep.subr.bf16.mxu0 0
        %3499 = vmatpush1.bf16.msra.mxu0 0
        %3500 = vmatprep.subr.bf16.mxu0 0
        %3501 = vmatpush1.bf16.msra.mxu0 0
        %3502 = vmatprep.subr.bf16.mxu0 0
        %3503 = vmatpush1.bf16.msra.mxu0 0
        %3504 = vmatprep.subr.bf16.mxu0 0
        %3505 = vmatpush1.bf16.msra.mxu0 0
        %3506 = vmatprep.subr.bf16.mxu0 0
        %3507 = vmatpush1.bf16.msra.mxu0 0
        %3508 = vmatprep.subr.bf16.mxu0 0
        %3509 = vmatpush1.bf16.msra.mxu0 0
        %3510 = vmatprep.subr.bf16.mxu0 0
        %3511 = vmatpush1.bf16.msra.mxu0 0
        %3512 = vmatprep.subr.bf16.mxu0 0
        %3513 = vmatpush1.bf16.msra.mxu0 0
        %3514 = vmatprep.subr.bf16.mxu0 0
        %3515 = vmatpush1.bf16.msra.mxu0 0
        %3516 = vmatprep.subr.bf16.mxu0 0
        %3517 = vmatpush1.bf16.msra.mxu0 0
        %3518 = vmatprep.mubr.bf16.mxu0 0
        %3519 = vmatmul.mubr.bf16.gmra.mrb[0].mxu0 %v3212
        %v3520 = vpop.f32.mrb[0].mxu0
        %v3521 = vadd.f32 0.0, %v3520
        %v3522 = vpop.f32.mrb[0].mxu0
        %v3523 = vpop.f32.mrb[0].mxu0
        %v3524 = vadd.f32 0.0, %v3523
        %v3525 = vpop.f32.mrb[0].mxu0
        %3526 = vmatprep.mubr.bf16.mxu0 0
        %3527 = vmatmul.mubr.bf16.gmra.mrb[0].mxu0 %v3215
        %v3528 = vpop.f32.mrb[0].mxu0
        %v3529 = vadd.f32 0.0, %v3528
        %v3530 = vpop.f32.mrb[0].mxu0
        %v3531 = vpop.f32.mrb[0].mxu0
        %v3532 = vadd.f32 0.0, %v3531
        %v3533 = vpop.f32.mrb[0].mxu0
        %3534 = vmatprep.mubr.bf16.mxu0 0
        %3535 = vmatmul.mubr.bf16.gmra.mrb[0].mxu0 %v3218
        %v3536 = vpop.f32.mrb[0].mxu0
        %v3537 = vadd.f32 0.0, %v3536
        %v3538 = vpop.f32.mrb[0].mxu0
        %v3539 = vpop.f32.mrb[0].mxu0
        %v3540 = vadd.f32 0.0, %v3539
        %v3541 = vpop.f32.mrb[0].mxu0
        %3542 = vmatprep.mubr.bf16.mxu0 0
        %3543 = vmatmul.mubr.bf16.gmra.mrb[0].mxu0 %v3221
        %v3544 = vpop.f32.mrb[0].mxu0
        %v3545 = vadd.f32 0.0, %v3544
        %v3546 = vpop.f32.mrb[0].mxu0
        %v3547 = vpop.f32.mrb[0].mxu0
        %v3548 = vadd.f32 0.0, %v3547
        %v3549 = vpop.f32.mrb[0].mxu0
        %3550 = vmatprep.mubr.bf16.mxu0 0
        %3551 = vmatmul.mubr.bf16.gmra.mrb[0].mxu0 %v3224
        %v3552 = vpop.f32.mrb[0].mxu0
        %v3553 = vadd.f32 0.0, %v3552
        %v3554 = vpop.f32.mrb[0].mxu0
        %v3555 = vpop.f32.mrb[0].mxu0
        %v3556 = vadd.f32 0.0, %v3555
        %v3557 = vpop.f32.mrb[0].mxu0
        %3558 = vmatprep.mubr.bf16.mxu0 0
        %3559 = vmatmul.mubr.bf16.gmra.mrb[0].mxu0 %v3227
        %v3560 = vpop.f32.mrb[0].mxu0
        %v3561 = vadd.f32 0.0, %v3560
        %v3562 = vpop.f32.mrb[0].mxu0
        %v3563 = vpop.f32.mrb[0].mxu0
        %v3564 = vadd.f32 0.0, %v3563
        %v3565 = vpop.f32.mrb[0].mxu0
        %3566 = vmatprep.mubr.bf16.mxu0 0
        %3567 = vmatmul.mubr.bf16.gmra.mrb[0].mxu0 %v3230
        %v3568 = vpop.f32.mrb[0].mxu0
        %v3569 = vadd.f32 0.0, %v3568
        %v3570 = vpop.f32.mrb[0].mxu0
        %v3571 = vpop.f32.mrb[0].mxu0
        %v3572 = vadd.f32 0.0, %v3571
        %v3573 = vpop.f32.mrb[0].mxu0
        %3574 = vmatprep.mubr.bf16.mxu0 0
        %3575 = vmatmul.mubr.bf16.gmra.mrb[0].mxu0 %v3233
        %v3576 = vpop.f32.mrb[0].mxu0
        %v3577 = vadd.f32 0.0, %v3576
        %v3578 = vpop.f32.mrb[0].mxu0
        %v3579 = vpop.f32.mrb[0].mxu0
        %v3580 = vadd.f32 0.0, %v3579
        %v3581 = vpop.f32.mrb[0].mxu0
        %3582 = vmatprep.mubr.bf16.mxu0 0
        %3583 = vmatmul.mubr.bf16.gmra.mrb[0].mxu0 %v3236
        %v3584 = vpop.f32.mrb[0].mxu0
        %v3585 = vadd.f32 0.0, %v3584
        %v3586 = vpop.f32.mrb[0].mxu0
        %v3587 = vpop.f32.mrb[0].mxu0
        %v3588 = vadd.f32 0.0, %v3587
        %v3589 = vpop.f32.mrb[0].mxu0
        %3590 = vmatprep.mubr.bf16.mxu0 0
        %3591 = vmatmul.mubr.bf16.gmra.mrb[0].mxu0 %v3239
        %v3592 = vpop.f32.mrb[0].mxu0
        %v3593 = vadd.f32 0.0, %v3592
        %v3594 = vpop.f32.mrb[0].mxu0
        %v3595 = vpop.f32.mrb[0].mxu0
        %v3596 = vadd.f32 0.0, %v3595
        %v3597 = vpop.f32.mrb[0].mxu0
        %3598 = vmatprep.mubr.bf16.mxu0 0
        %3599 = vmatmul.mubr.bf16.gmra.mrb[0].mxu0 %v3242
        %v3600 = vpop.f32.mrb[0].mxu0
        %v3601 = vadd.f32 0.0, %v3600
        %v3602 = vpop.f32.mrb[0].mxu0
        %v3603 = vpop.f32.mrb[0].mxu0
        %v3604 = vadd.f32 0.0, %v3603
        %v3605 = vpop.f32.mrb[0].mxu0
        %3606 = vmatprep.mubr.bf16.mxu0 0
        %3607 = vmatmul.mubr.bf16.gmra.mrb[0].mxu0 %v3245
        %v3608 = vpop.f32.mrb[0].mxu0
        %v3609 = vadd.f32 0.0, %v3608
        %v3610 = vpop.f32.mrb[0].mxu0
        %v3611 = vpop.f32.mrb[0].mxu0
        %v3612 = vadd.f32 0.0, %v3611
        %v3613 = vpop.f32.mrb[0].mxu0
        %3614 = vmatprep.mubr.bf16.mxu0 0
        %3615 = vmatmul.mubr.bf16.gmra.mrb[0].mxu0 %v3248
        %v3616 = vpop.f32.mrb[0].mxu0
        %v3617 = vadd.f32 0.0, %v3616
        %v3618 = vpop.f32.mrb[0].mxu0
        %v3619 = vpop.f32.mrb[0].mxu0
        %v3620 = vadd.f32 0.0, %v3619
        %v3621 = vpop.f32.mrb[0].mxu0
        %3622 = vmatprep.mubr.bf16.mxu0 0
        %3623 = vmatmul.mubr.bf16.gmra.mrb[0].mxu0 %v3251
        %v3624 = vpop.f32.mrb[0].mxu0
        %v3625 = vadd.f32 0.0, %v3624
        %v3626 = vpop.f32.mrb[0].mxu0
        %v3627 = vpop.f32.mrb[0].mxu0
        %v3628 = vadd.f32 0.0, %v3627
        %v3629 = vpop.f32.mrb[0].mxu0
        %3630 = vmatprep.mubr.bf16.mxu0 0
        %3631 = vmatmul.mubr.bf16.gmra.mrb[0].mxu0 %v3478
        %v3632 = vpop.f32.mrb[0].mxu0
        %v3633 = vadd.f32 0.0, %v3632
        %v3634 = vpop.f32.mrb[0].mxu0
        %v3635 = vpop.f32.mrb[0].mxu0
        %v3636 = vadd.f32 0.0, %v3635
        %v3637 = vpop.f32.mrb[0].mxu0
        %3638 = vmatprep.mubr.bf16.mxu0 0
        %3639 = vmatmul.mubr.bf16.gmra.mrb[0].mxu0 %v3481
        %v3640 = vpop.f32.mrb[0].mxu0
        %v3641 = vadd.f32 0.0, %v3640
        %v3642 = vpop.f32.mrb[0].mxu0
        %v3643 = vpop.f32.mrb[0].mxu0
        %v3644 = vadd.f32 0.0, %v3643
        %v3645 = vpop.f32.mrb[0].mxu0
        %3646 = vdwg.mxu0
        %v3647 = vadd.f32 %v3417, %v3521
        %v3648 = vadd.f32 %v3418, %v3524
        %v3649 = vadd.f32 %v3419, %v3529
        %v3650 = vadd.f32 %v3420, %v3532
        %v3651 = vadd.f32 %v3421, %v3537
        %v3652 = vadd.f32 %v3422, %v3540
        %v3653 = vadd.f32 %v3423, %v3545
        %v3654 = vadd.f32 %v3424, %v3548
        %v3655 = vadd.f32 %v3425, %v3553
        %v3656 = vadd.f32 %v3426, %v3556
        %v3657 = vadd.f32 %v3427, %v3561
        %v3658 = vadd.f32 %v3428, %v3564
        %v3659 = vadd.f32 %v3429, %v3569
        %v3660 = vadd.f32 %v3430, %v3572
        %v3661 = vadd.f32 %v3431, %v3577
        %v3662 = vadd.f32 %v3432, %v3580
        %v3663 = vadd.f32 %v3433, %v3585
        %v3664 = vadd.f32 %v3434, %v3588
        %v3665 = vadd.f32 %v3435, %v3593
        %v3666 = vadd.f32 %v3436, %v3596
        %v3667 = vadd.f32 %v3437, %v3601
        %v3668 = vadd.f32 %v3438, %v3604
        %v3669 = vadd.f32 %v3439, %v3609
        %v3670 = vadd.f32 %v3440, %v3612
        %v3671 = vadd.f32 %v3441, %v3617
        %v3672 = vadd.f32 %v3442, %v3620
        %v3673 = vadd.f32 %v3443, %v3625
        %v3674 = vadd.f32 %v3444, %v3628
        %v3675 = vadd.f32 %v3445, %v3633
        %v3676 = vadd.f32 %v3446, %v3636
        %v3677 = vadd.f32 %v3447, %v3641
        %v3678 = vadd.f32 %v3448, %v3644
        %s3679 = scalar_lea.vmem %s3, 16
        %v3680 = vld [vmem:[%s3679] sm:$0x3]
        %v3687 = vrot.slane %v2986, 5
        %v3688 = vrot.slane %v3687, 4
        %v3689 = vrot.slane %v2987, 5
        %v3690 = vsel %vm3044, %v3688, %v3689
        %v3691 = vrot.slane %v3689, 4
        %v3692 = vrot.slane %v2988, 5
        %v3693 = vsel %vm3044, %v3691, %v3692
        %v3694 = vrot.slane %v2989, 5
        %v3695 = vrot.slane %v3694, 4
        %v3696 = vrot.slane %v2990, 5
        %v3697 = vsel %vm3044, %v3695, %v3696
        %v3698 = vrot.slane %v3696, 4
        %v3699 = vrot.slane %v2991, 5
        %v3700 = vsel %vm3044, %v3698, %v3699
        %v3701 = vunpack.c.l.b16 %v3690
        %v3702 = vunpack.c.l.b16 %v3693
        %v3703 = vunpack.c.l.b16 %v3697
        %v3704 = vunpack.c.l.b16 %v3700
        %v3705 = vpack.c.b16 %v3702, %v3701
        %v3706 = vpack.c.b16 %v3704, %v3703
        %v3708 = vsel %vm1538, %v3705, 0
        %v3711 = vsel %vm1538, %v3706, 0
        %v3714 = vsel %vm1587, %v3680, 0
        %3716 = vmatprep.subr.bf16.mxu0 0
        %3717 = vmatpush1.bf16.msra.mxu0 %v3714
        %3718 = vmatprep.subr.bf16.mxu0 0
        %3719 = vmatpush1.bf16.msra.mxu0 0
        %3720 = vmatprep.subr.bf16.mxu0 0
        %3721 = vmatpush1.bf16.msra.mxu0 0
        %3722 = vmatprep.subr.bf16.mxu0 0
        %3723 = vmatpush1.bf16.msra.mxu0 0
        %3724 = vmatprep.subr.bf16.mxu0 0
        %3725 = vmatpush1.bf16.msra.mxu0 0
        %3726 = vmatprep.subr.bf16.mxu0 0
        %3727 = vmatpush1.bf16.msra.mxu0 0
        %3728 = vmatprep.subr.bf16.mxu0 0
        %3729 = vmatpush1.bf16.msra.mxu0 0
        %3730 = vmatprep.subr.bf16.mxu0 0
        %3731 = vmatpush1.bf16.msra.mxu0 0
        %3732 = vmatprep.subr.bf16.mxu0 0
        %3733 = vmatpush1.bf16.msra.mxu0 0
        %3734 = vmatprep.subr.bf16.mxu0 0
        %3735 = vmatpush1.bf16.msra.mxu0 0
        %3736 = vmatprep.subr.bf16.mxu0 0
        %3737 = vmatpush1.bf16.msra.mxu0 0
        %3738 = vmatprep.subr.bf16.mxu0 0
        %3739 = vmatpush1.bf16.msra.mxu0 0
        %3740 = vmatprep.subr.bf16.mxu0 0
        %3741 = vmatpush1.bf16.msra.mxu0 0
        %3742 = vmatprep.subr.bf16.mxu0 0
        %3743 = vmatpush1.bf16.msra.mxu0 0
        %3744 = vmatprep.subr.bf16.mxu0 0
        %3745 = vmatpush1.bf16.msra.mxu0 0
        %3746 = vmatprep.subr.bf16.mxu0 0
        %3747 = vmatpush1.bf16.msra.mxu0 0
        %3748 = vmatprep.mubr.bf16.mxu0 0
        %3749 = vmatmul.mubr.bf16.gmra.mrb[0].mxu0 %v3218
        %v3750 = vpop.f32.mrb[0].mxu0
        %v3751 = vadd.f32 0.0, %v3750
        %v3752 = vpop.f32.mrb[0].mxu0
        %v3753 = vpop.f32.mrb[0].mxu0
        %v3754 = vadd.f32 0.0, %v3753
        %v3755 = vpop.f32.mrb[0].mxu0
        %3756 = vmatprep.mubr.bf16.mxu0 0
        %3757 = vmatmul.mubr.bf16.gmra.mrb[0].mxu0 %v3221
        %v3758 = vpop.f32.mrb[0].mxu0
        %v3759 = vadd.f32 0.0, %v3758
        %v3760 = vpop.f32.mrb[0].mxu0
        %v3761 = vpop.f32.mrb[0].mxu0
        %v3762 = vadd.f32 0.0, %v3761
        %v3763 = vpop.f32.mrb[0].mxu0
        %3764 = vmatprep.mubr.bf16.mxu0 0
        %3765 = vmatmul.mubr.bf16.gmra.mrb[0].mxu0 %v3224
        %v3766 = vpop.f32.mrb[0].mxu0
        %v3767 = vadd.f32 0.0, %v3766
        %v3768 = vpop.f32.mrb[0].mxu0
        %v3769 = vpop.f32.mrb[0].mxu0
        %v3770 = vadd.f32 0.0, %v3769
        %v3771 = vpop.f32.mrb[0].mxu0
        %3772 = vmatprep.mubr.bf16.mxu0 0
        %3773 = vmatmul.mubr.bf16.gmra.mrb[0].mxu0 %v3227
        %v3774 = vpop.f32.mrb[0].mxu0
        %v3775 = vadd.f32 0.0, %v3774
        %v3776 = vpop.f32.mrb[0].mxu0
        %v3777 = vpop.f32.mrb[0].mxu0
        %v3778 = vadd.f32 0.0, %v3777
        %v3779 = vpop.f32.mrb[0].mxu0
        %3780 = vmatprep.mubr.bf16.mxu0 0
        %3781 = vmatmul.mubr.bf16.gmra.mrb[0].mxu0 %v3230
        %v3782 = vpop.f32.mrb[0].mxu0
        %v3783 = vadd.f32 0.0, %v3782
        %v3784 = vpop.f32.mrb[0].mxu0
        %v3785 = vpop.f32.mrb[0].mxu0
        %v3786 = vadd.f32 0.0, %v3785
        %v3787 = vpop.f32.mrb[0].mxu0
        %3788 = vmatprep.mubr.bf16.mxu0 0
        %3789 = vmatmul.mubr.bf16.gmra.mrb[0].mxu0 %v3233
        %v3790 = vpop.f32.mrb[0].mxu0
        %v3791 = vadd.f32 0.0, %v3790
        %v3792 = vpop.f32.mrb[0].mxu0
        %v3793 = vpop.f32.mrb[0].mxu0
        %v3794 = vadd.f32 0.0, %v3793
        %v3795 = vpop.f32.mrb[0].mxu0
        %3796 = vmatprep.mubr.bf16.mxu0 0
        %3797 = vmatmul.mubr.bf16.gmra.mrb[0].mxu0 %v3236
        %v3798 = vpop.f32.mrb[0].mxu0
        %v3799 = vadd.f32 0.0, %v3798
        %v3800 = vpop.f32.mrb[0].mxu0
        %v3801 = vpop.f32.mrb[0].mxu0
        %v3802 = vadd.f32 0.0, %v3801
        %v3803 = vpop.f32.mrb[0].mxu0
        %3804 = vmatprep.mubr.bf16.mxu0 0
        %3805 = vmatmul.mubr.bf16.gmra.mrb[0].mxu0 %v3239
        %v3806 = vpop.f32.mrb[0].mxu0
        %v3807 = vadd.f32 0.0, %v3806
        %v3808 = vpop.f32.mrb[0].mxu0
        %v3809 = vpop.f32.mrb[0].mxu0
        %v3810 = vadd.f32 0.0, %v3809
        %v3811 = vpop.f32.mrb[0].mxu0
        %3812 = vmatprep.mubr.bf16.mxu0 0
        %3813 = vmatmul.mubr.bf16.gmra.mrb[0].mxu0 %v3242
        %v3814 = vpop.f32.mrb[0].mxu0
        %v3815 = vadd.f32 0.0, %v3814
        %v3816 = vpop.f32.mrb[0].mxu0
        %v3817 = vpop.f32.mrb[0].mxu0
        %v3818 = vadd.f32 0.0, %v3817
        %v3819 = vpop.f32.mrb[0].mxu0
        %3820 = vmatprep.mubr.bf16.mxu0 0
        %3821 = vmatmul.mubr.bf16.gmra.mrb[0].mxu0 %v3245
        %v3822 = vpop.f32.mrb[0].mxu0
        %v3823 = vadd.f32 0.0, %v3822
        %v3824 = vpop.f32.mrb[0].mxu0
        %v3825 = vpop.f32.mrb[0].mxu0
        %v3826 = vadd.f32 0.0, %v3825
        %v3827 = vpop.f32.mrb[0].mxu0
        %3828 = vmatprep.mubr.bf16.mxu0 0
        %3829 = vmatmul.mubr.bf16.gmra.mrb[0].mxu0 %v3248
        %v3830 = vpop.f32.mrb[0].mxu0
        %v3831 = vadd.f32 0.0, %v3830
        %v3832 = vpop.f32.mrb[0].mxu0
        %v3833 = vpop.f32.mrb[0].mxu0
        %v3834 = vadd.f32 0.0, %v3833
        %v3835 = vpop.f32.mrb[0].mxu0
        %3836 = vmatprep.mubr.bf16.mxu0 0
        %3837 = vmatmul.mubr.bf16.gmra.mrb[0].mxu0 %v3251
        %v3838 = vpop.f32.mrb[0].mxu0
        %v3839 = vadd.f32 0.0, %v3838
        %v3840 = vpop.f32.mrb[0].mxu0
        %v3841 = vpop.f32.mrb[0].mxu0
        %v3842 = vadd.f32 0.0, %v3841
        %v3843 = vpop.f32.mrb[0].mxu0
        %3844 = vmatprep.mubr.bf16.mxu0 0
        %3845 = vmatmul.mubr.bf16.gmra.mrb[0].mxu0 %v3478
        %v3846 = vpop.f32.mrb[0].mxu0
        %v3847 = vadd.f32 0.0, %v3846
        %v3848 = vpop.f32.mrb[0].mxu0
        %v3849 = vpop.f32.mrb[0].mxu0
        %v3850 = vadd.f32 0.0, %v3849
        %v3851 = vpop.f32.mrb[0].mxu0
        %3852 = vmatprep.mubr.bf16.mxu0 0
        %3853 = vmatmul.mubr.bf16.gmra.mrb[0].mxu0 %v3481
        %v3854 = vpop.f32.mrb[0].mxu0
        %v3855 = vadd.f32 0.0, %v3854
        %v3856 = vpop.f32.mrb[0].mxu0
        %v3857 = vpop.f32.mrb[0].mxu0
        %v3858 = vadd.f32 0.0, %v3857
        %v3859 = vpop.f32.mrb[0].mxu0
        %3860 = vmatprep.mubr.bf16.mxu0 0
        %3861 = vmatmul.mubr.bf16.gmra.mrb[0].mxu0 %v3708
        %v3862 = vpop.f32.mrb[0].mxu0
        %v3863 = vadd.f32 0.0, %v3862
        %v3864 = vpop.f32.mrb[0].mxu0
        %v3865 = vpop.f32.mrb[0].mxu0
        %v3866 = vadd.f32 0.0, %v3865
        %v3867 = vpop.f32.mrb[0].mxu0
        %3868 = vmatprep.mubr.bf16.mxu0 0
        %3869 = vmatmul.mubr.bf16.gmra.mrb[0].mxu0 %v3711
        %v3870 = vpop.f32.mrb[0].mxu0
        %v3871 = vadd.f32 0.0, %v3870
        %v3872 = vpop.f32.mrb[0].mxu0
        %v3873 = vpop.f32.mrb[0].mxu0
        %v3874 = vadd.f32 0.0, %v3873
        %v3875 = vpop.f32.mrb[0].mxu0
        %3876 = vdwg.mxu0
        %v3877 = vadd.f32 %v3647, %v3751
        %v3878 = vadd.f32 %v3648, %v3754
        %v3879 = vadd.f32 %v3649, %v3759
        %v3880 = vadd.f32 %v3650, %v3762
        %v3881 = vadd.f32 %v3651, %v3767
        %v3882 = vadd.f32 %v3652, %v3770
        %v3883 = vadd.f32 %v3653, %v3775
        %v3884 = vadd.f32 %v3654, %v3778
        %v3885 = vadd.f32 %v3655, %v3783
        %v3886 = vadd.f32 %v3656, %v3786
        %v3887 = vadd.f32 %v3657, %v3791
        %v3888 = vadd.f32 %v3658, %v3794
        %v3889 = vadd.f32 %v3659, %v3799
        %v3890 = vadd.f32 %v3660, %v3802
        %v3891 = vadd.f32 %v3661, %v3807
        %v3892 = vadd.f32 %v3662, %v3810
        %v3893 = vadd.f32 %v3663, %v3815
        %v3894 = vadd.f32 %v3664, %v3818
        %v3895 = vadd.f32 %v3665, %v3823
        %v3896 = vadd.f32 %v3666, %v3826
        %v3897 = vadd.f32 %v3667, %v3831
        %v3898 = vadd.f32 %v3668, %v3834
        %v3899 = vadd.f32 %v3669, %v3839
        %v3900 = vadd.f32 %v3670, %v3842
        %v3901 = vadd.f32 %v3671, %v3847
        %v3902 = vadd.f32 %v3672, %v3850
        %v3903 = vadd.f32 %v3673, %v3855
        %v3904 = vadd.f32 %v3674, %v3858
        %v3905 = vadd.f32 %v3675, %v3863
        %v3906 = vadd.f32 %v3676, %v3866
        %v3907 = vadd.f32 %v3677, %v3871
        %v3908 = vadd.f32 %v3678, %v3874
        %v3909 = vld [vmem:[%s6] sm:$0x1]
        %v3910 = vlaneseq
        %v3911 = vshrl.u32 %v3910, 7
        %v3912 = vsub.s32 0, %v3911
        %v3913 = vrot.slane %v3909, %v3912
        %v3914 = vmul.f32 %v3877, %v3913
        %v3915 = vmul.f32 %v3878, %v3913
        %v3916 = vmul.f32 %v3879, %v3913
        %v3917 = vmul.f32 %v3880, %v3913
        %v3918 = vmul.f32 %v3881, %v3913
        %v3919 = vmul.f32 %v3882, %v3913
        %v3920 = vmul.f32 %v3883, %v3913
        %v3921 = vmul.f32 %v3884, %v3913
        %v3922 = vmul.f32 %v3885, %v3913
        %v3923 = vmul.f32 %v3886, %v3913
        %v3924 = vmul.f32 %v3887, %v3913
        %v3925 = vmul.f32 %v3888, %v3913
        %v3926 = vmul.f32 %v3889, %v3913
        %v3927 = vmul.f32 %v3890, %v3913
        %v3928 = vmul.f32 %v3891, %v3913
        %v3929 = vmul.f32 %v3892, %v3913
        %v3930 = vmul.f32 %v3893, %v3913
        %v3931 = vmul.f32 %v3894, %v3913
        %v3932 = vmul.f32 %v3895, %v3913
        %v3933 = vmul.f32 %v3896, %v3913
        %v3934 = vmul.f32 %v3897, %v3913
        %v3935 = vmul.f32 %v3898, %v3913
        %v3936 = vmul.f32 %v3899, %v3913
        %v3937 = vmul.f32 %v3900, %v3913
        %v3938 = vmul.f32 %v3901, %v3913
        %v3939 = vmul.f32 %v3902, %v3913
        %v3940 = vmul.f32 %v3903, %v3913
        %v3941 = vmul.f32 %v3904, %v3913
        %v3942 = vmul.f32 %v3905, %v3913
        %v3943 = vmul.f32 %v3906, %v3913
        %v3944 = vmul.f32 %v3907, %v3913
        %v3945 = vmul.f32 %v3908, %v3913
        %v3946 = vld [vmem:[%s6 + $0x1] sm:$0x1]
        %v3947 = vlaneseq
        %v3948 = vshrl.u32 %v3947, 7
        %v3949 = vsub.s32 0, %v3948
        %v3950 = vrot.slane %v3946, %v3949
        %v3951 = vadd.f32 %v3914, %v3950
        %v3952 = vadd.f32 %v3915, %v3950
        %v3953 = vadd.f32 %v3916, %v3950
        %v3954 = vadd.f32 %v3917, %v3950
        %v3955 = vadd.f32 %v3918, %v3950
        %v3956 = vadd.f32 %v3919, %v3950
        %v3957 = vadd.f32 %v3920, %v3950
        %v3958 = vadd.f32 %v3921, %v3950
        %v3959 = vadd.f32 %v3922, %v3950
        %v3960 = vadd.f32 %v3923, %v3950
        %v3961 = vadd.f32 %v3924, %v3950
        %v3962 = vadd.f32 %v3925, %v3950
        %v3963 = vadd.f32 %v3926, %v3950
        %v3964 = vadd.f32 %v3927, %v3950
        %v3965 = vadd.f32 %v3928, %v3950
        %v3966 = vadd.f32 %v3929, %v3950
        %v3967 = vadd.f32 %v3930, %v3950
        %v3968 = vadd.f32 %v3931, %v3950
        %v3969 = vadd.f32 %v3932, %v3950
        %v3970 = vadd.f32 %v3933, %v3950
        %v3971 = vadd.f32 %v3934, %v3950
        %v3972 = vadd.f32 %v3935, %v3950
        %v3973 = vadd.f32 %v3936, %v3950
        %v3974 = vadd.f32 %v3937, %v3950
        %v3975 = vadd.f32 %v3938, %v3950
        %v3976 = vadd.f32 %v3939, %v3950
        %v3977 = vadd.f32 %v3940, %v3950
        %v3978 = vadd.f32 %v3941, %v3950
        %v3979 = vadd.f32 %v3942, %v3950
        %v3980 = vadd.f32 %v3943, %v3950
        %v3981 = vadd.f32 %v3944, %v3950
        %v3982 = vadd.f32 %v3945, %v3950
        %v3983 = vmax.f32 %v3951, 0.0
        %v3984 = vmax.f32 %v3952, 0.0
        %v3985 = vmax.f32 %v3953, 0.0
        %v3986 = vmax.f32 %v3954, 0.0
        %v3987 = vmax.f32 %v3955, 0.0
        %v3988 = vmax.f32 %v3956, 0.0
        %v3989 = vmax.f32 %v3957, 0.0
        %v3990 = vmax.f32 %v3958, 0.0
        %v3991 = vmax.f32 %v3959, 0.0
        %v3992 = vmax.f32 %v3960, 0.0
        %v3993 = vmax.f32 %v3961, 0.0
        %v3994 = vmax.f32 %v3962, 0.0
        %v3995 = vmax.f32 %v3963, 0.0
        %v3996 = vmax.f32 %v3964, 0.0
        %v3997 = vmax.f32 %v3965, 0.0
        %v3998 = vmax.f32 %v3966, 0.0
        %v3999 = vmax.f32 %v3967, 0.0
        %v4000 = vmax.f32 %v3968, 0.0
        %v4001 = vmax.f32 %v3969, 0.0
        %v4002 = vmax.f32 %v3970, 0.0
        %v4003 = vmax.f32 %v3971, 0.0
        %v4004 = vmax.f32 %v3972, 0.0
        %v4005 = vmax.f32 %v3973, 0.0
        %v4006 = vmax.f32 %v3974, 0.0
        %v4007 = vmax.f32 %v3975, 0.0
        %v4008 = vmax.f32 %v3976, 0.0
        %v4009 = vmax.f32 %v3977, 0.0
        %v4010 = vmax.f32 %v3978, 0.0
        %v4011 = vmax.f32 %v3979, 0.0
        %v4012 = vmax.f32 %v3980, 0.0
        %v4013 = vmax.f32 %v3981, 0.0
        %v4014 = vmax.f32 %v3982, 0.0
        %v4015 = vpack.c.bf16 %v3984, %v3983
        %v4016 = vpack.c.bf16 %v3986, %v3985
        %v4017 = vpack.c.bf16 %v3988, %v3987
        %v4018 = vpack.c.bf16 %v3990, %v3989
        %v4019 = vpack.c.bf16 %v3992, %v3991
        %v4020 = vpack.c.bf16 %v3994, %v3993
        %v4021 = vpack.c.bf16 %v3996, %v3995
        %v4022 = vpack.c.bf16 %v3998, %v3997
        %v4023 = vpack.c.bf16 %v4000, %v3999
        %v4024 = vpack.c.bf16 %v4002, %v4001
        %v4025 = vpack.c.bf16 %v4004, %v4003
        %v4026 = vpack.c.bf16 %v4006, %v4005
        %v4027 = vpack.c.bf16 %v4008, %v4007
        %v4028 = vpack.c.bf16 %v4010, %v4009
        %v4029 = vpack.c.bf16 %v4012, %v4011
        %v4030 = vpack.c.bf16 %v4014, %v4013
        %v4031 = vld [vmem:[%s4] sm:$0x3]
        %v4033 = vsel %vm1538, %v4015, 0
        %v4036 = vsel %vm1538, %v4016, 0
        %v4039 = vsel %vm1538, %v4017, 0
        %v4042 = vsel %vm1538, %v4018, 0
        %v4045 = vsel %vm1538, %v4019, 0
        %v4048 = vsel %vm1538, %v4020, 0
        %v4051 = vsel %vm1538, %v4021, 0
        %v4054 = vsel %vm1538, %v4022, 0
        %v4057 = vsel %vm1538, %v4023, 0
        %v4060 = vsel %vm1538, %v4024, 0
        %v4063 = vsel %vm1538, %v4025, 0
        %v4066 = vsel %vm1538, %v4026, 0
        %v4069 = vsel %vm1538, %v4027, 0
        %v4072 = vsel %vm1538, %v4028, 0
        %v4075 = vsel %vm1538, %v4029, 0
        %v4078 = vsel %vm1538, %v4030, 0
        %v4081 = vsel %vm1587, %v4031, 0
        %4083 = vmatprep.subr.bf16.mxu0 0
        %4084 = vmatpush1.bf16.msra.mxu0 %v4081
        %4085 = vmatprep.subr.bf16.mxu0 0
        %4086 = vmatpush1.bf16.msra.mxu0 0
        %4087 = vmatprep.subr.bf16.mxu0 0
        %4088 = vmatpush1.bf16.msra.mxu0 0
        %4089 = vmatprep.subr.bf16.mxu0 0
        %4090 = vmatpush1.bf16.msra.mxu0 0
        %4091 = vmatprep.subr.bf16.mxu0 0
        %4092 = vmatpush1.bf16.msra.mxu0 0
        %4093 = vmatprep.subr.bf16.mxu0 0
        %4094 = vmatpush1.bf16.msra.mxu0 0
        %4095 = vmatprep.subr.bf16.mxu0 0
        %4096 = vmatpush1.bf16.msra.mxu0 0
        %4097 = vmatprep.subr.bf16.mxu0 0
        %4098 = vmatpush1.bf16.msra.mxu0 0
        %4099 = vmatprep.subr.bf16.mxu0 0
        %4100 = vmatpush1.bf16.msra.mxu0 0
        %4101 = vmatprep.subr.bf16.mxu0 0
        %4102 = vmatpush1.bf16.msra.mxu0 0
        %4103 = vmatprep.subr.bf16.mxu0 0
        %4104 = vmatpush1.bf16.msra.mxu0 0
        %4105 = vmatprep.subr.bf16.mxu0 0
        %4106 = vmatpush1.bf16.msra.mxu0 0
        %4107 = vmatprep.subr.bf16.mxu0 0
        %4108 = vmatpush1.bf16.msra.mxu0 0
        %4109 = vmatprep.subr.bf16.mxu0 0
        %4110 = vmatpush1.bf16.msra.mxu0 0
        %4111 = vmatprep.subr.bf16.mxu0 0
        %4112 = vmatpush1.bf16.msra.mxu0 0
        %4113 = vmatprep.subr.bf16.mxu0 0
        %4114 = vmatpush1.bf16.msra.mxu0 0
        %4115 = vmatprep.mubr.bf16.mxu0 0
        %4116 = vmatmul.mubr.bf16.gmra.mrb[0].mxu0 %v4033
        %v4117 = vpop.f32.mrb[0].mxu0
        %v4118 = vadd.f32 0.0, %v4117
        %v4119 = vpop.f32.mrb[0].mxu0
        %v4120 = vpop.f32.mrb[0].mxu0
        %v4121 = vadd.f32 0.0, %v4120
        %v4122 = vpop.f32.mrb[0].mxu0
        %4123 = vmatprep.mubr.bf16.mxu0 0
        %4124 = vmatmul.mubr.bf16.gmra.mrb[0].mxu0 %v4036
        %v4125 = vpop.f32.mrb[0].mxu0
        %v4126 = vadd.f32 0.0, %v4125
        %v4127 = vpop.f32.mrb[0].mxu0
        %v4128 = vpop.f32.mrb[0].mxu0
        %v4129 = vadd.f32 0.0, %v4128
        %v4130 = vpop.f32.mrb[0].mxu0
        %4131 = vmatprep.mubr.bf16.mxu0 0
        %4132 = vmatmul.mubr.bf16.gmra.mrb[0].mxu0 %v4039
        %v4133 = vpop.f32.mrb[0].mxu0
        %v4134 = vadd.f32 0.0, %v4133
        %v4135 = vpop.f32.mrb[0].mxu0
        %v4136 = vpop.f32.mrb[0].mxu0
        %v4137 = vadd.f32 0.0, %v4136
        %v4138 = vpop.f32.mrb[0].mxu0
        %4139 = vmatprep.mubr.bf16.mxu0 0
        %4140 = vmatmul.mubr.bf16.gmra.mrb[0].mxu0 %v4042
        %v4141 = vpop.f32.mrb[0].mxu0
        %v4142 = vadd.f32 0.0, %v4141
        %v4143 = vpop.f32.mrb[0].mxu0
        %v4144 = vpop.f32.mrb[0].mxu0
        %v4145 = vadd.f32 0.0, %v4144
        %v4146 = vpop.f32.mrb[0].mxu0
        %4147 = vmatprep.mubr.bf16.mxu0 0
        %4148 = vmatmul.mubr.bf16.gmra.mrb[0].mxu0 %v4045
        %v4149 = vpop.f32.mrb[0].mxu0
        %v4150 = vadd.f32 0.0, %v4149
        %v4151 = vpop.f32.mrb[0].mxu0
        %v4152 = vpop.f32.mrb[0].mxu0
        %v4153 = vadd.f32 0.0, %v4152
        %v4154 = vpop.f32.mrb[0].mxu0
        %4155 = vmatprep.mubr.bf16.mxu0 0
        %4156 = vmatmul.mubr.bf16.gmra.mrb[0].mxu0 %v4048
        %v4157 = vpop.f32.mrb[0].mxu0
        %v4158 = vadd.f32 0.0, %v4157
        %v4159 = vpop.f32.mrb[0].mxu0
        %v4160 = vpop.f32.mrb[0].mxu0
        %v4161 = vadd.f32 0.0, %v4160
        %v4162 = vpop.f32.mrb[0].mxu0
        %4163 = vmatprep.mubr.bf16.mxu0 0
        %4164 = vmatmul.mubr.bf16.gmra.mrb[0].mxu0 %v4051
        %v4165 = vpop.f32.mrb[0].mxu0
        %v4166 = vadd.f32 0.0, %v4165
        %v4167 = vpop.f32.mrb[0].mxu0
        %v4168 = vpop.f32.mrb[0].mxu0
        %v4169 = vadd.f32 0.0, %v4168
        %v4170 = vpop.f32.mrb[0].mxu0
        %4171 = vmatprep.mubr.bf16.mxu0 0
        %4172 = vmatmul.mubr.bf16.gmra.mrb[0].mxu0 %v4054
        %v4173 = vpop.f32.mrb[0].mxu0
        %v4174 = vadd.f32 0.0, %v4173
        %v4175 = vpop.f32.mrb[0].mxu0
        %v4176 = vpop.f32.mrb[0].mxu0
        %v4177 = vadd.f32 0.0, %v4176
        %v4178 = vpop.f32.mrb[0].mxu0
        %4179 = vmatprep.mubr.bf16.mxu0 0
        %4180 = vmatmul.mubr.bf16.gmra.mrb[0].mxu0 %v4057
        %v4181 = vpop.f32.mrb[0].mxu0
        %v4182 = vadd.f32 0.0, %v4181
        %v4183 = vpop.f32.mrb[0].mxu0
        %v4184 = vpop.f32.mrb[0].mxu0
        %v4185 = vadd.f32 0.0, %v4184
        %v4186 = vpop.f32.mrb[0].mxu0
        %4187 = vmatprep.mubr.bf16.mxu0 0
        %4188 = vmatmul.mubr.bf16.gmra.mrb[0].mxu0 %v4060
        %v4189 = vpop.f32.mrb[0].mxu0
        %v4190 = vadd.f32 0.0, %v4189
        %v4191 = vpop.f32.mrb[0].mxu0
        %v4192 = vpop.f32.mrb[0].mxu0
        %v4193 = vadd.f32 0.0, %v4192
        %v4194 = vpop.f32.mrb[0].mxu0
        %4195 = vmatprep.mubr.bf16.mxu0 0
        %4196 = vmatmul.mubr.bf16.gmra.mrb[0].mxu0 %v4063
        %v4197 = vpop.f32.mrb[0].mxu0
        %v4198 = vadd.f32 0.0, %v4197
        %v4199 = vpop.f32.mrb[0].mxu0
        %v4200 = vpop.f32.mrb[0].mxu0
        %v4201 = vadd.f32 0.0, %v4200
        %v4202 = vpop.f32.mrb[0].mxu0
        %4203 = vmatprep.mubr.bf16.mxu0 0
        %4204 = vmatmul.mubr.bf16.gmra.mrb[0].mxu0 %v4066
        %v4205 = vpop.f32.mrb[0].mxu0
        %v4206 = vadd.f32 0.0, %v4205
        %v4207 = vpop.f32.mrb[0].mxu0
        %v4208 = vpop.f32.mrb[0].mxu0
        %v4209 = vadd.f32 0.0, %v4208
        %v4210 = vpop.f32.mrb[0].mxu0
        %4211 = vmatprep.mubr.bf16.mxu0 0
        %4212 = vmatmul.mubr.bf16.gmra.mrb[0].mxu0 %v4069
        %v4213 = vpop.f32.mrb[0].mxu0
        %v4214 = vadd.f32 0.0, %v4213
        %v4215 = vpop.f32.mrb[0].mxu0
        %v4216 = vpop.f32.mrb[0].mxu0
        %v4217 = vadd.f32 0.0, %v4216
        %v4218 = vpop.f32.mrb[0].mxu0
        %4219 = vmatprep.mubr.bf16.mxu0 0
        %4220 = vmatmul.mubr.bf16.gmra.mrb[0].mxu0 %v4072
        %v4221 = vpop.f32.mrb[0].mxu0
        %v4222 = vadd.f32 0.0, %v4221
        %v4223 = vpop.f32.mrb[0].mxu0
        %v4224 = vpop.f32.mrb[0].mxu0
        %v4225 = vadd.f32 0.0, %v4224
        %v4226 = vpop.f32.mrb[0].mxu0
        %4227 = vmatprep.mubr.bf16.mxu0 0
        %4228 = vmatmul.mubr.bf16.gmra.mrb[0].mxu0 %v4075
        %v4229 = vpop.f32.mrb[0].mxu0
        %v4230 = vadd.f32 0.0, %v4229
        %v4231 = vpop.f32.mrb[0].mxu0
        %v4232 = vpop.f32.mrb[0].mxu0
        %v4233 = vadd.f32 0.0, %v4232
        %v4234 = vpop.f32.mrb[0].mxu0
        %4235 = vmatprep.mubr.bf16.mxu0 0
        %4236 = vmatmul.mubr.bf16.gmra.mrb[0].mxu0 %v4078
        %v4237 = vpop.f32.mrb[0].mxu0
        %v4238 = vadd.f32 0.0, %v4237
        %v4239 = vpop.f32.mrb[0].mxu0
        %v4240 = vpop.f32.mrb[0].mxu0
        %v4241 = vadd.f32 0.0, %v4240
        %v4242 = vpop.f32.mrb[0].mxu0
        %4243 = vdwg.mxu0
        %v4244 = vld [vmem:[%s7] sm:$0x1]
        %v4245 = vlaneseq
        %v4246 = vshrl.u32 %v4245, 7
        %v4247 = vsub.s32 0, %v4246
        %v4248 = vrot.slane %v4244, %v4247
        %v4249 = vmul.f32 %v4118, %v4248
        %v4250 = vmul.f32 %v4121, %v4248
        %v4251 = vmul.f32 %v4126, %v4248
        %v4252 = vmul.f32 %v4129, %v4248
        %v4253 = vmul.f32 %v4134, %v4248
        %v4254 = vmul.f32 %v4137, %v4248
        %v4255 = vmul.f32 %v4142, %v4248
        %v4256 = vmul.f32 %v4145, %v4248
        %v4257 = vmul.f32 %v4150, %v4248
        %v4258 = vmul.f32 %v4153, %v4248
        %v4259 = vmul.f32 %v4158, %v4248
        %v4260 = vmul.f32 %v4161, %v4248
        %v4261 = vmul.f32 %v4166, %v4248
        %v4262 = vmul.f32 %v4169, %v4248
        %v4263 = vmul.f32 %v4174, %v4248
        %v4264 = vmul.f32 %v4177, %v4248
        %v4265 = vmul.f32 %v4182, %v4248
        %v4266 = vmul.f32 %v4185, %v4248
        %v4267 = vmul.f32 %v4190, %v4248
        %v4268 = vmul.f32 %v4193, %v4248
        %v4269 = vmul.f32 %v4198, %v4248
        %v4270 = vmul.f32 %v4201, %v4248
        %v4271 = vmul.f32 %v4206, %v4248
        %v4272 = vmul.f32 %v4209, %v4248
        %v4273 = vmul.f32 %v4214, %v4248
        %v4274 = vmul.f32 %v4217, %v4248
        %v4275 = vmul.f32 %v4222, %v4248
        %v4276 = vmul.f32 %v4225, %v4248
        %v4277 = vmul.f32 %v4230, %v4248
        %v4278 = vmul.f32 %v4233, %v4248
        %v4279 = vmul.f32 %v4238, %v4248
        %v4280 = vmul.f32 %v4241, %v4248
        %v4281 = vld [vmem:[%s7 + $0x1] sm:$0x1]
        %v4282 = vlaneseq
        %v4283 = vshrl.u32 %v4282, 7
        %v4284 = vsub.s32 0, %v4283
        %v4285 = vrot.slane %v4281, %v4284
        %v4286 = vadd.f32 %v4249, %v4285
        %v4287 = vadd.f32 %v4250, %v4285
        %v4288 = vadd.f32 %v4251, %v4285
        %v4289 = vadd.f32 %v4252, %v4285
        %v4290 = vadd.f32 %v4253, %v4285
        %v4291 = vadd.f32 %v4254, %v4285
        %v4292 = vadd.f32 %v4255, %v4285
        %v4293 = vadd.f32 %v4256, %v4285
        %v4294 = vadd.f32 %v4257, %v4285
        %v4295 = vadd.f32 %v4258, %v4285
        %v4296 = vadd.f32 %v4259, %v4285
        %v4297 = vadd.f32 %v4260, %v4285
        %v4298 = vadd.f32 %v4261, %v4285
        %v4299 = vadd.f32 %v4262, %v4285
        %v4300 = vadd.f32 %v4263, %v4285
        %v4301 = vadd.f32 %v4264, %v4285
        %v4302 = vadd.f32 %v4265, %v4285
        %v4303 = vadd.f32 %v4266, %v4285
        %v4304 = vadd.f32 %v4267, %v4285
        %v4305 = vadd.f32 %v4268, %v4285
        %v4306 = vadd.f32 %v4269, %v4285
        %v4307 = vadd.f32 %v4270, %v4285
        %v4308 = vadd.f32 %v4271, %v4285
        %v4309 = vadd.f32 %v4272, %v4285
        %v4310 = vadd.f32 %v4273, %v4285
        %v4311 = vadd.f32 %v4274, %v4285
        %v4312 = vadd.f32 %v4275, %v4285
        %v4313 = vadd.f32 %v4276, %v4285
        %v4314 = vadd.f32 %v4277, %v4285
        %v4315 = vadd.f32 %v4278, %v4285
        %v4316 = vadd.f32 %v4279, %v4285
        %v4317 = vadd.f32 %v4280, %v4285
        %v4318 = vld [vmem:[%s286] sm:$0xf]
        %v4319 = vld [vmem:[%s286 + $0x4] sm:$0xf]
        %v4320 = vld [vmem:[%s286 + $0x8] sm:$0xf]
        %v4321 = vld [vmem:[%s286 + $0xc] sm:$0xf]
        %v4322 = vld [vmem:[%s286 + $0x10] sm:$0xf]
        %v4323 = vld [vmem:[%s286 + $0x14] sm:$0xf]
        %v4324 = vld [vmem:[%s286 + $0x18] sm:$0xf]
        %v4325 = vld [vmem:[%s286 + $0x1c] sm:$0xf]
        %v4326 = vld [vmem:[%s286 + $0x20] sm:$0xf]
        %v4327 = vld [vmem:[%s286 + $0x24] sm:$0xf]
        %v4328 = vld [vmem:[%s286 + $0x28] sm:$0xf]
        %v4329 = vld [vmem:[%s286 + $0x2c] sm:$0xf]
        %v4330 = vld [vmem:[%s286 + $0x30] sm:$0xf]
        %v4331 = vld [vmem:[%s286 + $0x34] sm:$0xf]
        %v4332 = vld [vmem:[%s286 + $0x38] sm:$0xf]
        %v4333 = vld [vmem:[%s286 + $0x3c] sm:$0xf]
        %v4334 = vld [vmem:[%s286 + $0x40] sm:$0xf]
        %v4335 = vld [vmem:[%s286 + $0x44] sm:$0xf]
        %v4336 = vld [vmem:[%s286 + $0x48] sm:$0xf]
        %v4337 = vld [vmem:[%s286 + $0x4c] sm:$0xf]
        %v4338 = vld [vmem:[%s286 + $0x50] sm:$0xf]
        %v4339 = vld [vmem:[%s286 + $0x54] sm:$0xf]
        %v4340 = vld [vmem:[%s286 + $0x58] sm:$0xf]
        %v4341 = vld [vmem:[%s286 + $0x5c] sm:$0xf]
        %v4342 = vld [vmem:[%s286 + $0x60] sm:$0xf]
        %v4343 = vld [vmem:[%s286 + $0x64] sm:$0xf]
        %v4344 = vld [vmem:[%s286 + $0x68] sm:$0xf]
        %v4345 = vld [vmem:[%s286 + $0x6c] sm:$0xf]
        %v4346 = vld [vmem:[%s286 + $0x70] sm:$0xf]
        %v4347 = vld [vmem:[%s286 + $0x74] sm:$0xf]
        %v4348 = vld [vmem:[%s286 + $0x78] sm:$0xf]
        %v4349 = vld [vmem:[%s286 + $0x7c] sm:$0xf]
        %v4350 = vunpack.c.l.bf16 %v4318
        %v4351 = vunpack.c.l.bf16 %v4319
        %v4352 = vunpack.c.l.bf16 %v4320
        %v4353 = vunpack.c.l.bf16 %v4321
        %v4354 = vunpack.c.l.bf16 %v4322
        %v4355 = vunpack.c.l.bf16 %v4323
        %v4356 = vunpack.c.l.bf16 %v4324
        %v4357 = vunpack.c.l.bf16 %v4325
        %v4358 = vunpack.c.l.bf16 %v4326
        %v4359 = vunpack.c.l.bf16 %v4327
        %v4360 = vunpack.c.l.bf16 %v4328
        %v4361 = vunpack.c.l.bf16 %v4329
        %v4362 = vunpack.c.l.bf16 %v4330
        %v4363 = vunpack.c.l.bf16 %v4331
        %v4364 = vunpack.c.l.bf16 %v4332
        %v4365 = vunpack.c.l.bf16 %v4333
        %v4366 = vunpack.c.l.bf16 %v4334
        %v4367 = vunpack.c.l.bf16 %v4335
        %v4368 = vunpack.c.l.bf16 %v4336
        %v4369 = vunpack.c.l.bf16 %v4337
        %v4370 = vunpack.c.l.bf16 %v4338
        %v4371 = vunpack.c.l.bf16 %v4339
        %v4372 = vunpack.c.l.bf16 %v4340
        %v4373 = vunpack.c.l.bf16 %v4341
        %v4374 = vunpack.c.l.bf16 %v4342
        %v4375 = vunpack.c.l.bf16 %v4343
        %v4376 = vunpack.c.l.bf16 %v4344
        %v4377 = vunpack.c.l.bf16 %v4345
        %v4378 = vunpack.c.l.bf16 %v4346
        %v4379 = vunpack.c.l.bf16 %v4347
        %v4380 = vunpack.c.l.bf16 %v4348
        %v4381 = vunpack.c.l.bf16 %v4349
        %v4382 = vadd.f32 %v4286, %v4350
        %v4383 = vadd.f32 %v4287, %v4351
        %v4384 = vadd.f32 %v4288, %v4352
        %v4385 = vadd.f32 %v4289, %v4353
        %v4386 = vadd.f32 %v4290, %v4354
        %v4387 = vadd.f32 %v4291, %v4355
        %v4388 = vadd.f32 %v4292, %v4356
        %v4389 = vadd.f32 %v4293, %v4357
        %v4390 = vadd.f32 %v4294, %v4358
        %v4391 = vadd.f32 %v4295, %v4359
        %v4392 = vadd.f32 %v4296, %v4360
        %v4393 = vadd.f32 %v4297, %v4361
        %v4394 = vadd.f32 %v4298, %v4362
        %v4395 = vadd.f32 %v4299, %v4363
        %v4396 = vadd.f32 %v4300, %v4364
        %v4397 = vadd.f32 %v4301, %v4365
        %v4398 = vadd.f32 %v4302, %v4366
        %v4399 = vadd.f32 %v4303, %v4367
        %v4400 = vadd.f32 %v4304, %v4368
        %v4401 = vadd.f32 %v4305, %v4369
        %v4402 = vadd.f32 %v4306, %v4370
        %v4403 = vadd.f32 %v4307, %v4371
        %v4404 = vadd.f32 %v4308, %v4372
        %v4405 = vadd.f32 %v4309, %v4373
        %v4406 = vadd.f32 %v4310, %v4374
        %v4407 = vadd.f32 %v4311, %v4375
        %v4408 = vadd.f32 %v4312, %v4376
        %v4409 = vadd.f32 %v4313, %v4377
        %v4410 = vadd.f32 %v4314, %v4378
        %v4411 = vadd.f32 %v4315, %v4379
        %v4412 = vadd.f32 %v4316, %v4380
        %v4413 = vadd.f32 %v4317, %v4381
        %v4414 = vmax.f32 %v4382, 0.0
        %v4415 = vmax.f32 %v4383, 0.0
        %v4416 = vmax.f32 %v4384, 0.0
        %v4417 = vmax.f32 %v4385, 0.0
        %v4418 = vmax.f32 %v4386, 0.0
        %v4419 = vmax.f32 %v4387, 0.0
        %v4420 = vmax.f32 %v4388, 0.0
        %v4421 = vmax.f32 %v4389, 0.0
        %v4422 = vmax.f32 %v4390, 0.0
        %v4423 = vmax.f32 %v4391, 0.0
        %v4424 = vmax.f32 %v4392, 0.0
        %v4425 = vmax.f32 %v4393, 0.0
        %v4426 = vmax.f32 %v4394, 0.0
        %v4427 = vmax.f32 %v4395, 0.0
        %v4428 = vmax.f32 %v4396, 0.0
        %v4429 = vmax.f32 %v4397, 0.0
        %v4430 = vmax.f32 %v4398, 0.0
        %v4431 = vmax.f32 %v4399, 0.0
        %v4432 = vmax.f32 %v4400, 0.0
        %v4433 = vmax.f32 %v4401, 0.0
        %v4434 = vmax.f32 %v4402, 0.0
        %v4435 = vmax.f32 %v4403, 0.0
        %v4436 = vmax.f32 %v4404, 0.0
        %v4437 = vmax.f32 %v4405, 0.0
        %v4438 = vmax.f32 %v4406, 0.0
        %v4439 = vmax.f32 %v4407, 0.0
        %v4440 = vmax.f32 %v4408, 0.0
        %v4441 = vmax.f32 %v4409, 0.0
        %v4442 = vmax.f32 %v4410, 0.0
        %v4443 = vmax.f32 %v4411, 0.0
        %v4444 = vmax.f32 %v4412, 0.0
        %v4445 = vmax.f32 %v4413, 0.0
        %v4446 = vpack.c.bf16 %v4415, %v4414
        %v4447 = vpack.c.bf16 %v4417, %v4416
        %v4448 = vpack.c.bf16 %v4419, %v4418
        %v4449 = vpack.c.bf16 %v4421, %v4420
        %v4450 = vpack.c.bf16 %v4423, %v4422
        %v4451 = vpack.c.bf16 %v4425, %v4424
        %v4452 = vpack.c.bf16 %v4427, %v4426
        %v4453 = vpack.c.bf16 %v4429, %v4428
        %v4454 = vpack.c.bf16 %v4431, %v4430
        %v4455 = vpack.c.bf16 %v4433, %v4432
        %v4456 = vpack.c.bf16 %v4435, %v4434
        %v4457 = vpack.c.bf16 %v4437, %v4436
        %v4458 = vpack.c.bf16 %v4439, %v4438
        %v4459 = vpack.c.bf16 %v4441, %v4440
        %v4460 = vpack.c.bf16 %v4443, %v4442
        %v4461 = vpack.c.bf16 %v4445, %v4444
        %v4478 = vunpack.c.l.b16 %v4446
        %v4479 = vunpack.c.h.b16 %v4446
        %v4480 = vunpack.c.l.b16 %v4447
        %v4481 = vunpack.c.h.b16 %v4447
        %v4482 = vunpack.c.l.b16 %v4448
        %v4483 = vunpack.c.h.b16 %v4448
        %v4484 = vunpack.c.l.b16 %v4449
        %v4485 = vunpack.c.h.b16 %v4449
        %v4486 = vunpack.c.l.b16 %v4450
        %v4487 = vunpack.c.h.b16 %v4450
        %v4488 = vunpack.c.l.b16 %v4451
        %v4489 = vunpack.c.h.b16 %v4451
        %v4490 = vunpack.c.l.b16 %v4452
        %v4491 = vunpack.c.h.b16 %v4452
        %v4492 = vunpack.c.l.b16 %v4453
        %v4493 = vunpack.c.h.b16 %v4453
        %v4494 = vunpack.c.l.b16 %v4454
        %v4495 = vunpack.c.h.b16 %v4454
        %v4496 = vunpack.c.l.b16 %v4455
        %v4497 = vunpack.c.h.b16 %v4455
        %v4498 = vunpack.c.l.b16 %v4456
        %v4499 = vunpack.c.h.b16 %v4456
        %v4500 = vunpack.c.l.b16 %v4457
        %v4501 = vunpack.c.h.b16 %v4457
        %v4502 = vunpack.c.l.b16 %v4458
        %v4503 = vunpack.c.h.b16 %v4458
        %v4504 = vunpack.c.l.b16 %v4459
        %v4505 = vunpack.c.h.b16 %v4459
        %v4506 = vunpack.c.l.b16 %v4460
        %v4507 = vunpack.c.h.b16 %v4460
        %v4508 = vunpack.c.l.b16 %v4461
        %v4509 = vunpack.c.h.b16 %v4461
        %v4510 = vpack.c.b16 %v4478, %v4478
        %v4511 = vpack.c.b16 %v4479, %v4479
        %v4512 = vpack.c.b16 %v4480, %v4480
        %v4513 = vpack.c.b16 %v4481, %v4481
        %v4514 = vpack.c.b16 %v4482, %v4482
        %v4515 = vpack.c.b16 %v4483, %v4483
        %v4516 = vpack.c.b16 %v4484, %v4484
        %v4517 = vpack.c.b16 %v4485, %v4485
        %v4518 = vpack.c.b16 %v4486, %v4486
        %v4519 = vpack.c.b16 %v4487, %v4487
        %v4520 = vpack.c.b16 %v4488, %v4488
        %v4521 = vpack.c.b16 %v4489, %v4489
        %v4522 = vpack.c.b16 %v4490, %v4490
        %v4523 = vpack.c.b16 %v4491, %v4491
        %v4524 = vpack.c.b16 %v4492, %v4492
        %v4525 = vpack.c.b16 %v4493, %v4493
        %v4526 = vpack.c.b16 %v4494, %v4494
        %v4527 = vpack.c.b16 %v4495, %v4495
        %v4528 = vpack.c.b16 %v4496, %v4496
        %v4529 = vpack.c.b16 %v4497, %v4497
        %v4530 = vpack.c.b16 %v4498, %v4498
        %v4531 = vpack.c.b16 %v4499, %v4499
        %v4532 = vpack.c.b16 %v4500, %v4500
        %v4533 = vpack.c.b16 %v4501, %v4501
        %v4534 = vpack.c.b16 %v4502, %v4502
        %v4535 = vpack.c.b16 %v4503, %v4503
        %v4536 = vpack.c.b16 %v4504, %v4504
        %v4537 = vpack.c.b16 %v4505, %v4505
        %v4538 = vpack.c.b16 %v4506, %v4506
        %v4539 = vpack.c.b16 %v4507, %v4507
        %v4540 = vpack.c.b16 %v4508, %v4508
        %v4541 = vpack.c.b16 %v4509, %v4509
        %vm4574 = vcmask 125952
        %4575 = vst.msk [vmem:[%s316] sm:$0xf] %vm4574, %v4510
        %4576 = vst.msk [vmem:[%s316 + $0x4] sm:$0xf] %vm4574, %v4511
        %4577 = vst.msk [vmem:[%s316 + $0x8] sm:$0xf] %vm4574, %v4512
        %4578 = vst.msk [vmem:[%s316 + $0xc] sm:$0xf] %vm4574, %v4513
        %4579 = vst.msk [vmem:[%s316 + $0x10] sm:$0xf] %vm4574, %v4514
        %4580 = vst.msk [vmem:[%s316 + $0x14] sm:$0xf] %vm4574, %v4515
        %4581 = vst.msk [vmem:[%s316 + $0x18] sm:$0xf] %vm4574, %v4516
        %4582 = vst.msk [vmem:[%s316 + $0x1c] sm:$0xf] %vm4574, %v4517
        %4583 = vst.msk [vmem:[%s316 + $0x20] sm:$0xf] %vm4574, %v4518
        %4584 = vst.msk [vmem:[%s316 + $0x24] sm:$0xf] %vm4574, %v4519
        %4585 = vst.msk [vmem:[%s316 + $0x28] sm:$0xf] %vm4574, %v4520
        %4586 = vst.msk [vmem:[%s316 + $0x2c] sm:$0xf] %vm4574, %v4521
        %4587 = vst.msk [vmem:[%s316 + $0x30] sm:$0xf] %vm4574, %v4522
        %4588 = vst.msk [vmem:[%s316 + $0x34] sm:$0xf] %vm4574, %v4523
        %4589 = vst.msk [vmem:[%s316 + $0x38] sm:$0xf] %vm4574, %v4524
        %4590 = vst.msk [vmem:[%s316 + $0x3c] sm:$0xf] %vm4574, %v4525
        %4591 = vst.msk [vmem:[%s316 + $0x40] sm:$0xf] %vm4574, %v4526
        %4592 = vst.msk [vmem:[%s316 + $0x44] sm:$0xf] %vm4574, %v4527
        %4593 = vst.msk [vmem:[%s316 + $0x48] sm:$0xf] %vm4574, %v4528
        %4594 = vst.msk [vmem:[%s316 + $0x4c] sm:$0xf] %vm4574, %v4529
        %4595 = vst.msk [vmem:[%s316 + $0x50] sm:$0xf] %vm4574, %v4530
        %4596 = vst.msk [vmem:[%s316 + $0x54] sm:$0xf] %vm4574, %v4531
        %4597 = vst.msk [vmem:[%s316 + $0x58] sm:$0xf] %vm4574, %v4532
        %4598 = vst.msk [vmem:[%s316 + $0x5c] sm:$0xf] %vm4574, %v4533
        %4599 = vst.msk [vmem:[%s316 + $0x60] sm:$0xf] %vm4574, %v4534
        %4600 = vst.msk [vmem:[%s316 + $0x64] sm:$0xf] %vm4574, %v4535
        %4601 = vst.msk [vmem:[%s316 + $0x68] sm:$0xf] %vm4574, %v4536
        %4602 = vst.msk [vmem:[%s316 + $0x6c] sm:$0xf] %vm4574, %v4537
        %4603 = vst.msk [vmem:[%s316 + $0x70] sm:$0xf] %vm4574, %v4538
        %4604 = vst.msk [vmem:[%s316 + $0x74] sm:$0xf] %vm4574, %v4539
        %4605 = vst.msk [vmem:[%s316 + $0x78] sm:$0xf] %vm4574, %v4540
        %4606 = vst.msk [vmem:[%s316 + $0x7c] sm:$0xf] %vm4574, %v4541
        %s4607 = sand.u32 %s201, 1
        %s4608 = scalar_lea.sflag [#allocation8], %s4607
        %s4609 = sand.u32 %s201, 1
        %s4610 = smul.addr %s4609, 128
        %s4611 = scalar_lea.vmem [#allocation9], %s4610
        // Predicated region
        $region85: #{tpu_custom_call.1} parent=47 // pred_check
          %p4612 = pneg %p211
        $region86: #{tpu_custom_call.1} parent=47 // pred_check_branch
          %4614 = sbr.rel (%p4612) target = $region88
        $region87: #{tpu_custom_call.1} parent=47 // pred_region
          %s4615 = smul.u32 16, %s30
          %s4617 = ssub.s32 2048, 2048
          %4618 = vsyncadd %s4608, %s4617
          %s4619 = smul.addr %s4615, 2
          %s4620 = smul.addr %s29, 32
          %s4621 = sadd.s32 %s4619, %s4620
          %s4622 = smul.addr %s4621, 64
          %s4623 = scalar_lea.hbm %s8, %s4622
          %s4624 = sshll.u32 %s4611, 4
          %s4625 = int_to_ptr.vmem [resolvable:$true] %s4624
          %4630 = dma.vmem_to_hbm [thread:$0]  %s4625, 2048, %s4623, %s4608, 64, 64, 4
        $region88: #{tpu_custom_call.1} parent=47 // pred_fallthru
          _
      $region48: #{tpu_custom_call.1} parent=5 // pred_fallthru
        _
      %p4631 = scmp.le.s32.totalorder 2, %s20
      // Predicated region
      $region89: #{tpu_custom_call.1} parent=5 // pred_check
        %p4632 = pneg %p4631
      $region90: #{tpu_custom_call.1} parent=5 // pred_check_branch
        %4634 = sbr.rel (%p4632) target = $region92
      $region91: #{tpu_custom_call.1} parent=5 // pred_region
        %s4635 = ssub.s32 %s20, 2
        // Predicated region
        $region93: #{tpu_custom_call.1} parent=91 // pred_check
          %p4636 = pneg %p217
        $region94: #{tpu_custom_call.1} parent=91 // pred_check_branch
          %4638 = sbr.rel (%p4636) target = $region96
        $region95: #{tpu_custom_call.1} parent=91 // pred_region
          %s4639 = sand.u32 %s202, 1
          %s4640 = scalar_lea.sflag [#allocation8], %s4639
          %s4641 = sand.u32 %s202, 1
          %s4642 = smul.addr %s4641, 128
          %s4643 = scalar_lea.vmem [#allocation9], %s4642
          %4644 = dma.done %s4640, 2048
        $region96: #{tpu_custom_call.1} parent=91 // pred_fallthru
          _
      $region92: #{tpu_custom_call.1} parent=5 // pred_fallthru
        _
    $region6: #{tpu_custom_call.1} parent=1 // loop_footer
      %s24 = sadd.s32 1, %s20
    $region7: #{tpu_custom_call.1} parent=1 // loop_footer_branch
      %19 = sbr.rel target = $region3
    $region8: #{tpu_custom_call.1} parent=1 // loop_exit
      _
    %4645 = vsyncpa [#allocation7], 1
    %s4646 = scalar_lea.sflag [#allocation7], 1
    %4647 = vsyncpa %s4646, 1
    %4648 = vsyncpa [#allocation8], 1
    %s4649 = scalar_lea.sflag [#allocation8], 1
    %4650 = vsyncpa %s4649, 1
  %4651 = vsyncmov [#allocation5]
  %s4652 = vpop.sfrf %4651
  %p4653 = scmp.eq.s32.totalorder %s4652, 0
  %p4654 = pneg %p4653
  %4656 = shalt.err (%p4654)
  %s4657 = scalar_lea.sflag [#allocation5], 1
  %4658 = vsyncmov %s4657
  %s4659 = vpop.sfrf %4658
  %p4660 = scmp.eq.s32.totalorder %s4659, 0
  %p4661 = pneg %p4660
  %4663 = shalt.err (%p4661)

// kernel: tpu_custom_call.1
$region0: #{tpu_custom_call.1}
  #allocation0 [shape = 'u32[]', space=smem, size = 0x4, offset = 0x4, fixed_abs, tag = 'smem constant byte address 0x4 - core index']
  #allocation1 [shape = 'u32[144,128]{1,0:T(1,128)}', space=vmem, size = 0x12000, scoped, tag = 'internal scratch']
  #allocation2 [shape = 'bf16[2,16,16]{2,1,0:T(16,128)(2,1)}', space=vmem, size = 0x2000, scoped, tag = 'scratch operand']
  #allocation3 [shape = 'bf16[2,16,16]{2,1,0:T(16,128)(2,1)}', space=vmem, size = 0x2000, scoped, tag = 'scratch operand']
  #allocation4 [shape = 'bf16[20,34,4]{2,1,0:T(8,128)(2,1)}', space=vmem, size = 0x32000, scoped, tag = 'scratch operand']
  #allocation5 [shape = 's32[2]{0}', space=sflag, size = 0x8, scoped, tag = 'scratch operand']
  #allocation10 [shape = 's32[]', space=sflag, size = 0x4, offset = 0, fixed_abs, tag = 'sflag constant byte address 0x0 - dummy sync flag']
  #allocation11 [shape = 's32[]', space=sflag, size = 0x4, offset = 0, fixed_abs, tag = 'sflag constant byte address 0x0 - dummy sync flag']
  #allocation12 [shape = 'u32[]', space=smem, size = 0x4, offset = 0x44, fixed_abs, tag = 'smem constant byte address 0x44 - assertion arg 0']
  #allocation13 [shape = 'u32[]', space=smem, size = 0x4, offset = 0x48, fixed_abs, tag = 'smem constant byte address 0x48 - assertion arg 1']
  #allocation14 [shape = 's32[]', space=sflag, size = 0x4, offset = 0, fixed_abs, tag = 'sflag constant byte address 0x0 - dummy sync flag']
  #allocation15 [shape = 's32[]', space=sflag, size = 0x4, offset = 0, fixed_abs, tag = 'sflag constant byte address 0x0 - dummy sync flag']
  %s0 = inlined_call_operand.hbm [shape: bf16[2,16,16,16], index: 0, kind: input, shape index: {}]
  %s1 = inlined_call_operand.hbm [shape: bf16[2,16,16,16], index: 1, kind: input, shape index: {}]
  %s2 = inlined_call_operand.vmem [shape: bf16[16,4], index: 2, kind: input, shape index: {}]
  %s3 = inlined_call_operand.vmem [shape: bf16[3,3,4,4], index: 3, kind: input, shape index: {}]
  %s4 = inlined_call_operand.vmem [shape: bf16[4,16], index: 4, kind: input, shape index: {}]
  %s5 = inlined_call_operand.vmem [shape: f32[2,4], index: 5, kind: input, shape index: {}]
  %s6 = inlined_call_operand.vmem [shape: f32[2,4], index: 6, kind: input, shape index: {}]
  %s7 = inlined_call_operand.vmem [shape: f32[2,16], index: 7, kind: input, shape index: {}]
  %s8 = inlined_call_operand.hbm [shape: bf16[2,16,16,16], index: 8, kind: output, shape index: {}]
  %s9 = sld [smem:[#allocation0]]
  $region97: #{tpu_custom_call.1} parent=0
    _
  %s11 = ssub.s32 1, %s9
  %s12 = scalar_select 0, %s11, %s9
  $region1: #{tpu_custom_call.1} parent=0
    #allocation6 [shape = 'u8[131072]{0}', space=vmem, size = 0x20000, scoped, tag = 'input window, operand 0']
    #allocation7 [shape = 's32[2]{0}', space=sflag, size = 0x8, scoped, tag = 'scoped memory for tpu_custom_call.1']
    #allocation8 [shape = 's32[2]{0}', space=sflag, size = 0x8, scoped, tag = 'scoped memory for tpu_custom_call.1']
    #allocation9 [shape = 'u8[131072]{0}', space=vmem, size = 0x20000, scoped, tag = 'output window, operand 0']
    %13 = vsyncpa [#allocation7], 0
    %s14 = scalar_lea.sflag [#allocation7], 1
    %15 = vsyncpa %s14, 0
    %16 = vsyncpa [#allocation8], 0
    %s17 = scalar_lea.sflag [#allocation8], 1
    %18 = vsyncpa %s17, 0
    loop: start=0, step=1, limit=4
    $region2: #{tpu_custom_call.1} parent=1 // loop_pre_header
      _
    $region3: #{tpu_custom_call.1} parent=1 // loop_header
      %s20 = sphi 0, %s24
      %p21 = scmp.ge.s32.totalorder %s20, 4
      %s27 = sphi 0, %s39
      %s28 = sphi 0, %s35
      %s29 = sphi 0, %s27
      %s30 = sphi 0, %s28
      %s31 = sphi 0, %s29
      %s32 = sphi 0, %s30
      %s44 = sphi 0, %s46
      %s47 = sphi 0, %s44
      %s48 = sphi 0, %s47
      %s64 = sphi 0, %s48
      %s68 = sphi 0, %s68
      %s70 = sphi 0, %s68
      %s71 = sphi 0, %s70
      %s85 = sphi 0, %s71
      %s89 = sphi 0, %s89
      %s91 = sphi 0, %s89
      %s92 = sphi 0, %s91
      %s106 = sphi 0, %s92
      %s110 = sphi 0, %s110
      %s112 = sphi 0, %s110
      %s113 = sphi 0, %s112
      %s127 = sphi 0, %s113
      %s131 = sphi 0, %s131
      %s133 = sphi 0, %s131
      %s134 = sphi 0, %s133
      %s148 = sphi 0, %s134
      %s152 = sphi 0, %s152
      %s154 = sphi 0, %s152
      %s155 = sphi 0, %s154
      %s169 = sphi 0, %s155
      %s173 = sphi 0, %s173
      %s175 = sphi 0, %s173
      %s176 = sphi 0, %s175
      %s190 = sphi 0, %s176
      %s198 = sphi 0, %s200
      %s201 = sphi 0, %s198
      %s202 = sphi 0, %s201
      %s218 = sphi 0, %s202
    $region4: #{tpu_custom_call.1} parent=1 // loop_header_branch
      %23 = sbr.rel (%p21) target = $region8
    $region5: #{tpu_custom_call.1} parent=1 // loop_body
      %s25 = ssub.s32 %s20, 1
      %s26 = ssub.s32 %s20, 2
      %s33 = sadd.s32 1, %s28
      %p34 = scmp.ge.s32.totalorder %s33, 1
      %s35 = scalar_select %p34, 0, %s33
      %s36 = sadd.s32 1, %s27
      %s37 = scalar_select %p34, %s36, %s27
      %p38 = scmp.ge.s32.totalorder %s37, 2
      %s39 = scalar_select %p38, 0, %s37
      %s40 = ssub.s32 %s27, %s39
      %s41 = ssub.s32 %s28, %s35
      %s42 = sor.u32 %s40, %s41
      %p43 = scmp.eq.s32.totalorder %s42, 0
      %s45 = sadd.s32 %s44, 1
      %s46 = scalar_select %p43, %s44, %s45
      %p49 = pneg %p43
      %p50 = scmp.eq.s32.totalorder %s20, 1
      %p51 = por %p49, %p50
      %p52 = scmp.ne.s32.totalorder %s44, %s47
      %p53 = scmp.eq.s32.totalorder %s20, 0
      %p54 = por %p52, %p53
      %p55 = scmp.ne.s32.totalorder %s44, %s47
      %p56 = scmp.eq.s32.totalorder %s25, 1
      %p57 = por %p55, %p56
      %p58 = scmp.ne.s32.totalorder %s47, %s48
      %p59 = scmp.eq.s32.totalorder %s25, 0
      %p60 = por %p58, %p59
      %p61 = scmp.ne.s32.totalorder %s47, %s48
      %p62 = scmp.eq.s32.totalorder %s26, 1
      %p63 = por %p61, %p62
      %p65 = scmp.ne.s32.totalorder %s48, %s64
      %p66 = scmp.eq.s32.totalorder %s26, 0
      %p67 = por %p65, %p66
      %s69 = sadd.s32 %s68, 1
      %p72 = scmp.eq.s32.totalorder %s20, 1
      %p73 = scmp.ne.s32.totalorder %s68, %s70
      %p74 = scmp.eq.s32.totalorder %s20, 0
      %p75 = por %p73, %p74
      %p76 = scmp.ne.s32.totalorder %s68, %s70
      %p77 = scmp.eq.s32.totalorder %s25, 1
      %p78 = por %p76, %p77
      %p79 = scmp.ne.s32.totalorder %s70, %s71
      %p80 = scmp.eq.s32.totalorder %s25, 0
      %p81 = por %p79, %p80
      %p82 = scmp.ne.s32.totalorder %s70, %s71
      %p83 = scmp.eq.s32.totalorder %s26, 1
      %p84 = por %p82, %p83
      %p86 = scmp.ne.s32.totalorder %s71, %s85
      %p87 = scmp.eq.s32.totalorder %s26, 0
      %p88 = por %p86, %p87
      %s90 = sadd.s32 %s89, 1
      %p93 = scmp.eq.s32.totalorder %s20, 1
      %p94 = scmp.ne.s32.totalorder %s89, %s91
      %p95 = scmp.eq.s32.totalorder %s20, 0
      %p96 = por %p94, %p95
      %p97 = scmp.ne.s32.totalorder %s89, %s91
      %p98 = scmp.eq.s32.totalorder %s25, 1
      %p99 = por %p97, %p98
      %p100 = scmp.ne.s32.totalorder %s91, %s92
      %p101 = scmp.eq.s32.totalorder %s25, 0
      %p102 = por %p100, %p101
      %p103 = scmp.ne.s32.totalorder %s91, %s92
      %p104 = scmp.eq.s32.totalorder %s26, 1
      %p105 = por %p103, %p104
      %p107 = scmp.ne.s32.totalorder %s92, %s106
      %p108 = scmp.eq.s32.totalorder %s26, 0
      %p109 = por %p107, %p108
      %s111 = sadd.s32 %s110, 1
      %p114 = scmp.eq.s32.totalorder %s20, 1
      %p115 = scmp.ne.s32.totalorder %s110, %s112
      %p116 = scmp.eq.s32.totalorder %s20, 0
      %p117 = por %p115, %p116
      %p118 = scmp.ne.s32.totalorder %s110, %s112
      %p119 = scmp.eq.s32.totalorder %s25, 1
      %p120 = por %p118, %p119
      %p121 = scmp.ne.s32.totalorder %s112, %s113
      %p122 = scmp.eq.s32.totalorder %s25, 0
      %p123 = por %p121, %p122
      %p124 = scmp.ne.s32.totalorder %s112, %s113
      %p125 = scmp.eq.s32.totalorder %s26, 1
      %p126 = por %p124, %p125
      %p128 = scmp.ne.s32.totalorder %s113, %s127
      %p129 = scmp.eq.s32.totalorder %s26, 0
      %p130 = por %p128, %p129
      %s132 = sadd.s32 %s131, 1
      %p135 = scmp.eq.s32.totalorder %s20, 1
      %p136 = scmp.ne.s32.totalorder %s131, %s133
      %p137 = scmp.eq.s32.totalorder %s20, 0
      %p138 = por %p136, %p137
      %p139 = scmp.ne.s32.totalorder %s131, %s133
      %p140 = scmp.eq.s32.totalorder %s25, 1
      %p141 = por %p139, %p140
      %p142 = scmp.ne.s32.totalorder %s133, %s134
      %p143 = scmp.eq.s32.totalorder %s25, 0
      %p144 = por %p142, %p143
      %p145 = scmp.ne.s32.totalorder %s133, %s134
      %p146 = scmp.eq.s32.totalorder %s26, 1
      %p147 = por %p145, %p146
      %p149 = scmp.ne.s32.totalorder %s134, %s148
      %p150 = scmp.eq.s32.totalorder %s26, 0
      %p151 = por %p149, %p150
      %s153 = sadd.s32 %s152, 1
      %p156 = scmp.eq.s32.totalorder %s20, 1
      %p157 = scmp.ne.s32.totalorder %s152, %s154
      %p158 = scmp.eq.s32.totalorder %s20, 0
      %p159 = por %p157, %p158
      %p160 = scmp.ne.s32.totalorder %s152, %s154
      %p161 = scmp.eq.s32.totalorder %s25, 1
      %p162 = por %p160, %p161
      %p163 = scmp.ne.s32.totalorder %s154, %s155
      %p164 = scmp.eq.s32.totalorder %s25, 0
      %p165 = por %p163, %p164
      %p166 = scmp.ne.s32.totalorder %s154, %s155
      %p167 = scmp.eq.s32.totalorder %s26, 1
      %p168 = por %p166, %p167
      %p170 = scmp.ne.s32.totalorder %s155, %s169
      %p171 = scmp.eq.s32.totalorder %s26, 0
      %p172 = por %p170, %p171
      %s174 = sadd.s32 %s173, 1
      %p177 = scmp.eq.s32.totalorder %s20, 1
      %p178 = scmp.ne.s32.totalorder %s173, %s175
      %p179 = scmp.eq.s32.totalorder %s20, 0
      %p180 = por %p178, %p179
      %p181 = scmp.ne.s32.totalorder %s173, %s175
      %p182 = scmp.eq.s32.totalorder %s25, 1
      %p183 = por %p181, %p182
      %p184 = scmp.ne.s32.totalorder %s175, %s176
      %p185 = scmp.eq.s32.totalorder %s25, 0
      %p186 = por %p184, %p185
      %p187 = scmp.ne.s32.totalorder %s175, %s176
      %p188 = scmp.eq.s32.totalorder %s26, 1
      %p189 = por %p187, %p188
      %p191 = scmp.ne.s32.totalorder %s176, %s190
      %p192 = scmp.eq.s32.totalorder %s26, 0
      %p193 = por %p191, %p192
      %s194 = ssub.s32 %s27, %s39
      %s195 = ssub.s32 %s28, %s35
      %s196 = sor.u32 %s194, %s195
      %p197 = scmp.eq.s32.totalorder %s196, 0
      %s199 = sadd.s32 %s198, 1
      %s200 = scalar_select %p197, %s198, %s199
      %p203 = pneg %p197
      %p204 = scmp.eq.s32.totalorder %s20, 1
      %p205 = por %p203, %p204
      %p206 = scmp.ne.s32.totalorder %s198, %s201
      %p207 = scmp.eq.s32.totalorder %s20, 0
      %p208 = por %p206, %p207
      %p209 = scmp.ne.s32.totalorder %s198, %s201
      %p210 = scmp.eq.s32.totalorder %s25, 1
      %p211 = por %p209, %p210
      %p212 = scmp.ne.s32.totalorder %s201, %s202
      %p213 = scmp.eq.s32.totalorder %s25, 0
      %p214 = por %p212, %p213
      %p215 = scmp.ne.s32.totalorder %s201, %s202
      %p216 = scmp.eq.s32.totalorder %s26, 1
      %p217 = por %p215, %p216
      %p219 = scmp.ne.s32.totalorder %s202, %s218
      %p220 = scmp.eq.s32.totalorder %s26, 0
      %p221 = por %p219, %p220
      %p222 = scmp.le.s32.totalorder 1, %s20
      %p223 = scmp.lt.s32.totalorder %s20, 3
      %p224 = pnand %p222, %p223
      %p225 = pneg %p224
      // Predicated region
      $region9: #{tpu_custom_call.1} parent=5 // pred_check
        _
      $region10: #{tpu_custom_call.1} parent=5 // pred_check_branch
        %227 = sbr.rel (%p224) target = $region12
      $region11: #{tpu_custom_call.1} parent=5 // pred_region
        %s228 = ssub.s32 %s20, 1
        // Predicated region
        $region13: #{tpu_custom_call.1} parent=11 // pred_check
          %p229 = pneg %p81
        $region14: #{tpu_custom_call.1} parent=11 // pred_check_branch
          %231 = sbr.rel (%p229) target = $region16
        $region15: #{tpu_custom_call.1} parent=11 // pred_region
          _
        $region16: #{tpu_custom_call.1} parent=11 // pred_fallthru
          _
        // Predicated region
        $region17: #{tpu_custom_call.1} parent=11 // pred_check
          %p232 = pneg %p102
        $region18: #{tpu_custom_call.1} parent=11 // pred_check_branch
          %234 = sbr.rel (%p232) target = $region20
        $region19: #{tpu_custom_call.1} parent=11 // pred_region
          _
        $region20: #{tpu_custom_call.1} parent=11 // pred_fallthru
          _
        // Predicated region
        $region21: #{tpu_custom_call.1} parent=11 // pred_check
          %p235 = pneg %p123
        $region22: #{tpu_custom_call.1} parent=11 // pred_check_branch
          %237 = sbr.rel (%p235) target = $region24
        $region23: #{tpu_custom_call.1} parent=11 // pred_region
          _
        $region24: #{tpu_custom_call.1} parent=11 // pred_fallthru
          _
        // Predicated region
        $region25: #{tpu_custom_call.1} parent=11 // pred_check
          %p238 = pneg %p144
        $region26: #{tpu_custom_call.1} parent=11 // pred_check_branch
          %240 = sbr.rel (%p238) target = $region28
        $region27: #{tpu_custom_call.1} parent=11 // pred_region
          _
        $region28: #{tpu_custom_call.1} parent=11 // pred_fallthru
          _
        // Predicated region
        $region29: #{tpu_custom_call.1} parent=11 // pred_check
          %p241 = pneg %p165
        $region30: #{tpu_custom_call.1} parent=11 // pred_check_branch
          %243 = sbr.rel (%p241) target = $region32
        $region31: #{tpu_custom_call.1} parent=11 // pred_region
          _
        $region32: #{tpu_custom_call.1} parent=11 // pred_fallthru
          _
        // Predicated region
        $region33: #{tpu_custom_call.1} parent=11 // pred_check
          %p244 = pneg %p186
        $region34: #{tpu_custom_call.1} parent=11 // pred_check_branch
          %246 = sbr.rel (%p244) target = $region36
        $region35: #{tpu_custom_call.1} parent=11 // pred_region
          _
        $region36: #{tpu_custom_call.1} parent=11 // pred_fallthru
          _
      $region12: #{tpu_custom_call.1} parent=5 // pred_fallthru
        _
      %p247 = scmp.lt.s32.totalorder %s20, 2
      // Predicated region
      $region37: #{tpu_custom_call.1} parent=5 // pred_check
        %p248 = pneg %p247
      $region38: #{tpu_custom_call.1} parent=5 // pred_check_branch
        %250 = sbr.rel (%p248) target = $region40
      $region39: #{tpu_custom_call.1} parent=5 // pred_region
        // Predicated region
        $region41: #{tpu_custom_call.1} parent=39 // pred_check
          %p251 = pneg %p54
        $region42: #{tpu_custom_call.1} parent=39 // pred_check_branch
          %253 = sbr.rel (%p251) target = $region44
        $region43: #{tpu_custom_call.1} parent=39 // pred_region
          %s254 = sand.u32 %s44, 1
          %s255 = scalar_lea.sflag [#allocation7], %s254
          %s256 = sand.u32 %s44, 1
          %s257 = smul.addr %s256, 128
          %s258 = scalar_lea.vmem [#allocation6], %s257
          %s259 = smul.u32 16, %s28
          %s261 = ssub.s32 2048, 2048
          %262 = vsyncadd %s255, %s261
          %s263 = smul.addr %s259, 2
          %s264 = smul.addr %s27, 32
          %s265 = sadd.s32 %s263, %s264
          %s266 = smul.addr %s265, 64
          %s267 = scalar_lea.hbm %s0, %s266
          %s268 = sshll.u32 %s258, 4
          %s269 = int_to_ptr.vmem [resolvable:$true] %s268
          %274 = dma.hbm_to_vmem [thread:$0]  %s267, 2048, %s269, %s255, 64, 64, 4
        $region44: #{tpu_custom_call.1} parent=39 // pred_fallthru
          _
      $region40: #{tpu_custom_call.1} parent=5 // pred_fallthru
        _
      %p275 = scmp.le.s32.totalorder 1, %s20
      %p276 = scmp.lt.s32.totalorder %s20, 3
      %p277 = pnand %p275, %p276
      %p278 = pneg %p277
      // Predicated region
      $region45: #{tpu_custom_call.1} parent=5 // pred_check
        _
      $region46: #{tpu_custom_call.1} parent=5 // pred_check_branch
        %280 = sbr.rel (%p277) target = $region48
      $region47: #{tpu_custom_call.1} parent=5 // pred_region
        %s281 = ssub.s32 %s20, 1
        %s282 = sand.u32 %s47, 1
        %s283 = scalar_lea.sflag [#allocation7], %s282
        %s284 = sand.u32 %s47, 1
        %s285 = smul.addr %s284, 128
        %s286 = scalar_lea.vmem [#allocation6], %s285
        // Predicated region
        $region49: #{tpu_custom_call.1} parent=47 // pred_check
          %p287 = pneg %p60
        $region50: #{tpu_custom_call.1} parent=47 // pred_check_branch
          %289 = sbr.rel (%p287) target = $region52
        $region51: #{tpu_custom_call.1} parent=47 // pred_region
          %290 = dma.done %s283, 2048
        $region52: #{tpu_custom_call.1} parent=47 // pred_fallthru
          _
        %s291 = sand.u32 %s47, 1
        %s292 = scalar_lea.sflag [#allocation7], %s291
        %s293 = sand.u32 %s47, 1
        %s294 = smul.addr %s293, 128
        %s295 = scalar_lea.vmem [#allocation6], %s294
        %p296 = pneg %p60
        %p297 = pneg %p57
        %p298 = pneg %p81
        %p299 = pneg %p78
        %p300 = pneg %p102
        %p301 = pneg %p99
        %p302 = pneg %p123
        %p303 = pneg %p120
        %p304 = pneg %p144
        %p305 = pneg %p141
        %p306 = pneg %p165
        %p307 = pneg %p162
        %p308 = pneg %p186
        %p309 = pneg %p183
        %p310 = pneg %p214
        %p311 = pneg %p211
        %s312 = sand.u32 %s201, 1
        %s313 = scalar_lea.sflag [#allocation8], %s312
        %s314 = sand.u32 %s201, 1
        %s315 = smul.addr %s314, 128
        %s316 = scalar_lea.vmem [#allocation9], %s315
        %s317 = smul.u32 16, %s30
        %s318 = smul.u32 16, %s30
        %s320 = smul.u32 %s30, 16
        %p321 = scmp.gt.s32.totalorder %s30, 0
        // Predicated region
        $region53: #{tpu_custom_call.1} parent=47 // pred_check
          %p322 = pneg %p321
        $region54: #{tpu_custom_call.1} parent=47 // pred_check_branch
          %324 = sbr.rel (%p322) target = $region56
        $region55: #{tpu_custom_call.1} parent=47 // pred_region
          %s325 = ssub.s32 %s320, 2
          %s326 = smul.u32 %s325, 2
          %s327 = smul.u32 %s29, 32
          %s328 = sadd.s32 %s326, %s327
          %s329 = smul.addr %s328, 64
          %s330 = scalar_lea.hbm %s1, %s329
          // Predicated region
          $region57: #{tpu_custom_call.1} parent=55 // pred_check
            _
          $region58: #{tpu_custom_call.1} parent=55 // pred_check_branch
            %332 = sbr.rel target = $region60
          $region59: #{tpu_custom_call.1} parent=55 // pred_region
            %333 = sst [smem:[#allocation12]] [#allocation11]
            %334 = sst [smem:[#allocation13]] [#allocation10]
          $region60: #{tpu_custom_call.1} parent=55 // pred_fallthru
            _
          %336 = shalt.err (0)
          %s338 = sshll.u32 [#allocation2], 4
          %s339 = int_to_ptr.vmem [resolvable:$true] %s338
          %341 = dma.hbm_to_vmem [thread:$0]  %s330, 256, %s339, [#allocation5]
        $region56: #{tpu_custom_call.1} parent=47 // pred_fallthru
          _
        %p342 = scmp.lt.s32.totalorder %s30, 0
        // Predicated region
        $region61: #{tpu_custom_call.1} parent=47 // pred_check
          %p343 = pneg %p342
        $region62: #{tpu_custom_call.1} parent=47 // pred_check_branch
          %345 = sbr.rel (%p343) target = $region64
        $region63: #{tpu_custom_call.1} parent=47 // pred_region
          %s346 = sadd.s32 %s320, 16
          %s347 = smul.u32 %s346, 2
          %s348 = smul.u32 %s29, 32
          %s349 = sadd.s32 %s347, %s348
          %s350 = smul.addr %s349, 64
          %s351 = scalar_lea.hbm %s1, %s350
          %s352 = scalar_lea.sflag [#allocation5], 1
          // Predicated region
          $region65: #{tpu_custom_call.1} parent=63 // pred_check
            _
          $region66: #{tpu_custom_call.1} parent=63 // pred_check_branch
            %354 = sbr.rel target = $region68
          $region67: #{tpu_custom_call.1} parent=63 // pred_region
            %355 = sst [smem:[#allocation12]] [#allocation15]
            %356 = sst [smem:[#allocation13]] [#allocation14]
          $region68: #{tpu_custom_call.1} parent=63 // pred_fallthru
            _
          %358 = shalt.err (0)
          %s360 = sshll.u32 [#allocation3], 4
          %s361 = int_to_ptr.vmem [resolvable:$true] %s360
          %363 = dma.hbm_to_vmem [thread:$0]  %s351, 256, %s361, %s352
        $region64: #{tpu_custom_call.1} parent=47 // pred_fallthru
          _
        %v364 = vld [vmem:[%s286] sm:$0xf]
        %v365 = vld [vmem:[%s286 + $0x4] sm:$0xf]
        %v366 = vld [vmem:[%s286 + $0x8] sm:$0xf]
        %v367 = vld [vmem:[%s286 + $0xc] sm:$0xf]
        %v368 = vld [vmem:[%s286 + $0x10] sm:$0xf]
        %v369 = vld [vmem:[%s286 + $0x14] sm:$0xf]
        %v370 = vld [vmem:[%s286 + $0x18] sm:$0xf]
        %v371 = vld [vmem:[%s286 + $0x1c] sm:$0xf]
        %v372 = vld [vmem:[%s286 + $0x20] sm:$0xf]
        %v373 = vld [vmem:[%s286 + $0x24] sm:$0xf]
        %v374 = vld [vmem:[%s286 + $0x28] sm:$0xf]
        %v375 = vld [vmem:[%s286 + $0x2c] sm:$0xf]
        %v376 = vld [vmem:[%s286 + $0x30] sm:$0xf]
        %v377 = vld [vmem:[%s286 + $0x34] sm:$0xf]
        %v378 = vld [vmem:[%s286 + $0x38] sm:$0xf]
        %v379 = vld [vmem:[%s286 + $0x3c] sm:$0xf]
        %v380 = vld [vmem:[%s286 + $0x40] sm:$0xf]
        %v381 = vld [vmem:[%s286 + $0x44] sm:$0xf]
        %v382 = vld [vmem:[%s286 + $0x48] sm:$0xf]
        %v383 = vld [vmem:[%s286 + $0x4c] sm:$0xf]
        %v384 = vld [vmem:[%s286 + $0x50] sm:$0xf]
        %v385 = vld [vmem:[%s286 + $0x54] sm:$0xf]
        %v386 = vld [vmem:[%s286 + $0x58] sm:$0xf]
        %v387 = vld [vmem:[%s286 + $0x5c] sm:$0xf]
        %v388 = vld [vmem:[%s286 + $0x60] sm:$0xf]
        %v389 = vld [vmem:[%s286 + $0x64] sm:$0xf]
        %v390 = vld [vmem:[%s286 + $0x68] sm:$0xf]
        %v391 = vld [vmem:[%s286 + $0x6c] sm:$0xf]
        %v392 = vld [vmem:[%s286 + $0x70] sm:$0xf]
        %v393 = vld [vmem:[%s286 + $0x74] sm:$0xf]
        %v394 = vld [vmem:[%s286 + $0x78] sm:$0xf]
        %v395 = vld [vmem:[%s286 + $0x7c] sm:$0xf]
        %v396 = vld [vmem:[%s2] sm:$0xf]
        %v397 = vld [vmem:[%s2 + $0x4] sm:$0xf]
        %v430 = vunpack.c.l.b16 %v364
        %v431 = vunpack.c.l.b16 %v365
        %v432 = vunpack.c.l.b16 %v366
        %v433 = vunpack.c.l.b16 %v367
        %v434 = vunpack.c.l.b16 %v368
        %v435 = vunpack.c.l.b16 %v369
        %v436 = vunpack.c.l.b16 %v370
        %v437 = vunpack.c.l.b16 %v371
        %v438 = vunpack.c.l.b16 %v372
        %v439 = vunpack.c.l.b16 %v373
        %v440 = vunpack.c.l.b16 %v374
        %v441 = vunpack.c.l.b16 %v375
        %v442 = vunpack.c.l.b16 %v376
        %v443 = vunpack.c.l.b16 %v377
        %v444 = vunpack.c.l.b16 %v378
        %v445 = vunpack.c.l.b16 %v379
        %v446 = vunpack.c.l.b16 %v380
        %v447 = vunpack.c.l.b16 %v381
        %v448 = vunpack.c.l.b16 %v382
        %v449 = vunpack.c.l.b16 %v383
        %v450 = vunpack.c.l.b16 %v384
        %v451 = vunpack.c.l.b16 %v385
        %v452 = vunpack.c.l.b16 %v386
        %v453 = vunpack.c.l.b16 %v387
        %v454 = vunpack.c.l.b16 %v388
        %v455 = vunpack.c.l.b16 %v389
        %v456 = vunpack.c.l.b16 %v390
        %v457 = vunpack.c.l.b16 %v391
        %v458 = vunpack.c.l.b16 %v392
        %v459 = vunpack.c.l.b16 %v393
        %v460 = vunpack.c.l.b16 %v394
        %v461 = vunpack.c.l.b16 %v395
        %v462 = vpack.c.b16 %v431, %v430
        %v463 = vpack.c.b16 %v433, %v432
        %v464 = vpack.c.b16 %v435, %v434
        %v465 = vpack.c.b16 %v437, %v436
        %v466 = vpack.c.b16 %v439, %v438
        %v467 = vpack.c.b16 %v441, %v440
        %v468 = vpack.c.b16 %v443, %v442
        %v469 = vpack.c.b16 %v445, %v444
        %v470 = vpack.c.b16 %v447, %v446
        %v471 = vpack.c.b16 %v449, %v448
        %v472 = vpack.c.b16 %v451, %v450
        %v473 = vpack.c.b16 %v453, %v452
        %v474 = vpack.c.b16 %v455, %v454
        %v475 = vpack.c.b16 %v457, %v456
        %v476 = vpack.c.b16 %v459, %v458
        %v477 = vpack.c.b16 %v461, %v460
        %v480 = vunpack.c.l.b16 %v396
        %v481 = vunpack.c.l.b16 %v397
        %v482 = vpack.c.b16 %v481, %v480
        %vm484 = vcmask 130048
        %v486 = vsel %vm484, %v462, 0
        %v489 = vsel %vm484, %v463, 0
        %v492 = vsel %vm484, %v464, 0
        %v495 = vsel %vm484, %v465, 0
        %v498 = vsel %vm484, %v466, 0
        %v501 = vsel %vm484, %v467, 0
        %v504 = vsel %vm484, %v468, 0
        %v507 = vsel %vm484, %v469, 0
        %v510 = vsel %vm484, %v470, 0
        %v513 = vsel %vm484, %v471, 0
        %v516 = vsel %vm484, %v472, 0
        %v519 = vsel %vm484, %v473, 0
        %v522 = vsel %vm484, %v474, 0
        %v525 = vsel %vm484, %v475, 0
        %v528 = vsel %vm484, %v476, 0
        %v531 = vsel %vm484, %v477, 0
        %533 = vmatprep.subr.bf16.mxu0 0
        %534 = vmatpush1.bf16.msra.mxu0 %v482
        %535 = vmatprep.subr.bf16.mxu0 0
        %536 = vmatpush1.bf16.msra.mxu0 0
        %537 = vmatprep.subr.bf16.mxu0 0
        %538 = vmatpush1.bf16.msra.mxu0 0
        %539 = vmatprep.subr.bf16.mxu0 0
        %540 = vmatpush1.bf16.msra.mxu0 0
        %541 = vmatprep.subr.bf16.mxu0 0
        %542 = vmatpush1.bf16.msra.mxu0 0
        %543 = vmatprep.subr.bf16.mxu0 0
        %544 = vmatpush1.bf16.msra.mxu0 0
        %545 = vmatprep.subr.bf16.mxu0 0
        %546 = vmatpush1.bf16.msra.mxu0 0
        %547 = vmatprep.subr.bf16.mxu0 0
        %548 = vmatpush1.bf16.msra.mxu0 0
        %549 = vmatprep.subr.bf16.mxu0 0
        %550 = vmatpush1.bf16.msra.mxu0 0
        %551 = vmatprep.subr.bf16.mxu0 0
        %552 = vmatpush1.bf16.msra.mxu0 0
        %553 = vmatprep.subr.bf16.mxu0 0
        %554 = vmatpush1.bf16.msra.mxu0 0
        %555 = vmatprep.subr.bf16.mxu0 0
        %556 = vmatpush1.bf16.msra.mxu0 0
        %557 = vmatprep.subr.bf16.mxu0 0
        %558 = vmatpush1.bf16.msra.mxu0 0
        %559 = vmatprep.subr.bf16.mxu0 0
        %560 = vmatpush1.bf16.msra.mxu0 0
        %561 = vmatprep.subr.bf16.mxu0 0
        %562 = vmatpush1.bf16.msra.mxu0 0
        %563 = vmatprep.subr.bf16.mxu0 0
        %564 = vmatpush1.bf16.msra.mxu0 0
        %565 = vmatprep.mubr.bf16.mxu0 0
        %566 = vmatmul.mubr.bf16.gmra.mrb[0].mxu0 %v486
        %v567 = vpop.f32.mrb[0].mxu0
        %v568 = vadd.f32 0.0, %v567
        %v569 = vpop.f32.mrb[0].mxu0
        %v570 = vpop.f32.mrb[0].mxu0
        %v571 = vadd.f32 0.0, %v570
        %v572 = vpop.f32.mrb[0].mxu0
        %573 = vmatprep.mubr.bf16.mxu0 0
        %574 = vmatmul.mubr.bf16.gmra.mrb[0].mxu0 %v489
        %v575 = vpop.f32.mrb[0].mxu0
        %v576 = vadd.f32 0.0, %v575
        %v577 = vpop.f32.mrb[0].mxu0
        %v578 = vpop.f32.mrb[0].mxu0
        %v579 = vadd.f32 0.0, %v578
        %v580 = vpop.f32.mrb[0].mxu0
        %581 = vmatprep.mubr.bf16.mxu0 0
        %582 = vmatmul.mubr.bf16.gmra.mrb[0].mxu0 %v492
        %v583 = vpop.f32.mrb[0].mxu0
        %v584 = vadd.f32 0.0, %v583
        %v585 = vpop.f32.mrb[0].mxu0
        %v586 = vpop.f32.mrb[0].mxu0
        %v587 = vadd.f32 0.0, %v586
        %v588 = vpop.f32.mrb[0].mxu0
        %589 = vmatprep.mubr.bf16.mxu0 0
        %590 = vmatmul.mubr.bf16.gmra.mrb[0].mxu0 %v495
        %v591 = vpop.f32.mrb[0].mxu0
        %v592 = vadd.f32 0.0, %v591
        %v593 = vpop.f32.mrb[0].mxu0
        %v594 = vpop.f32.mrb[0].mxu0
        %v595 = vadd.f32 0.0, %v594
        %v596 = vpop.f32.mrb[0].mxu0
        %597 = vmatprep.mubr.bf16.mxu0 0
        %598 = vmatmul.mubr.bf16.gmra.mrb[0].mxu0 %v498
        %v599 = vpop.f32.mrb[0].mxu0
        %v600 = vadd.f32 0.0, %v599
        %v601 = vpop.f32.mrb[0].mxu0
        %v602 = vpop.f32.mrb[0].mxu0
        %v603 = vadd.f32 0.0, %v602
        %v604 = vpop.f32.mrb[0].mxu0
        %605 = vmatprep.mubr.bf16.mxu0 0
        %606 = vmatmul.mubr.bf16.gmra.mrb[0].mxu0 %v501
        %v607 = vpop.f32.mrb[0].mxu0
        %v608 = vadd.f32 0.0, %v607
        %v609 = vpop.f32.mrb[0].mxu0
        %v610 = vpop.f32.mrb[0].mxu0
        %v611 = vadd.f32 0.0, %v610
        %v612 = vpop.f32.mrb[0].mxu0
        %613 = vmatprep.mubr.bf16.mxu0 0
        %614 = vmatmul.mubr.bf16.gmra.mrb[0].mxu0 %v504
        %v615 = vpop.f32.mrb[0].mxu0
        %v616 = vadd.f32 0.0, %v615
        %v617 = vpop.f32.mrb[0].mxu0
        %v618 = vpop.f32.mrb[0].mxu0
        %v619 = vadd.f32 0.0, %v618
        %v620 = vpop.f32.mrb[0].mxu0
        %621 = vmatprep.mubr.bf16.mxu0 0
        %622 = vmatmul.mubr.bf16.gmra.mrb[0].mxu0 %v507
        %v623 = vpop.f32.mrb[0].mxu0
        %v624 = vadd.f32 0.0, %v623
        %v625 = vpop.f32.mrb[0].mxu0
        %v626 = vpop.f32.mrb[0].mxu0
        %v627 = vadd.f32 0.0, %v626
        %v628 = vpop.f32.mrb[0].mxu0
        %629 = vmatprep.mubr.bf16.mxu0 0
        %630 = vmatmul.mubr.bf16.gmra.mrb[0].mxu0 %v510
        %v631 = vpop.f32.mrb[0].mxu0
        %v632 = vadd.f32 0.0, %v631
        %v633 = vpop.f32.mrb[0].mxu0
        %v634 = vpop.f32.mrb[0].mxu0
        %v635 = vadd.f32 0.0, %v634
        %v636 = vpop.f32.mrb[0].mxu0
        %637 = vmatprep.mubr.bf16.mxu0 0
        %638 = vmatmul.mubr.bf16.gmra.mrb[0].mxu0 %v513
        %v639 = vpop.f32.mrb[0].mxu0
        %v640 = vadd.f32 0.0, %v639
        %v641 = vpop.f32.mrb[0].mxu0
        %v642 = vpop.f32.mrb[0].mxu0
        %v643 = vadd.f32 0.0, %v642
        %v644 = vpop.f32.mrb[0].mxu0
        %645 = vmatprep.mubr.bf16.mxu0 0
        %646 = vmatmul.mubr.bf16.gmra.mrb[0].mxu0 %v516
        %v647 = vpop.f32.mrb[0].mxu0
        %v648 = vadd.f32 0.0, %v647
        %v649 = vpop.f32.mrb[0].mxu0
        %v650 = vpop.f32.mrb[0].mxu0
        %v651 = vadd.f32 0.0, %v650
        %v652 = vpop.f32.mrb[0].mxu0
        %653 = vmatprep.mubr.bf16.mxu0 0
        %654 = vmatmul.mubr.bf16.gmra.mrb[0].mxu0 %v519
        %v655 = vpop.f32.mrb[0].mxu0
        %v656 = vadd.f32 0.0, %v655
        %v657 = vpop.f32.mrb[0].mxu0
        %v658 = vpop.f32.mrb[0].mxu0
        %v659 = vadd.f32 0.0, %v658
        %v660 = vpop.f32.mrb[0].mxu0
        %661 = vmatprep.mubr.bf16.mxu0 0
        %662 = vmatmul.mubr.bf16.gmra.mrb[0].mxu0 %v522
        %v663 = vpop.f32.mrb[0].mxu0
        %v664 = vadd.f32 0.0, %v663
        %v665 = vpop.f32.mrb[0].mxu0
        %v666 = vpop.f32.mrb[0].mxu0
        %v667 = vadd.f32 0.0, %v666
        %v668 = vpop.f32.mrb[0].mxu0
        %669 = vmatprep.mubr.bf16.mxu0 0
        %670 = vmatmul.mubr.bf16.gmra.mrb[0].mxu0 %v525
        %v671 = vpop.f32.mrb[0].mxu0
        %v672 = vadd.f32 0.0, %v671
        %v673 = vpop.f32.mrb[0].mxu0
        %v674 = vpop.f32.mrb[0].mxu0
        %v675 = vadd.f32 0.0, %v674
        %v676 = vpop.f32.mrb[0].mxu0
        %677 = vmatprep.mubr.bf16.mxu0 0
        %678 = vmatmul.mubr.bf16.gmra.mrb[0].mxu0 %v528
        %v679 = vpop.f32.mrb[0].mxu0
        %v680 = vadd.f32 0.0, %v679
        %v681 = vpop.f32.mrb[0].mxu0
        %v682 = vpop.f32.mrb[0].mxu0
        %v683 = vadd.f32 0.0, %v682
        %v684 = vpop.f32.mrb[0].mxu0
        %685 = vmatprep.mubr.bf16.mxu0 0
        %686 = vmatmul.mubr.bf16.gmra.mrb[0].mxu0 %v531
        %v687 = vpop.f32.mrb[0].mxu0
        %v688 = vadd.f32 0.0, %v687
        %v689 = vpop.f32.mrb[0].mxu0
        %v690 = vpop.f32.mrb[0].mxu0
        %v691 = vadd.f32 0.0, %v690
        %v692 = vpop.f32.mrb[0].mxu0
        %693 = vdwg.mxu0
        %v694 = vld [vmem:[%s5] sm:$0x1]
        %v695 = vlaneseq
        %v696 = vshrl.u32 %v695, 7
        %v697 = vsub.s32 0, %v696
        %v698 = vrot.slane %v694, %v697
        %v699 = vmul.f32 %v568, %v698
        %v700 = vmul.f32 %v571, %v698
        %v701 = vmul.f32 %v576, %v698
        %v702 = vmul.f32 %v579, %v698
        %v703 = vmul.f32 %v584, %v698
        %v704 = vmul.f32 %v587, %v698
        %v705 = vmul.f32 %v592, %v698
        %v706 = vmul.f32 %v595, %v698
        %v707 = vmul.f32 %v600, %v698
        %v708 = vmul.f32 %v603, %v698
        %v709 = vmul.f32 %v608, %v698
        %v710 = vmul.f32 %v611, %v698
        %v711 = vmul.f32 %v616, %v698
        %v712 = vmul.f32 %v619, %v698
        %v713 = vmul.f32 %v624, %v698
        %v714 = vmul.f32 %v627, %v698
        %v715 = vmul.f32 %v632, %v698
        %v716 = vmul.f32 %v635, %v698
        %v717 = vmul.f32 %v640, %v698
        %v718 = vmul.f32 %v643, %v698
        %v719 = vmul.f32 %v648, %v698
        %v720 = vmul.f32 %v651, %v698
        %v721 = vmul.f32 %v656, %v698
        %v722 = vmul.f32 %v659, %v698
        %v723 = vmul.f32 %v664, %v698
        %v724 = vmul.f32 %v667, %v698
        %v725 = vmul.f32 %v672, %v698
        %v726 = vmul.f32 %v675, %v698
        %v727 = vmul.f32 %v680, %v698
        %v728 = vmul.f32 %v683, %v698
        %v729 = vmul.f32 %v688, %v698
        %v730 = vmul.f32 %v691, %v698
        %v731 = vld [vmem:[%s5 + $0x1] sm:$0x1]
        %v732 = vlaneseq
        %v733 = vshrl.u32 %v732, 7
        %v734 = vsub.s32 0, %v733
        %v735 = vrot.slane %v731, %v734
        %v736 = vadd.f32 %v699, %v735
        %v737 = vadd.f32 %v700, %v735
        %v738 = vadd.f32 %v701, %v735
        %v739 = vadd.f32 %v702, %v735
        %v740 = vadd.f32 %v703, %v735
        %v741 = vadd.f32 %v704, %v735
        %v742 = vadd.f32 %v705, %v735
        %v743 = vadd.f32 %v706, %v735
        %v744 = vadd.f32 %v707, %v735
        %v745 = vadd.f32 %v708, %v735
        %v746 = vadd.f32 %v709, %v735
        %v747 = vadd.f32 %v710, %v735
        %v748 = vadd.f32 %v711, %v735
        %v749 = vadd.f32 %v712, %v735
        %v750 = vadd.f32 %v713, %v735
        %v751 = vadd.f32 %v714, %v735
        %v752 = vadd.f32 %v715, %v735
        %v753 = vadd.f32 %v716, %v735
        %v754 = vadd.f32 %v717, %v735
        %v755 = vadd.f32 %v718, %v735
        %v756 = vadd.f32 %v719, %v735
        %v757 = vadd.f32 %v720, %v735
        %v758 = vadd.f32 %v721, %v735
        %v759 = vadd.f32 %v722, %v735
        %v760 = vadd.f32 %v723, %v735
        %v761 = vadd.f32 %v724, %v735
        %v762 = vadd.f32 %v725, %v735
        %v763 = vadd.f32 %v726, %v735
        %v764 = vadd.f32 %v727, %v735
        %v765 = vadd.f32 %v728, %v735
        %v766 = vadd.f32 %v729, %v735
        %v767 = vadd.f32 %v730, %v735
        %v768 = vmax.f32 %v736, 0.0
        %v769 = vmax.f32 %v737, 0.0
        %v770 = vmax.f32 %v738, 0.0
        %v771 = vmax.f32 %v739, 0.0
        %v772 = vmax.f32 %v740, 0.0
        %v773 = vmax.f32 %v741, 0.0
        %v774 = vmax.f32 %v742, 0.0
        %v775 = vmax.f32 %v743, 0.0
        %v776 = vmax.f32 %v744, 0.0
        %v777 = vmax.f32 %v745, 0.0
        %v778 = vmax.f32 %v746, 0.0
        %v779 = vmax.f32 %v747, 0.0
        %v780 = vmax.f32 %v748, 0.0
        %v781 = vmax.f32 %v749, 0.0
        %v782 = vmax.f32 %v750, 0.0
        %v783 = vmax.f32 %v751, 0.0
        %v784 = vmax.f32 %v752, 0.0
        %v785 = vmax.f32 %v753, 0.0
        %v786 = vmax.f32 %v754, 0.0
        %v787 = vmax.f32 %v755, 0.0
        %v788 = vmax.f32 %v756, 0.0
        %v789 = vmax.f32 %v757, 0.0
        %v790 = vmax.f32 %v758, 0.0
        %v791 = vmax.f32 %v759, 0.0
        %v792 = vmax.f32 %v760, 0.0
        %v793 = vmax.f32 %v761, 0.0
        %v794 = vmax.f32 %v762, 0.0
        %v795 = vmax.f32 %v763, 0.0
        %v796 = vmax.f32 %v764, 0.0
        %v797 = vmax.f32 %v765, 0.0
        %v798 = vmax.f32 %v766, 0.0
        %v799 = vmax.f32 %v767, 0.0
        %v800 = vpack.c.bf16 %v769, %v768
        %v801 = vpack.c.bf16 %v771, %v770
        %v802 = vpack.c.bf16 %v773, %v772
        %v803 = vpack.c.bf16 %v775, %v774
        %v804 = vpack.c.bf16 %v777, %v776
        %v805 = vpack.c.bf16 %v779, %v778
        %v806 = vpack.c.bf16 %v781, %v780
        %v807 = vpack.c.bf16 %v783, %v782
        %v808 = vpack.c.bf16 %v785, %v784
        %v809 = vpack.c.bf16 %v787, %v786
        %v810 = vpack.c.bf16 %v789, %v788
        %v811 = vpack.c.bf16 %v791, %v790
        %v812 = vpack.c.bf16 %v793, %v792
        %v813 = vpack.c.bf16 %v795, %v794
        %v814 = vpack.c.bf16 %v797, %v796
        %v815 = vpack.c.bf16 %v799, %v798
        %v832 = vunpack.c.l.b16 %v800
        %v833 = vunpack.c.h.b16 %v800
        %v834 = vunpack.c.l.b16 %v801
        %v835 = vunpack.c.h.b16 %v801
        %v836 = vunpack.c.l.b16 %v802
        %v837 = vunpack.c.h.b16 %v802
        %v838 = vunpack.c.l.b16 %v803
        %v839 = vunpack.c.h.b16 %v803
        %v840 = vunpack.c.l.b16 %v804
        %v841 = vunpack.c.h.b16 %v804
        %v842 = vunpack.c.l.b16 %v805
        %v843 = vunpack.c.h.b16 %v805
        %v844 = vunpack.c.l.b16 %v806
        %v845 = vunpack.c.h.b16 %v806
        %v846 = vunpack.c.l.b16 %v807
        %v847 = vunpack.c.h.b16 %v807
        %v848 = vunpack.c.l.b16 %v808
        %v849 = vunpack.c.h.b16 %v808
        %v850 = vunpack.c.l.b16 %v809
        %v851 = vunpack.c.h.b16 %v809
        %v852 = vunpack.c.l.b16 %v810
        %v853 = vunpack.c.h.b16 %v810
        %v854 = vunpack.c.l.b16 %v811
        %v855 = vunpack.c.h.b16 %v811
        %v856 = vunpack.c.l.b16 %v812
        %v857 = vunpack.c.h.b16 %v812
        %v858 = vunpack.c.l.b16 %v813
        %v859 = vunpack.c.h.b16 %v813
        %v860 = vunpack.c.l.b16 %v814
        %v861 = vunpack.c.h.b16 %v814
        %v862 = vunpack.c.l.b16 %v815
        %v863 = vunpack.c.h.b16 %v815
        %v864 = vpack.c.b16 %v832, %v832
        %v865 = vpack.c.b16 %v833, %v833
        %v866 = vpack.c.b16 %v834, %v834
        %v867 = vpack.c.b16 %v835, %v835
        %v868 = vpack.c.b16 %v836, %v836
        %v869 = vpack.c.b16 %v837, %v837
        %v870 = vpack.c.b16 %v838, %v838
        %v871 = vpack.c.b16 %v839, %v839
        %v872 = vpack.c.b16 %v840, %v840
        %v873 = vpack.c.b16 %v841, %v841
        %v874 = vpack.c.b16 %v842, %v842
        %v875 = vpack.c.b16 %v843, %v843
        %v876 = vpack.c.b16 %v844, %v844
        %v877 = vpack.c.b16 %v845, %v845
        %v878 = vpack.c.b16 %v846, %v846
        %v879 = vpack.c.b16 %v847, %v847
        %v880 = vpack.c.b16 %v848, %v848
        %v881 = vpack.c.b16 %v849, %v849
        %v882 = vpack.c.b16 %v850, %v850
        %v883 = vpack.c.b16 %v851, %v851
        %v884 = vpack.c.b16 %v852, %v852
        %v885 = vpack.c.b16 %v853, %v853
        %v886 = vpack.c.b16 %v854, %v854
        %v887 = vpack.c.b16 %v855, %v855
        %v888 = vpack.c.b16 %v856, %v856
        %v889 = vpack.c.b16 %v857, %v857
        %v890 = vpack.c.b16 %v858, %v858
        %v891 = vpack.c.b16 %v859, %v859
        %v892 = vpack.c.b16 %v860, %v860
        %v893 = vpack.c.b16 %v861, %v861
        %v894 = vpack.c.b16 %v862, %v862
        %v895 = vpack.c.b16 %v863, %v863
        %s928 = scalar_lea.vmem [#allocation4], 40
        %vm929 = vcmask 27648
        %930 = vst.msk [vmem:[%s928 + $0x8] sm:$0xf] %vm929, %v864
        %931 = vst.msk [vmem:[%s928 + $0xc] sm:$0xf] %vm929, %v865
        %932 = vst.msk [vmem:[%s928 + $0x1c] sm:$0xf] %vm929, %v866
        %933 = vst.msk [vmem:[%s928 + $0x20] sm:$0xf] %vm929, %v867
        %934 = vst.msk [vmem:[%s928 + $0x30] sm:$0xf] %vm929, %v868
        %935 = vst.msk [vmem:[%s928 + $0x34] sm:$0xf] %vm929, %v869
        %936 = vst.msk [vmem:[%s928 + $0x44] sm:$0xf] %vm929, %v870
        %937 = vst.msk [vmem:[%s928 + $0x48] sm:$0xf] %vm929, %v871
        %938 = vst.msk [vmem:[%s928 + $0x58] sm:$0xf] %vm929, %v872
        %939 = vst.msk [vmem:[%s928 + $0x5c] sm:$0xf] %vm929, %v873
        %940 = vst.msk [vmem:[%s928 + $0x6c] sm:$0xf] %vm929, %v874
        %941 = vst.msk [vmem:[%s928 + $0x70] sm:$0xf] %vm929, %v875
        %942 = vst.msk [vmem:[%s928 + $0x80] sm:$0xf] %vm929, %v876
        %943 = vst.msk [vmem:[%s928 + $0x84] sm:$0xf] %vm929, %v877
        %944 = vst.msk [vmem:[%s928 + $0x94] sm:$0xf] %vm929, %v878
        %945 = vst.msk [vmem:[%s928 + $0x98] sm:$0xf] %vm929, %v879
        %946 = vst.msk [vmem:[%s928 + $0xa8] sm:$0xf] %vm929, %v880
        %947 = vst.msk [vmem:[%s928 + $0xac] sm:$0xf] %vm929, %v881
        %948 = vst.msk [vmem:[%s928 + $0xbc] sm:$0xf] %vm929, %v882
        %949 = vst.msk [vmem:[%s928 + $0xc0] sm:$0xf] %vm929, %v883
        %950 = vst.msk [vmem:[%s928 + $0xd0] sm:$0xf] %vm929, %v884
        %951 = vst.msk [vmem:[%s928 + $0xd4] sm:$0xf] %vm929, %v885
        %952 = vst.msk [vmem:[%s928 + $0xe4] sm:$0xf] %vm929, %v886
        %953 = vst.msk [vmem:[%s928 + $0xe8] sm:$0xf] %vm929, %v887
        %954 = vst.msk [vmem:[%s928 + $0xf8] sm:$0xf] %vm929, %v888
        %955 = vst.msk [vmem:[%s928 + $0xfc] sm:$0xf] %vm929, %v889
        %956 = vst.msk [vmem:[%s928 + $0x10c] sm:$0xf] %vm929, %v890
        %957 = vst.msk [vmem:[%s928 + $0x110] sm:$0xf] %vm929, %v891
        %958 = vst.msk [vmem:[%s928 + $0x120] sm:$0xf] %vm929, %v892
        %959 = vst.msk [vmem:[%s928 + $0x124] sm:$0xf] %vm929, %v893
        %960 = vst.msk [vmem:[%s928 + $0x134] sm:$0xf] %vm929, %v894
        %961 = vst.msk [vmem:[%s928 + $0x138] sm:$0xf] %vm929, %v895
        %vm962 = vcmask 27651
        %963 = vst.msk [vmem:[#allocation4 + $0x4] sm:$0x8] %vm962, 0
        %964 = vst.msk [vmem:[#allocation4 + $0x18] sm:$0x8] %vm962, 0
        %965 = vst.msk [vmem:[#allocation4 + $0x2c] sm:$0x8] %vm962, 0
        %966 = vst.msk [vmem:[#allocation4 + $0x40] sm:$0x8] %vm962, 0
        %967 = vst.msk [vmem:[#allocation4 + $0x54] sm:$0x8] %vm962, 0
        %968 = vst.msk [vmem:[#allocation4 + $0x68] sm:$0x8] %vm962, 0
        %969 = vst.msk [vmem:[#allocation4 + $0x7c] sm:$0x8] %vm962, 0
        %970 = vst.msk [vmem:[#allocation4 + $0x90] sm:$0x8] %vm962, 0
        %971 = vst.msk [vmem:[#allocation4 + $0xa4] sm:$0x8] %vm962, 0
        %972 = vst.msk [vmem:[#allocation4 + $0xb8] sm:$0x8] %vm962, 0
        %973 = vst.msk [vmem:[#allocation4 + $0xcc] sm:$0x8] %vm962, 0
        %974 = vst.msk [vmem:[#allocation4 + $0xe0] sm:$0x8] %vm962, 0
        %975 = vst.msk [vmem:[#allocation4 + $0xf4] sm:$0x8] %vm962, 0
        %976 = vst.msk [vmem:[#allocation4 + $0x108] sm:$0x8] %vm962, 0
        %977 = vst.msk [vmem:[#allocation4 + $0x11c] sm:$0x8] %vm962, 0
        %978 = vst.msk [vmem:[#allocation4 + $0x130] sm:$0x8] %vm962, 0
        %979 = vst.msk [vmem:[#allocation4 + $0x144] sm:$0x8] %vm962, 0
        %980 = vst.msk [vmem:[#allocation4 + $0x158] sm:$0x8] %vm962, 0
        %981 = vst.msk [vmem:[#allocation4 + $0x16c] sm:$0x8] %vm962, 0
        %982 = vst.msk [vmem:[#allocation4 + $0x180] sm:$0x8] %vm962, 0
        %vm983 = vcmask 24576
        %984 = vst.msk [vmem:[#allocation4 + $0x10] sm:$0x1] %vm983, 0
        %985 = vst.msk [vmem:[#allocation4 + $0x24] sm:$0x1] %vm983, 0
        %986 = vst.msk [vmem:[#allocation4 + $0x38] sm:$0x1] %vm983, 0
        %987 = vst.msk [vmem:[#allocation4 + $0x4c] sm:$0x1] %vm983, 0
        %988 = vst.msk [vmem:[#allocation4 + $0x60] sm:$0x1] %vm983, 0
        %989 = vst.msk [vmem:[#allocation4 + $0x74] sm:$0x1] %vm983, 0
        %990 = vst.msk [vmem:[#allocation4 + $0x88] sm:$0x1] %vm983, 0
        %991 = vst.msk [vmem:[#allocation4 + $0x9c] sm:$0x1] %vm983, 0
        %992 = vst.msk [vmem:[#allocation4 + $0xb0] sm:$0x1] %vm983, 0
        %993 = vst.msk [vmem:[#allocation4 + $0xc4] sm:$0x1] %vm983, 0
        %994 = vst.msk [vmem:[#allocation4 + $0xd8] sm:$0x1] %vm983, 0
        %995 = vst.msk [vmem:[#allocation4 + $0xec] sm:$0x1] %vm983, 0
        %996 = vst.msk [vmem:[#allocation4 + $0x100] sm:$0x1] %vm983, 0
        %997 = vst.msk [vmem:[#allocation4 + $0x114] sm:$0x1] %vm983, 0
        %998 = vst.msk [vmem:[#allocation4 + $0x128] sm:$0x1] %vm983, 0
        %999 = vst.msk [vmem:[#allocation4 + $0x13c] sm:$0x1] %vm983, 0
        %1000 = vst.msk [vmem:[#allocation4 + $0x150] sm:$0x1] %vm983, 0
        %1001 = vst.msk [vmem:[#allocation4 + $0x164] sm:$0x1] %vm983, 0
        %1002 = vst.msk [vmem:[#allocation4 + $0x178] sm:$0x1] %vm983, 0
        %1003 = vst.msk [vmem:[#allocation4 + $0x18c] sm:$0x1] %vm983, 0
        // Predicated region
        $region69: #{tpu_custom_call.1} parent=47 // pred_check
          %p1004 = pneg %p321
        $region70: #{tpu_custom_call.1} parent=47 // pred_check_branch
          %1006 = sbr.rel (%p1004) target = $region72
        $region71: #{tpu_custom_call.1} parent=47 // pred_region
          %s1007 = smul.u32 4, 2
          %s1008 = smul.u32 %s1007, 2
          %s1009 = smul.u32 %s1008, 1
          %s1010 = sshll.u32 %s1009, 4
          %1011 = dma.done [#allocation5], %s1010
          %v1012 = vld [vmem:[#allocation2] sm:$0xff]
          %v1013 = vld [vmem:[#allocation2 + $0x8] sm:$0xff]
          %v1014 = vld [vmem:[%s2] sm:$0xf]
          %v1015 = vld [vmem:[%s2 + $0x4] sm:$0xf]
          %v1018 = vunpack.c.l.b16 %v1014
          %v1019 = vunpack.c.l.b16 %v1015
          %v1020 = vpack.c.b16 %v1019, %v1018
          %v1023 = vsel %vm484, %v1012, 0
          %v1026 = vsel %vm484, %v1013, 0
          %1028 = vmatprep.subr.bf16.mxu0 0
          %1029 = vmatpush1.bf16.msra.mxu0 %v1020
          %1030 = vmatprep.subr.bf16.mxu0 0
          %1031 = vmatpush1.bf16.msra.mxu0 0
          %1032 = vmatprep.subr.bf16.mxu0 0
          %1033 = vmatpush1.bf16.msra.mxu0 0
          %1034 = vmatprep.subr.bf16.mxu0 0
          %1035 = vmatpush1.bf16.msra.mxu0 0
          %1036 = vmatprep.subr.bf16.mxu0 0
          %1037 = vmatpush1.bf16.msra.mxu0 0
          %1038 = vmatprep.subr.bf16.mxu0 0
          %1039 = vmatpush1.bf16.msra.mxu0 0
          %1040 = vmatprep.subr.bf16.mxu0 0
          %1041 = vmatpush1.bf16.msra.mxu0 0
          %1042 = vmatprep.subr.bf16.mxu0 0
          %1043 = vmatpush1.bf16.msra.mxu0 0
          %1044 = vmatprep.subr.bf16.mxu0 0
          %1045 = vmatpush1.bf16.msra.mxu0 0
          %1046 = vmatprep.subr.bf16.mxu0 0
          %1047 = vmatpush1.bf16.msra.mxu0 0
          %1048 = vmatprep.subr.bf16.mxu0 0
          %1049 = vmatpush1.bf16.msra.mxu0 0
          %1050 = vmatprep.subr.bf16.mxu0 0
          %1051 = vmatpush1.bf16.msra.mxu0 0
          %1052 = vmatprep.subr.bf16.mxu0 0
          %1053 = vmatpush1.bf16.msra.mxu0 0
          %1054 = vmatprep.subr.bf16.mxu0 0
          %1055 = vmatpush1.bf16.msra.mxu0 0
          %1056 = vmatprep.subr.bf16.mxu0 0
          %1057 = vmatpush1.bf16.msra.mxu0 0
          %1058 = vmatprep.subr.bf16.mxu0 0
          %1059 = vmatpush1.bf16.msra.mxu0 0
          %1060 = vmatprep.mubr.bf16.mxu0 0
          %1061 = vmatmul.mubr.bf16.gmra.mrb[0].mxu0 %v1023
          %v1062 = vpop.f32.mrb[0].mxu0
          %v1063 = vadd.f32 0.0, %v1062
          %v1064 = vpop.f32.mrb[0].mxu0
          %v1065 = vpop.f32.mrb[0].mxu0
          %v1066 = vadd.f32 0.0, %v1065
          %v1067 = vpop.f32.mrb[0].mxu0
          %1068 = vmatprep.mubr.bf16.mxu0 0
          %1069 = vmatmul.mubr.bf16.gmra.mrb[0].mxu0 %v1026
          %v1070 = vpop.f32.mrb[0].mxu0
          %v1071 = vadd.f32 0.0, %v1070
          %v1072 = vpop.f32.mrb[0].mxu0
          %v1073 = vpop.f32.mrb[0].mxu0
          %v1074 = vadd.f32 0.0, %v1073
          %v1075 = vpop.f32.mrb[0].mxu0
          %1076 = vdwg.mxu0
          %v1077 = vld [vmem:[%s5] sm:$0x1]
          %v1078 = vlaneseq
          %v1079 = vshrl.u32 %v1078, 7
          %v1080 = vsub.s32 0, %v1079
          %v1081 = vrot.slane %v1077, %v1080
          %v1082 = vmul.f32 %v1063, %v1081
          %v1083 = vmul.f32 %v1066, %v1081
          %v1084 = vmul.f32 %v1071, %v1081
          %v1085 = vmul.f32 %v1074, %v1081
          %v1086 = vld [vmem:[%s5 + $0x1] sm:$0x1]
          %v1087 = vlaneseq
          %v1088 = vshrl.u32 %v1087, 7
          %v1089 = vsub.s32 0, %v1088
          %v1090 = vrot.slane %v1086, %v1089
          %v1091 = vadd.f32 %v1082, %v1090
          %v1092 = vadd.f32 %v1083, %v1090
          %v1093 = vadd.f32 %v1084, %v1090
          %v1094 = vadd.f32 %v1085, %v1090
          %v1095 = vmax.f32 %v1091, 0.0
          %v1096 = vmax.f32 %v1092, 0.0
          %v1097 = vmax.f32 %v1093, 0.0
          %v1098 = vmax.f32 %v1094, 0.0
          %v1099 = vpack.c.bf16 %v1096, %v1095
          %v1100 = vpack.c.bf16 %v1098, %v1097
          %v1103 = vunpack.c.l.b16 %v1099
          %v1104 = vunpack.c.h.b16 %v1099
          %v1105 = vunpack.c.l.b16 %v1100
          %v1106 = vunpack.c.h.b16 %v1100
          %v1107 = vpack.c.b16 %v1103, %v1103
          %v1108 = vpack.c.b16 %v1104, %v1104
          %v1109 = vpack.c.b16 %v1105, %v1105
          %v1110 = vpack.c.b16 %v1106, %v1106
          %1115 = vst.msk [vmem:[#allocation4 + $0x8] sm:$0xf] %vm929, %v1107
          %1116 = vst.msk [vmem:[#allocation4 + $0xc] sm:$0xf] %vm929, %v1108
          %1117 = vst.msk [vmem:[#allocation4 + $0x1c] sm:$0xf] %vm929, %v1109
          %1118 = vst.msk [vmem:[#allocation4 + $0x20] sm:$0xf] %vm929, %v1110
        $region72: #{tpu_custom_call.1} parent=47 // pred_fallthru
          _
        %p1119 = scmp.eq.s32.totalorder %s30, 0
        // Predicated region
        $region73: #{tpu_custom_call.1} parent=47 // pred_check
          %p1120 = pneg %p1119
        $region74: #{tpu_custom_call.1} parent=47 // pred_check_branch
          %1122 = sbr.rel (%p1120) target = $region76
        $region75: #{tpu_custom_call.1} parent=47 // pred_region
          %1123 = vst.msk [vmem:[#allocation4] sm:$0xf] %vm929, 0
          %1124 = vst.msk [vmem:[#allocation4 + $0x4] sm:$0xf] %vm929, 0
          %1125 = vst.msk [vmem:[#allocation4 + $0x8] sm:$0xf] %vm929, 0
          %1126 = vst.msk [vmem:[#allocation4 + $0xc] sm:$0xf] %vm929, 0
          %1127 = vst.msk [vmem:[#allocation4 + $0x10] sm:$0x1] %vm983, 0
          %1128 = vst.msk [vmem:[#allocation4 + $0x14] sm:$0xf] %vm929, 0
          %1129 = vst.msk [vmem:[#allocation4 + $0x18] sm:$0xf] %vm929, 0
          %1130 = vst.msk [vmem:[#allocation4 + $0x1c] sm:$0xf] %vm929, 0
          %1131 = vst.msk [vmem:[#allocation4 + $0x20] sm:$0xf] %vm929, 0
          %1132 = vst.msk [vmem:[#allocation4 + $0x24] sm:$0x1] %vm983, 0
        $region76: #{tpu_custom_call.1} parent=47 // pred_fallthru
          _
        // Predicated region
        $region77: #{tpu_custom_call.1} parent=47 // pred_check
          %p1133 = pneg %p342
        $region78: #{tpu_custom_call.1} parent=47 // pred_check_branch
          %1135 = sbr.rel (%p1133) target = $region80
        $region79: #{tpu_custom_call.1} parent=47 // pred_region
          %s1136 = scalar_lea.sflag [#allocation5], 1
          %s1137 = smul.u32 4, 2
          %s1138 = smul.u32 %s1137, 2
          %s1139 = smul.u32 %s1138, 1
          %s1140 = sshll.u32 %s1139, 4
          %1141 = dma.done %s1136, %s1140
          %v1142 = vld [vmem:[#allocation3] sm:$0xff]
          %v1143 = vld [vmem:[#allocation3 + $0x8] sm:$0xff]
          %v1144 = vld [vmem:[%s2] sm:$0xf]
          %v1145 = vld [vmem:[%s2 + $0x4] sm:$0xf]
          %v1148 = vunpack.c.l.b16 %v1144
          %v1149 = vunpack.c.l.b16 %v1145
          %v1150 = vpack.c.b16 %v1149, %v1148
          %v1153 = vsel %vm484, %v1142, 0
          %v1156 = vsel %vm484, %v1143, 0
          %1158 = vmatprep.subr.bf16.mxu0 0
          %1159 = vmatpush1.bf16.msra.mxu0 %v1150
          %1160 = vmatprep.subr.bf16.mxu0 0
          %1161 = vmatpush1.bf16.msra.mxu0 0
          %1162 = vmatprep.subr.bf16.mxu0 0
          %1163 = vmatpush1.bf16.msra.mxu0 0
          %1164 = vmatprep.subr.bf16.mxu0 0
          %1165 = vmatpush1.bf16.msra.mxu0 0
          %1166 = vmatprep.subr.bf16.mxu0 0
          %1167 = vmatpush1.bf16.msra.mxu0 0
          %1168 = vmatprep.subr.bf16.mxu0 0
          %1169 = vmatpush1.bf16.msra.mxu0 0
          %1170 = vmatprep.subr.bf16.mxu0 0
          %1171 = vmatpush1.bf16.msra.mxu0 0
          %1172 = vmatprep.subr.bf16.mxu0 0
          %1173 = vmatpush1.bf16.msra.mxu0 0
          %1174 = vmatprep.subr.bf16.mxu0 0
          %1175 = vmatpush1.bf16.msra.mxu0 0
          %1176 = vmatprep.subr.bf16.mxu0 0
          %1177 = vmatpush1.bf16.msra.mxu0 0
          %1178 = vmatprep.subr.bf16.mxu0 0
          %1179 = vmatpush1.bf16.msra.mxu0 0
          %1180 = vmatprep.subr.bf16.mxu0 0
          %1181 = vmatpush1.bf16.msra.mxu0 0
          %1182 = vmatprep.subr.bf16.mxu0 0
          %1183 = vmatpush1.bf16.msra.mxu0 0
          %1184 = vmatprep.subr.bf16.mxu0 0
          %1185 = vmatpush1.bf16.msra.mxu0 0
          %1186 = vmatprep.subr.bf16.mxu0 0
          %1187 = vmatpush1.bf16.msra.mxu0 0
          %1188 = vmatprep.subr.bf16.mxu0 0
          %1189 = vmatpush1.bf16.msra.mxu0 0
          %1190 = vmatprep.mubr.bf16.mxu0 0
          %1191 = vmatmul.mubr.bf16.gmra.mrb[0].mxu0 %v1153
          %v1192 = vpop.f32.mrb[0].mxu0
          %v1193 = vadd.f32 0.0, %v1192
          %v1194 = vpop.f32.mrb[0].mxu0
          %v1195 = vpop.f32.mrb[0].mxu0
          %v1196 = vadd.f32 0.0, %v1195
          %v1197 = vpop.f32.mrb[0].mxu0
          %1198 = vmatprep.mubr.bf16.mxu0 0
          %1199 = vmatmul.mubr.bf16.gmra.mrb[0].mxu0 %v1156
          %v1200 = vpop.f32.mrb[0].mxu0
          %v1201 = vadd.f32 0.0, %v1200
          %v1202 = vpop.f32.mrb[0].mxu0
          %v1203 = vpop.f32.mrb[0].mxu0
          %v1204 = vadd.f32 0.0, %v1203
          %v1205 = vpop.f32.mrb[0].mxu0
          %1206 = vdwg.mxu0
          %v1207 = vld [vmem:[%s5] sm:$0x1]
          %v1208 = vlaneseq
          %v1209 = vshrl.u32 %v1208, 7
          %v1210 = vsub.s32 0, %v1209
          %v1211 = vrot.slane %v1207, %v1210
          %v1212 = vmul.f32 %v1193, %v1211
          %v1213 = vmul.f32 %v1196, %v1211
          %v1214 = vmul.f32 %v1201, %v1211
          %v1215 = vmul.f32 %v1204, %v1211
          %v1216 = vld [vmem:[%s5 + $0x1] sm:$0x1]
          %v1217 = vlaneseq
          %v1218 = vshrl.u32 %v1217, 7
          %v1219 = vsub.s32 0, %v1218
          %v1220 = vrot.slane %v1216, %v1219
          %v1221 = vadd.f32 %v1212, %v1220
          %v1222 = vadd.f32 %v1213, %v1220
          %v1223 = vadd.f32 %v1214, %v1220
          %v1224 = vadd.f32 %v1215, %v1220
          %v1225 = vmax.f32 %v1221, 0.0
          %v1226 = vmax.f32 %v1222, 0.0
          %v1227 = vmax.f32 %v1223, 0.0
          %v1228 = vmax.f32 %v1224, 0.0
          %v1229 = vpack.c.bf16 %v1226, %v1225
          %v1230 = vpack.c.bf16 %v1228, %v1227
          %v1233 = vunpack.c.l.b16 %v1229
          %v1234 = vunpack.c.h.b16 %v1229
          %v1235 = vunpack.c.l.b16 %v1230
          %v1236 = vunpack.c.h.b16 %v1230
          %v1237 = vpack.c.b16 %v1233, %v1233
          %v1238 = vpack.c.b16 %v1234, %v1234
          %v1239 = vpack.c.b16 %v1235, %v1235
          %v1240 = vpack.c.b16 %v1236, %v1236
          %s1245 = scalar_lea.vmem [#allocation4], 360
          %1246 = vst.msk [vmem:[%s1245 + $0x8] sm:$0xf] %vm929, %v1237
          %1247 = vst.msk [vmem:[%s1245 + $0xc] sm:$0xf] %vm929, %v1238
          %1248 = vst.msk [vmem:[%s1245 + $0x1c] sm:$0xf] %vm929, %v1239
          %1249 = vst.msk [vmem:[%s1245 + $0x20] sm:$0xf] %vm929, %v1240
        $region80: #{tpu_custom_call.1} parent=47 // pred_fallthru
          _
        // Predicated region
        $region81: #{tpu_custom_call.1} parent=47 // pred_check
          %p1250 = pneg %p1119
        $region82: #{tpu_custom_call.1} parent=47 // pred_check_branch
          %1252 = sbr.rel (%p1250) target = $region84
        $region83: #{tpu_custom_call.1} parent=47 // pred_region
          %s1253 = scalar_lea.vmem [#allocation4], 360
          %1254 = vst.msk [vmem:[%s1253] sm:$0xf] %vm929, 0
          %1255 = vst.msk [vmem:[%s1253 + $0x4] sm:$0xf] %vm929, 0
          %1256 = vst.msk [vmem:[%s1253 + $0x8] sm:$0xf] %vm929, 0
          %1257 = vst.msk [vmem:[%s1253 + $0xc] sm:$0xf] %vm929, 0
          %1258 = vst.msk [vmem:[%s1253 + $0x10] sm:$0x1] %vm983, 0
          %1259 = vst.msk [vmem:[%s1253 + $0x14] sm:$0xf] %vm929, 0
          %1260 = vst.msk [vmem:[%s1253 + $0x18] sm:$0xf] %vm929, 0
          %1261 = vst.msk [vmem:[%s1253 + $0x1c] sm:$0xf] %vm929, 0
          %1262 = vst.msk [vmem:[%s1253 + $0x20] sm:$0xf] %vm929, 0
          %1263 = vst.msk [vmem:[%s1253 + $0x24] sm:$0x1] %vm983, 0
        $region84: #{tpu_custom_call.1} parent=47 // pred_fallthru
          _
        %v1264 = vld [vmem:[#allocation4 + $0x4] sm:$0x8]
        %v1265 = vld [vmem:[#allocation4 + $0x8] sm:$0xf]
        %v1266 = vld [vmem:[#allocation4 + $0xc] sm:$0x7]
        %v1267 = vld [vmem:[#allocation4 + $0x18] sm:$0x8]
        %v1268 = vld [vmem:[#allocation4 + $0x1c] sm:$0xf]
        %v1269 = vld [vmem:[#allocation4 + $0x20] sm:$0x7]
        %v1270 = vld [vmem:[#allocation4 + $0x2c] sm:$0x8]
        %v1271 = vld [vmem:[#allocation4 + $0x30] sm:$0xf]
        %v1272 = vld [vmem:[#allocation4 + $0x34] sm:$0x7]
        %v1273 = vld [vmem:[#allocation4 + $0x40] sm:$0x8]
        %v1274 = vld [vmem:[#allocation4 + $0x44] sm:$0xf]
        %v1275 = vld [vmem:[#allocation4 + $0x48] sm:$0x7]
        %v1276 = vld [vmem:[#allocation4 + $0x54] sm:$0x8]
        %v1277 = vld [vmem:[#allocation4 + $0x58] sm:$0xf]
        %v1278 = vld [vmem:[#allocation4 + $0x5c] sm:$0x7]
        %v1279 = vld [vmem:[#allocation4 + $0x68] sm:$0x8]
        %v1280 = vld [vmem:[#allocation4 + $0x6c] sm:$0xf]
        %v1281 = vld [vmem:[#allocation4 + $0x70] sm:$0x7]
        %v1282 = vld [vmem:[#allocation4 + $0x7c] sm:$0x8]
        %v1283 = vld [vmem:[#allocation4 + $0x80] sm:$0xf]
        %v1284 = vld [vmem:[#allocation4 + $0x84] sm:$0x7]
        %v1285 = vld [vmem:[#allocation4 + $0x90] sm:$0x8]
        %v1286 = vld [vmem:[#allocation4 + $0x94] sm:$0xf]
        %v1287 = vld [vmem:[#allocation4 + $0x98] sm:$0x7]
        %v1288 = vld [vmem:[#allocation4 + $0xa4] sm:$0x8]
        %v1289 = vld [vmem:[#allocation4 + $0xa8] sm:$0xf]
        %v1290 = vld [vmem:[#allocation4 + $0xac] sm:$0x7]
        %v1291 = vld [vmem:[#allocation4 + $0xb8] sm:$0x8]
        %v1292 = vld [vmem:[#allocation4 + $0xbc] sm:$0xf]
        %v1293 = vld [vmem:[#allocation4 + $0xc0] sm:$0x7]
        %v1294 = vld [vmem:[#allocation4 + $0xcc] sm:$0x8]
        %v1295 = vld [vmem:[#allocation4 + $0xd0] sm:$0xf]
        %v1296 = vld [vmem:[#allocation4 + $0xd4] sm:$0x7]
        %v1297 = vld [vmem:[#allocation4 + $0xe0] sm:$0x8]
        %v1298 = vld [vmem:[#allocation4 + $0xe4] sm:$0xf]
        %v1299 = vld [vmem:[#allocation4 + $0xe8] sm:$0x7]
        %v1300 = vld [vmem:[#allocation4 + $0xf4] sm:$0x8]
        %v1301 = vld [vmem:[#allocation4 + $0xf8] sm:$0xf]
        %v1302 = vld [vmem:[#allocation4 + $0xfc] sm:$0x7]
        %v1303 = vld [vmem:[#allocation4 + $0x108] sm:$0x8]
        %v1304 = vld [vmem:[#allocation4 + $0x10c] sm:$0xf]
        %v1305 = vld [vmem:[#allocation4 + $0x110] sm:$0x7]
        %v1306 = vld [vmem:[#allocation4 + $0x11c] sm:$0x8]
        %v1307 = vld [vmem:[#allocation4 + $0x120] sm:$0xf]
        %v1308 = vld [vmem:[#allocation4 + $0x124] sm:$0x7]
        %v1309 = vld [vmem:[#allocation4 + $0x130] sm:$0x8]
        %v1310 = vld [vmem:[#allocation4 + $0x134] sm:$0xf]
        %v1311 = vld [vmem:[#allocation4 + $0x138] sm:$0x7]
        %v1312 = vld [vmem:[#allocation4 + $0x144] sm:$0x8]
        %v1313 = vld [vmem:[#allocation4 + $0x148] sm:$0xf]
        %v1314 = vld [vmem:[#allocation4 + $0x14c] sm:$0x7]
        %v1315 = vld [vmem:[#allocation4 + $0x158] sm:$0x8]
        %v1316 = vld [vmem:[#allocation4 + $0x15c] sm:$0xf]
        %v1317 = vld [vmem:[#allocation4 + $0x160] sm:$0x7]
        %v1318 = vld [vmem:[#allocation4 + $0x16c] sm:$0x8]
        %v1319 = vld [vmem:[#allocation4 + $0x170] sm:$0xf]
        %v1320 = vld [vmem:[#allocation4 + $0x174] sm:$0x7]
        %v1321 = vld [vmem:[#allocation4 + $0x180] sm:$0x8]
        %v1322 = vld [vmem:[#allocation4 + $0x184] sm:$0xf]
        %v1323 = vld [vmem:[#allocation4 + $0x188] sm:$0x7]
        %v1324 = vld [vmem:[%s3] sm:$0x3]
        %s1325 = scalar_lea.vmem %s3, 6
        %v1326 = vld [vmem:[%s1325] sm:$0x3]
        %vm1375 = vcmask 1040384
        %vm1376 = vcmask 1044484
        %vm1377 = vmor %vm1375, %vm1376
        %v1378 = vrot.slane %v1270, 7
        %v1379 = vrot.slane %v1378, 4
        %v1380 = vrot.slane %v1271, 7
        %v1381 = vsel %vm1377, %v1379, %v1380
        %v1382 = vrot.slane %v1380, 4
        %v1383 = vrot.slane %v1272, 7
        %v1384 = vsel %vm1377, %v1382, %v1383
        %v1385 = vrot.slane %v1273, 7
        %v1386 = vrot.slane %v1385, 4
        %v1387 = vrot.slane %v1274, 7
        %v1388 = vsel %vm1377, %v1386, %v1387
        %v1389 = vrot.slane %v1387, 4
        %v1390 = vrot.slane %v1275, 7
        %v1391 = vsel %vm1377, %v1389, %v1390
        %v1392 = vrot.slane %v1276, 7
        %v1393 = vrot.slane %v1392, 4
        %v1394 = vrot.slane %v1277, 7
        %v1395 = vsel %vm1377, %v1393, %v1394
        %v1396 = vrot.slane %v1394, 4
        %v1397 = vrot.slane %v1278, 7
        %v1398 = vsel %vm1377, %v1396, %v1397
        %v1399 = vrot.slane %v1279, 7
        %v1400 = vrot.slane %v1399, 4
        %v1401 = vrot.slane %v1280, 7
        %v1402 = vsel %vm1377, %v1400, %v1401
        %v1403 = vrot.slane %v1401, 4
        %v1404 = vrot.slane %v1281, 7
        %v1405 = vsel %vm1377, %v1403, %v1404
        %v1406 = vrot.slane %v1282, 7
        %v1407 = vrot.slane %v1406, 4
        %v1408 = vrot.slane %v1283, 7
        %v1409 = vsel %vm1377, %v1407, %v1408
        %v1410 = vrot.slane %v1408, 4
        %v1411 = vrot.slane %v1284, 7
        %v1412 = vsel %vm1377, %v1410, %v1411
        %v1413 = vrot.slane %v1285, 7
        %v1414 = vrot.slane %v1413, 4
        %v1415 = vrot.slane %v1286, 7
        %v1416 = vsel %vm1377, %v1414, %v1415
        %v1417 = vrot.slane %v1415, 4
        %v1418 = vrot.slane %v1287, 7
        %v1419 = vsel %vm1377, %v1417, %v1418
        %v1420 = vrot.slane %v1288, 7
        %v1421 = vrot.slane %v1420, 4
        %v1422 = vrot.slane %v1289, 7
        %v1423 = vsel %vm1377, %v1421, %v1422
        %v1424 = vrot.slane %v1422, 4
        %v1425 = vrot.slane %v1290, 7
        %v1426 = vsel %vm1377, %v1424, %v1425
        %v1427 = vrot.slane %v1291, 7
        %v1428 = vrot.slane %v1427, 4
        %v1429 = vrot.slane %v1292, 7
        %v1430 = vsel %vm1377, %v1428, %v1429
        %v1431 = vrot.slane %v1429, 4
        %v1432 = vrot.slane %v1293, 7
        %v1433 = vsel %vm1377, %v1431, %v1432
        %v1434 = vrot.slane %v1294, 7
        %v1435 = vrot.slane %v1434, 4
        %v1436 = vrot.slane %v1295, 7
        %v1437 = vsel %vm1377, %v1435, %v1436
        %v1438 = vrot.slane %v1436, 4
        %v1439 = vrot.slane %v1296, 7
        %v1440 = vsel %vm1377, %v1438, %v1439
        %v1441 = vrot.slane %v1297, 7
        %v1442 = vrot.slane %v1441, 4
        %v1443 = vrot.slane %v1298, 7
        %v1444 = vsel %vm1377, %v1442, %v1443
        %v1445 = vrot.slane %v1443, 4
        %v1446 = vrot.slane %v1299, 7
        %v1447 = vsel %vm1377, %v1445, %v1446
        %v1448 = vrot.slane %v1300, 7
        %v1449 = vrot.slane %v1448, 4
        %v1450 = vrot.slane %v1301, 7
        %v1451 = vsel %vm1377, %v1449, %v1450
        %v1452 = vrot.slane %v1450, 4
        %v1453 = vrot.slane %v1302, 7
        %v1454 = vsel %vm1377, %v1452, %v1453
        %v1455 = vrot.slane %v1303, 7
        %v1456 = vrot.slane %v1455, 4
        %v1457 = vrot.slane %v1304, 7
        %v1458 = vsel %vm1377, %v1456, %v1457
        %v1459 = vrot.slane %v1457, 4
        %v1460 = vrot.slane %v1305, 7
        %v1461 = vsel %vm1377, %v1459, %v1460
        %v1462 = vrot.slane %v1306, 7
        %v1463 = vrot.slane %v1462, 4
        %v1464 = vrot.slane %v1307, 7
        %v1465 = vsel %vm1377, %v1463, %v1464
        %v1466 = vrot.slane %v1464, 4
        %v1467 = vrot.slane %v1308, 7
        %v1468 = vsel %vm1377, %v1466, %v1467
        %v1469 = vrot.slane %v1309, 7
        %v1470 = vrot.slane %v1469, 4
        %v1471 = vrot.slane %v1310, 7
        %v1472 = vsel %vm1377, %v1470, %v1471
        %v1473 = vrot.slane %v1471, 4
        %v1474 = vrot.slane %v1311, 7
        %v1475 = vsel %vm1377, %v1473, %v1474
        %v1476 = vrot.slane %v1312, 7
        %v1477 = vrot.slane %v1476, 4
        %v1478 = vrot.slane %v1313, 7
        %v1479 = vsel %vm1377, %v1477, %v1478
        %v1480 = vrot.slane %v1478, 4
        %v1481 = vrot.slane %v1314, 7
        %v1482 = vsel %vm1377, %v1480, %v1481
        %v1483 = vrot.slane %v1315, 7
        %v1484 = vrot.slane %v1483, 4
        %v1485 = vrot.slane %v1316, 7
        %v1486 = vsel %vm1377, %v1484, %v1485
        %v1487 = vrot.slane %v1485, 4
        %v1488 = vrot.slane %v1317, 7
        %v1489 = vsel %vm1377, %v1487, %v1488
        %v1490 = vunpack.c.l.b16 %v1381
        %v1491 = vunpack.c.l.b16 %v1384
        %v1492 = vunpack.c.l.b16 %v1388
        %v1493 = vunpack.c.l.b16 %v1391
        %v1494 = vunpack.c.l.b16 %v1395
        %v1495 = vunpack.c.l.b16 %v1398
        %v1496 = vunpack.c.l.b16 %v1402
        %v1497 = vunpack.c.l.b16 %v1405
        %v1498 = vunpack.c.l.b16 %v1409
        %v1499 = vunpack.c.l.b16 %v1412
        %v1500 = vunpack.c.l.b16 %v1416
        %v1501 = vunpack.c.l.b16 %v1419
        %v1502 = vunpack.c.l.b16 %v1423
        %v1503 = vunpack.c.l.b16 %v1426
        %v1504 = vunpack.c.l.b16 %v1430
        %v1505 = vunpack.c.l.b16 %v1433
        %v1506 = vunpack.c.l.b16 %v1437
        %v1507 = vunpack.c.l.b16 %v1440
        %v1508 = vunpack.c.l.b16 %v1444
        %v1509 = vunpack.c.l.b16 %v1447
        %v1510 = vunpack.c.l.b16 %v1451
        %v1511 = vunpack.c.l.b16 %v1454
        %v1512 = vunpack.c.l.b16 %v1458
        %v1513 = vunpack.c.l.b16 %v1461
        %v1514 = vunpack.c.l.b16 %v1465
        %v1515 = vunpack.c.l.b16 %v1468
        %v1516 = vunpack.c.l.b16 %v1472
        %v1517 = vunpack.c.l.b16 %v1475
        %v1518 = vunpack.c.l.b16 %v1479
        %v1519 = vunpack.c.l.b16 %v1482
        %v1520 = vunpack.c.l.b16 %v1486
        %v1521 = vunpack.c.l.b16 %v1489
        %v1522 = vpack.c.b16 %v1491, %v1490
        %v1523 = vpack.c.b16 %v1493, %v1492
        %v1524 = vpack.c.b16 %v1495, %v1494
        %v1525 = vpack.c.b16 %v1497, %v1496
        %v1526 = vpack.c.b16 %v1499, %v1498
        %v1527 = vpack.c.b16 %v1501, %v1500
        %v1528 = vpack.c.b16 %v1503, %v1502
        %v1529 = vpack.c.b16 %v1505, %v1504
        %v1530 = vpack.c.b16 %v1507, %v1506
        %v1531 = vpack.c.b16 %v1509, %v1508
        %v1532 = vpack.c.b16 %v1511, %v1510
        %v1533 = vpack.c.b16 %v1513, %v1512
        %v1534 = vpack.c.b16 %v1515, %v1514
        %v1535 = vpack.c.b16 %v1517, %v1516
        %v1536 = vpack.c.b16 %v1519, %v1518
        %v1537 = vpack.c.b16 %v1521, %v1520
        %vm1538 = vcmask 31744
        %v1540 = vsel %vm1538, %v1522, 0
        %v1543 = vsel %vm1538, %v1523, 0
        %v1546 = vsel %vm1538, %v1524, 0
        %v1549 = vsel %vm1538, %v1525, 0
        %v1552 = vsel %vm1538, %v1526, 0
        %v1555 = vsel %vm1538, %v1527, 0
        %v1558 = vsel %vm1538, %v1528, 0
        %v1561 = vsel %vm1538, %v1529, 0
        %v1564 = vsel %vm1538, %v1530, 0
        %v1567 = vsel %vm1538, %v1531, 0
        %v1570 = vsel %vm1538, %v1532, 0
        %v1573 = vsel %vm1538, %v1533, 0
        %v1576 = vsel %vm1538, %v1534, 0
        %v1579 = vsel %vm1538, %v1535, 0
        %v1582 = vsel %vm1538, %v1536, 0
        %v1585 = vsel %vm1538, %v1537, 0
        %vm1587 = vcmask 1041408
        %v1589 = vsel %vm1587, %v1326, 0
        %1591 = vmatprep.subr.bf16.mxu0 0
        %1592 = vmatpush1.bf16.msra.mxu0 %v1589
        %1593 = vmatprep.subr.bf16.mxu0 0
        %1594 = vmatpush1.bf16.msra.mxu0 0
        %1595 = vmatprep.subr.bf16.mxu0 0
        %1596 = vmatpush1.bf16.msra.mxu0 0
        %1597 = vmatprep.subr.bf16.mxu0 0
        %1598 = vmatpush1.bf16.msra.mxu0 0
        %1599 = vmatprep.subr.bf16.mxu0 0
        %1600 = vmatpush1.bf16.msra.mxu0 0
        %1601 = vmatprep.subr.bf16.mxu0 0
        %1602 = vmatpush1.bf16.msra.mxu0 0
        %1603 = vmatprep.subr.bf16.mxu0 0
        %1604 = vmatpush1.bf16.msra.mxu0 0
        %1605 = vmatprep.subr.bf16.mxu0 0
        %1606 = vmatpush1.bf16.msra.mxu0 0
        %1607 = vmatprep.subr.bf16.mxu0 0
        %1608 = vmatpush1.bf16.msra.mxu0 0
        %1609 = vmatprep.subr.bf16.mxu0 0
        %1610 = vmatpush1.bf16.msra.mxu0 0
        %1611 = vmatprep.subr.bf16.mxu0 0
        %1612 = vmatpush1.bf16.msra.mxu0 0
        %1613 = vmatprep.subr.bf16.mxu0 0
        %1614 = vmatpush1.bf16.msra.mxu0 0
        %1615 = vmatprep.subr.bf16.mxu0 0
        %1616 = vmatpush1.bf16.msra.mxu0 0
        %1617 = vmatprep.subr.bf16.mxu0 0
        %1618 = vmatpush1.bf16.msra.mxu0 0
        %1619 = vmatprep.subr.bf16.mxu0 0
        %1620 = vmatpush1.bf16.msra.mxu0 0
        %1621 = vmatprep.subr.bf16.mxu0 0
        %1622 = vmatpush1.bf16.msra.mxu0 0
        %1623 = vmatprep.mubr.bf16.mxu0 0
        %1624 = vmatmul.mubr.bf16.gmra.mrb[0].mxu0 %v1540
        %v1625 = vpop.f32.mrb[0].mxu0
        %v1626 = vadd.f32 0.0, %v1625
        %v1627 = vpop.f32.mrb[0].mxu0
        %v1628 = vpop.f32.mrb[0].mxu0
        %v1629 = vadd.f32 0.0, %v1628
        %v1630 = vpop.f32.mrb[0].mxu0
        %1631 = vmatprep.mubr.bf16.mxu0 0
        %1632 = vmatmul.mubr.bf16.gmra.mrb[0].mxu0 %v1543
        %v1633 = vpop.f32.mrb[0].mxu0
        %v1634 = vadd.f32 0.0, %v1633
        %v1635 = vpop.f32.mrb[0].mxu0
        %v1636 = vpop.f32.mrb[0].mxu0
        %v1637 = vadd.f32 0.0, %v1636
        %v1638 = vpop.f32.mrb[0].mxu0
        %1639 = vmatprep.mubr.bf16.mxu0 0
        %1640 = vmatmul.mubr.bf16.gmra.mrb[0].mxu0 %v1546
        %v1641 = vpop.f32.mrb[0].mxu0
        %v1642 = vadd.f32 0.0, %v1641
        %v1643 = vpop.f32.mrb[0].mxu0
        %v1644 = vpop.f32.mrb[0].mxu0
        %v1645 = vadd.f32 0.0, %v1644
        %v1646 = vpop.f32.mrb[0].mxu0
        %1647 = vmatprep.mubr.bf16.mxu0 0
        %1648 = vmatmul.mubr.bf16.gmra.mrb[0].mxu0 %v1549
        %v1649 = vpop.f32.mrb[0].mxu0
        %v1650 = vadd.f32 0.0, %v1649
        %v1651 = vpop.f32.mrb[0].mxu0
        %v1652 = vpop.f32.mrb[0].mxu0
        %v1653 = vadd.f32 0.0, %v1652
        %v1654 = vpop.f32.mrb[0].mxu0
        %1655 = vmatprep.mubr.bf16.mxu0 0
        %1656 = vmatmul.mubr.bf16.gmra.mrb[0].mxu0 %v1552
        %v1657 = vpop.f32.mrb[0].mxu0
        %v1658 = vadd.f32 0.0, %v1657
        %v1659 = vpop.f32.mrb[0].mxu0
        %v1660 = vpop.f32.mrb[0].mxu0
        %v1661 = vadd.f32 0.0, %v1660
        %v1662 = vpop.f32.mrb[0].mxu0
        %1663 = vmatprep.mubr.bf16.mxu0 0
        %1664 = vmatmul.mubr.bf16.gmra.mrb[0].mxu0 %v1555
        %v1665 = vpop.f32.mrb[0].mxu0
        %v1666 = vadd.f32 0.0, %v1665
        %v1667 = vpop.f32.mrb[0].mxu0
        %v1668 = vpop.f32.mrb[0].mxu0
        %v1669 = vadd.f32 0.0, %v1668
        %v1670 = vpop.f32.mrb[0].mxu0
        %1671 = vmatprep.mubr.bf16.mxu0 0
        %1672 = vmatmul.mubr.bf16.gmra.mrb[0].mxu0 %v1558
        %v1673 = vpop.f32.mrb[0].mxu0
        %v1674 = vadd.f32 0.0, %v1673
        %v1675 = vpop.f32.mrb[0].mxu0
        %v1676 = vpop.f32.mrb[0].mxu0
        %v1677 = vadd.f32 0.0, %v1676
        %v1678 = vpop.f32.mrb[0].mxu0
        %1679 = vmatprep.mubr.bf16.mxu0 0
        %1680 = vmatmul.mubr.bf16.gmra.mrb[0].mxu0 %v1561
        %v1681 = vpop.f32.mrb[0].mxu0
        %v1682 = vadd.f32 0.0, %v1681
        %v1683 = vpop.f32.mrb[0].mxu0
        %v1684 = vpop.f32.mrb[0].mxu0
        %v1685 = vadd.f32 0.0, %v1684
        %v1686 = vpop.f32.mrb[0].mxu0
        %1687 = vmatprep.mubr.bf16.mxu0 0
        %1688 = vmatmul.mubr.bf16.gmra.mrb[0].mxu0 %v1564
        %v1689 = vpop.f32.mrb[0].mxu0
        %v1690 = vadd.f32 0.0, %v1689
        %v1691 = vpop.f32.mrb[0].mxu0
        %v1692 = vpop.f32.mrb[0].mxu0
        %v1693 = vadd.f32 0.0, %v1692
        %v1694 = vpop.f32.mrb[0].mxu0
        %1695 = vmatprep.mubr.bf16.mxu0 0
        %1696 = vmatmul.mubr.bf16.gmra.mrb[0].mxu0 %v1567
        %v1697 = vpop.f32.mrb[0].mxu0
        %v1698 = vadd.f32 0.0, %v1697
        %v1699 = vpop.f32.mrb[0].mxu0
        %v1700 = vpop.f32.mrb[0].mxu0
        %v1701 = vadd.f32 0.0, %v1700
        %v1702 = vpop.f32.mrb[0].mxu0
        %1703 = vmatprep.mubr.bf16.mxu0 0
        %1704 = vmatmul.mubr.bf16.gmra.mrb[0].mxu0 %v1570
        %v1705 = vpop.f32.mrb[0].mxu0
        %v1706 = vadd.f32 0.0, %v1705
        %v1707 = vpop.f32.mrb[0].mxu0
        %v1708 = vpop.f32.mrb[0].mxu0
        %v1709 = vadd.f32 0.0, %v1708
        %v1710 = vpop.f32.mrb[0].mxu0
        %1711 = vmatprep.mubr.bf16.mxu0 0
        %1712 = vmatmul.mubr.bf16.gmra.mrb[0].mxu0 %v1573
        %v1713 = vpop.f32.mrb[0].mxu0
        %v1714 = vadd.f32 0.0, %v1713
        %v1715 = vpop.f32.mrb[0].mxu0
        %v1716 = vpop.f32.mrb[0].mxu0
        %v1717 = vadd.f32 0.0, %v1716
        %v1718 = vpop.f32.mrb[0].mxu0
        %1719 = vmatprep.mubr.bf16.mxu0 0
        %1720 = vmatmul.mubr.bf16.gmra.mrb[0].mxu0 %v1576
        %v1721 = vpop.f32.mrb[0].mxu0
        %v1722 = vadd.f32 0.0, %v1721
        %v1723 = vpop.f32.mrb[0].mxu0
        %v1724 = vpop.f32.mrb[0].mxu0
        %v1725 = vadd.f32 0.0, %v1724
        %v1726 = vpop.f32.mrb[0].mxu0
        %1727 = vmatprep.mubr.bf16.mxu0 0
        %1728 = vmatmul.mubr.bf16.gmra.mrb[0].mxu0 %v1579
        %v1729 = vpop.f32.mrb[0].mxu0
        %v1730 = vadd.f32 0.0, %v1729
        %v1731 = vpop.f32.mrb[0].mxu0
        %v1732 = vpop.f32.mrb[0].mxu0
        %v1733 = vadd.f32 0.0, %v1732
        %v1734 = vpop.f32.mrb[0].mxu0
        %1735 = vmatprep.mubr.bf16.mxu0 0
        %1736 = vmatmul.mubr.bf16.gmra.mrb[0].mxu0 %v1582
        %v1737 = vpop.f32.mrb[0].mxu0
        %v1738 = vadd.f32 0.0, %v1737
        %v1739 = vpop.f32.mrb[0].mxu0
        %v1740 = vpop.f32.mrb[0].mxu0
        %v1741 = vadd.f32 0.0, %v1740
        %v1742 = vpop.f32.mrb[0].mxu0
        %1743 = vmatprep.mubr.bf16.mxu0 0
        %1744 = vmatmul.mubr.bf16.gmra.mrb[0].mxu0 %v1585
        %v1745 = vpop.f32.mrb[0].mxu0
        %v1746 = vadd.f32 0.0, %v1745
        %v1747 = vpop.f32.mrb[0].mxu0
        %v1748 = vpop.f32.mrb[0].mxu0
        %v1749 = vadd.f32 0.0, %v1748
        %v1750 = vpop.f32.mrb[0].mxu0
        %1751 = vdwg.mxu0
        %v1758 = vrot.slane %v1264, 7
        %v1759 = vrot.slane %v1758, 4
        %v1760 = vrot.slane %v1265, 7
        %v1761 = vsel %vm1377, %v1759, %v1760
        %v1762 = vrot.slane %v1760, 4
        %v1763 = vrot.slane %v1266, 7
        %v1764 = vsel %vm1377, %v1762, %v1763
        %v1765 = vrot.slane %v1267, 7
        %v1766 = vrot.slane %v1765, 4
        %v1767 = vrot.slane %v1268, 7
        %v1768 = vsel %vm1377, %v1766, %v1767
        %v1769 = vrot.slane %v1767, 4
        %v1770 = vrot.slane %v1269, 7
        %v1771 = vsel %vm1377, %v1769, %v1770
        %v1772 = vunpack.c.l.b16 %v1761
        %v1773 = vunpack.c.l.b16 %v1764
        %v1774 = vunpack.c.l.b16 %v1768
        %v1775 = vunpack.c.l.b16 %v1771
        %v1776 = vpack.c.b16 %v1773, %v1772
        %v1777 = vpack.c.b16 %v1775, %v1774
        %v1779 = vsel %vm1538, %v1776, 0
        %v1782 = vsel %vm1538, %v1777, 0
        %v1785 = vsel %vm1587, %v1324, 0
        %1787 = vmatprep.subr.bf16.mxu0 0
        %1788 = vmatpush1.bf16.msra.mxu0 %v1785
        %1789 = vmatprep.subr.bf16.mxu0 0
        %1790 = vmatpush1.bf16.msra.mxu0 0
        %1791 = vmatprep.subr.bf16.mxu0 0
        %1792 = vmatpush1.bf16.msra.mxu0 0
        %1793 = vmatprep.subr.bf16.mxu0 0
        %1794 = vmatpush1.bf16.msra.mxu0 0
        %1795 = vmatprep.subr.bf16.mxu0 0
        %1796 = vmatpush1.bf16.msra.mxu0 0
        %1797 = vmatprep.subr.bf16.mxu0 0
        %1798 = vmatpush1.bf16.msra.mxu0 0
        %1799 = vmatprep.subr.bf16.mxu0 0
        %1800 = vmatpush1.bf16.msra.mxu0 0
        %1801 = vmatprep.subr.bf16.mxu0 0
        %1802 = vmatpush1.bf16.msra.mxu0 0
        %1803 = vmatprep.subr.bf16.mxu0 0
        %1804 = vmatpush1.bf16.msra.mxu0 0
        %1805 = vmatprep.subr.bf16.mxu0 0
        %1806 = vmatpush1.bf16.msra.mxu0 0
        %1807 = vmatprep.subr.bf16.mxu0 0
        %1808 = vmatpush1.bf16.msra.mxu0 0
        %1809 = vmatprep.subr.bf16.mxu0 0
        %1810 = vmatpush1.bf16.msra.mxu0 0
        %1811 = vmatprep.subr.bf16.mxu0 0
        %1812 = vmatpush1.bf16.msra.mxu0 0
        %1813 = vmatprep.subr.bf16.mxu0 0
        %1814 = vmatpush1.bf16.msra.mxu0 0
        %1815 = vmatprep.subr.bf16.mxu0 0
        %1816 = vmatpush1.bf16.msra.mxu0 0
        %1817 = vmatprep.subr.bf16.mxu0 0
        %1818 = vmatpush1.bf16.msra.mxu0 0
        %1819 = vmatprep.mubr.bf16.mxu0 0
        %1820 = vmatmul.mubr.bf16.gmra.mrb[0].mxu0 %v1779
        %v1821 = vpop.f32.mrb[0].mxu0
        %v1822 = vadd.f32 %v1626, %v1821
        %v1823 = vpop.f32.mrb[0].mxu0
        %v1824 = vpop.f32.mrb[0].mxu0
        %v1825 = vadd.f32 %v1629, %v1824
        %v1826 = vpop.f32.mrb[0].mxu0
        %1827 = vmatprep.mubr.bf16.mxu0 0
        %1828 = vmatmul.mubr.bf16.gmra.mrb[0].mxu0 %v1782
        %v1829 = vpop.f32.mrb[0].mxu0
        %v1830 = vadd.f32 %v1634, %v1829
        %v1831 = vpop.f32.mrb[0].mxu0
        %v1832 = vpop.f32.mrb[0].mxu0
        %v1833 = vadd.f32 %v1637, %v1832
        %v1834 = vpop.f32.mrb[0].mxu0
        %1835 = vmatprep.mubr.bf16.mxu0 0
        %1836 = vmatmul.mubr.bf16.gmra.mrb[0].mxu0 %v1540
        %v1837 = vpop.f32.mrb[0].mxu0
        %v1838 = vadd.f32 %v1642, %v1837
        %v1839 = vpop.f32.mrb[0].mxu0
        %v1840 = vpop.f32.mrb[0].mxu0
        %v1841 = vadd.f32 %v1645, %v1840
        %v1842 = vpop.f32.mrb[0].mxu0
        %1843 = vmatprep.mubr.bf16.mxu0 0
        %1844 = vmatmul.mubr.bf16.gmra.mrb[0].mxu0 %v1543
        %v1845 = vpop.f32.mrb[0].mxu0
        %v1846 = vadd.f32 %v1650, %v1845
        %v1847 = vpop.f32.mrb[0].mxu0
        %v1848 = vpop.f32.mrb[0].mxu0
        %v1849 = vadd.f32 %v1653, %v1848
        %v1850 = vpop.f32.mrb[0].mxu0
        %1851 = vmatprep.mubr.bf16.mxu0 0
        %1852 = vmatmul.mubr.bf16.gmra.mrb[0].mxu0 %v1546
        %v1853 = vpop.f32.mrb[0].mxu0
        %v1854 = vadd.f32 %v1658, %v1853
        %v1855 = vpop.f32.mrb[0].mxu0
        %v1856 = vpop.f32.mrb[0].mxu0
        %v1857 = vadd.f32 %v1661, %v1856
        %v1858 = vpop.f32.mrb[0].mxu0
        %1859 = vmatprep.mubr.bf16.mxu0 0
        %1860 = vmatmul.mubr.bf16.gmra.mrb[0].mxu0 %v1549
        %v1861 = vpop.f32.mrb[0].mxu0
        %v1862 = vadd.f32 %v1666, %v1861
        %v1863 = vpop.f32.mrb[0].mxu0
        %v1864 = vpop.f32.mrb[0].mxu0
        %v1865 = vadd.f32 %v1669, %v1864
        %v1866 = vpop.f32.mrb[0].mxu0
        %1867 = vmatprep.mubr.bf16.mxu0 0
        %1868 = vmatmul.mubr.bf16.gmra.mrb[0].mxu0 %v1552
        %v1869 = vpop.f32.mrb[0].mxu0
        %v1870 = vadd.f32 %v1674, %v1869
        %v1871 = vpop.f32.mrb[0].mxu0
        %v1872 = vpop.f32.mrb[0].mxu0
        %v1873 = vadd.f32 %v1677, %v1872
        %v1874 = vpop.f32.mrb[0].mxu0
        %1875 = vmatprep.mubr.bf16.mxu0 0
        %1876 = vmatmul.mubr.bf16.gmra.mrb[0].mxu0 %v1555
        %v1877 = vpop.f32.mrb[0].mxu0
        %v1878 = vadd.f32 %v1682, %v1877
        %v1879 = vpop.f32.mrb[0].mxu0
        %v1880 = vpop.f32.mrb[0].mxu0
        %v1881 = vadd.f32 %v1685, %v1880
        %v1882 = vpop.f32.mrb[0].mxu0
        %1883 = vmatprep.mubr.bf16.mxu0 0
        %1884 = vmatmul.mubr.bf16.gmra.mrb[0].mxu0 %v1558
        %v1885 = vpop.f32.mrb[0].mxu0
        %v1886 = vadd.f32 %v1690, %v1885
        %v1887 = vpop.f32.mrb[0].mxu0
        %v1888 = vpop.f32.mrb[0].mxu0
        %v1889 = vadd.f32 %v1693, %v1888
        %v1890 = vpop.f32.mrb[0].mxu0
        %1891 = vmatprep.mubr.bf16.mxu0 0
        %1892 = vmatmul.mubr.bf16.gmra.mrb[0].mxu0 %v1561
        %v1893 = vpop.f32.mrb[0].mxu0
        %v1894 = vadd.f32 %v1698, %v1893
        %v1895 = vpop.f32.mrb[0].mxu0
        %v1896 = vpop.f32.mrb[0].mxu0
        %v1897 = vadd.f32 %v1701, %v1896
        %v1898 = vpop.f32.mrb[0].mxu0
        %1899 = vmatprep.mubr.bf16.mxu0 0
        %1900 = vmatmul.mubr.bf16.gmra.mrb[0].mxu0 %v1564
        %v1901 = vpop.f32.mrb[0].mxu0
        %v1902 = vadd.f32 %v1706, %v1901
        %v1903 = vpop.f32.mrb[0].mxu0
        %v1904 = vpop.f32.mrb[0].mxu0
        %v1905 = vadd.f32 %v1709, %v1904
        %v1906 = vpop.f32.mrb[0].mxu0
        %1907 = vmatprep.mubr.bf16.mxu0 0
        %1908 = vmatmul.mubr.bf16.gmra.mrb[0].mxu0 %v1567
        %v1909 = vpop.f32.mrb[0].mxu0
        %v1910 = vadd.f32 %v1714, %v1909
        %v1911 = vpop.f32.mrb[0].mxu0
        %v1912 = vpop.f32.mrb[0].mxu0
        %v1913 = vadd.f32 %v1717, %v1912
        %v1914 = vpop.f32.mrb[0].mxu0
        %1915 = vmatprep.mubr.bf16.mxu0 0
        %1916 = vmatmul.mubr.bf16.gmra.mrb[0].mxu0 %v1570
        %v1917 = vpop.f32.mrb[0].mxu0
        %v1918 = vadd.f32 %v1722, %v1917
        %v1919 = vpop.f32.mrb[0].mxu0
        %v1920 = vpop.f32.mrb[0].mxu0
        %v1921 = vadd.f32 %v1725, %v1920
        %v1922 = vpop.f32.mrb[0].mxu0
        %1923 = vmatprep.mubr.bf16.mxu0 0
        %1924 = vmatmul.mubr.bf16.gmra.mrb[0].mxu0 %v1573
        %v1925 = vpop.f32.mrb[0].mxu0
        %v1926 = vadd.f32 %v1730, %v1925
        %v1927 = vpop.f32.mrb[0].mxu0
        %v1928 = vpop.f32.mrb[0].mxu0
        %v1929 = vadd.f32 %v1733, %v1928
        %v1930 = vpop.f32.mrb[0].mxu0
        %1931 = vmatprep.mubr.bf16.mxu0 0
        %1932 = vmatmul.mubr.bf16.gmra.mrb[0].mxu0 %v1576
        %v1933 = vpop.f32.mrb[0].mxu0
        %v1934 = vadd.f32 %v1738, %v1933
        %v1935 = vpop.f32.mrb[0].mxu0
        %v1936 = vpop.f32.mrb[0].mxu0
        %v1937 = vadd.f32 %v1741, %v1936
        %v1938 = vpop.f32.mrb[0].mxu0
        %1939 = vmatprep.mubr.bf16.mxu0 0
        %1940 = vmatmul.mubr.bf16.gmra.mrb[0].mxu0 %v1579
        %v1941 = vpop.f32.mrb[0].mxu0
        %v1942 = vadd.f32 %v1746, %v1941
        %v1943 = vpop.f32.mrb[0].mxu0
        %v1944 = vpop.f32.mrb[0].mxu0
        %v1945 = vadd.f32 %v1749, %v1944
        %v1946 = vpop.f32.mrb[0].mxu0
        %1947 = vdwg.mxu0
        %s1948 = scalar_lea.vmem %s3, 12
        %v1949 = vld [vmem:[%s1948] sm:$0x3]
        %v1956 = vrot.slane %v1318, 7
        %v1957 = vrot.slane %v1956, 4
        %v1958 = vrot.slane %v1319, 7
        %v1959 = vsel %vm1377, %v1957, %v1958
        %v1960 = vrot.slane %v1958, 4
        %v1961 = vrot.slane %v1320, 7
        %v1962 = vsel %vm1377, %v1960, %v1961
        %v1963 = vrot.slane %v1321, 7
        %v1964 = vrot.slane %v1963, 4
        %v1965 = vrot.slane %v1322, 7
        %v1966 = vsel %vm1377, %v1964, %v1965
        %v1967 = vrot.slane %v1965, 4
        %v1968 = vrot.slane %v1323, 7
        %v1969 = vsel %vm1377, %v1967, %v1968
        %v1970 = vunpack.c.l.b16 %v1959
        %v1971 = vunpack.c.l.b16 %v1962
        %v1972 = vunpack.c.l.b16 %v1966
        %v1973 = vunpack.c.l.b16 %v1969
        %v1974 = vpack.c.b16 %v1971, %v1970
        %v1975 = vpack.c.b16 %v1973, %v1972
        %v1977 = vsel %vm1538, %v1974, 0
        %v1980 = vsel %vm1538, %v1975, 0
        %v1983 = vsel %vm1587, %v1949, 0
        %1985 = vmatprep.subr.bf16.mxu0 0
        %1986 = vmatpush1.bf16.msra.mxu0 %v1983
        %1987 = vmatprep.subr.bf16.mxu0 0
        %1988 = vmatpush1.bf16.msra.mxu0 0
        %1989 = vmatprep.subr.bf16.mxu0 0
        %1990 = vmatpush1.bf16.msra.mxu0 0
        %1991 = vmatprep.subr.bf16.mxu0 0
        %1992 = vmatpush1.bf16.msra.mxu0 0
        %1993 = vmatprep.subr.bf16.mxu0 0
        %1994 = vmatpush1.bf16.msra.mxu0 0
        %1995 = vmatprep.subr.bf16.mxu0 0
        %1996 = vmatpush1.bf16.msra.mxu0 0
        %1997 = vmatprep.subr.bf16.mxu0 0
        %1998 = vmatpush1.bf16.msra.mxu0 0
        %1999 = vmatprep.subr.bf16.mxu0 0
        %2000 = vmatpush1.bf16.msra.mxu0 0
        %2001 = vmatprep.subr.bf16.mxu0 0
        %2002 = vmatpush1.bf16.msra.mxu0 0
        %2003 = vmatprep.subr.bf16.mxu0 0
        %2004 = vmatpush1.bf16.msra.mxu0 0
        %2005 = vmatprep.subr.bf16.mxu0 0
        %2006 = vmatpush1.bf16.msra.mxu0 0
        %2007 = vmatprep.subr.bf16.mxu0 0
        %2008 = vmatpush1.bf16.msra.mxu0 0
        %2009 = vmatprep.subr.bf16.mxu0 0
        %2010 = vmatpush1.bf16.msra.mxu0 0
        %2011 = vmatprep.subr.bf16.mxu0 0
        %2012 = vmatpush1.bf16.msra.mxu0 0
        %2013 = vmatprep.subr.bf16.mxu0 0
        %2014 = vmatpush1.bf16.msra.mxu0 0
        %2015 = vmatprep.subr.bf16.mxu0 0
        %2016 = vmatpush1.bf16.msra.mxu0 0
        %2017 = vmatprep.mubr.bf16.mxu0 0
        %2018 = vmatmul.mubr.bf16.gmra.mrb[0].mxu0 %v1546
        %v2019 = vpop.f32.mrb[0].mxu0
        %v2020 = vadd.f32 0.0, %v2019
        %v2021 = vpop.f32.mrb[0].mxu0
        %v2022 = vpop.f32.mrb[0].mxu0
        %v2023 = vadd.f32 0.0, %v2022
        %v2024 = vpop.f32.mrb[0].mxu0
        %2025 = vmatprep.mubr.bf16.mxu0 0
        %2026 = vmatmul.mubr.bf16.gmra.mrb[0].mxu0 %v1549
        %v2027 = vpop.f32.mrb[0].mxu0
        %v2028 = vadd.f32 0.0, %v2027
        %v2029 = vpop.f32.mrb[0].mxu0
        %v2030 = vpop.f32.mrb[0].mxu0
        %v2031 = vadd.f32 0.0, %v2030
        %v2032 = vpop.f32.mrb[0].mxu0
        %2033 = vmatprep.mubr.bf16.mxu0 0
        %2034 = vmatmul.mubr.bf16.gmra.mrb[0].mxu0 %v1552
        %v2035 = vpop.f32.mrb[0].mxu0
        %v2036 = vadd.f32 0.0, %v2035
        %v2037 = vpop.f32.mrb[0].mxu0
        %v2038 = vpop.f32.mrb[0].mxu0
        %v2039 = vadd.f32 0.0, %v2038
        %v2040 = vpop.f32.mrb[0].mxu0
        %2041 = vmatprep.mubr.bf16.mxu0 0
        %2042 = vmatmul.mubr.bf16.gmra.mrb[0].mxu0 %v1555
        %v2043 = vpop.f32.mrb[0].mxu0
        %v2044 = vadd.f32 0.0, %v2043
        %v2045 = vpop.f32.mrb[0].mxu0
        %v2046 = vpop.f32.mrb[0].mxu0
        %v2047 = vadd.f32 0.0, %v2046
        %v2048 = vpop.f32.mrb[0].mxu0
        %2049 = vmatprep.mubr.bf16.mxu0 0
        %2050 = vmatmul.mubr.bf16.gmra.mrb[0].mxu0 %v1558
        %v2051 = vpop.f32.mrb[0].mxu0
        %v2052 = vadd.f32 0.0, %v2051
        %v2053 = vpop.f32.mrb[0].mxu0
        %v2054 = vpop.f32.mrb[0].mxu0
        %v2055 = vadd.f32 0.0, %v2054
        %v2056 = vpop.f32.mrb[0].mxu0
        %2057 = vmatprep.mubr.bf16.mxu0 0
        %2058 = vmatmul.mubr.bf16.gmra.mrb[0].mxu0 %v1561
        %v2059 = vpop.f32.mrb[0].mxu0
        %v2060 = vadd.f32 0.0, %v2059
        %v2061 = vpop.f32.mrb[0].mxu0
        %v2062 = vpop.f32.mrb[0].mxu0
        %v2063 = vadd.f32 0.0, %v2062
        %v2064 = vpop.f32.mrb[0].mxu0
        %2065 = vmatprep.mubr.bf16.mxu0 0
        %2066 = vmatmul.mubr.bf16.gmra.mrb[0].mxu0 %v1564
        %v2067 = vpop.f32.mrb[0].mxu0
        %v2068 = vadd.f32 0.0, %v2067
        %v2069 = vpop.f32.mrb[0].mxu0
        %v2070 = vpop.f32.mrb[0].mxu0
        %v2071 = vadd.f32 0.0, %v2070
        %v2072 = vpop.f32.mrb[0].mxu0
        %2073 = vmatprep.mubr.bf16.mxu0 0
        %2074 = vmatmul.mubr.bf16.gmra.mrb[0].mxu0 %v1567
        %v2075 = vpop.f32.mrb[0].mxu0
        %v2076 = vadd.f32 0.0, %v2075
        %v2077 = vpop.f32.mrb[0].mxu0
        %v2078 = vpop.f32.mrb[0].mxu0
        %v2079 = vadd.f32 0.0, %v2078
        %v2080 = vpop.f32.mrb[0].mxu0
        %2081 = vmatprep.mubr.bf16.mxu0 0
        %2082 = vmatmul.mubr.bf16.gmra.mrb[0].mxu0 %v1570
        %v2083 = vpop.f32.mrb[0].mxu0
        %v2084 = vadd.f32 0.0, %v2083
        %v2085 = vpop.f32.mrb[0].mxu0
        %v2086 = vpop.f32.mrb[0].mxu0
        %v2087 = vadd.f32 0.0, %v2086
        %v2088 = vpop.f32.mrb[0].mxu0
        %2089 = vmatprep.mubr.bf16.mxu0 0
        %2090 = vmatmul.mubr.bf16.gmra.mrb[0].mxu0 %v1573
        %v2091 = vpop.f32.mrb[0].mxu0
        %v2092 = vadd.f32 0.0, %v2091
        %v2093 = vpop.f32.mrb[0].mxu0
        %v2094 = vpop.f32.mrb[0].mxu0
        %v2095 = vadd.f32 0.0, %v2094
        %v2096 = vpop.f32.mrb[0].mxu0
        %2097 = vmatprep.mubr.bf16.mxu0 0
        %2098 = vmatmul.mubr.bf16.gmra.mrb[0].mxu0 %v1576
        %v2099 = vpop.f32.mrb[0].mxu0
        %v2100 = vadd.f32 0.0, %v2099
        %v2101 = vpop.f32.mrb[0].mxu0
        %v2102 = vpop.f32.mrb[0].mxu0
        %v2103 = vadd.f32 0.0, %v2102
        %v2104 = vpop.f32.mrb[0].mxu0
        %2105 = vmatprep.mubr.bf16.mxu0 0
        %2106 = vmatmul.mubr.bf16.gmra.mrb[0].mxu0 %v1579
        %v2107 = vpop.f32.mrb[0].mxu0
        %v2108 = vadd.f32 0.0, %v2107
        %v2109 = vpop.f32.mrb[0].mxu0
        %v2110 = vpop.f32.mrb[0].mxu0
        %v2111 = vadd.f32 0.0, %v2110
        %v2112 = vpop.f32.mrb[0].mxu0
        %2113 = vmatprep.mubr.bf16.mxu0 0
        %2114 = vmatmul.mubr.bf16.gmra.mrb[0].mxu0 %v1582
        %v2115 = vpop.f32.mrb[0].mxu0
        %v2116 = vadd.f32 0.0, %v2115
        %v2117 = vpop.f32.mrb[0].mxu0
        %v2118 = vpop.f32.mrb[0].mxu0
        %v2119 = vadd.f32 0.0, %v2118
        %v2120 = vpop.f32.mrb[0].mxu0
        %2121 = vmatprep.mubr.bf16.mxu0 0
        %2122 = vmatmul.mubr.bf16.gmra.mrb[0].mxu0 %v1585
        %v2123 = vpop.f32.mrb[0].mxu0
        %v2124 = vadd.f32 0.0, %v2123
        %v2125 = vpop.f32.mrb[0].mxu0
        %v2126 = vpop.f32.mrb[0].mxu0
        %v2127 = vadd.f32 0.0, %v2126
        %v2128 = vpop.f32.mrb[0].mxu0
        %2129 = vmatprep.mubr.bf16.mxu0 0
        %2130 = vmatmul.mubr.bf16.gmra.mrb[0].mxu0 %v1977
        %v2131 = vpop.f32.mrb[0].mxu0
        %v2132 = vadd.f32 0.0, %v2131
        %v2133 = vpop.f32.mrb[0].mxu0
        %v2134 = vpop.f32.mrb[0].mxu0
        %v2135 = vadd.f32 0.0, %v2134
        %v2136 = vpop.f32.mrb[0].mxu0
        %2137 = vmatprep.mubr.bf16.mxu0 0
        %2138 = vmatmul.mubr.bf16.gmra.mrb[0].mxu0 %v1980
        %v2139 = vpop.f32.mrb[0].mxu0
        %v2140 = vadd.f32 0.0, %v2139
        %v2141 = vpop.f32.mrb[0].mxu0
        %v2142 = vpop.f32.mrb[0].mxu0
        %v2143 = vadd.f32 0.0, %v2142
        %v2144 = vpop.f32.mrb[0].mxu0
        %2145 = vdwg.mxu0
        %v2146 = vadd.f32 %v1822, %v2020
        %v2147 = vadd.f32 %v1825, %v2023
        %v2148 = vadd.f32 %v1830, %v2028
        %v2149 = vadd.f32 %v1833, %v2031
        %v2150 = vadd.f32 %v1838, %v2036
        %v2151 = vadd.f32 %v1841, %v2039
        %v2152 = vadd.f32 %v1846, %v2044
        %v2153 = vadd.f32 %v1849, %v2047
        %v2154 = vadd.f32 %v1854, %v2052
        %v2155 = vadd.f32 %v1857, %v2055
        %v2156 = vadd.f32 %v1862, %v2060
        %v2157 = vadd.f32 %v1865, %v2063
        %v2158 = vadd.f32 %v1870, %v2068
        %v2159 = vadd.f32 %v1873, %v2071
        %v2160 = vadd.f32 %v1878, %v2076
        %v2161 = vadd.f32 %v1881, %v2079
        %v2162 = vadd.f32 %v1886, %v2084
        %v2163 = vadd.f32 %v1889, %v2087
        %v2164 = vadd.f32 %v1894, %v2092
        %v2165 = vadd.f32 %v1897, %v2095
        %v2166 = vadd.f32 %v1902, %v2100
        %v2167 = vadd.f32 %v1905, %v2103
        %v2168 = vadd.f32 %v1910, %v2108
        %v2169 = vadd.f32 %v1913, %v2111
        %v2170 = vadd.f32 %v1918, %v2116
        %v2171 = vadd.f32 %v1921, %v2119
        %v2172 = vadd.f32 %v1926, %v2124
        %v2173 = vadd.f32 %v1929, %v2127
        %v2174 = vadd.f32 %v1934, %v2132
        %v2175 = vadd.f32 %v1937, %v2135
        %v2176 = vadd.f32 %v1942, %v2140
        %v2177 = vadd.f32 %v1945, %v2143
        %v2178 = vld [vmem:[#allocation4 + $0xc] sm:$0xf]
        %v2179 = vld [vmem:[#allocation4 + $0x20] sm:$0xf]
        %v2180 = vld [vmem:[#allocation4 + $0x34] sm:$0xf]
        %v2181 = vld [vmem:[#allocation4 + $0x48] sm:$0xf]
        %v2182 = vld [vmem:[#allocation4 + $0x5c] sm:$0xf]
        %v2183 = vld [vmem:[#allocation4 + $0x70] sm:$0xf]
        %v2184 = vld [vmem:[#allocation4 + $0x84] sm:$0xf]
        %v2185 = vld [vmem:[#allocation4 + $0x98] sm:$0xf]
        %v2186 = vld [vmem:[#allocation4 + $0xac] sm:$0xf]
        %v2187 = vld [vmem:[#allocation4 + $0xc0] sm:$0xf]
        %v2188 = vld [vmem:[#allocation4 + $0xd4] sm:$0xf]
        %v2189 = vld [vmem:[#allocation4 + $0xe8] sm:$0xf]
        %v2190 = vld [vmem:[#allocation4 + $0xfc] sm:$0xf]
        %v2191 = vld [vmem:[#allocation4 + $0x110] sm:$0xf]
        %v2192 = vld [vmem:[#allocation4 + $0x124] sm:$0xf]
        %v2193 = vld [vmem:[#allocation4 + $0x138] sm:$0xf]
        %v2194 = vld [vmem:[#allocation4 + $0x14c] sm:$0xf]
        %v2195 = vld [vmem:[#allocation4 + $0x160] sm:$0xf]
        %v2196 = vld [vmem:[#allocation4 + $0x174] sm:$0xf]
        %v2197 = vld [vmem:[#allocation4 + $0x188] sm:$0xf]
        %s2198 = scalar_lea.vmem %s3, 2
        %v2199 = vld [vmem:[%s2198] sm:$0x3]
        %v2216 = vunpack.c.l.b16 %v1265
        %v2217 = vunpack.c.l.b16 %v2178
        %v2218 = vunpack.c.l.b16 %v1268
        %v2219 = vunpack.c.l.b16 %v2179
        %v2220 = vunpack.c.l.b16 %v1271
        %v2221 = vunpack.c.l.b16 %v2180
        %v2222 = vunpack.c.l.b16 %v1274
        %v2223 = vunpack.c.l.b16 %v2181
        %v2224 = vunpack.c.l.b16 %v1277
        %v2225 = vunpack.c.l.b16 %v2182
        %v2226 = vunpack.c.l.b16 %v1280
        %v2227 = vunpack.c.l.b16 %v2183
        %v2228 = vunpack.c.l.b16 %v1283
        %v2229 = vunpack.c.l.b16 %v2184
        %v2230 = vunpack.c.l.b16 %v1286
        %v2231 = vunpack.c.l.b16 %v2185
        %v2232 = vunpack.c.l.b16 %v1289
        %v2233 = vunpack.c.l.b16 %v2186
        %v2234 = vunpack.c.l.b16 %v1292
        %v2235 = vunpack.c.l.b16 %v2187
        %v2236 = vunpack.c.l.b16 %v1295
        %v2237 = vunpack.c.l.b16 %v2188
        %v2238 = vunpack.c.l.b16 %v1298
        %v2239 = vunpack.c.l.b16 %v2189
        %v2240 = vunpack.c.l.b16 %v1301
        %v2241 = vunpack.c.l.b16 %v2190
        %v2242 = vunpack.c.l.b16 %v1304
        %v2243 = vunpack.c.l.b16 %v2191
        %v2244 = vunpack.c.l.b16 %v1307
        %v2245 = vunpack.c.l.b16 %v2192
        %v2246 = vunpack.c.l.b16 %v1310
        %v2247 = vunpack.c.l.b16 %v2193
        %v2248 = vpack.c.b16 %v2217, %v2216
        %v2249 = vpack.c.b16 %v2219, %v2218
        %v2250 = vpack.c.b16 %v2221, %v2220
        %v2251 = vpack.c.b16 %v2223, %v2222
        %v2252 = vpack.c.b16 %v2225, %v2224
        %v2253 = vpack.c.b16 %v2227, %v2226
        %v2254 = vpack.c.b16 %v2229, %v2228
        %v2255 = vpack.c.b16 %v2231, %v2230
        %v2256 = vpack.c.b16 %v2233, %v2232
        %v2257 = vpack.c.b16 %v2235, %v2234
        %v2258 = vpack.c.b16 %v2237, %v2236
        %v2259 = vpack.c.b16 %v2239, %v2238
        %v2260 = vpack.c.b16 %v2241, %v2240
        %v2261 = vpack.c.b16 %v2243, %v2242
        %v2262 = vpack.c.b16 %v2245, %v2244
        %v2263 = vpack.c.b16 %v2247, %v2246
        %v2265 = vsel %vm1538, %v2248, 0
        %v2268 = vsel %vm1538, %v2249, 0
        %v2271 = vsel %vm1538, %v2250, 0
        %v2274 = vsel %vm1538, %v2251, 0
        %v2277 = vsel %vm1538, %v2252, 0
        %v2280 = vsel %vm1538, %v2253, 0
        %v2283 = vsel %vm1538, %v2254, 0
        %v2286 = vsel %vm1538, %v2255, 0
        %v2289 = vsel %vm1538, %v2256, 0
        %v2292 = vsel %vm1538, %v2257, 0
        %v2295 = vsel %vm1538, %v2258, 0
        %v2298 = vsel %vm1538, %v2259, 0
        %v2301 = vsel %vm1538, %v2260, 0
        %v2304 = vsel %vm1538, %v2261, 0
        %v2307 = vsel %vm1538, %v2262, 0
        %v2310 = vsel %vm1538, %v2263, 0
        %v2313 = vsel %vm1587, %v2199, 0
        %2315 = vmatprep.subr.bf16.mxu0 0
        %2316 = vmatpush1.bf16.msra.mxu0 %v2313
        %2317 = vmatprep.subr.bf16.mxu0 0
        %2318 = vmatpush1.bf16.msra.mxu0 0
        %2319 = vmatprep.subr.bf16.mxu0 0
        %2320 = vmatpush1.bf16.msra.mxu0 0
        %2321 = vmatprep.subr.bf16.mxu0 0
        %2322 = vmatpush1.bf16.msra.mxu0 0
        %2323 = vmatprep.subr.bf16.mxu0 0
        %2324 = vmatpush1.bf16.msra.mxu0 0
        %2325 = vmatprep.subr.bf16.mxu0 0
        %2326 = vmatpush1.bf16.msra.mxu0 0
        %2327 = vmatprep.subr.bf16.mxu0 0
        %2328 = vmatpush1.bf16.msra.mxu0 0
        %2329 = vmatprep.subr.bf16.mxu0 0
        %2330 = vmatpush1.bf16.msra.mxu0 0
        %2331 = vmatprep.subr.bf16.mxu0 0
        %2332 = vmatpush1.bf16.msra.mxu0 0
        %2333 = vmatprep.subr.bf16.mxu0 0
        %2334 = vmatpush1.bf16.msra.mxu0 0
        %2335 = vmatprep.subr.bf16.mxu0 0
        %2336 = vmatpush1.bf16.msra.mxu0 0
        %2337 = vmatprep.subr.bf16.mxu0 0
        %2338 = vmatpush1.bf16.msra.mxu0 0
        %2339 = vmatprep.subr.bf16.mxu0 0
        %2340 = vmatpush1.bf16.msra.mxu0 0
        %2341 = vmatprep.subr.bf16.mxu0 0
        %2342 = vmatpush1.bf16.msra.mxu0 0
        %2343 = vmatprep.subr.bf16.mxu0 0
        %2344 = vmatpush1.bf16.msra.mxu0 0
        %2345 = vmatprep.subr.bf16.mxu0 0
        %2346 = vmatpush1.bf16.msra.mxu0 0
        %2347 = vmatprep.mubr.bf16.mxu0 0
        %2348 = vmatmul.mubr.bf16.gmra.mrb[0].mxu0 %v2265
        %v2349 = vpop.f32.mrb[0].mxu0
        %v2350 = vadd.f32 0.0, %v2349
        %v2351 = vpop.f32.mrb[0].mxu0
        %v2352 = vpop.f32.mrb[0].mxu0
        %v2353 = vadd.f32 0.0, %v2352
        %v2354 = vpop.f32.mrb[0].mxu0
        %2355 = vmatprep.mubr.bf16.mxu0 0
        %2356 = vmatmul.mubr.bf16.gmra.mrb[0].mxu0 %v2268
        %v2357 = vpop.f32.mrb[0].mxu0
        %v2358 = vadd.f32 0.0, %v2357
        %v2359 = vpop.f32.mrb[0].mxu0
        %v2360 = vpop.f32.mrb[0].mxu0
        %v2361 = vadd.f32 0.0, %v2360
        %v2362 = vpop.f32.mrb[0].mxu0
        %2363 = vmatprep.mubr.bf16.mxu0 0
        %2364 = vmatmul.mubr.bf16.gmra.mrb[0].mxu0 %v2271
        %v2365 = vpop.f32.mrb[0].mxu0
        %v2366 = vadd.f32 0.0, %v2365
        %v2367 = vpop.f32.mrb[0].mxu0
        %v2368 = vpop.f32.mrb[0].mxu0
        %v2369 = vadd.f32 0.0, %v2368
        %v2370 = vpop.f32.mrb[0].mxu0
        %2371 = vmatprep.mubr.bf16.mxu0 0
        %2372 = vmatmul.mubr.bf16.gmra.mrb[0].mxu0 %v2274
        %v2373 = vpop.f32.mrb[0].mxu0
        %v2374 = vadd.f32 0.0, %v2373
        %v2375 = vpop.f32.mrb[0].mxu0
        %v2376 = vpop.f32.mrb[0].mxu0
        %v2377 = vadd.f32 0.0, %v2376
        %v2378 = vpop.f32.mrb[0].mxu0
        %2379 = vmatprep.mubr.bf16.mxu0 0
        %2380 = vmatmul.mubr.bf16.gmra.mrb[0].mxu0 %v2277
        %v2381 = vpop.f32.mrb[0].mxu0
        %v2382 = vadd.f32 0.0, %v2381
        %v2383 = vpop.f32.mrb[0].mxu0
        %v2384 = vpop.f32.mrb[0].mxu0
        %v2385 = vadd.f32 0.0, %v2384
        %v2386 = vpop.f32.mrb[0].mxu0
        %2387 = vmatprep.mubr.bf16.mxu0 0
        %2388 = vmatmul.mubr.bf16.gmra.mrb[0].mxu0 %v2280
        %v2389 = vpop.f32.mrb[0].mxu0
        %v2390 = vadd.f32 0.0, %v2389
        %v2391 = vpop.f32.mrb[0].mxu0
        %v2392 = vpop.f32.mrb[0].mxu0
        %v2393 = vadd.f32 0.0, %v2392
        %v2394 = vpop.f32.mrb[0].mxu0
        %2395 = vmatprep.mubr.bf16.mxu0 0
        %2396 = vmatmul.mubr.bf16.gmra.mrb[0].mxu0 %v2283
        %v2397 = vpop.f32.mrb[0].mxu0
        %v2398 = vadd.f32 0.0, %v2397
        %v2399 = vpop.f32.mrb[0].mxu0
        %v2400 = vpop.f32.mrb[0].mxu0
        %v2401 = vadd.f32 0.0, %v2400
        %v2402 = vpop.f32.mrb[0].mxu0
        %2403 = vmatprep.mubr.bf16.mxu0 0
        %2404 = vmatmul.mubr.bf16.gmra.mrb[0].mxu0 %v2286
        %v2405 = vpop.f32.mrb[0].mxu0
        %v2406 = vadd.f32 0.0, %v2405
        %v2407 = vpop.f32.mrb[0].mxu0
        %v2408 = vpop.f32.mrb[0].mxu0
        %v2409 = vadd.f32 0.0, %v2408
        %v2410 = vpop.f32.mrb[0].mxu0
        %2411 = vmatprep.mubr.bf16.mxu0 0
        %2412 = vmatmul.mubr.bf16.gmra.mrb[0].mxu0 %v2289
        %v2413 = vpop.f32.mrb[0].mxu0
        %v2414 = vadd.f32 0.0, %v2413
        %v2415 = vpop.f32.mrb[0].mxu0
        %v2416 = vpop.f32.mrb[0].mxu0
        %v2417 = vadd.f32 0.0, %v2416
        %v2418 = vpop.f32.mrb[0].mxu0
        %2419 = vmatprep.mubr.bf16.mxu0 0
        %2420 = vmatmul.mubr.bf16.gmra.mrb[0].mxu0 %v2292
        %v2421 = vpop.f32.mrb[0].mxu0
        %v2422 = vadd.f32 0.0, %v2421
        %v2423 = vpop.f32.mrb[0].mxu0
        %v2424 = vpop.f32.mrb[0].mxu0
        %v2425 = vadd.f32 0.0, %v2424
        %v2426 = vpop.f32.mrb[0].mxu0
        %2427 = vmatprep.mubr.bf16.mxu0 0
        %2428 = vmatmul.mubr.bf16.gmra.mrb[0].mxu0 %v2295
        %v2429 = vpop.f32.mrb[0].mxu0
        %v2430 = vadd.f32 0.0, %v2429
        %v2431 = vpop.f32.mrb[0].mxu0
        %v2432 = vpop.f32.mrb[0].mxu0
        %v2433 = vadd.f32 0.0, %v2432
        %v2434 = vpop.f32.mrb[0].mxu0
        %2435 = vmatprep.mubr.bf16.mxu0 0
        %2436 = vmatmul.mubr.bf16.gmra.mrb[0].mxu0 %v2298
        %v2437 = vpop.f32.mrb[0].mxu0
        %v2438 = vadd.f32 0.0, %v2437
        %v2439 = vpop.f32.mrb[0].mxu0
        %v2440 = vpop.f32.mrb[0].mxu0
        %v2441 = vadd.f32 0.0, %v2440
        %v2442 = vpop.f32.mrb[0].mxu0
        %2443 = vmatprep.mubr.bf16.mxu0 0
        %2444 = vmatmul.mubr.bf16.gmra.mrb[0].mxu0 %v2301
        %v2445 = vpop.f32.mrb[0].mxu0
        %v2446 = vadd.f32 0.0, %v2445
        %v2447 = vpop.f32.mrb[0].mxu0
        %v2448 = vpop.f32.mrb[0].mxu0
        %v2449 = vadd.f32 0.0, %v2448
        %v2450 = vpop.f32.mrb[0].mxu0
        %2451 = vmatprep.mubr.bf16.mxu0 0
        %2452 = vmatmul.mubr.bf16.gmra.mrb[0].mxu0 %v2304
        %v2453 = vpop.f32.mrb[0].mxu0
        %v2454 = vadd.f32 0.0, %v2453
        %v2455 = vpop.f32.mrb[0].mxu0
        %v2456 = vpop.f32.mrb[0].mxu0
        %v2457 = vadd.f32 0.0, %v2456
        %v2458 = vpop.f32.mrb[0].mxu0
        %2459 = vmatprep.mubr.bf16.mxu0 0
        %2460 = vmatmul.mubr.bf16.gmra.mrb[0].mxu0 %v2307
        %v2461 = vpop.f32.mrb[0].mxu0
        %v2462 = vadd.f32 0.0, %v2461
        %v2463 = vpop.f32.mrb[0].mxu0
        %v2464 = vpop.f32.mrb[0].mxu0
        %v2465 = vadd.f32 0.0, %v2464
        %v2466 = vpop.f32.mrb[0].mxu0
        %2467 = vmatprep.mubr.bf16.mxu0 0
        %2468 = vmatmul.mubr.bf16.gmra.mrb[0].mxu0 %v2310
        %v2469 = vpop.f32.mrb[0].mxu0
        %v2470 = vadd.f32 0.0, %v2469
        %v2471 = vpop.f32.mrb[0].mxu0
        %v2472 = vpop.f32.mrb[0].mxu0
        %v2473 = vadd.f32 0.0, %v2472
        %v2474 = vpop.f32.mrb[0].mxu0
        %2475 = vdwg.mxu0
        %v2476 = vadd.f32 %v2146, %v2350
        %v2477 = vadd.f32 %v2147, %v2353
        %v2478 = vadd.f32 %v2148, %v2358
        %v2479 = vadd.f32 %v2149, %v2361
        %v2480 = vadd.f32 %v2150, %v2366
        %v2481 = vadd.f32 %v2151, %v2369
        %v2482 = vadd.f32 %v2152, %v2374
        %v2483 = vadd.f32 %v2153, %v2377
        %v2484 = vadd.f32 %v2154, %v2382
        %v2485 = vadd.f32 %v2155, %v2385
        %v2486 = vadd.f32 %v2156, %v2390
        %v2487 = vadd.f32 %v2157, %v2393
        %v2488 = vadd.f32 %v2158, %v2398
        %v2489 = vadd.f32 %v2159, %v2401
        %v2490 = vadd.f32 %v2160, %v2406
        %v2491 = vadd.f32 %v2161, %v2409
        %v2492 = vadd.f32 %v2162, %v2414
        %v2493 = vadd.f32 %v2163, %v2417
        %v2494 = vadd.f32 %v2164, %v2422
        %v2495 = vadd.f32 %v2165, %v2425
        %v2496 = vadd.f32 %v2166, %v2430
        %v2497 = vadd.f32 %v2167, %v2433
        %v2498 = vadd.f32 %v2168, %v2438
        %v2499 = vadd.f32 %v2169, %v2441
        %v2500 = vadd.f32 %v2170, %v2446
        %v2501 = vadd.f32 %v2171, %v2449
        %v2502 = vadd.f32 %v2172, %v2454
        %v2503 = vadd.f32 %v2173, %v2457
        %v2504 = vadd.f32 %v2174, %v2462
        %v2505 = vadd.f32 %v2175, %v2465
        %v2506 = vadd.f32 %v2176, %v2470
        %v2507 = vadd.f32 %v2177, %v2473
        %s2508 = scalar_lea.vmem %s3, 8
        %v2509 = vld [vmem:[%s2508] sm:$0x3]
        %v2512 = vunpack.c.l.b16 %v1313
        %v2513 = vunpack.c.l.b16 %v2194
        %v2514 = vunpack.c.l.b16 %v1316
        %v2515 = vunpack.c.l.b16 %v2195
        %v2516 = vpack.c.b16 %v2513, %v2512
        %v2517 = vpack.c.b16 %v2515, %v2514
        %v2519 = vsel %vm1538, %v2516, 0
        %v2522 = vsel %vm1538, %v2517, 0
        %v2525 = vsel %vm1587, %v2509, 0
        %2527 = vmatprep.subr.bf16.mxu0 0
        %2528 = vmatpush1.bf16.msra.mxu0 %v2525
        %2529 = vmatprep.subr.bf16.mxu0 0
        %2530 = vmatpush1.bf16.msra.mxu0 0
        %2531 = vmatprep.subr.bf16.mxu0 0
        %2532 = vmatpush1.bf16.msra.mxu0 0
        %2533 = vmatprep.subr.bf16.mxu0 0
        %2534 = vmatpush1.bf16.msra.mxu0 0
        %2535 = vmatprep.subr.bf16.mxu0 0
        %2536 = vmatpush1.bf16.msra.mxu0 0
        %2537 = vmatprep.subr.bf16.mxu0 0
        %2538 = vmatpush1.bf16.msra.mxu0 0
        %2539 = vmatprep.subr.bf16.mxu0 0
        %2540 = vmatpush1.bf16.msra.mxu0 0
        %2541 = vmatprep.subr.bf16.mxu0 0
        %2542 = vmatpush1.bf16.msra.mxu0 0
        %2543 = vmatprep.subr.bf16.mxu0 0
        %2544 = vmatpush1.bf16.msra.mxu0 0
        %2545 = vmatprep.subr.bf16.mxu0 0
        %2546 = vmatpush1.bf16.msra.mxu0 0
        %2547 = vmatprep.subr.bf16.mxu0 0
        %2548 = vmatpush1.bf16.msra.mxu0 0
        %2549 = vmatprep.subr.bf16.mxu0 0
        %2550 = vmatpush1.bf16.msra.mxu0 0
        %2551 = vmatprep.subr.bf16.mxu0 0
        %2552 = vmatpush1.bf16.msra.mxu0 0
        %2553 = vmatprep.subr.bf16.mxu0 0
        %2554 = vmatpush1.bf16.msra.mxu0 0
        %2555 = vmatprep.subr.bf16.mxu0 0
        %2556 = vmatpush1.bf16.msra.mxu0 0
        %2557 = vmatprep.subr.bf16.mxu0 0
        %2558 = vmatpush1.bf16.msra.mxu0 0
        %2559 = vmatprep.mubr.bf16.mxu0 0
        %2560 = vmatmul.mubr.bf16.gmra.mrb[0].mxu0 %v2271
        %v2561 = vpop.f32.mrb[0].mxu0
        %v2562 = vadd.f32 0.0, %v2561
        %v2563 = vpop.f32.mrb[0].mxu0
        %v2564 = vpop.f32.mrb[0].mxu0
        %v2565 = vadd.f32 0.0, %v2564
        %v2566 = vpop.f32.mrb[0].mxu0
        %2567 = vmatprep.mubr.bf16.mxu0 0
        %2568 = vmatmul.mubr.bf16.gmra.mrb[0].mxu0 %v2274
        %v2569 = vpop.f32.mrb[0].mxu0
        %v2570 = vadd.f32 0.0, %v2569
        %v2571 = vpop.f32.mrb[0].mxu0
        %v2572 = vpop.f32.mrb[0].mxu0
        %v2573 = vadd.f32 0.0, %v2572
        %v2574 = vpop.f32.mrb[0].mxu0
        %2575 = vmatprep.mubr.bf16.mxu0 0
        %2576 = vmatmul.mubr.bf16.gmra.mrb[0].mxu0 %v2277
        %v2577 = vpop.f32.mrb[0].mxu0
        %v2578 = vadd.f32 0.0, %v2577
        %v2579 = vpop.f32.mrb[0].mxu0
        %v2580 = vpop.f32.mrb[0].mxu0
        %v2581 = vadd.f32 0.0, %v2580
        %v2582 = vpop.f32.mrb[0].mxu0
        %2583 = vmatprep.mubr.bf16.mxu0 0
        %2584 = vmatmul.mubr.bf16.gmra.mrb[0].mxu0 %v2280
        %v2585 = vpop.f32.mrb[0].mxu0
        %v2586 = vadd.f32 0.0, %v2585
        %v2587 = vpop.f32.mrb[0].mxu0
        %v2588 = vpop.f32.mrb[0].mxu0
        %v2589 = vadd.f32 0.0, %v2588
        %v2590 = vpop.f32.mrb[0].mxu0
        %2591 = vmatprep.mubr.bf16.mxu0 0
        %2592 = vmatmul.mubr.bf16.gmra.mrb[0].mxu0 %v2283
        %v2593 = vpop.f32.mrb[0].mxu0
        %v2594 = vadd.f32 0.0, %v2593
        %v2595 = vpop.f32.mrb[0].mxu0
        %v2596 = vpop.f32.mrb[0].mxu0
        %v2597 = vadd.f32 0.0, %v2596
        %v2598 = vpop.f32.mrb[0].mxu0
        %2599 = vmatprep.mubr.bf16.mxu0 0
        %2600 = vmatmul.mubr.bf16.gmra.mrb[0].mxu0 %v2286
        %v2601 = vpop.f32.mrb[0].mxu0
        %v2602 = vadd.f32 0.0, %v2601
        %v2603 = vpop.f32.mrb[0].mxu0
        %v2604 = vpop.f32.mrb[0].mxu0
        %v2605 = vadd.f32 0.0, %v2604
        %v2606 = vpop.f32.mrb[0].mxu0
        %2607 = vmatprep.mubr.bf16.mxu0 0
        %2608 = vmatmul.mubr.bf16.gmra.mrb[0].mxu0 %v2289
        %v2609 = vpop.f32.mrb[0].mxu0
        %v2610 = vadd.f32 0.0, %v2609
        %v2611 = vpop.f32.mrb[0].mxu0
        %v2612 = vpop.f32.mrb[0].mxu0
        %v2613 = vadd.f32 0.0, %v2612
        %v2614 = vpop.f32.mrb[0].mxu0
        %2615 = vmatprep.mubr.bf16.mxu0 0
        %2616 = vmatmul.mubr.bf16.gmra.mrb[0].mxu0 %v2292
        %v2617 = vpop.f32.mrb[0].mxu0
        %v2618 = vadd.f32 0.0, %v2617
        %v2619 = vpop.f32.mrb[0].mxu0
        %v2620 = vpop.f32.mrb[0].mxu0
        %v2621 = vadd.f32 0.0, %v2620
        %v2622 = vpop.f32.mrb[0].mxu0
        %2623 = vmatprep.mubr.bf16.mxu0 0
        %2624 = vmatmul.mubr.bf16.gmra.mrb[0].mxu0 %v2295
        %v2625 = vpop.f32.mrb[0].mxu0
        %v2626 = vadd.f32 0.0, %v2625
        %v2627 = vpop.f32.mrb[0].mxu0
        %v2628 = vpop.f32.mrb[0].mxu0
        %v2629 = vadd.f32 0.0, %v2628
        %v2630 = vpop.f32.mrb[0].mxu0
        %2631 = vmatprep.mubr.bf16.mxu0 0
        %2632 = vmatmul.mubr.bf16.gmra.mrb[0].mxu0 %v2298
        %v2633 = vpop.f32.mrb[0].mxu0
        %v2634 = vadd.f32 0.0, %v2633
        %v2635 = vpop.f32.mrb[0].mxu0
        %v2636 = vpop.f32.mrb[0].mxu0
        %v2637 = vadd.f32 0.0, %v2636
        %v2638 = vpop.f32.mrb[0].mxu0
        %2639 = vmatprep.mubr.bf16.mxu0 0
        %2640 = vmatmul.mubr.bf16.gmra.mrb[0].mxu0 %v2301
        %v2641 = vpop.f32.mrb[0].mxu0
        %v2642 = vadd.f32 0.0, %v2641
        %v2643 = vpop.f32.mrb[0].mxu0
        %v2644 = vpop.f32.mrb[0].mxu0
        %v2645 = vadd.f32 0.0, %v2644
        %v2646 = vpop.f32.mrb[0].mxu0
        %2647 = vmatprep.mubr.bf16.mxu0 0
        %2648 = vmatmul.mubr.bf16.gmra.mrb[0].mxu0 %v2304
        %v2649 = vpop.f32.mrb[0].mxu0
        %v2650 = vadd.f32 0.0, %v2649
        %v2651 = vpop.f32.mrb[0].mxu0
        %v2652 = vpop.f32.mrb[0].mxu0
        %v2653 = vadd.f32 0.0, %v2652
        %v2654 = vpop.f32.mrb[0].mxu0
        %2655 = vmatprep.mubr.bf16.mxu0 0
        %2656 = vmatmul.mubr.bf16.gmra.mrb[0].mxu0 %v2307
        %v2657 = vpop.f32.mrb[0].mxu0
        %v2658 = vadd.f32 0.0, %v2657
        %v2659 = vpop.f32.mrb[0].mxu0
        %v2660 = vpop.f32.mrb[0].mxu0
        %v2661 = vadd.f32 0.0, %v2660
        %v2662 = vpop.f32.mrb[0].mxu0
        %2663 = vmatprep.mubr.bf16.mxu0 0
        %2664 = vmatmul.mubr.bf16.gmra.mrb[0].mxu0 %v2310
        %v2665 = vpop.f32.mrb[0].mxu0
        %v2666 = vadd.f32 0.0, %v2665
        %v2667 = vpop.f32.mrb[0].mxu0
        %v2668 = vpop.f32.mrb[0].mxu0
        %v2669 = vadd.f32 0.0, %v2668
        %v2670 = vpop.f32.mrb[0].mxu0
        %2671 = vmatprep.mubr.bf16.mxu0 0
        %2672 = vmatmul.mubr.bf16.gmra.mrb[0].mxu0 %v2519
        %v2673 = vpop.f32.mrb[0].mxu0
        %v2674 = vadd.f32 0.0, %v2673
        %v2675 = vpop.f32.mrb[0].mxu0
        %v2676 = vpop.f32.mrb[0].mxu0
        %v2677 = vadd.f32 0.0, %v2676
        %v2678 = vpop.f32.mrb[0].mxu0
        %2679 = vmatprep.mubr.bf16.mxu0 0
        %2680 = vmatmul.mubr.bf16.gmra.mrb[0].mxu0 %v2522
        %v2681 = vpop.f32.mrb[0].mxu0
        %v2682 = vadd.f32 0.0, %v2681
        %v2683 = vpop.f32.mrb[0].mxu0
        %v2684 = vpop.f32.mrb[0].mxu0
        %v2685 = vadd.f32 0.0, %v2684
        %v2686 = vpop.f32.mrb[0].mxu0
        %2687 = vdwg.mxu0
        %v2688 = vadd.f32 %v2476, %v2562
        %v2689 = vadd.f32 %v2477, %v2565
        %v2690 = vadd.f32 %v2478, %v2570
        %v2691 = vadd.f32 %v2479, %v2573
        %v2692 = vadd.f32 %v2480, %v2578
        %v2693 = vadd.f32 %v2481, %v2581
        %v2694 = vadd.f32 %v2482, %v2586
        %v2695 = vadd.f32 %v2483, %v2589
        %v2696 = vadd.f32 %v2484, %v2594
        %v2697 = vadd.f32 %v2485, %v2597
        %v2698 = vadd.f32 %v2486, %v2602
        %v2699 = vadd.f32 %v2487, %v2605
        %v2700 = vadd.f32 %v2488, %v2610
        %v2701 = vadd.f32 %v2489, %v2613
        %v2702 = vadd.f32 %v2490, %v2618
        %v2703 = vadd.f32 %v2491, %v2621
        %v2704 = vadd.f32 %v2492, %v2626
        %v2705 = vadd.f32 %v2493, %v2629
        %v2706 = vadd.f32 %v2494, %v2634
        %v2707 = vadd.f32 %v2495, %v2637
        %v2708 = vadd.f32 %v2496, %v2642
        %v2709 = vadd.f32 %v2497, %v2645
        %v2710 = vadd.f32 %v2498, %v2650
        %v2711 = vadd.f32 %v2499, %v2653
        %v2712 = vadd.f32 %v2500, %v2658
        %v2713 = vadd.f32 %v2501, %v2661
        %v2714 = vadd.f32 %v2502, %v2666
        %v2715 = vadd.f32 %v2503, %v2669
        %v2716 = vadd.f32 %v2504, %v2674
        %v2717 = vadd.f32 %v2505, %v2677
        %v2718 = vadd.f32 %v2506, %v2682
        %v2719 = vadd.f32 %v2507, %v2685
        %s2720 = scalar_lea.vmem %s3, 14
        %v2721 = vld [vmem:[%s2720] sm:$0x3]
        %v2724 = vunpack.c.l.b16 %v1319
        %v2725 = vunpack.c.l.b16 %v2196
        %v2726 = vunpack.c.l.b16 %v1322
        %v2727 = vunpack.c.l.b16 %v2197
        %v2728 = vpack.c.b16 %v2725, %v2724
        %v2729 = vpack.c.b16 %v2727, %v2726
        %v2731 = vsel %vm1538, %v2728, 0
        %v2734 = vsel %vm1538, %v2729, 0
        %v2737 = vsel %vm1587, %v2721, 0
        %2739 = vmatprep.subr.bf16.mxu0 0
        %2740 = vmatpush1.bf16.msra.mxu0 %v2737
        %2741 = vmatprep.subr.bf16.mxu0 0
        %2742 = vmatpush1.bf16.msra.mxu0 0
        %2743 = vmatprep.subr.bf16.mxu0 0
        %2744 = vmatpush1.bf16.msra.mxu0 0
        %2745 = vmatprep.subr.bf16.mxu0 0
        %2746 = vmatpush1.bf16.msra.mxu0 0
        %2747 = vmatprep.subr.bf16.mxu0 0
        %2748 = vmatpush1.bf16.msra.mxu0 0
        %2749 = vmatprep.subr.bf16.mxu0 0
        %2750 = vmatpush1.bf16.msra.mxu0 0
        %2751 = vmatprep.subr.bf16.mxu0 0
        %2752 = vmatpush1.bf16.msra.mxu0 0
        %2753 = vmatprep.subr.bf16.mxu0 0
        %2754 = vmatpush1.bf16.msra.mxu0 0
        %2755 = vmatprep.subr.bf16.mxu0 0
        %2756 = vmatpush1.bf16.msra.mxu0 0
        %2757 = vmatprep.subr.bf16.mxu0 0
        %2758 = vmatpush1.bf16.msra.mxu0 0
        %2759 = vmatprep.subr.bf16.mxu0 0
        %2760 = vmatpush1.bf16.msra.mxu0 0
        %2761 = vmatprep.subr.bf16.mxu0 0
        %2762 = vmatpush1.bf16.msra.mxu0 0
        %2763 = vmatprep.subr.bf16.mxu0 0
        %2764 = vmatpush1.bf16.msra.mxu0 0
        %2765 = vmatprep.subr.bf16.mxu0 0
        %2766 = vmatpush1.bf16.msra.mxu0 0
        %2767 = vmatprep.subr.bf16.mxu0 0
        %2768 = vmatpush1.bf16.msra.mxu0 0
        %2769 = vmatprep.subr.bf16.mxu0 0
        %2770 = vmatpush1.bf16.msra.mxu0 0
        %2771 = vmatprep.mubr.bf16.mxu0 0
        %2772 = vmatmul.mubr.bf16.gmra.mrb[0].mxu0 %v2277
        %v2773 = vpop.f32.mrb[0].mxu0
        %v2774 = vadd.f32 0.0, %v2773
        %v2775 = vpop.f32.mrb[0].mxu0
        %v2776 = vpop.f32.mrb[0].mxu0
        %v2777 = vadd.f32 0.0, %v2776
        %v2778 = vpop.f32.mrb[0].mxu0
        %2779 = vmatprep.mubr.bf16.mxu0 0
        %2780 = vmatmul.mubr.bf16.gmra.mrb[0].mxu0 %v2280
        %v2781 = vpop.f32.mrb[0].mxu0
        %v2782 = vadd.f32 0.0, %v2781
        %v2783 = vpop.f32.mrb[0].mxu0
        %v2784 = vpop.f32.mrb[0].mxu0
        %v2785 = vadd.f32 0.0, %v2784
        %v2786 = vpop.f32.mrb[0].mxu0
        %2787 = vmatprep.mubr.bf16.mxu0 0
        %2788 = vmatmul.mubr.bf16.gmra.mrb[0].mxu0 %v2283
        %v2789 = vpop.f32.mrb[0].mxu0
        %v2790 = vadd.f32 0.0, %v2789
        %v2791 = vpop.f32.mrb[0].mxu0
        %v2792 = vpop.f32.mrb[0].mxu0
        %v2793 = vadd.f32 0.0, %v2792
        %v2794 = vpop.f32.mrb[0].mxu0
        %2795 = vmatprep.mubr.bf16.mxu0 0
        %2796 = vmatmul.mubr.bf16.gmra.mrb[0].mxu0 %v2286
        %v2797 = vpop.f32.mrb[0].mxu0
        %v2798 = vadd.f32 0.0, %v2797
        %v2799 = vpop.f32.mrb[0].mxu0
        %v2800 = vpop.f32.mrb[0].mxu0
        %v2801 = vadd.f32 0.0, %v2800
        %v2802 = vpop.f32.mrb[0].mxu0
        %2803 = vmatprep.mubr.bf16.mxu0 0
        %2804 = vmatmul.mubr.bf16.gmra.mrb[0].mxu0 %v2289
        %v2805 = vpop.f32.mrb[0].mxu0
        %v2806 = vadd.f32 0.0, %v2805
        %v2807 = vpop.f32.mrb[0].mxu0
        %v2808 = vpop.f32.mrb[0].mxu0
        %v2809 = vadd.f32 0.0, %v2808
        %v2810 = vpop.f32.mrb[0].mxu0
        %2811 = vmatprep.mubr.bf16.mxu0 0
        %2812 = vmatmul.mubr.bf16.gmra.mrb[0].mxu0 %v2292
        %v2813 = vpop.f32.mrb[0].mxu0
        %v2814 = vadd.f32 0.0, %v2813
        %v2815 = vpop.f32.mrb[0].mxu0
        %v2816 = vpop.f32.mrb[0].mxu0
        %v2817 = vadd.f32 0.0, %v2816
        %v2818 = vpop.f32.mrb[0].mxu0
        %2819 = vmatprep.mubr.bf16.mxu0 0
        %2820 = vmatmul.mubr.bf16.gmra.mrb[0].mxu0 %v2295
        %v2821 = vpop.f32.mrb[0].mxu0
        %v2822 = vadd.f32 0.0, %v2821
        %v2823 = vpop.f32.mrb[0].mxu0
        %v2824 = vpop.f32.mrb[0].mxu0
        %v2825 = vadd.f32 0.0, %v2824
        %v2826 = vpop.f32.mrb[0].mxu0
        %2827 = vmatprep.mubr.bf16.mxu0 0
        %2828 = vmatmul.mubr.bf16.gmra.mrb[0].mxu0 %v2298
        %v2829 = vpop.f32.mrb[0].mxu0
        %v2830 = vadd.f32 0.0, %v2829
        %v2831 = vpop.f32.mrb[0].mxu0
        %v2832 = vpop.f32.mrb[0].mxu0
        %v2833 = vadd.f32 0.0, %v2832
        %v2834 = vpop.f32.mrb[0].mxu0
        %2835 = vmatprep.mubr.bf16.mxu0 0
        %2836 = vmatmul.mubr.bf16.gmra.mrb[0].mxu0 %v2301
        %v2837 = vpop.f32.mrb[0].mxu0
        %v2838 = vadd.f32 0.0, %v2837
        %v2839 = vpop.f32.mrb[0].mxu0
        %v2840 = vpop.f32.mrb[0].mxu0
        %v2841 = vadd.f32 0.0, %v2840
        %v2842 = vpop.f32.mrb[0].mxu0
        %2843 = vmatprep.mubr.bf16.mxu0 0
        %2844 = vmatmul.mubr.bf16.gmra.mrb[0].mxu0 %v2304
        %v2845 = vpop.f32.mrb[0].mxu0
        %v2846 = vadd.f32 0.0, %v2845
        %v2847 = vpop.f32.mrb[0].mxu0
        %v2848 = vpop.f32.mrb[0].mxu0
        %v2849 = vadd.f32 0.0, %v2848
        %v2850 = vpop.f32.mrb[0].mxu0
        %2851 = vmatprep.mubr.bf16.mxu0 0
        %2852 = vmatmul.mubr.bf16.gmra.mrb[0].mxu0 %v2307
        %v2853 = vpop.f32.mrb[0].mxu0
        %v2854 = vadd.f32 0.0, %v2853
        %v2855 = vpop.f32.mrb[0].mxu0
        %v2856 = vpop.f32.mrb[0].mxu0
        %v2857 = vadd.f32 0.0, %v2856
        %v2858 = vpop.f32.mrb[0].mxu0
        %2859 = vmatprep.mubr.bf16.mxu0 0
        %2860 = vmatmul.mubr.bf16.gmra.mrb[0].mxu0 %v2310
        %v2861 = vpop.f32.mrb[0].mxu0
        %v2862 = vadd.f32 0.0, %v2861
        %v2863 = vpop.f32.mrb[0].mxu0
        %v2864 = vpop.f32.mrb[0].mxu0
        %v2865 = vadd.f32 0.0, %v2864
        %v2866 = vpop.f32.mrb[0].mxu0
        %2867 = vmatprep.mubr.bf16.mxu0 0
        %2868 = vmatmul.mubr.bf16.gmra.mrb[0].mxu0 %v2519
        %v2869 = vpop.f32.mrb[0].mxu0
        %v2870 = vadd.f32 0.0, %v2869
        %v2871 = vpop.f32.mrb[0].mxu0
        %v2872 = vpop.f32.mrb[0].mxu0
        %v2873 = vadd.f32 0.0, %v2872
        %v2874 = vpop.f32.mrb[0].mxu0
        %2875 = vmatprep.mubr.bf16.mxu0 0
        %2876 = vmatmul.mubr.bf16.gmra.mrb[0].mxu0 %v2522
        %v2877 = vpop.f32.mrb[0].mxu0
        %v2878 = vadd.f32 0.0, %v2877
        %v2879 = vpop.f32.mrb[0].mxu0
        %v2880 = vpop.f32.mrb[0].mxu0
        %v2881 = vadd.f32 0.0, %v2880
        %v2882 = vpop.f32.mrb[0].mxu0
        %2883 = vmatprep.mubr.bf16.mxu0 0
        %2884 = vmatmul.mubr.bf16.gmra.mrb[0].mxu0 %v2731
        %v2885 = vpop.f32.mrb[0].mxu0
        %v2886 = vadd.f32 0.0, %v2885
        %v2887 = vpop.f32.mrb[0].mxu0
        %v2888 = vpop.f32.mrb[0].mxu0
        %v2889 = vadd.f32 0.0, %v2888
        %v2890 = vpop.f32.mrb[0].mxu0
        %2891 = vmatprep.mubr.bf16.mxu0 0
        %2892 = vmatmul.mubr.bf16.gmra.mrb[0].mxu0 %v2734
        %v2893 = vpop.f32.mrb[0].mxu0
        %v2894 = vadd.f32 0.0, %v2893
        %v2895 = vpop.f32.mrb[0].mxu0
        %v2896 = vpop.f32.mrb[0].mxu0
        %v2897 = vadd.f32 0.0, %v2896
        %v2898 = vpop.f32.mrb[0].mxu0
        %2899 = vdwg.mxu0
        %v2900 = vadd.f32 %v2688, %v2774
        %v2901 = vadd.f32 %v2689, %v2777
        %v2902 = vadd.f32 %v2690, %v2782
        %v2903 = vadd.f32 %v2691, %v2785
        %v2904 = vadd.f32 %v2692, %v2790
        %v2905 = vadd.f32 %v2693, %v2793
        %v2906 = vadd.f32 %v2694, %v2798
        %v2907 = vadd.f32 %v2695, %v2801
        %v2908 = vadd.f32 %v2696, %v2806
        %v2909 = vadd.f32 %v2697, %v2809
        %v2910 = vadd.f32 %v2698, %v2814
        %v2911 = vadd.f32 %v2699, %v2817
        %v2912 = vadd.f32 %v2700, %v2822
        %v2913 = vadd.f32 %v2701, %v2825
        %v2914 = vadd.f32 %v2702, %v2830
        %v2915 = vadd.f32 %v2703, %v2833
        %v2916 = vadd.f32 %v2704, %v2838
        %v2917 = vadd.f32 %v2705, %v2841
        %v2918 = vadd.f32 %v2706, %v2846
        %v2919 = vadd.f32 %v2707, %v2849
        %v2920 = vadd.f32 %v2708, %v2854
        %v2921 = vadd.f32 %v2709, %v2857
        %v2922 = vadd.f32 %v2710, %v2862
        %v2923 = vadd.f32 %v2711, %v2865
        %v2924 = vadd.f32 %v2712, %v2870
        %v2925 = vadd.f32 %v2713, %v2873
        %v2926 = vadd.f32 %v2714, %v2878
        %v2927 = vadd.f32 %v2715, %v2881
        %v2928 = vadd.f32 %v2716, %v2886
        %v2929 = vadd.f32 %v2717, %v2889
        %v2930 = vadd.f32 %v2718, %v2894
        %v2931 = vadd.f32 %v2719, %v2897
        %v2932 = vld [vmem:[#allocation4 + $0x8] sm:$0xe]
        %v2933 = vld [vmem:[#allocation4 + $0xc] sm:$0xf]
        %v2934 = vld [vmem:[#allocation4 + $0x10] sm:$0x1]
        %v2935 = vld [vmem:[#allocation4 + $0x1c] sm:$0xe]
        %v2936 = vld [vmem:[#allocation4 + $0x20] sm:$0xf]
        %v2937 = vld [vmem:[#allocation4 + $0x24] sm:$0x1]
        %v2938 = vld [vmem:[#allocation4 + $0x30] sm:$0xe]
        %v2939 = vld [vmem:[#allocation4 + $0x34] sm:$0xf]
        %v2940 = vld [vmem:[#allocation4 + $0x38] sm:$0x1]
        %v2941 = vld [vmem:[#allocation4 + $0x44] sm:$0xe]
        %v2942 = vld [vmem:[#allocation4 + $0x48] sm:$0xf]
        %v2943 = vld [vmem:[#allocation4 + $0x4c] sm:$0x1]
        %v2944 = vld [vmem:[#allocation4 + $0x58] sm:$0xe]
        %v2945 = vld [vmem:[#allocation4 + $0x5c] sm:$0xf]
        %v2946 = vld [vmem:[#allocation4 + $0x60] sm:$0x1]
        %v2947 = vld [vmem:[#allocation4 + $0x6c] sm:$0xe]
        %v2948 = vld [vmem:[#allocation4 + $0x70] sm:$0xf]
        %v2949 = vld [vmem:[#allocation4 + $0x74] sm:$0x1]
        %v2950 = vld [vmem:[#allocation4 + $0x80] sm:$0xe]
        %v2951 = vld [vmem:[#allocation4 + $0x84] sm:$0xf]
        %v2952 = vld [vmem:[#allocation4 + $0x88] sm:$0x1]
        %v2953 = vld [vmem:[#allocation4 + $0x94] sm:$0xe]
        %v2954 = vld [vmem:[#allocation4 + $0x98] sm:$0xf]
        %v2955 = vld [vmem:[#allocation4 + $0x9c] sm:$0x1]
        %v2956 = vld [vmem:[#allocation4 + $0xa8] sm:$0xe]
        %v2957 = vld [vmem:[#allocation4 + $0xac] sm:$0xf]
        %v2958 = vld [vmem:[#allocation4 + $0xb0] sm:$0x1]
        %v2959 = vld [vmem:[#allocation4 + $0xbc] sm:$0xe]
        %v2960 = vld [vmem:[#allocation4 + $0xc0] sm:$0xf]
        %v2961 = vld [vmem:[#allocation4 + $0xc4] sm:$0x1]
        %v2962 = vld [vmem:[#allocation4 + $0xd0] sm:$0xe]
        %v2963 = vld [vmem:[#allocation4 + $0xd4] sm:$0xf]
        %v2964 = vld [vmem:[#allocation4 + $0xd8] sm:$0x1]
        %v2965 = vld [vmem:[#allocation4 + $0xe4] sm:$0xe]
        %v2966 = vld [vmem:[#allocation4 + $0xe8] sm:$0xf]
        %v2967 = vld [vmem:[#allocation4 + $0xec] sm:$0x1]
        %v2968 = vld [vmem:[#allocation4 + $0xf8] sm:$0xe]
        %v2969 = vld [vmem:[#allocation4 + $0xfc] sm:$0xf]
        %v2970 = vld [vmem:[#allocation4 + $0x100] sm:$0x1]
        %v2971 = vld [vmem:[#allocation4 + $0x10c] sm:$0xe]
        %v2972 = vld [vmem:[#allocation4 + $0x110] sm:$0xf]
        %v2973 = vld [vmem:[#allocation4 + $0x114] sm:$0x1]
        %v2974 = vld [vmem:[#allocation4 + $0x120] sm:$0xe]
        %v2975 = vld [vmem:[#allocation4 + $0x124] sm:$0xf]
        %v2976 = vld [vmem:[#allocation4 + $0x128] sm:$0x1]
        %v2977 = vld [vmem:[#allocation4 + $0x134] sm:$0xe]
        %v2978 = vld [vmem:[#allocation4 + $0x138] sm:$0xf]
        %v2979 = vld [vmem:[#allocation4 + $0x13c] sm:$0x1]
        %v2980 = vld [vmem:[#allocation4 + $0x148] sm:$0xe]
        %v2981 = vld [vmem:[#allocation4 + $0x14c] sm:$0xf]
        %v2982 = vld [vmem:[#allocation4 + $0x150] sm:$0x1]
        %v2983 = vld [vmem:[#allocation4 + $0x15c] sm:$0xe]
        %v2984 = vld [vmem:[#allocation4 + $0x160] sm:$0xf]
        %v2985 = vld [vmem:[#allocation4 + $0x164] sm:$0x1]
        %v2986 = vld [vmem:[#allocation4 + $0x170] sm:$0xe]
        %v2987 = vld [vmem:[#allocation4 + $0x174] sm:$0xf]
        %v2988 = vld [vmem:[#allocation4 + $0x178] sm:$0x1]
        %v2989 = vld [vmem:[#allocation4 + $0x184] sm:$0xe]
        %v2990 = vld [vmem:[#allocation4 + $0x188] sm:$0xf]
        %v2991 = vld [vmem:[#allocation4 + $0x18c] sm:$0x1]
        %s2992 = scalar_lea.vmem %s3, 4
        %v2993 = vld [vmem:[%s2992] sm:$0x3]
        %vm3042 = vcmask 1042432
        %vm3043 = vcmask 1046532
        %vm3044 = vmor %vm3042, %vm3043
        %v3045 = vrot.slane %v2932, 5
        %v3046 = vrot.slane %v3045, 4
        %v3047 = vrot.slane %v2933, 5
        %v3048 = vsel %vm3044, %v3046, %v3047
        %v3049 = vrot.slane %v3047, 4
        %v3050 = vrot.slane %v2934, 5
        %v3051 = vsel %vm3044, %v3049, %v3050
        %v3052 = vrot.slane %v2935, 5
        %v3053 = vrot.slane %v3052, 4
        %v3054 = vrot.slane %v2936, 5
        %v3055 = vsel %vm3044, %v3053, %v3054
        %v3056 = vrot.slane %v3054, 4
        %v3057 = vrot.slane %v2937, 5
        %v3058 = vsel %vm3044, %v3056, %v3057
        %v3059 = vrot.slane %v2938, 5
        %v3060 = vrot.slane %v3059, 4
        %v3061 = vrot.slane %v2939, 5
        %v3062 = vsel %vm3044, %v3060, %v3061
        %v3063 = vrot.slane %v3061, 4
        %v3064 = vrot.slane %v2940, 5
        %v3065 = vsel %vm3044, %v3063, %v3064
        %v3066 = vrot.slane %v2941, 5
        %v3067 = vrot.slane %v3066, 4
        %v3068 = vrot.slane %v2942, 5
        %v3069 = vsel %vm3044, %v3067, %v3068
        %v3070 = vrot.slane %v3068, 4
        %v3071 = vrot.slane %v2943, 5
        %v3072 = vsel %vm3044, %v3070, %v3071
        %v3073 = vrot.slane %v2944, 5
        %v3074 = vrot.slane %v3073, 4
        %v3075 = vrot.slane %v2945, 5
        %v3076 = vsel %vm3044, %v3074, %v3075
        %v3077 = vrot.slane %v3075, 4
        %v3078 = vrot.slane %v2946, 5
        %v3079 = vsel %vm3044, %v3077, %v3078
        %v3080 = vrot.slane %v2947, 5
        %v3081 = vrot.slane %v3080, 4
        %v3082 = vrot.slane %v2948, 5
        %v3083 = vsel %vm3044, %v3081, %v3082
        %v3084 = vrot.slane %v3082, 4
        %v3085 = vrot.slane %v2949, 5
        %v3086 = vsel %vm3044, %v3084, %v3085
        %v3087 = vrot.slane %v2950, 5
        %v3088 = vrot.slane %v3087, 4
        %v3089 = vrot.slane %v2951, 5
        %v3090 = vsel %vm3044, %v3088, %v3089
        %v3091 = vrot.slane %v3089, 4
        %v3092 = vrot.slane %v2952, 5
        %v3093 = vsel %vm3044, %v3091, %v3092
        %v3094 = vrot.slane %v2953, 5
        %v3095 = vrot.slane %v3094, 4
        %v3096 = vrot.slane %v2954, 5
        %v3097 = vsel %vm3044, %v3095, %v3096
        %v3098 = vrot.slane %v3096, 4
        %v3099 = vrot.slane %v2955, 5
        %v3100 = vsel %vm3044, %v3098, %v3099
        %v3101 = vrot.slane %v2956, 5
        %v3102 = vrot.slane %v3101, 4
        %v3103 = vrot.slane %v2957, 5
        %v3104 = vsel %vm3044, %v3102, %v3103
        %v3105 = vrot.slane %v3103, 4
        %v3106 = vrot.slane %v2958, 5
        %v3107 = vsel %vm3044, %v3105, %v3106
        %v3108 = vrot.slane %v2959, 5
        %v3109 = vrot.slane %v3108, 4
        %v3110 = vrot.slane %v2960, 5
        %v3111 = vsel %vm3044, %v3109, %v3110
        %v3112 = vrot.slane %v3110, 4
        %v3113 = vrot.slane %v2961, 5
        %v3114 = vsel %vm3044, %v3112, %v3113
        %v3115 = vrot.slane %v2962, 5
        %v3116 = vrot.slane %v3115, 4
        %v3117 = vrot.slane %v2963, 5
        %v3118 = vsel %vm3044, %v3116, %v3117
        %v3119 = vrot.slane %v3117, 4
        %v3120 = vrot.slane %v2964, 5
        %v3121 = vsel %vm3044, %v3119, %v3120
        %v3122 = vrot.slane %v2965, 5
        %v3123 = vrot.slane %v3122, 4
        %v3124 = vrot.slane %v2966, 5
        %v3125 = vsel %vm3044, %v3123, %v3124
        %v3126 = vrot.slane %v3124, 4
        %v3127 = vrot.slane %v2967, 5
        %v3128 = vsel %vm3044, %v3126, %v3127
        %v3129 = vrot.slane %v2968, 5
        %v3130 = vrot.slane %v3129, 4
        %v3131 = vrot.slane %v2969, 5
        %v3132 = vsel %vm3044, %v3130, %v3131
        %v3133 = vrot.slane %v3131, 4
        %v3134 = vrot.slane %v2970, 5
        %v3135 = vsel %vm3044, %v3133, %v3134
        %v3136 = vrot.slane %v2971, 5
        %v3137 = vrot.slane %v3136, 4
        %v3138 = vrot.slane %v2972, 5
        %v3139 = vsel %vm3044, %v3137, %v3138
        %v3140 = vrot.slane %v3138, 4
        %v3141 = vrot.slane %v2973, 5
        %v3142 = vsel %vm3044, %v3140, %v3141
        %v3143 = vrot.slane %v2974, 5
        %v3144 = vrot.slane %v3143, 4
        %v3145 = vrot.slane %v2975, 5
        %v3146 = vsel %vm3044, %v3144, %v3145
        %v3147 = vrot.slane %v3145, 4
        %v3148 = vrot.slane %v2976, 5
        %v3149 = vsel %vm3044, %v3147, %v3148
        %v3150 = vrot.slane %v2977, 5
        %v3151 = vrot.slane %v3150, 4
        %v3152 = vrot.slane %v2978, 5
        %v3153 = vsel %vm3044, %v3151, %v3152
        %v3154 = vrot.slane %v3152, 4
        %v3155 = vrot.slane %v2979, 5
        %v3156 = vsel %vm3044, %v3154, %v3155
        %v3157 = vunpack.c.l.b16 %v3048
        %v3158 = vunpack.c.l.b16 %v3051
        %v3159 = vunpack.c.l.b16 %v3055
        %v3160 = vunpack.c.l.b16 %v3058
        %v3161 = vunpack.c.l.b16 %v3062
        %v3162 = vunpack.c.l.b16 %v3065
        %v3163 = vunpack.c.l.b16 %v3069
        %v3164 = vunpack.c.l.b16 %v3072
        %v3165 = vunpack.c.l.b16 %v3076
        %v3166 = vunpack.c.l.b16 %v3079
        %v3167 = vunpack.c.l.b16 %v3083
        %v3168 = vunpack.c.l.b16 %v3086
        %v3169 = vunpack.c.l.b16 %v3090
        %v3170 = vunpack.c.l.b16 %v3093
        %v3171 = vunpack.c.l.b16 %v3097
        %v3172 = vunpack.c.l.b16 %v3100
        %v3173 = vunpack.c.l.b16 %v3104
        %v3174 = vunpack.c.l.b16 %v3107
        %v3175 = vunpack.c.l.b16 %v3111
        %v3176 = vunpack.c.l.b16 %v3114
        %v3177 = vunpack.c.l.b16 %v3118
        %v3178 = vunpack.c.l.b16 %v3121
        %v3179 = vunpack.c.l.b16 %v3125
        %v3180 = vunpack.c.l.b16 %v3128
        %v3181 = vunpack.c.l.b16 %v3132
        %v3182 = vunpack.c.l.b16 %v3135
        %v3183 = vunpack.c.l.b16 %v3139
        %v3184 = vunpack.c.l.b16 %v3142
        %v3185 = vunpack.c.l.b16 %v3146
        %v3186 = vunpack.c.l.b16 %v3149
        %v3187 = vunpack.c.l.b16 %v3153
        %v3188 = vunpack.c.l.b16 %v3156
        %v3189 = vpack.c.b16 %v3158, %v3157
        %v3190 = vpack.c.b16 %v3160, %v3159
        %v3191 = vpack.c.b16 %v3162, %v3161
        %v3192 = vpack.c.b16 %v3164, %v3163
        %v3193 = vpack.c.b16 %v3166, %v3165
        %v3194 = vpack.c.b16 %v3168, %v3167
        %v3195 = vpack.c.b16 %v3170, %v3169
        %v3196 = vpack.c.b16 %v3172, %v3171
        %v3197 = vpack.c.b16 %v3174, %v3173
        %v3198 = vpack.c.b16 %v3176, %v3175
        %v3199 = vpack.c.b16 %v3178, %v3177
        %v3200 = vpack.c.b16 %v3180, %v3179
        %v3201 = vpack.c.b16 %v3182, %v3181
        %v3202 = vpack.c.b16 %v3184, %v3183
        %v3203 = vpack.c.b16 %v3186, %v3185
        %v3204 = vpack.c.b16 %v3188, %v3187
        %v3206 = vsel %vm1538, %v3189, 0
        %v3209 = vsel %vm1538, %v3190, 0
        %v3212 = vsel %vm1538, %v3191, 0
        %v3215 = vsel %vm1538, %v3192, 0
        %v3218 = vsel %vm1538, %v3193, 0
        %v3221 = vsel %vm1538, %v3194, 0
        %v3224 = vsel %vm1538, %v3195, 0
        %v3227 = vsel %vm1538, %v3196, 0
        %v3230 = vsel %vm1538, %v3197, 0
        %v3233 = vsel %vm1538, %v3198, 0
        %v3236 = vsel %vm1538, %v3199, 0
        %v3239 = vsel %vm1538, %v3200, 0
        %v3242 = vsel %vm1538, %v3201, 0
        %v3245 = vsel %vm1538, %v3202, 0
        %v3248 = vsel %vm1538, %v3203, 0
        %v3251 = vsel %vm1538, %v3204, 0
        %v3254 = vsel %vm1587, %v2993, 0
        %3256 = vmatprep.subr.bf16.mxu0 0
        %3257 = vmatpush1.bf16.msra.mxu0 %v3254
        %3258 = vmatprep.subr.bf16.mxu0 0
        %3259 = vmatpush1.bf16.msra.mxu0 0
        %3260 = vmatprep.subr.bf16.mxu0 0
        %3261 = vmatpush1.bf16.msra.mxu0 0
        %3262 = vmatprep.subr.bf16.mxu0 0
        %3263 = vmatpush1.bf16.msra.mxu0 0
        %3264 = vmatprep.subr.bf16.mxu0 0
        %3265 = vmatpush1.bf16.msra.mxu0 0
        %3266 = vmatprep.subr.bf16.mxu0 0
        %3267 = vmatpush1.bf16.msra.mxu0 0
        %3268 = vmatprep.subr.bf16.mxu0 0
        %3269 = vmatpush1.bf16.msra.mxu0 0
        %3270 = vmatprep.subr.bf16.mxu0 0
        %3271 = vmatpush1.bf16.msra.mxu0 0
        %3272 = vmatprep.subr.bf16.mxu0 0
        %3273 = vmatpush1.bf16.msra.mxu0 0
        %3274 = vmatprep.subr.bf16.mxu0 0
        %3275 = vmatpush1.bf16.msra.mxu0 0
        %3276 = vmatprep.subr.bf16.mxu0 0
        %3277 = vmatpush1.bf16.msra.mxu0 0
        %3278 = vmatprep.subr.bf16.mxu0 0
        %3279 = vmatpush1.bf16.msra.mxu0 0
        %3280 = vmatprep.subr.bf16.mxu0 0
        %3281 = vmatpush1.bf16.msra.mxu0 0
        %3282 = vmatprep.subr.bf16.mxu0 0
        %3283 = vmatpush1.bf16.msra.mxu0 0
        %3284 = vmatprep.subr.bf16.mxu0 0
        %3285 = vmatpush1.bf16.msra.mxu0 0
        %3286 = vmatprep.subr.bf16.mxu0 0
        %3287 = vmatpush1.bf16.msra.mxu0 0
        %3288 = vmatprep.mubr.bf16.mxu0 0
        %3289 = vmatmul.mubr.bf16.gmra.mrb[0].mxu0 %v3206
        %v3290 = vpop.f32.mrb[0].mxu0
        %v3291 = vadd.f32 0.0, %v3290
        %v3292 = vpop.f32.mrb[0].mxu0
        %v3293 = vpop.f32.mrb[0].mxu0
        %v3294 = vadd.f32 0.0, %v3293
        %v3295 = vpop.f32.mrb[0].mxu0
        %3296 = vmatprep.mubr.bf16.mxu0 0
        %3297 = vmatmul.mubr.bf16.gmra.mrb[0].mxu0 %v3209
        %v3298 = vpop.f32.mrb[0].mxu0
        %v3299 = vadd.f32 0.0, %v3298
        %v3300 = vpop.f32.mrb[0].mxu0
        %v3301 = vpop.f32.mrb[0].mxu0
        %v3302 = vadd.f32 0.0, %v3301
        %v3303 = vpop.f32.mrb[0].mxu0
        %3304 = vmatprep.mubr.bf16.mxu0 0
        %3305 = vmatmul.mubr.bf16.gmra.mrb[0].mxu0 %v3212
        %v3306 = vpop.f32.mrb[0].mxu0
        %v3307 = vadd.f32 0.0, %v3306
        %v3308 = vpop.f32.mrb[0].mxu0
        %v3309 = vpop.f32.mrb[0].mxu0
        %v3310 = vadd.f32 0.0, %v3309
        %v3311 = vpop.f32.mrb[0].mxu0
        %3312 = vmatprep.mubr.bf16.mxu0 0
        %3313 = vmatmul.mubr.bf16.gmra.mrb[0].mxu0 %v3215
        %v3314 = vpop.f32.mrb[0].mxu0
        %v3315 = vadd.f32 0.0, %v3314
        %v3316 = vpop.f32.mrb[0].mxu0
        %v3317 = vpop.f32.mrb[0].mxu0
        %v3318 = vadd.f32 0.0, %v3317
        %v3319 = vpop.f32.mrb[0].mxu0
        %3320 = vmatprep.mubr.bf16.mxu0 0
        %3321 = vmatmul.mubr.bf16.gmra.mrb[0].mxu0 %v3218
        %v3322 = vpop.f32.mrb[0].mxu0
        %v3323 = vadd.f32 0.0, %v3322
        %v3324 = vpop.f32.mrb[0].mxu0
        %v3325 = vpop.f32.mrb[0].mxu0
        %v3326 = vadd.f32 0.0, %v3325
        %v3327 = vpop.f32.mrb[0].mxu0
        %3328 = vmatprep.mubr.bf16.mxu0 0
        %3329 = vmatmul.mubr.bf16.gmra.mrb[0].mxu0 %v3221
        %v3330 = vpop.f32.mrb[0].mxu0
        %v3331 = vadd.f32 0.0, %v3330
        %v3332 = vpop.f32.mrb[0].mxu0
        %v3333 = vpop.f32.mrb[0].mxu0
        %v3334 = vadd.f32 0.0, %v3333
        %v3335 = vpop.f32.mrb[0].mxu0
        %3336 = vmatprep.mubr.bf16.mxu0 0
        %3337 = vmatmul.mubr.bf16.gmra.mrb[0].mxu0 %v3224
        %v3338 = vpop.f32.mrb[0].mxu0
        %v3339 = vadd.f32 0.0, %v3338
        %v3340 = vpop.f32.mrb[0].mxu0
        %v3341 = vpop.f32.mrb[0].mxu0
        %v3342 = vadd.f32 0.0, %v3341
        %v3343 = vpop.f32.mrb[0].mxu0
        %3344 = vmatprep.mubr.bf16.mxu0 0
        %3345 = vmatmul.mubr.bf16.gmra.mrb[0].mxu0 %v3227
        %v3346 = vpop.f32.mrb[0].mxu0
        %v3347 = vadd.f32 0.0, %v3346
        %v3348 = vpop.f32.mrb[0].mxu0
        %v3349 = vpop.f32.mrb[0].mxu0
        %v3350 = vadd.f32 0.0, %v3349
        %v3351 = vpop.f32.mrb[0].mxu0
        %3352 = vmatprep.mubr.bf16.mxu0 0
        %3353 = vmatmul.mubr.bf16.gmra.mrb[0].mxu0 %v3230
        %v3354 = vpop.f32.mrb[0].mxu0
        %v3355 = vadd.f32 0.0, %v3354
        %v3356 = vpop.f32.mrb[0].mxu0
        %v3357 = vpop.f32.mrb[0].mxu0
        %v3358 = vadd.f32 0.0, %v3357
        %v3359 = vpop.f32.mrb[0].mxu0
        %3360 = vmatprep.mubr.bf16.mxu0 0
        %3361 = vmatmul.mubr.bf16.gmra.mrb[0].mxu0 %v3233
        %v3362 = vpop.f32.mrb[0].mxu0
        %v3363 = vadd.f32 0.0, %v3362
        %v3364 = vpop.f32.mrb[0].mxu0
        %v3365 = vpop.f32.mrb[0].mxu0
        %v3366 = vadd.f32 0.0, %v3365
        %v3367 = vpop.f32.mrb[0].mxu0
        %3368 = vmatprep.mubr.bf16.mxu0 0
        %3369 = vmatmul.mubr.bf16.gmra.mrb[0].mxu0 %v3236
        %v3370 = vpop.f32.mrb[0].mxu0
        %v3371 = vadd.f32 0.0, %v3370
        %v3372 = vpop.f32.mrb[0].mxu0
        %v3373 = vpop.f32.mrb[0].mxu0
        %v3374 = vadd.f32 0.0, %v3373
        %v3375 = vpop.f32.mrb[0].mxu0
        %3376 = vmatprep.mubr.bf16.mxu0 0
        %3377 = vmatmul.mubr.bf16.gmra.mrb[0].mxu0 %v3239
        %v3378 = vpop.f32.mrb[0].mxu0
        %v3379 = vadd.f32 0.0, %v3378
        %v3380 = vpop.f32.mrb[0].mxu0
        %v3381 = vpop.f32.mrb[0].mxu0
        %v3382 = vadd.f32 0.0, %v3381
        %v3383 = vpop.f32.mrb[0].mxu0
        %3384 = vmatprep.mubr.bf16.mxu0 0
        %3385 = vmatmul.mubr.bf16.gmra.mrb[0].mxu0 %v3242
        %v3386 = vpop.f32.mrb[0].mxu0
        %v3387 = vadd.f32 0.0, %v3386
        %v3388 = vpop.f32.mrb[0].mxu0
        %v3389 = vpop.f32.mrb[0].mxu0
        %v3390 = vadd.f32 0.0, %v3389
        %v3391 = vpop.f32.mrb[0].mxu0
        %3392 = vmatprep.mubr.bf16.mxu0 0
        %3393 = vmatmul.mubr.bf16.gmra.mrb[0].mxu0 %v3245
        %v3394 = vpop.f32.mrb[0].mxu0
        %v3395 = vadd.f32 0.0, %v3394
        %v3396 = vpop.f32.mrb[0].mxu0
        %v3397 = vpop.f32.mrb[0].mxu0
        %v3398 = vadd.f32 0.0, %v3397
        %v3399 = vpop.f32.mrb[0].mxu0
        %3400 = vmatprep.mubr.bf16.mxu0 0
        %3401 = vmatmul.mubr.bf16.gmra.mrb[0].mxu0 %v3248
        %v3402 = vpop.f32.mrb[0].mxu0
        %v3403 = vadd.f32 0.0, %v3402
        %v3404 = vpop.f32.mrb[0].mxu0
        %v3405 = vpop.f32.mrb[0].mxu0
        %v3406 = vadd.f32 0.0, %v3405
        %v3407 = vpop.f32.mrb[0].mxu0
        %3408 = vmatprep.mubr.bf16.mxu0 0
        %3409 = vmatmul.mubr.bf16.gmra.mrb[0].mxu0 %v3251
        %v3410 = vpop.f32.mrb[0].mxu0
        %v3411 = vadd.f32 0.0, %v3410
        %v3412 = vpop.f32.mrb[0].mxu0
        %v3413 = vpop.f32.mrb[0].mxu0
        %v3414 = vadd.f32 0.0, %v3413
        %v3415 = vpop.f32.mrb[0].mxu0
        %3416 = vdwg.mxu0
        %v3417 = vadd.f32 %v2900, %v3291
        %v3418 = vadd.f32 %v2901, %v3294
        %v3419 = vadd.f32 %v2902, %v3299
        %v3420 = vadd.f32 %v2903, %v3302
        %v3421 = vadd.f32 %v2904, %v3307
        %v3422 = vadd.f32 %v2905, %v3310
        %v3423 = vadd.f32 %v2906, %v3315
        %v3424 = vadd.f32 %v2907, %v3318
        %v3425 = vadd.f32 %v2908, %v3323
        %v3426 = vadd.f32 %v2909, %v3326
        %v3427 = vadd.f32 %v2910, %v3331
        %v3428 = vadd.f32 %v2911, %v3334
        %v3429 = vadd.f32 %v2912, %v3339
        %v3430 = vadd.f32 %v2913, %v3342
        %v3431 = vadd.f32 %v2914, %v3347
        %v3432 = vadd.f32 %v2915, %v3350
        %v3433 = vadd.f32 %v2916, %v3355
        %v3434 = vadd.f32 %v2917, %v3358
        %v3435 = vadd.f32 %v2918, %v3363
        %v3436 = vadd.f32 %v2919, %v3366
        %v3437 = vadd.f32 %v2920, %v3371
        %v3438 = vadd.f32 %v2921, %v3374
        %v3439 = vadd.f32 %v2922, %v3379
        %v3440 = vadd.f32 %v2923, %v3382
        %v3441 = vadd.f32 %v2924, %v3387
        %v3442 = vadd.f32 %v2925, %v3390
        %v3443 = vadd.f32 %v2926, %v3395
        %v3444 = vadd.f32 %v2927, %v3398
        %v3445 = vadd.f32 %v2928, %v3403
        %v3446 = vadd.f32 %v2929, %v3406
        %v3447 = vadd.f32 %v2930, %v3411
        %v3448 = vadd.f32 %v2931, %v3414
        %s3449 = scalar_lea.vmem %s3, 10
        %v3450 = vld [vmem:[%s3449] sm:$0x3]
        %v3457 = vrot.slane %v2980, 5
        %v3458 = vrot.slane %v3457, 4
        %v3459 = vrot.slane %v2981, 5
        %v3460 = vsel %vm3044, %v3458, %v3459
        %v3461 = vrot.slane %v3459, 4
        %v3462 = vrot.slane %v2982, 5
        %v3463 = vsel %vm3044, %v3461, %v3462
        %v3464 = vrot.slane %v2983, 5
        %v3465 = vrot.slane %v3464, 4
        %v3466 = vrot.slane %v2984, 5
        %v3467 = vsel %vm3044, %v3465, %v3466
        %v3468 = vrot.slane %v3466, 4
        %v3469 = vrot.slane %v2985, 5
        %v3470 = vsel %vm3044, %v3468, %v3469
        %v3471 = vunpack.c.l.b16 %v3460
        %v3472 = vunpack.c.l.b16 %v3463
        %v3473 = vunpack.c.l.b16 %v3467
        %v3474 = vunpack.c.l.b16 %v3470
        %v3475 = vpack.c.b16 %v3472, %v3471
        %v3476 = vpack.c.b16 %v3474, %v3473
        %v3478 = vsel %vm1538, %v3475, 0
        %v3481 = vsel %vm1538, %v3476, 0
        %v3484 = vsel %vm1587, %v3450, 0
        %3486 = vmatprep.subr.bf16.mxu0 0
        %3487 = vmatpush1.bf16.msra.mxu0 %v3484
        %3488 = vmatprep.subr.bf16.mxu0 0
        %3489 = vmatpush1.bf16.msra.mxu0 0
        %3490 = vmatprep.subr.bf16.mxu0 0
        %3491 = vmatpush1.bf16.msra.mxu0 0
        %3492 = vmatprep.subr.bf16.mxu0 0
        %3493 = vmatpush1.bf16.msra.mxu0 0
        %3494 = vmatprep.subr.bf16.mxu0 0
        %3495 = vmatpush1.bf16.msra.mxu0 0
        %3496 = vmatprep.subr.bf16.mxu0 0
        %3497 = vmatpush1.bf16.msra.mxu0 0
        %3498 = vmatprep.subr.bf16.mxu0 0
        %3499 = vmatpush1.bf16.msra.mxu0 0
        %3500 = vmatprep.subr.bf16.mxu0 0
        %3501 = vmatpush1.bf16.msra.mxu0 0
        %3502 = vmatprep.subr.bf16.mxu0 0
        %3503 = vmatpush1.bf16.msra.mxu0 0
        %3504 = vmatprep.subr.bf16.mxu0 0
        %3505 = vmatpush1.bf16.msra.mxu0 0
        %3506 = vmatprep.subr.bf16.mxu0 0
        %3507 = vmatpush1.bf16.msra.mxu0 0
        %3508 = vmatprep.subr.bf16.mxu0 0
        %3509 = vmatpush1.bf16.msra.mxu0 0
        %3510 = vmatprep.subr.bf16.mxu0 0
        %3511 = vmatpush1.bf16.msra.mxu0 0
        %3512 = vmatprep.subr.bf16.mxu0 0
        %3513 = vmatpush1.bf16.msra.mxu0 0
        %3514 = vmatprep.subr.bf16.mxu0 0
        %3515 = vmatpush1.bf16.msra.mxu0 0
        %3516 = vmatprep.subr.bf16.mxu0 0
        %3517 = vmatpush1.bf16.msra.mxu0 0
        %3518 = vmatprep.mubr.bf16.mxu0 0
        %3519 = vmatmul.mubr.bf16.gmra.mrb[0].mxu0 %v3212
        %v3520 = vpop.f32.mrb[0].mxu0
        %v3521 = vadd.f32 0.0, %v3520
        %v3522 = vpop.f32.mrb[0].mxu0
        %v3523 = vpop.f32.mrb[0].mxu0
        %v3524 = vadd.f32 0.0, %v3523
        %v3525 = vpop.f32.mrb[0].mxu0
        %3526 = vmatprep.mubr.bf16.mxu0 0
        %3527 = vmatmul.mubr.bf16.gmra.mrb[0].mxu0 %v3215
        %v3528 = vpop.f32.mrb[0].mxu0
        %v3529 = vadd.f32 0.0, %v3528
        %v3530 = vpop.f32.mrb[0].mxu0
        %v3531 = vpop.f32.mrb[0].mxu0
        %v3532 = vadd.f32 0.0, %v3531
        %v3533 = vpop.f32.mrb[0].mxu0
        %3534 = vmatprep.mubr.bf16.mxu0 0
        %3535 = vmatmul.mubr.bf16.gmra.mrb[0].mxu0 %v3218
        %v3536 = vpop.f32.mrb[0].mxu0
        %v3537 = vadd.f32 0.0, %v3536
        %v3538 = vpop.f32.mrb[0].mxu0
        %v3539 = vpop.f32.mrb[0].mxu0
        %v3540 = vadd.f32 0.0, %v3539
        %v3541 = vpop.f32.mrb[0].mxu0
        %3542 = vmatprep.mubr.bf16.mxu0 0
        %3543 = vmatmul.mubr.bf16.gmra.mrb[0].mxu0 %v3221
        %v3544 = vpop.f32.mrb[0].mxu0
        %v3545 = vadd.f32 0.0, %v3544
        %v3546 = vpop.f32.mrb[0].mxu0
        %v3547 = vpop.f32.mrb[0].mxu0
        %v3548 = vadd.f32 0.0, %v3547
        %v3549 = vpop.f32.mrb[0].mxu0
        %3550 = vmatprep.mubr.bf16.mxu0 0
        %3551 = vmatmul.mubr.bf16.gmra.mrb[0].mxu0 %v3224
        %v3552 = vpop.f32.mrb[0].mxu0
        %v3553 = vadd.f32 0.0, %v3552
        %v3554 = vpop.f32.mrb[0].mxu0
        %v3555 = vpop.f32.mrb[0].mxu0
        %v3556 = vadd.f32 0.0, %v3555
        %v3557 = vpop.f32.mrb[0].mxu0
        %3558 = vmatprep.mubr.bf16.mxu0 0
        %3559 = vmatmul.mubr.bf16.gmra.mrb[0].mxu0 %v3227
        %v3560 = vpop.f32.mrb[0].mxu0
        %v3561 = vadd.f32 0.0, %v3560
        %v3562 = vpop.f32.mrb[0].mxu0
        %v3563 = vpop.f32.mrb[0].mxu0
        %v3564 = vadd.f32 0.0, %v3563
        %v3565 = vpop.f32.mrb[0].mxu0
        %3566 = vmatprep.mubr.bf16.mxu0 0
        %3567 = vmatmul.mubr.bf16.gmra.mrb[0].mxu0 %v3230
        %v3568 = vpop.f32.mrb[0].mxu0
        %v3569 = vadd.f32 0.0, %v3568
        %v3570 = vpop.f32.mrb[0].mxu0
        %v3571 = vpop.f32.mrb[0].mxu0
        %v3572 = vadd.f32 0.0, %v3571
        %v3573 = vpop.f32.mrb[0].mxu0
        %3574 = vmatprep.mubr.bf16.mxu0 0
        %3575 = vmatmul.mubr.bf16.gmra.mrb[0].mxu0 %v3233
        %v3576 = vpop.f32.mrb[0].mxu0
        %v3577 = vadd.f32 0.0, %v3576
        %v3578 = vpop.f32.mrb[0].mxu0
        %v3579 = vpop.f32.mrb[0].mxu0
        %v3580 = vadd.f32 0.0, %v3579
        %v3581 = vpop.f32.mrb[0].mxu0
        %3582 = vmatprep.mubr.bf16.mxu0 0
        %3583 = vmatmul.mubr.bf16.gmra.mrb[0].mxu0 %v3236
        %v3584 = vpop.f32.mrb[0].mxu0
        %v3585 = vadd.f32 0.0, %v3584
        %v3586 = vpop.f32.mrb[0].mxu0
        %v3587 = vpop.f32.mrb[0].mxu0
        %v3588 = vadd.f32 0.0, %v3587
        %v3589 = vpop.f32.mrb[0].mxu0
        %3590 = vmatprep.mubr.bf16.mxu0 0
        %3591 = vmatmul.mubr.bf16.gmra.mrb[0].mxu0 %v3239
        %v3592 = vpop.f32.mrb[0].mxu0
        %v3593 = vadd.f32 0.0, %v3592
        %v3594 = vpop.f32.mrb[0].mxu0
        %v3595 = vpop.f32.mrb[0].mxu0
        %v3596 = vadd.f32 0.0, %v3595
        %v3597 = vpop.f32.mrb[0].mxu0
        %3598 = vmatprep.mubr.bf16.mxu0 0
        %3599 = vmatmul.mubr.bf16.gmra.mrb[0].mxu0 %v3242
        %v3600 = vpop.f32.mrb[0].mxu0
        %v3601 = vadd.f32 0.0, %v3600
        %v3602 = vpop.f32.mrb[0].mxu0
        %v3603 = vpop.f32.mrb[0].mxu0
        %v3604 = vadd.f32 0.0, %v3603
        %v3605 = vpop.f32.mrb[0].mxu0
        %3606 = vmatprep.mubr.bf16.mxu0 0
        %3607 = vmatmul.mubr.bf16.gmra.mrb[0].mxu0 %v3245
        %v3608 = vpop.f32.mrb[0].mxu0
        %v3609 = vadd.f32 0.0, %v3608
        %v3610 = vpop.f32.mrb[0].mxu0
        %v3611 = vpop.f32.mrb[0].mxu0
        %v3612 = vadd.f32 0.0, %v3611
        %v3613 = vpop.f32.mrb[0].mxu0
        %3614 = vmatprep.mubr.bf16.mxu0 0
        %3615 = vmatmul.mubr.bf16.gmra.mrb[0].mxu0 %v3248
        %v3616 = vpop.f32.mrb[0].mxu0
        %v3617 = vadd.f32 0.0, %v3616
        %v3618 = vpop.f32.mrb[0].mxu0
        %v3619 = vpop.f32.mrb[0].mxu0
        %v3620 = vadd.f32 0.0, %v3619
        %v3621 = vpop.f32.mrb[0].mxu0
        %3622 = vmatprep.mubr.bf16.mxu0 0
        %3623 = vmatmul.mubr.bf16.gmra.mrb[0].mxu0 %v3251
        %v3624 = vpop.f32.mrb[0].mxu0
        %v3625 = vadd.f32 0.0, %v3624
        %v3626 = vpop.f32.mrb[0].mxu0
        %v3627 = vpop.f32.mrb[0].mxu0
        %v3628 = vadd.f32 0.0, %v3627
        %v3629 = vpop.f32.mrb[0].mxu0
        %3630 = vmatprep.mubr.bf16.mxu0 0
        %3631 = vmatmul.mubr.bf16.gmra.mrb[0].mxu0 %v3478
        %v3632 = vpop.f32.mrb[0].mxu0
        %v3633 = vadd.f32 0.0, %v3632
        %v3634 = vpop.f32.mrb[0].mxu0
        %v3635 = vpop.f32.mrb[0].mxu0
        %v3636 = vadd.f32 0.0, %v3635
        %v3637 = vpop.f32.mrb[0].mxu0
        %3638 = vmatprep.mubr.bf16.mxu0 0
        %3639 = vmatmul.mubr.bf16.gmra.mrb[0].mxu0 %v3481
        %v3640 = vpop.f32.mrb[0].mxu0
        %v3641 = vadd.f32 0.0, %v3640
        %v3642 = vpop.f32.mrb[0].mxu0
        %v3643 = vpop.f32.mrb[0].mxu0
        %v3644 = vadd.f32 0.0, %v3643
        %v3645 = vpop.f32.mrb[0].mxu0
        %3646 = vdwg.mxu0
        %v3647 = vadd.f32 %v3417, %v3521
        %v3648 = vadd.f32 %v3418, %v3524
        %v3649 = vadd.f32 %v3419, %v3529
        %v3650 = vadd.f32 %v3420, %v3532
        %v3651 = vadd.f32 %v3421, %v3537
        %v3652 = vadd.f32 %v3422, %v3540
        %v3653 = vadd.f32 %v3423, %v3545
        %v3654 = vadd.f32 %v3424, %v3548
        %v3655 = vadd.f32 %v3425, %v3553
        %v3656 = vadd.f32 %v3426, %v3556
        %v3657 = vadd.f32 %v3427, %v3561
        %v3658 = vadd.f32 %v3428, %v3564
        %v3659 = vadd.f32 %v3429, %v3569
        %v3660 = vadd.f32 %v3430, %v3572
        %v3661 = vadd.f32 %v3431, %v3577
        %v3662 = vadd.f32 %v3432, %v3580
        %v3663 = vadd.f32 %v3433, %v3585
        %v3664 = vadd.f32 %v3434, %v3588
        %v3665 = vadd.f32 %v3435, %v3593
        %v3666 = vadd.f32 %v3436, %v3596
        %v3667 = vadd.f32 %v3437, %v3601
        %v3668 = vadd.f32 %v3438, %v3604
        %v3669 = vadd.f32 %v3439, %v3609
        %v3670 = vadd.f32 %v3440, %v3612
        %v3671 = vadd.f32 %v3441, %v3617
        %v3672 = vadd.f32 %v3442, %v3620
        %v3673 = vadd.f32 %v3443, %v3625
        %v3674 = vadd.f32 %v3444, %v3628
        %v3675 = vadd.f32 %v3445, %v3633
        %v3676 = vadd.f32 %v3446, %v3636
        %v3677 = vadd.f32 %v3447, %v3641
        %v3678 = vadd.f32 %v3448, %v3644
        %s3679 = scalar_lea.vmem %s3, 16
        %v3680 = vld [vmem:[%s3679] sm:$0x3]
        %v3687 = vrot.slane %v2986, 5
        %v3688 = vrot.slane %v3687, 4
        %v3689 = vrot.slane %v2987, 5
        %v3690 = vsel %vm3044, %v3688, %v3689
        %v3691 = vrot.slane %v3689, 4
        %v3692 = vrot.slane %v2988, 5
        %v3693 = vsel %vm3044, %v3691, %v3692
        %v3694 = vrot.slane %v2989, 5
        %v3695 = vrot.slane %v3694, 4
        %v3696 = vrot.slane %v2990, 5
        %v3697 = vsel %vm3044, %v3695, %v3696
        %v3698 = vrot.slane %v3696, 4
        %v3699 = vrot.slane %v2991, 5
        %v3700 = vsel %vm3044, %v3698, %v3699
        %v3701 = vunpack.c.l.b16 %v3690
        %v3702 = vunpack.c.l.b16 %v3693
        %v3703 = vunpack.c.l.b16 %v3697
        %v3704 = vunpack.c.l.b16 %v3700
        %v3705 = vpack.c.b16 %v3702, %v3701
        %v3706 = vpack.c.b16 %v3704, %v3703
        %v3708 = vsel %vm1538, %v3705, 0
        %v3711 = vsel %vm1538, %v3706, 0
        %v3714 = vsel %vm1587, %v3680, 0
        %3716 = vmatprep.subr.bf16.mxu0 0
        %3717 = vmatpush1.bf16.msra.mxu0 %v3714
        %3718 = vmatprep.subr.bf16.mxu0 0
        %3719 = vmatpush1.bf16.msra.mxu0 0
        %3720 = vmatprep.subr.bf16.mxu0 0
        %3721 = vmatpush1.bf16.msra.mxu0 0
        %3722 = vmatprep.subr.bf16.mxu0 0
        %3723 = vmatpush1.bf16.msra.mxu0 0
        %3724 = vmatprep.subr.bf16.mxu0 0
        %3725 = vmatpush1.bf16.msra.mxu0 0
        %3726 = vmatprep.subr.bf16.mxu0 0
        %3727 = vmatpush1.bf16.msra.mxu0 0
        %3728 = vmatprep.subr.bf16.mxu0 0
        %3729 = vmatpush1.bf16.msra.mxu0 0
        %3730 = vmatprep.subr.bf16.mxu0 0
        %3731 = vmatpush1.bf16.msra.mxu0 0
        %3732 = vmatprep.subr.bf16.mxu0 0
        %3733 = vmatpush1.bf16.msra.mxu0 0
        %3734 = vmatprep.subr.bf16.mxu0 0
        %3735 = vmatpush1.bf16.msra.mxu0 0
        %3736 = vmatprep.subr.bf16.mxu0 0
        %3737 = vmatpush1.bf16.msra.mxu0 0
        %3738 = vmatprep.subr.bf16.mxu0 0
        %3739 = vmatpush1.bf16.msra.mxu0 0
        %3740 = vmatprep.subr.bf16.mxu0 0
        %3741 = vmatpush1.bf16.msra.mxu0 0
        %3742 = vmatprep.subr.bf16.mxu0 0
        %3743 = vmatpush1.bf16.msra.mxu0 0
        %3744 = vmatprep.subr.bf16.mxu0 0
        %3745 = vmatpush1.bf16.msra.mxu0 0
        %3746 = vmatprep.subr.bf16.mxu0 0
        %3747 = vmatpush1.bf16.msra.mxu0 0
        %3748 = vmatprep.mubr.bf16.mxu0 0
        %3749 = vmatmul.mubr.bf16.gmra.mrb[0].mxu0 %v3218
        %v3750 = vpop.f32.mrb[0].mxu0
        %v3751 = vadd.f32 0.0, %v3750
        %v3752 = vpop.f32.mrb[0].mxu0
        %v3753 = vpop.f32.mrb[0].mxu0
        %v3754 = vadd.f32 0.0, %v3753
        %v3755 = vpop.f32.mrb[0].mxu0
        %3756 = vmatprep.mubr.bf16.mxu0 0
        %3757 = vmatmul.mubr.bf16.gmra.mrb[0].mxu0 %v3221
        %v3758 = vpop.f32.mrb[0].mxu0
        %v3759 = vadd.f32 0.0, %v3758
        %v3760 = vpop.f32.mrb[0].mxu0
        %v3761 = vpop.f32.mrb[0].mxu0
        %v3762 = vadd.f32 0.0, %v3761
        %v3763 = vpop.f32.mrb[0].mxu0
        %3764 = vmatprep.mubr.bf16.mxu0 0
        %3765 = vmatmul.mubr.bf16.gmra.mrb[0].mxu0 %v3224
        %v3766 = vpop.f32.mrb[0].mxu0
        %v3767 = vadd.f32 0.0, %v3766
        %v3768 = vpop.f32.mrb[0].mxu0
        %v3769 = vpop.f32.mrb[0].mxu0
        %v3770 = vadd.f32 0.0, %v3769
        %v3771 = vpop.f32.mrb[0].mxu0
        %3772 = vmatprep.mubr.bf16.mxu0 0
        %3773 = vmatmul.mubr.bf16.gmra.mrb[0].mxu0 %v3227
        %v3774 = vpop.f32.mrb[0].mxu0
        %v3775 = vadd.f32 0.0, %v3774
        %v3776 = vpop.f32.mrb[0].mxu0
        %v3777 = vpop.f32.mrb[0].mxu0
        %v3778 = vadd.f32 0.0, %v3777
        %v3779 = vpop.f32.mrb[0].mxu0
        %3780 = vmatprep.mubr.bf16.mxu0 0
        %3781 = vmatmul.mubr.bf16.gmra.mrb[0].mxu0 %v3230
        %v3782 = vpop.f32.mrb[0].mxu0
        %v3783 = vadd.f32 0.0, %v3782
        %v3784 = vpop.f32.mrb[0].mxu0
        %v3785 = vpop.f32.mrb[0].mxu0
        %v3786 = vadd.f32 0.0, %v3785
        %v3787 = vpop.f32.mrb[0].mxu0
        %3788 = vmatprep.mubr.bf16.mxu0 0
        %3789 = vmatmul.mubr.bf16.gmra.mrb[0].mxu0 %v3233
        %v3790 = vpop.f32.mrb[0].mxu0
        %v3791 = vadd.f32 0.0, %v3790
        %v3792 = vpop.f32.mrb[0].mxu0
        %v3793 = vpop.f32.mrb[0].mxu0
        %v3794 = vadd.f32 0.0, %v3793
        %v3795 = vpop.f32.mrb[0].mxu0
        %3796 = vmatprep.mubr.bf16.mxu0 0
        %3797 = vmatmul.mubr.bf16.gmra.mrb[0].mxu0 %v3236
        %v3798 = vpop.f32.mrb[0].mxu0
        %v3799 = vadd.f32 0.0, %v3798
        %v3800 = vpop.f32.mrb[0].mxu0
        %v3801 = vpop.f32.mrb[0].mxu0
        %v3802 = vadd.f32 0.0, %v3801
        %v3803 = vpop.f32.mrb[0].mxu0
        %3804 = vmatprep.mubr.bf16.mxu0 0
        %3805 = vmatmul.mubr.bf16.gmra.mrb[0].mxu0 %v3239
        %v3806 = vpop.f32.mrb[0].mxu0
        %v3807 = vadd.f32 0.0, %v3806
        %v3808 = vpop.f32.mrb[0].mxu0
        %v3809 = vpop.f32.mrb[0].mxu0
        %v3810 = vadd.f32 0.0, %v3809
        %v3811 = vpop.f32.mrb[0].mxu0
        %3812 = vmatprep.mubr.bf16.mxu0 0
        %3813 = vmatmul.mubr.bf16.gmra.mrb[0].mxu0 %v3242
        %v3814 = vpop.f32.mrb[0].mxu0
        %v3815 = vadd.f32 0.0, %v3814
        %v3816 = vpop.f32.mrb[0].mxu0
        %v3817 = vpop.f32.mrb[0].mxu0
        %v3818 = vadd.f32 0.0, %v3817
        %v3819 = vpop.f32.mrb[0].mxu0
        %3820 = vmatprep.mubr.bf16.mxu0 0
        %3821 = vmatmul.mubr.bf16.gmra.mrb[0].mxu0 %v3245
        %v3822 = vpop.f32.mrb[0].mxu0
        %v3823 = vadd.f32 0.0, %v3822
        %v3824 = vpop.f32.mrb[0].mxu0
        %v3825 = vpop.f32.mrb[0].mxu0
        %v3826 = vadd.f32 0.0, %v3825
        %v3827 = vpop.f32.mrb[0].mxu0
        %3828 = vmatprep.mubr.bf16.mxu0 0
        %3829 = vmatmul.mubr.bf16.gmra.mrb[0].mxu0 %v3248
        %v3830 = vpop.f32.mrb[0].mxu0
        %v3831 = vadd.f32 0.0, %v3830
        %v3832 = vpop.f32.mrb[0].mxu0
        %v3833 = vpop.f32.mrb[0].mxu0
        %v3834 = vadd.f32 0.0, %v3833
        %v3835 = vpop.f32.mrb[0].mxu0
        %3836 = vmatprep.mubr.bf16.mxu0 0
        %3837 = vmatmul.mubr.bf16.gmra.mrb[0].mxu0 %v3251
        %v3838 = vpop.f32.mrb[0].mxu0
        %v3839 = vadd.f32 0.0, %v3838
        %v3840 = vpop.f32.mrb[0].mxu0
        %v3841 = vpop.f32.mrb[0].mxu0
        %v3842 = vadd.f32 0.0, %v3841
        %v3843 = vpop.f32.mrb[0].mxu0
        %3844 = vmatprep.mubr.bf16.mxu0 0
        %3845 = vmatmul.mubr.bf16.gmra.mrb[0].mxu0 %v3478
        %v3846 = vpop.f32.mrb[0].mxu0
        %v3847 = vadd.f32 0.0, %v3846
        %v3848 = vpop.f32.mrb[0].mxu0
        %v3849 = vpop.f32.mrb[0].mxu0
        %v3850 = vadd.f32 0.0, %v3849
        %v3851 = vpop.f32.mrb[0].mxu0
        %3852 = vmatprep.mubr.bf16.mxu0 0
        %3853 = vmatmul.mubr.bf16.gmra.mrb[0].mxu0 %v3481
        %v3854 = vpop.f32.mrb[0].mxu0
        %v3855 = vadd.f32 0.0, %v3854
        %v3856 = vpop.f32.mrb[0].mxu0
        %v3857 = vpop.f32.mrb[0].mxu0
        %v3858 = vadd.f32 0.0, %v3857
        %v3859 = vpop.f32.mrb[0].mxu0
        %3860 = vmatprep.mubr.bf16.mxu0 0
        %3861 = vmatmul.mubr.bf16.gmra.mrb[0].mxu0 %v3708
        %v3862 = vpop.f32.mrb[0].mxu0
        %v3863 = vadd.f32 0.0, %v3862
        %v3864 = vpop.f32.mrb[0].mxu0
        %v3865 = vpop.f32.mrb[0].mxu0
        %v3866 = vadd.f32 0.0, %v3865
        %v3867 = vpop.f32.mrb[0].mxu0
        %3868 = vmatprep.mubr.bf16.mxu0 0
        %3869 = vmatmul.mubr.bf16.gmra.mrb[0].mxu0 %v3711
        %v3870 = vpop.f32.mrb[0].mxu0
        %v3871 = vadd.f32 0.0, %v3870
        %v3872 = vpop.f32.mrb[0].mxu0
        %v3873 = vpop.f32.mrb[0].mxu0
        %v3874 = vadd.f32 0.0, %v3873
        %v3875 = vpop.f32.mrb[0].mxu0
        %3876 = vdwg.mxu0
        %v3877 = vadd.f32 %v3647, %v3751
        %v3878 = vadd.f32 %v3648, %v3754
        %v3879 = vadd.f32 %v3649, %v3759
        %v3880 = vadd.f32 %v3650, %v3762
        %v3881 = vadd.f32 %v3651, %v3767
        %v3882 = vadd.f32 %v3652, %v3770
        %v3883 = vadd.f32 %v3653, %v3775
        %v3884 = vadd.f32 %v3654, %v3778
        %v3885 = vadd.f32 %v3655, %v3783
        %v3886 = vadd.f32 %v3656, %v3786
        %v3887 = vadd.f32 %v3657, %v3791
        %v3888 = vadd.f32 %v3658, %v3794
        %v3889 = vadd.f32 %v3659, %v3799
        %v3890 = vadd.f32 %v3660, %v3802
        %v3891 = vadd.f32 %v3661, %v3807
        %v3892 = vadd.f32 %v3662, %v3810
        %v3893 = vadd.f32 %v3663, %v3815
        %v3894 = vadd.f32 %v3664, %v3818
        %v3895 = vadd.f32 %v3665, %v3823
        %v3896 = vadd.f32 %v3666, %v3826
        %v3897 = vadd.f32 %v3667, %v3831
        %v3898 = vadd.f32 %v3668, %v3834
        %v3899 = vadd.f32 %v3669, %v3839
        %v3900 = vadd.f32 %v3670, %v3842
        %v3901 = vadd.f32 %v3671, %v3847
        %v3902 = vadd.f32 %v3672, %v3850
        %v3903 = vadd.f32 %v3673, %v3855
        %v3904 = vadd.f32 %v3674, %v3858
        %v3905 = vadd.f32 %v3675, %v3863
        %v3906 = vadd.f32 %v3676, %v3866
        %v3907 = vadd.f32 %v3677, %v3871
        %v3908 = vadd.f32 %v3678, %v3874
        %v3909 = vld [vmem:[%s6] sm:$0x1]
        %v3910 = vlaneseq
        %v3911 = vshrl.u32 %v3910, 7
        %v3912 = vsub.s32 0, %v3911
        %v3913 = vrot.slane %v3909, %v3912
        %v3914 = vmul.f32 %v3877, %v3913
        %v3915 = vmul.f32 %v3878, %v3913
        %v3916 = vmul.f32 %v3879, %v3913
        %v3917 = vmul.f32 %v3880, %v3913
        %v3918 = vmul.f32 %v3881, %v3913
        %v3919 = vmul.f32 %v3882, %v3913
        %v3920 = vmul.f32 %v3883, %v3913
        %v3921 = vmul.f32 %v3884, %v3913
        %v3922 = vmul.f32 %v3885, %v3913
        %v3923 = vmul.f32 %v3886, %v3913
        %v3924 = vmul.f32 %v3887, %v3913
        %v3925 = vmul.f32 %v3888, %v3913
        %v3926 = vmul.f32 %v3889, %v3913
        %v3927 = vmul.f32 %v3890, %v3913
        %v3928 = vmul.f32 %v3891, %v3913
        %v3929 = vmul.f32 %v3892, %v3913
        %v3930 = vmul.f32 %v3893, %v3913
        %v3931 = vmul.f32 %v3894, %v3913
        %v3932 = vmul.f32 %v3895, %v3913
        %v3933 = vmul.f32 %v3896, %v3913
        %v3934 = vmul.f32 %v3897, %v3913
        %v3935 = vmul.f32 %v3898, %v3913
        %v3936 = vmul.f32 %v3899, %v3913
        %v3937 = vmul.f32 %v3900, %v3913
        %v3938 = vmul.f32 %v3901, %v3913
        %v3939 = vmul.f32 %v3902, %v3913
        %v3940 = vmul.f32 %v3903, %v3913
        %v3941 = vmul.f32 %v3904, %v3913
        %v3942 = vmul.f32 %v3905, %v3913
        %v3943 = vmul.f32 %v3906, %v3913
        %v3944 = vmul.f32 %v3907, %v3913
        %v3945 = vmul.f32 %v3908, %v3913
        %v3946 = vld [vmem:[%s6 + $0x1] sm:$0x1]
        %v3947 = vlaneseq
        %v3948 = vshrl.u32 %v3947, 7
        %v3949 = vsub.s32 0, %v3948
        %v3950 = vrot.slane %v3946, %v3949
        %v3951 = vadd.f32 %v3914, %v3950
        %v3952 = vadd.f32 %v3915, %v3950
        %v3953 = vadd.f32 %v3916, %v3950
        %v3954 = vadd.f32 %v3917, %v3950
        %v3955 = vadd.f32 %v3918, %v3950
        %v3956 = vadd.f32 %v3919, %v3950
        %v3957 = vadd.f32 %v3920, %v3950
        %v3958 = vadd.f32 %v3921, %v3950
        %v3959 = vadd.f32 %v3922, %v3950
        %v3960 = vadd.f32 %v3923, %v3950
        %v3961 = vadd.f32 %v3924, %v3950
        %v3962 = vadd.f32 %v3925, %v3950
        %v3963 = vadd.f32 %v3926, %v3950
        %v3964 = vadd.f32 %v3927, %v3950
        %v3965 = vadd.f32 %v3928, %v3950
        %v3966 = vadd.f32 %v3929, %v3950
        %v3967 = vadd.f32 %v3930, %v3950
        %v3968 = vadd.f32 %v3931, %v3950
        %v3969 = vadd.f32 %v3932, %v3950
        %v3970 = vadd.f32 %v3933, %v3950
        %v3971 = vadd.f32 %v3934, %v3950
        %v3972 = vadd.f32 %v3935, %v3950
        %v3973 = vadd.f32 %v3936, %v3950
        %v3974 = vadd.f32 %v3937, %v3950
        %v3975 = vadd.f32 %v3938, %v3950
        %v3976 = vadd.f32 %v3939, %v3950
        %v3977 = vadd.f32 %v3940, %v3950
        %v3978 = vadd.f32 %v3941, %v3950
        %v3979 = vadd.f32 %v3942, %v3950
        %v3980 = vadd.f32 %v3943, %v3950
        %v3981 = vadd.f32 %v3944, %v3950
        %v3982 = vadd.f32 %v3945, %v3950
        %v3983 = vmax.f32 %v3951, 0.0
        %v3984 = vmax.f32 %v3952, 0.0
        %v3985 = vmax.f32 %v3953, 0.0
        %v3986 = vmax.f32 %v3954, 0.0
        %v3987 = vmax.f32 %v3955, 0.0
        %v3988 = vmax.f32 %v3956, 0.0
        %v3989 = vmax.f32 %v3957, 0.0
        %v3990 = vmax.f32 %v3958, 0.0
        %v3991 = vmax.f32 %v3959, 0.0
        %v3992 = vmax.f32 %v3960, 0.0
        %v3993 = vmax.f32 %v3961, 0.0
        %v3994 = vmax.f32 %v3962, 0.0
        %v3995 = vmax.f32 %v3963, 0.0
        %v3996 = vmax.f32 %v3964, 0.0
        %v3997 = vmax.f32 %v3965, 0.0
        %v3998 = vmax.f32 %v3966, 0.0
        %v3999 = vmax.f32 %v3967, 0.0
        %v4000 = vmax.f32 %v3968, 0.0
        %v4001 = vmax.f32 %v3969, 0.0
        %v4002 = vmax.f32 %v3970, 0.0
        %v4003 = vmax.f32 %v3971, 0.0
        %v4004 = vmax.f32 %v3972, 0.0
        %v4005 = vmax.f32 %v3973, 0.0
        %v4006 = vmax.f32 %v3974, 0.0
        %v4007 = vmax.f32 %v3975, 0.0
        %v4008 = vmax.f32 %v3976, 0.0
        %v4009 = vmax.f32 %v3977, 0.0
        %v4010 = vmax.f32 %v3978, 0.0
        %v4011 = vmax.f32 %v3979, 0.0
        %v4012 = vmax.f32 %v3980, 0.0
        %v4013 = vmax.f32 %v3981, 0.0
        %v4014 = vmax.f32 %v3982, 0.0
        %v4015 = vpack.c.bf16 %v3984, %v3983
        %v4016 = vpack.c.bf16 %v3986, %v3985
        %v4017 = vpack.c.bf16 %v3988, %v3987
        %v4018 = vpack.c.bf16 %v3990, %v3989
        %v4019 = vpack.c.bf16 %v3992, %v3991
        %v4020 = vpack.c.bf16 %v3994, %v3993
        %v4021 = vpack.c.bf16 %v3996, %v3995
        %v4022 = vpack.c.bf16 %v3998, %v3997
        %v4023 = vpack.c.bf16 %v4000, %v3999
        %v4024 = vpack.c.bf16 %v4002, %v4001
        %v4025 = vpack.c.bf16 %v4004, %v4003
        %v4026 = vpack.c.bf16 %v4006, %v4005
        %v4027 = vpack.c.bf16 %v4008, %v4007
        %v4028 = vpack.c.bf16 %v4010, %v4009
        %v4029 = vpack.c.bf16 %v4012, %v4011
        %v4030 = vpack.c.bf16 %v4014, %v4013
        %v4031 = vld [vmem:[%s4] sm:$0x3]
        %v4033 = vsel %vm1538, %v4015, 0
        %v4036 = vsel %vm1538, %v4016, 0
        %v4039 = vsel %vm1538, %v4017, 0
        %v4042 = vsel %vm1538, %v4018, 0
        %v4045 = vsel %vm1538, %v4019, 0
        %v4048 = vsel %vm1538, %v4020, 0
        %v4051 = vsel %vm1538, %v4021, 0
        %v4054 = vsel %vm1538, %v4022, 0
        %v4057 = vsel %vm1538, %v4023, 0
        %v4060 = vsel %vm1538, %v4024, 0
        %v4063 = vsel %vm1538, %v4025, 0
        %v4066 = vsel %vm1538, %v4026, 0
        %v4069 = vsel %vm1538, %v4027, 0
        %v4072 = vsel %vm1538, %v4028, 0
        %v4075 = vsel %vm1538, %v4029, 0
        %v4078 = vsel %vm1538, %v4030, 0
        %v4081 = vsel %vm1587, %v4031, 0
        %4083 = vmatprep.subr.bf16.mxu0 0
        %4084 = vmatpush1.bf16.msra.mxu0 %v4081
        %4085 = vmatprep.subr.bf16.mxu0 0
        %4086 = vmatpush1.bf16.msra.mxu0 0
        %4087 = vmatprep.subr.bf16.mxu0 0
        %4088 = vmatpush1.bf16.msra.mxu0 0
        %4089 = vmatprep.subr.bf16.mxu0 0
        %4090 = vmatpush1.bf16.msra.mxu0 0
        %4091 = vmatprep.subr.bf16.mxu0 0
        %4092 = vmatpush1.bf16.msra.mxu0 0
        %4093 = vmatprep.subr.bf16.mxu0 0
        %4094 = vmatpush1.bf16.msra.mxu0 0
        %4095 = vmatprep.subr.bf16.mxu0 0
        %4096 = vmatpush1.bf16.msra.mxu0 0
        %4097 = vmatprep.subr.bf16.mxu0 0
        %4098 = vmatpush1.bf16.msra.mxu0 0
        %4099 = vmatprep.subr.bf16.mxu0 0
        %4100 = vmatpush1.bf16.msra.mxu0 0
        %4101 = vmatprep.subr.bf16.mxu0 0
        %4102 = vmatpush1.bf16.msra.mxu0 0
        %4103 = vmatprep.subr.bf16.mxu0 0
        %4104 = vmatpush1.bf16.msra.mxu0 0
        %4105 = vmatprep.subr.bf16.mxu0 0
        %4106 = vmatpush1.bf16.msra.mxu0 0
        %4107 = vmatprep.subr.bf16.mxu0 0
        %4108 = vmatpush1.bf16.msra.mxu0 0
        %4109 = vmatprep.subr.bf16.mxu0 0
        %4110 = vmatpush1.bf16.msra.mxu0 0
        %4111 = vmatprep.subr.bf16.mxu0 0
        %4112 = vmatpush1.bf16.msra.mxu0 0
        %4113 = vmatprep.subr.bf16.mxu0 0
        %4114 = vmatpush1.bf16.msra.mxu0 0
        %4115 = vmatprep.mubr.bf16.mxu0 0
        %4116 = vmatmul.mubr.bf16.gmra.mrb[0].mxu0 %v4033
        %v4117 = vpop.f32.mrb[0].mxu0
        %v4118 = vadd.f32 0.0, %v4117
        %v4119 = vpop.f32.mrb[0].mxu0
        %v4120 = vpop.f32.mrb[0].mxu0
        %v4121 = vadd.f32 0.0, %v4120
        %v4122 = vpop.f32.mrb[0].mxu0
        %4123 = vmatprep.mubr.bf16.mxu0 0
        %4124 = vmatmul.mubr.bf16.gmra.mrb[0].mxu0 %v4036
        %v4125 = vpop.f32.mrb[0].mxu0
        %v4126 = vadd.f32 0.0, %v4125
        %v4127 = vpop.f32.mrb[0].mxu0
        %v4128 = vpop.f32.mrb[0].mxu0
        %v4129 = vadd.f32 0.0, %v4128
        %v4130 = vpop.f32.mrb[0].mxu0
        %4131 = vmatprep.mubr.bf16.mxu0 0
        %4132 = vmatmul.mubr.bf16.gmra.mrb[0].mxu0 %v4039
        %v4133 = vpop.f32.mrb[0].mxu0
        %v4134 = vadd.f32 0.0, %v4133
        %v4135 = vpop.f32.mrb[0].mxu0
        %v4136 = vpop.f32.mrb[0].mxu0
        %v4137 = vadd.f32 0.0, %v4136
        %v4138 = vpop.f32.mrb[0].mxu0
        %4139 = vmatprep.mubr.bf16.mxu0 0
        %4140 = vmatmul.mubr.bf16.gmra.mrb[0].mxu0 %v4042
        %v4141 = vpop.f32.mrb[0].mxu0
        %v4142 = vadd.f32 0.0, %v4141
        %v4143 = vpop.f32.mrb[0].mxu0
        %v4144 = vpop.f32.mrb[0].mxu0
        %v4145 = vadd.f32 0.0, %v4144
        %v4146 = vpop.f32.mrb[0].mxu0
        %4147 = vmatprep.mubr.bf16.mxu0 0
        %4148 = vmatmul.mubr.bf16.gmra.mrb[0].mxu0 %v4045
        %v4149 = vpop.f32.mrb[0].mxu0
        %v4150 = vadd.f32 0.0, %v4149
        %v4151 = vpop.f32.mrb[0].mxu0
        %v4152 = vpop.f32.mrb[0].mxu0
        %v4153 = vadd.f32 0.0, %v4152
        %v4154 = vpop.f32.mrb[0].mxu0
        %4155 = vmatprep.mubr.bf16.mxu0 0
        %4156 = vmatmul.mubr.bf16.gmra.mrb[0].mxu0 %v4048
        %v4157 = vpop.f32.mrb[0].mxu0
        %v4158 = vadd.f32 0.0, %v4157
        %v4159 = vpop.f32.mrb[0].mxu0
        %v4160 = vpop.f32.mrb[0].mxu0
        %v4161 = vadd.f32 0.0, %v4160
        %v4162 = vpop.f32.mrb[0].mxu0
        %4163 = vmatprep.mubr.bf16.mxu0 0
        %4164 = vmatmul.mubr.bf16.gmra.mrb[0].mxu0 %v4051
        %v4165 = vpop.f32.mrb[0].mxu0
        %v4166 = vadd.f32 0.0, %v4165
        %v4167 = vpop.f32.mrb[0].mxu0
        %v4168 = vpop.f32.mrb[0].mxu0
        %v4169 = vadd.f32 0.0, %v4168
        %v4170 = vpop.f32.mrb[0].mxu0
        %4171 = vmatprep.mubr.bf16.mxu0 0
        %4172 = vmatmul.mubr.bf16.gmra.mrb[0].mxu0 %v4054
        %v4173 = vpop.f32.mrb[0].mxu0
        %v4174 = vadd.f32 0.0, %v4173
        %v4175 = vpop.f32.mrb[0].mxu0
        %v4176 = vpop.f32.mrb[0].mxu0
        %v4177 = vadd.f32 0.0, %v4176
        %v4178 = vpop.f32.mrb[0].mxu0
        %4179 = vmatprep.mubr.bf16.mxu0 0
        %4180 = vmatmul.mubr.bf16.gmra.mrb[0].mxu0 %v4057
        %v4181 = vpop.f32.mrb[0].mxu0
        %v4182 = vadd.f32 0.0, %v4181
        %v4183 = vpop.f32.mrb[0].mxu0
        %v4184 = vpop.f32.mrb[0].mxu0
        %v4185 = vadd.f32 0.0, %v4184
        %v4186 = vpop.f32.mrb[0].mxu0
        %4187 = vmatprep.mubr.bf16.mxu0 0
        %4188 = vmatmul.mubr.bf16.gmra.mrb[0].mxu0 %v4060
        %v4189 = vpop.f32.mrb[0].mxu0
        %v4190 = vadd.f32 0.0, %v4189
        %v4191 = vpop.f32.mrb[0].mxu0
        %v4192 = vpop.f32.mrb[0].mxu0
        %v4193 = vadd.f32 0.0, %v4192
        %v4194 = vpop.f32.mrb[0].mxu0
        %4195 = vmatprep.mubr.bf16.mxu0 0
        %4196 = vmatmul.mubr.bf16.gmra.mrb[0].mxu0 %v4063
        %v4197 = vpop.f32.mrb[0].mxu0
        %v4198 = vadd.f32 0.0, %v4197
        %v4199 = vpop.f32.mrb[0].mxu0
        %v4200 = vpop.f32.mrb[0].mxu0
        %v4201 = vadd.f32 0.0, %v4200
        %v4202 = vpop.f32.mrb[0].mxu0
        %4203 = vmatprep.mubr.bf16.mxu0 0
        %4204 = vmatmul.mubr.bf16.gmra.mrb[0].mxu0 %v4066
        %v4205 = vpop.f32.mrb[0].mxu0
        %v4206 = vadd.f32 0.0, %v4205
        %v4207 = vpop.f32.mrb[0].mxu0
        %v4208 = vpop.f32.mrb[0].mxu0
        %v4209 = vadd.f32 0.0, %v4208
        %v4210 = vpop.f32.mrb[0].mxu0
        %4211 = vmatprep.mubr.bf16.mxu0 0
        %4212 = vmatmul.mubr.bf16.gmra.mrb[0].mxu0 %v4069
        %v4213 = vpop.f32.mrb[0].mxu0
        %v4214 = vadd.f32 0.0, %v4213
        %v4215 = vpop.f32.mrb[0].mxu0
        %v4216 = vpop.f32.mrb[0].mxu0
        %v4217 = vadd.f32 0.0, %v4216
        %v4218 = vpop.f32.mrb[0].mxu0
        %4219 = vmatprep.mubr.bf16.mxu0 0
        %4220 = vmatmul.mubr.bf16.gmra.mrb[0].mxu0 %v4072
        %v4221 = vpop.f32.mrb[0].mxu0
        %v4222 = vadd.f32 0.0, %v4221
        %v4223 = vpop.f32.mrb[0].mxu0
        %v4224 = vpop.f32.mrb[0].mxu0
        %v4225 = vadd.f32 0.0, %v4224
        %v4226 = vpop.f32.mrb[0].mxu0
        %4227 = vmatprep.mubr.bf16.mxu0 0
        %4228 = vmatmul.mubr.bf16.gmra.mrb[0].mxu0 %v4075
        %v4229 = vpop.f32.mrb[0].mxu0
        %v4230 = vadd.f32 0.0, %v4229
        %v4231 = vpop.f32.mrb[0].mxu0
        %v4232 = vpop.f32.mrb[0].mxu0
        %v4233 = vadd.f32 0.0, %v4232
        %v4234 = vpop.f32.mrb[0].mxu0
        %4235 = vmatprep.mubr.bf16.mxu0 0
        %4236 = vmatmul.mubr.bf16.gmra.mrb[0].mxu0 %v4078
        %v4237 = vpop.f32.mrb[0].mxu0
        %v4238 = vadd.f32 0.0, %v4237
        %v4239 = vpop.f32.mrb[0].mxu0
        %v4240 = vpop.f32.mrb[0].mxu0
        %v4241 = vadd.f32 0.0, %v4240
        %v4242 = vpop.f32.mrb[0].mxu0
        %4243 = vdwg.mxu0
        %v4244 = vld [vmem:[%s7] sm:$0x1]
        %v4245 = vlaneseq
        %v4246 = vshrl.u32 %v4245, 7
        %v4247 = vsub.s32 0, %v4246
        %v4248 = vrot.slane %v4244, %v4247
        %v4249 = vmul.f32 %v4118, %v4248
        %v4250 = vmul.f32 %v4121, %v4248
        %v4251 = vmul.f32 %v4126, %v4248
        %v4252 = vmul.f32 %v4129, %v4248
        %v4253 = vmul.f32 %v4134, %v4248
        %v4254 = vmul.f32 %v4137, %v4248
        %v4255 = vmul.f32 %v4142, %v4248
        %v4256 = vmul.f32 %v4145, %v4248
        %v4257 = vmul.f32 %v4150, %v4248
        %v4258 = vmul.f32 %v4153, %v4248
        %v4259 = vmul.f32 %v4158, %v4248
        %v4260 = vmul.f32 %v4161, %v4248
        %v4261 = vmul.f32 %v4166, %v4248
        %v4262 = vmul.f32 %v4169, %v4248
        %v4263 = vmul.f32 %v4174, %v4248
        %v4264 = vmul.f32 %v4177, %v4248
        %v4265 = vmul.f32 %v4182, %v4248
        %v4266 = vmul.f32 %v4185, %v4248
        %v4267 = vmul.f32 %v4190, %v4248
        %v4268 = vmul.f32 %v4193, %v4248
        %v4269 = vmul.f32 %v4198, %v4248
        %v4270 = vmul.f32 %v4201, %v4248
        %v4271 = vmul.f32 %v4206, %v4248
        %v4272 = vmul.f32 %v4209, %v4248
        %v4273 = vmul.f32 %v4214, %v4248
        %v4274 = vmul.f32 %v4217, %v4248
        %v4275 = vmul.f32 %v4222, %v4248
        %v4276 = vmul.f32 %v4225, %v4248
        %v4277 = vmul.f32 %v4230, %v4248
        %v4278 = vmul.f32 %v4233, %v4248
        %v4279 = vmul.f32 %v4238, %v4248
        %v4280 = vmul.f32 %v4241, %v4248
        %v4281 = vld [vmem:[%s7 + $0x1] sm:$0x1]
        %v4282 = vlaneseq
        %v4283 = vshrl.u32 %v4282, 7
        %v4284 = vsub.s32 0, %v4283
        %v4285 = vrot.slane %v4281, %v4284
        %v4286 = vadd.f32 %v4249, %v4285
        %v4287 = vadd.f32 %v4250, %v4285
        %v4288 = vadd.f32 %v4251, %v4285
        %v4289 = vadd.f32 %v4252, %v4285
        %v4290 = vadd.f32 %v4253, %v4285
        %v4291 = vadd.f32 %v4254, %v4285
        %v4292 = vadd.f32 %v4255, %v4285
        %v4293 = vadd.f32 %v4256, %v4285
        %v4294 = vadd.f32 %v4257, %v4285
        %v4295 = vadd.f32 %v4258, %v4285
        %v4296 = vadd.f32 %v4259, %v4285
        %v4297 = vadd.f32 %v4260, %v4285
        %v4298 = vadd.f32 %v4261, %v4285
        %v4299 = vadd.f32 %v4262, %v4285
        %v4300 = vadd.f32 %v4263, %v4285
        %v4301 = vadd.f32 %v4264, %v4285
        %v4302 = vadd.f32 %v4265, %v4285
        %v4303 = vadd.f32 %v4266, %v4285
        %v4304 = vadd.f32 %v4267, %v4285
        %v4305 = vadd.f32 %v4268, %v4285
        %v4306 = vadd.f32 %v4269, %v4285
        %v4307 = vadd.f32 %v4270, %v4285
        %v4308 = vadd.f32 %v4271, %v4285
        %v4309 = vadd.f32 %v4272, %v4285
        %v4310 = vadd.f32 %v4273, %v4285
        %v4311 = vadd.f32 %v4274, %v4285
        %v4312 = vadd.f32 %v4275, %v4285
        %v4313 = vadd.f32 %v4276, %v4285
        %v4314 = vadd.f32 %v4277, %v4285
        %v4315 = vadd.f32 %v4278, %v4285
        %v4316 = vadd.f32 %v4279, %v4285
        %v4317 = vadd.f32 %v4280, %v4285
        %v4318 = vld [vmem:[%s286] sm:$0xf]
        %v4319 = vld [vmem:[%s286 + $0x4] sm:$0xf]
        %v4320 = vld [vmem:[%s286 + $0x8] sm:$0xf]
        %v4321 = vld [vmem:[%s286 + $0xc] sm:$0xf]
        %v4322 = vld [vmem:[%s286 + $0x10] sm:$0xf]
        %v4323 = vld [vmem:[%s286 + $0x14] sm:$0xf]
        %v4324 = vld [vmem:[%s286 + $0x18] sm:$0xf]
        %v4325 = vld [vmem:[%s286 + $0x1c] sm:$0xf]
        %v4326 = vld [vmem:[%s286 + $0x20] sm:$0xf]
        %v4327 = vld [vmem:[%s286 + $0x24] sm:$0xf]
        %v4328 = vld [vmem:[%s286 + $0x28] sm:$0xf]
        %v4329 = vld [vmem:[%s286 + $0x2c] sm:$0xf]
        %v4330 = vld [vmem:[%s286 + $0x30] sm:$0xf]
        %v4331 = vld [vmem:[%s286 + $0x34] sm:$0xf]
        %v4332 = vld [vmem:[%s286 + $0x38] sm:$0xf]
        %v4333 = vld [vmem:[%s286 + $0x3c] sm:$0xf]
        %v4334 = vld [vmem:[%s286 + $0x40] sm:$0xf]
        %v4335 = vld [vmem:[%s286 + $0x44] sm:$0xf]
        %v4336 = vld [vmem:[%s286 + $0x48] sm:$0xf]
        %v4337 = vld [vmem:[%s286 + $0x4c] sm:$0xf]
        %v4338 = vld [vmem:[%s286 + $0x50] sm:$0xf]
        %v4339 = vld [vmem:[%s286 + $0x54] sm:$0xf]
        %v4340 = vld [vmem:[%s286 + $0x58] sm:$0xf]
        %v4341 = vld [vmem:[%s286 + $0x5c] sm:$0xf]
        %v4342 = vld [vmem:[%s286 + $0x60] sm:$0xf]
        %v4343 = vld [vmem:[%s286 + $0x64] sm:$0xf]
        %v4344 = vld [vmem:[%s286 + $0x68] sm:$0xf]
        %v4345 = vld [vmem:[%s286 + $0x6c] sm:$0xf]
        %v4346 = vld [vmem:[%s286 + $0x70] sm:$0xf]
        %v4347 = vld [vmem:[%s286 + $0x74] sm:$0xf]
        %v4348 = vld [vmem:[%s286 + $0x78] sm:$0xf]
        %v4349 = vld [vmem:[%s286 + $0x7c] sm:$0xf]
        %v4350 = vunpack.c.l.bf16 %v4318
        %v4351 = vunpack.c.l.bf16 %v4319
        %v4352 = vunpack.c.l.bf16 %v4320
        %v4353 = vunpack.c.l.bf16 %v4321
        %v4354 = vunpack.c.l.bf16 %v4322
        %v4355 = vunpack.c.l.bf16 %v4323
        %v4356 = vunpack.c.l.bf16 %v4324
        %v4357 = vunpack.c.l.bf16 %v4325
        %v4358 = vunpack.c.l.bf16 %v4326
        %v4359 = vunpack.c.l.bf16 %v4327
        %v4360 = vunpack.c.l.bf16 %v4328
        %v4361 = vunpack.c.l.bf16 %v4329
        %v4362 = vunpack.c.l.bf16 %v4330
        %v4363 = vunpack.c.l.bf16 %v4331
        %v4364 = vunpack.c.l.bf16 %v4332
        %v4365 = vunpack.c.l.bf16 %v4333
        %v4366 = vunpack.c.l.bf16 %v4334
        %v4367 = vunpack.c.l.bf16 %v4335
        %v4368 = vunpack.c.l.bf16 %v4336
        %v4369 = vunpack.c.l.bf16 %v4337
        %v4370 = vunpack.c.l.bf16 %v4338
        %v4371 = vunpack.c.l.bf16 %v4339
        %v4372 = vunpack.c.l.bf16 %v4340
        %v4373 = vunpack.c.l.bf16 %v4341
        %v4374 = vunpack.c.l.bf16 %v4342
        %v4375 = vunpack.c.l.bf16 %v4343
        %v4376 = vunpack.c.l.bf16 %v4344
        %v4377 = vunpack.c.l.bf16 %v4345
        %v4378 = vunpack.c.l.bf16 %v4346
        %v4379 = vunpack.c.l.bf16 %v4347
        %v4380 = vunpack.c.l.bf16 %v4348
        %v4381 = vunpack.c.l.bf16 %v4349
        %v4382 = vadd.f32 %v4286, %v4350
        %v4383 = vadd.f32 %v4287, %v4351
        %v4384 = vadd.f32 %v4288, %v4352
        %v4385 = vadd.f32 %v4289, %v4353
        %v4386 = vadd.f32 %v4290, %v4354
        %v4387 = vadd.f32 %v4291, %v4355
        %v4388 = vadd.f32 %v4292, %v4356
        %v4389 = vadd.f32 %v4293, %v4357
        %v4390 = vadd.f32 %v4294, %v4358
        %v4391 = vadd.f32 %v4295, %v4359
        %v4392 = vadd.f32 %v4296, %v4360
        %v4393 = vadd.f32 %v4297, %v4361
        %v4394 = vadd.f32 %v4298, %v4362
        %v4395 = vadd.f32 %v4299, %v4363
        %v4396 = vadd.f32 %v4300, %v4364
        %v4397 = vadd.f32 %v4301, %v4365
        %v4398 = vadd.f32 %v4302, %v4366
        %v4399 = vadd.f32 %v4303, %v4367
        %v4400 = vadd.f32 %v4304, %v4368
        %v4401 = vadd.f32 %v4305, %v4369
        %v4402 = vadd.f32 %v4306, %v4370
        %v4403 = vadd.f32 %v4307, %v4371
        %v4404 = vadd.f32 %v4308, %v4372
        %v4405 = vadd.f32 %v4309, %v4373
        %v4406 = vadd.f32 %v4310, %v4374
        %v4407 = vadd.f32 %v4311, %v4375
        %v4408 = vadd.f32 %v4312, %v4376
        %v4409 = vadd.f32 %v4313, %v4377
        %v4410 = vadd.f32 %v4314, %v4378
        %v4411 = vadd.f32 %v4315, %v4379
        %v4412 = vadd.f32 %v4316, %v4380
        %v4413 = vadd.f32 %v4317, %v4381
        %v4414 = vmax.f32 %v4382, 0.0
        %v4415 = vmax.f32 %v4383, 0.0
        %v4416 = vmax.f32 %v4384, 0.0
        %v4417 = vmax.f32 %v4385, 0.0
        %v4418 = vmax.f32 %v4386, 0.0
        %v4419 = vmax.f32 %v4387, 0.0
        %v4420 = vmax.f32 %v4388, 0.0
        %v4421 = vmax.f32 %v4389, 0.0
        %v4422 = vmax.f32 %v4390, 0.0
        %v4423 = vmax.f32 %v4391, 0.0
        %v4424 = vmax.f32 %v4392, 0.0
        %v4425 = vmax.f32 %v4393, 0.0
        %v4426 = vmax.f32 %v4394, 0.0
        %v4427 = vmax.f32 %v4395, 0.0
        %v4428 = vmax.f32 %v4396, 0.0
        %v4429 = vmax.f32 %v4397, 0.0
        %v4430 = vmax.f32 %v4398, 0.0
        %v4431 = vmax.f32 %v4399, 0.0
        %v4432 = vmax.f32 %v4400, 0.0
        %v4433 = vmax.f32 %v4401, 0.0
        %v4434 = vmax.f32 %v4402, 0.0
        %v4435 = vmax.f32 %v4403, 0.0
        %v4436 = vmax.f32 %v4404, 0.0
        %v4437 = vmax.f32 %v4405, 0.0
        %v4438 = vmax.f32 %v4406, 0.0
        %v4439 = vmax.f32 %v4407, 0.0
        %v4440 = vmax.f32 %v4408, 0.0
        %v4441 = vmax.f32 %v4409, 0.0
        %v4442 = vmax.f32 %v4410, 0.0
        %v4443 = vmax.f32 %v4411, 0.0
        %v4444 = vmax.f32 %v4412, 0.0
        %v4445 = vmax.f32 %v4413, 0.0
        %v4446 = vpack.c.bf16 %v4415, %v4414
        %v4447 = vpack.c.bf16 %v4417, %v4416
        %v4448 = vpack.c.bf16 %v4419, %v4418
        %v4449 = vpack.c.bf16 %v4421, %v4420
        %v4450 = vpack.c.bf16 %v4423, %v4422
        %v4451 = vpack.c.bf16 %v4425, %v4424
        %v4452 = vpack.c.bf16 %v4427, %v4426
        %v4453 = vpack.c.bf16 %v4429, %v4428
        %v4454 = vpack.c.bf16 %v4431, %v4430
        %v4455 = vpack.c.bf16 %v4433, %v4432
        %v4456 = vpack.c.bf16 %v4435, %v4434
        %v4457 = vpack.c.bf16 %v4437, %v4436
        %v4458 = vpack.c.bf16 %v4439, %v4438
        %v4459 = vpack.c.bf16 %v4441, %v4440
        %v4460 = vpack.c.bf16 %v4443, %v4442
        %v4461 = vpack.c.bf16 %v4445, %v4444
        %v4478 = vunpack.c.l.b16 %v4446
        %v4479 = vunpack.c.h.b16 %v4446
        %v4480 = vunpack.c.l.b16 %v4447
        %v4481 = vunpack.c.h.b16 %v4447
        %v4482 = vunpack.c.l.b16 %v4448
        %v4483 = vunpack.c.h.b16 %v4448
        %v4484 = vunpack.c.l.b16 %v4449
        %v4485 = vunpack.c.h.b16 %v4449
        %v4486 = vunpack.c.l.b16 %v4450
        %v4487 = vunpack.c.h.b16 %v4450
        %v4488 = vunpack.c.l.b16 %v4451
        %v4489 = vunpack.c.h.b16 %v4451
        %v4490 = vunpack.c.l.b16 %v4452
        %v4491 = vunpack.c.h.b16 %v4452
        %v4492 = vunpack.c.l.b16 %v4453
        %v4493 = vunpack.c.h.b16 %v4453
        %v4494 = vunpack.c.l.b16 %v4454
        %v4495 = vunpack.c.h.b16 %v4454
        %v4496 = vunpack.c.l.b16 %v4455
        %v4497 = vunpack.c.h.b16 %v4455
        %v4498 = vunpack.c.l.b16 %v4456
        %v4499 = vunpack.c.h.b16 %v4456
        %v4500 = vunpack.c.l.b16 %v4457
        %v4501 = vunpack.c.h.b16 %v4457
        %v4502 = vunpack.c.l.b16 %v4458
        %v4503 = vunpack.c.h.b16 %v4458
        %v4504 = vunpack.c.l.b16 %v4459
        %v4505 = vunpack.c.h.b16 %v4459
        %v4506 = vunpack.c.l.b16 %v4460
        %v4507 = vunpack.c.h.b16 %v4460
        %v4508 = vunpack.c.l.b16 %v4461
        %v4509 = vunpack.c.h.b16 %v4461
        %v4510 = vpack.c.b16 %v4478, %v4478
        %v4511 = vpack.c.b16 %v4479, %v4479
        %v4512 = vpack.c.b16 %v4480, %v4480
        %v4513 = vpack.c.b16 %v4481, %v4481
        %v4514 = vpack.c.b16 %v4482, %v4482
        %v4515 = vpack.c.b16 %v4483, %v4483
        %v4516 = vpack.c.b16 %v4484, %v4484
        %v4517 = vpack.c.b16 %v4485, %v4485
        %v4518 = vpack.c.b16 %v4486, %v4486
        %v4519 = vpack.c.b16 %v4487, %v4487
        %v4520 = vpack.c.b16 %v4488, %v4488
        %v4521 = vpack.c.b16 %v4489, %v4489
        %v4522 = vpack.c.b16 %v4490, %v4490
        %v4523 = vpack.c.b16 %v4491, %v4491
        %v4524 = vpack.c.b16 %v4492, %v4492
        %v4525 = vpack.c.b16 %v4493, %v4493
        %v4526 = vpack.c.b16 %v4494, %v4494
        %v4527 = vpack.c.b16 %v4495, %v4495
        %v4528 = vpack.c.b16 %v4496, %v4496
        %v4529 = vpack.c.b16 %v4497, %v4497
        %v4530 = vpack.c.b16 %v4498, %v4498
        %v4531 = vpack.c.b16 %v4499, %v4499
        %v4532 = vpack.c.b16 %v4500, %v4500
        %v4533 = vpack.c.b16 %v4501, %v4501
        %v4534 = vpack.c.b16 %v4502, %v4502
        %v4535 = vpack.c.b16 %v4503, %v4503
        %v4536 = vpack.c.b16 %v4504, %v4504
        %v4537 = vpack.c.b16 %v4505, %v4505
        %v4538 = vpack.c.b16 %v4506, %v4506
        %v4539 = vpack.c.b16 %v4507, %v4507
        %v4540 = vpack.c.b16 %v4508, %v4508
        %v4541 = vpack.c.b16 %v4509, %v4509
        %vm4574 = vcmask 125952
        %4575 = vst.msk [vmem:[%s316] sm:$0xf] %vm4574, %v4510
        %4576 = vst.msk [vmem:[%s316 + $0x4] sm:$0xf] %vm4574, %v4511
        %4577 = vst.msk [vmem:[%s316 + $0x8] sm:$0xf] %vm4574, %v4512
        %4578 = vst.msk [vmem:[%s316 + $0xc] sm:$0xf] %vm4574, %v4513
        %4579 = vst.msk [vmem:[%s316 + $0x10] sm:$0xf] %vm4574, %v4514
        %4580 = vst.msk [vmem:[%s316 + $0x14] sm:$0xf] %vm4574, %v4515
        %4581 = vst.msk [vmem:[%s316 + $0x18] sm:$0xf] %vm4574, %v4516
        %4582 = vst.msk [vmem:[%s316 + $0x1c] sm:$0xf] %vm4574, %v4517
        %4583 = vst.msk [vmem:[%s316 + $0x20] sm:$0xf] %vm4574, %v4518
        %4584 = vst.msk [vmem:[%s316 + $0x24] sm:$0xf] %vm4574, %v4519
        %4585 = vst.msk [vmem:[%s316 + $0x28] sm:$0xf] %vm4574, %v4520
        %4586 = vst.msk [vmem:[%s316 + $0x2c] sm:$0xf] %vm4574, %v4521
        %4587 = vst.msk [vmem:[%s316 + $0x30] sm:$0xf] %vm4574, %v4522
        %4588 = vst.msk [vmem:[%s316 + $0x34] sm:$0xf] %vm4574, %v4523
        %4589 = vst.msk [vmem:[%s316 + $0x38] sm:$0xf] %vm4574, %v4524
        %4590 = vst.msk [vmem:[%s316 + $0x3c] sm:$0xf] %vm4574, %v4525
        %4591 = vst.msk [vmem:[%s316 + $0x40] sm:$0xf] %vm4574, %v4526
        %4592 = vst.msk [vmem:[%s316 + $0x44] sm:$0xf] %vm4574, %v4527
        %4593 = vst.msk [vmem:[%s316 + $0x48] sm:$0xf] %vm4574, %v4528
        %4594 = vst.msk [vmem:[%s316 + $0x4c] sm:$0xf] %vm4574, %v4529
        %4595 = vst.msk [vmem:[%s316 + $0x50] sm:$0xf] %vm4574, %v4530
        %4596 = vst.msk [vmem:[%s316 + $0x54] sm:$0xf] %vm4574, %v4531
        %4597 = vst.msk [vmem:[%s316 + $0x58] sm:$0xf] %vm4574, %v4532
        %4598 = vst.msk [vmem:[%s316 + $0x5c] sm:$0xf] %vm4574, %v4533
        %4599 = vst.msk [vmem:[%s316 + $0x60] sm:$0xf] %vm4574, %v4534
        %4600 = vst.msk [vmem:[%s316 + $0x64] sm:$0xf] %vm4574, %v4535
        %4601 = vst.msk [vmem:[%s316 + $0x68] sm:$0xf] %vm4574, %v4536
        %4602 = vst.msk [vmem:[%s316 + $0x6c] sm:$0xf] %vm4574, %v4537
        %4603 = vst.msk [vmem:[%s316 + $0x70] sm:$0xf] %vm4574, %v4538
        %4604 = vst.msk [vmem:[%s316 + $0x74] sm:$0xf] %vm4574, %v4539
        %4605 = vst.msk [vmem:[%s316 + $0x78] sm:$0xf] %vm4574, %v4540
        %4606 = vst.msk [vmem:[%s316 + $0x7c] sm:$0xf] %vm4574, %v4541
        %s4607 = sand.u32 %s201, 1
        %s4608 = scalar_lea.sflag [#allocation8], %s4607
        %s4609 = sand.u32 %s201, 1
        %s4610 = smul.addr %s4609, 128
        %s4611 = scalar_lea.vmem [#allocation9], %s4610
        // Predicated region
        $region85: #{tpu_custom_call.1} parent=47 // pred_check
          %p4612 = pneg %p211
        $region86: #{tpu_custom_call.1} parent=47 // pred_check_branch
          %4614 = sbr.rel (%p4612) target = $region88
        $region87: #{tpu_custom_call.1} parent=47 // pred_region
          %s4615 = smul.u32 16, %s30
          %s4617 = ssub.s32 2048, 2048
          %4618 = vsyncadd %s4608, %s4617
          %s4619 = smul.addr %s4615, 2
          %s4620 = smul.addr %s29, 32
          %s4621 = sadd.s32 %s4619, %s4620
          %s4622 = smul.addr %s4621, 64
          %s4623 = scalar_lea.hbm %s8, %s4622
          %s4624 = sshll.u32 %s4611, 4
          %s4625 = int_to_ptr.vmem [resolvable:$true] %s4624
          %4630 = dma.vmem_to_hbm [thread:$0]  %s4625, 2048, %s4623, %s4608, 64, 64, 4
        $region88: #{tpu_custom_call.1} parent=47 // pred_fallthru
          _
      $region48: #{tpu_custom_call.1} parent=5 // pred_fallthru
        _
      %p4631 = scmp.le.s32.totalorder 2, %s20
      // Predicated region
      $region89: #{tpu_custom_call.1} parent=5 // pred_check
        %p4632 = pneg %p4631
      $region90: #{tpu_custom_call.1} parent=5 // pred_check_branch
        %4634 = sbr.rel (%p4632) target = $region92
      $region91: #{tpu_custom_call.1} parent=5 // pred_region
        %s4635 = ssub.s32 %s20, 2
        // Predicated region
        $region93: #{tpu_custom_call.1} parent=91 // pred_check
          %p4636 = pneg %p217
        $region94: #{tpu_custom_call.1} parent=91 // pred_check_branch
          %4638 = sbr.rel (%p4636) target = $region96
        $region95: #{tpu_custom_call.1} parent=91 // pred_region
          %s4639 = sand.u32 %s202, 1
          %s4640 = scalar_lea.sflag [#allocation8], %s4639
          %s4641 = sand.u32 %s202, 1
          %s4642 = smul.addr %s4641, 128
          %s4643 = scalar_lea.vmem [#allocation9], %s4642
          %4644 = dma.done %s4640, 2048
        $region96: #{tpu_custom_call.1} parent=91 // pred_fallthru
          _
      $region92: #{tpu_custom_call.1} parent=5 // pred_fallthru
        _
    $region6: #{tpu_custom_call.1} parent=1 // loop_footer
      %s24 = sadd.s32 1, %s20
    $region7: #{tpu_custom_call.1} parent=1 // loop_footer_branch
      %19 = sbr.rel target = $region3
    $region8: #{tpu_custom_call.1} parent=1 // loop_exit
      _
    %4645 = vsyncpa [#allocation7], 1
    %s4646 = scalar_lea.sflag [#allocation7], 1
    %4647 = vsyncpa %s4646, 1
    %4648 = vsyncpa [#allocation8], 1
    %s4649 = scalar_lea.sflag [#allocation8], 1
    %4650 = vsyncpa %s4649, 1
  %4651 = vsyncmov [#allocation5]
  %s4652 = vpop.sfrf %4651
  %p4653 = scmp.eq.s32.totalorder %s4652, 0
  %p4654 = pneg %p4653
  %4656 = shalt.err (%p4654)
  %s4657 = scalar_lea.sflag [#allocation5], 1
  %4658 = vsyncmov %s4657
  %s4659 = vpop.sfrf %4658
  %p4660 = scmp.eq.s32.totalorder %s4659, 0
  %p4661 = pneg %p4660
  %4663 = shalt.err (%p4661)

</llo_original>
